<compile_context>
chip_gen: v6e
topology: v6e:2x2x1
jax: 0.10.0
libtpu: 0.0.40
codegen_flags: <defaults>
</compile_context>

<pallas_src>
import functools
import numpy as np
import jax
import jax.numpy as jnp
from jax.experimental import pallas as pl
from jax.experimental.pallas import tpu as pltpu


# ----------------------------------------------------------------------------
# Pallas kernel: tiled matmul + K-reduction accumulator + fused bias/ReLU epilogue
# ----------------------------------------------------------------------------
def _mm_fused_kernel(x_ref, w_ref, b_ref, o_ref, acc_ref, *, relu):
    @pl.when(pl.program_id(2) == 0)
    def _init():
        acc_ref[...] = jnp.zeros_like(acc_ref)

    acc_ref[...] += jnp.dot(x_ref[...], w_ref[...],
                            preferred_element_type=jnp.float32)

    @pl.when(pl.program_id(2) == pl.num_programs(2) - 1)
    def _epilogue():
        y = acc_ref[...] + b_ref[...]
        if relu:
            y = jnp.maximum(y, 0.0)
        o_ref[...] = y.astype(o_ref.dtype)


def _ru(x, m):
    return (x + m - 1) // m * m


def _pick_tile(dim, unit, cap, min_blocks=1):
    """Tile size: multiple of `unit`, <= cap.  The dim is padded UP to a multiple
    of the chosen tile (never shrink the tile to an odd divisor).  When the dim
    exceeds the cap, pick the candidate minimizing (padded size, #grid steps).
    `min_blocks` forces >=N blocks along this axis (v7x megacore feeding)."""
    cap = max(unit, (cap // unit) * unit)
    dim_u = _ru(dim, unit)
    if dim_u <= cap:
        t = dim_u
    else:
        best = None
        for cand in range(cap, unit - 1, -unit):
            dp_c = _ru(dim, cand)
            key = (dp_c, dp_c // cand)
            if best is None or key < best[0]:
                best = (key, cand)
        t = best[1]
    if min_blocks > 1 and dim_u > unit:
        t = min(t, max(unit, _ru(-(-dim // min_blocks), unit)))
    dp = _ru(dim, t)
    return t, dp


def pallas_matmul(x, w, bias=None, relu=False, out_dtype=jnp.bfloat16):
    """y = relu((x @ w) + bias); x:(M,K), w:(K,N), bias:(N,).

    bf16 operands on the MXU, f32 accumulation in a VMEM scratch, fused
    bias/ReLU/cast epilogue on the last K grid step.  Output dtype is bf16 for
    inter-layer activations, f32 only for the final logits.
    """
    M, K = x.shape
    K2, N = w.shape
    assert K == K2
    # bf16 operands pack 2 rows/sublane -> M tiles are multiples of 16.
    # N/K tiles 128-aligned (256-friendly on v6e/v7x MXU).  Worst-case
    # double-buffered footprint stays ~4-7 MiB << 32 MiB scoped VMEM on all gens.
    tm, Mp = _pick_tile(M, 16, 512, min_blocks=2)   # >=2 M blocks -> both v7x cores
    tn, Np = _pick_tile(N, 128, 256)
    tk, Kp = _pick_tile(K, 128, 1024)

    xp = jnp.pad(x.astype(jnp.bfloat16), ((0, Mp - M), (0, Kp - K)))
    wp = jnp.pad(w.astype(jnp.bfloat16), ((0, Kp - K), (0, Np - N)))
    b = jnp.zeros((N,), jnp.float32) if bias is None else bias.astype(jnp.float32)
    bp = jnp.pad(b[None, :], ((0, 0), (0, Np - N)))

    out_bytes = jnp.dtype(out_dtype).itemsize
    grid = (Mp // tm, Np // tn, Kp // tk)
    out = pl.pallas_call(
        functools.partial(_mm_fused_kernel, relu=relu),
        out_shape=jax.ShapeDtypeStruct((Mp, Np), out_dtype),
        grid=grid,
        in_specs=[
            pl.BlockSpec((tm, tk), lambda i, j, k: (i, k)),
            pl.BlockSpec((tk, tn), lambda i, j, k: (k, j)),
            pl.BlockSpec((1, tn), lambda i, j, k: (0, j)),
        ],
        out_specs=pl.BlockSpec((tm, tn), lambda i, j, k: (i, j)),
        scratch_shapes=[pltpu.VMEM((tm, tn), jnp.float32)],
        compiler_params=pltpu.CompilerParams(
            dimension_semantics=("parallel", "parallel", "arbitrary"),
            vmem_limit_bytes=32 * 1024 * 1024),
        cost_estimate=pl.CostEstimate(
            flops=2 * M * N * K,
            transcendentals=0,
            bytes_accessed=Mp * Kp * 2 + Kp * Np * 2 + Mp * Np * out_bytes + Np * 4),
    )(xp, wp, bp)
    if Mp == M and Np == N:
        return out
    return out[:M, :N]


# ----------------------------------------------------------------------------
# Conv / pooling / interpolation expressed on top of the Pallas matmul kernel
# ----------------------------------------------------------------------------
def conv2d_bias_relu(x, w, bias=None, relu=False, stride=1, padding=0,
                     dilation=1, out_dtype=jnp.bfloat16):
    """x: (N,H,W,Cin) NHWC bf16, w: (kh,kw,Cin,Cout) bf16 (BN already folded in)."""
    N, H, W, C = x.shape
    kh, kw, _, Cout = w.shape
    Ho = (H + 2 * padding - dilation * (kh - 1) - 1) // stride + 1
    Wo = (W + 2 * padding - dilation * (kw - 1) - 1) // stride + 1
    if kh == 1 and kw == 1 and stride == 1 and padding == 0:
        patches = x.reshape(N * H * W, C)
    else:
        xp = jnp.pad(x, ((0, 0), (padding, padding), (padding, padding), (0, 0)))
        cols = []
        for i in range(kh):
            for j in range(kw):
                hs, ws = i * dilation, j * dilation
                cols.append(xp[:, hs:hs + stride * (Ho - 1) + 1:stride,
                               ws:ws + stride * (Wo - 1) + 1:stride, :])
        patches = jnp.concatenate(cols, axis=-1).reshape(N * Ho * Wo, kh * kw * C)
    out = pallas_matmul(patches, w.reshape(kh * kw * C, Cout), bias, relu, out_dtype)
    return out.reshape(N, Ho, Wo, Cout)


def maxpool_3x3_s2_p1(x):
    """MaxPool2d(kernel=3, stride=2, padding=1) in NHWC (XLA glue, elementwise max)."""
    N, H, W, C = x.shape
    xp = jnp.pad(x, ((0, 0), (1, 1), (1, 1), (0, 0)), constant_values=-jnp.inf)
    Ho = (H + 2 - 3) // 2 + 1
    Wo = (W + 2 - 3) // 2 + 1
    out = None
    for i in range(3):
        for j in range(3):
            p = xp[:, i:i + 2 * (Ho - 1) + 1:2, j:j + 2 * (Wo - 1) + 1:2, :]
            out = p if out is None else jnp.maximum(out, p)
    return out


def _axis_weights(n_in, n_out):
    """1-D bilinear (align_corners=True) interpolation matrix (n_out, n_in)."""
    A = np.zeros((n_out, n_in), np.float32)
    for o in range(n_out):
        src = 0.0 if (n_in == 1 or n_out == 1) else o * (n_in - 1) / (n_out - 1)
        i0 = min(int(np.floor(src)), n_in - 1)
        i1 = min(i0 + 1, n_in - 1)
        f = src - i0
        A[o, i0] += 1.0 - f
        A[o, i1] += f
    return A


def bilinear_resize(x, Ho, Wo, out_dtype=jnp.bfloat16):
    """Separable align_corners=True bilinear resize of NHWC x (two small matmuls)."""
    N, Hi, Wi, C = x.shape
    Ah = jnp.asarray(_axis_weights(Hi, Ho), dtype=jnp.bfloat16)   # (Ho, Hi)
    Aw = jnp.asarray(_axis_weights(Wi, Wo), dtype=jnp.bfloat16)   # (Wo, Wi)
    # H axis: (Ho,Hi) @ (Hi, N*Wi*C)  -> lane-dense columns; bf16 intermediate
    xh = x.transpose(1, 0, 2, 3).reshape(Hi, N * Wi * C)
    y = pallas_matmul(Ah, xh).reshape(Ho, N, Wi, C)
    # W axis: (Wo,Wi) @ (Wi, N*Ho*C)
    yw = y.transpose(2, 1, 0, 3).reshape(Wi, N * Ho * C)
    z = pallas_matmul(Aw, yw, out_dtype=out_dtype).reshape(Wo, N, Ho, C)
    return z.transpose(1, 2, 0, 3)            # (N, Ho, Wo, C)


def adaptive_pool_matrix(H, W, out):
    """Matrix form of nn.AdaptiveAvgPool2d(out): (out*out, H*W) (numpy)."""
    P = np.zeros((out * out, H * W), np.float32)
    for i in range(out):
        hs, he = (i * H) // out, -(-((i + 1) * H) // out)
        for j in range(out):
            ws, we = (j * W) // out, -(-((j + 1) * W) // out)
            wgt = 1.0 / ((he - hs) * (we - ws))
            for a in range(hs, he):
                for b in range(ws, we):
                    P[i * out + j, a * W + b] = wgt
    return P


# ----------------------------------------------------------------------------
# Deterministic parameter construction (scaled-down PSPNet), eval-mode BN folded
# ----------------------------------------------------------------------------
BINS = (1, 2, 3, 6)
CLASSES = 3
ZOOM = 8
FEA_DIM = 64                      # stand-in for 2048
RED = FEA_DIM // len(BINS)        # reduction_dim
CLS_MID = 32                      # stand-in for 512


def _make_conv(key, kh, kw, cin, cout):
    std = 1.0 / np.sqrt(kh * kw * cin)
    return std * jax.random.normal(key, (kh, kw, cin, cout), jnp.float32)


def _make_bn(key, c):
    k1, k2, k3, k4 = jax.random.split(key, 4)
    gamma = 1.0 + 0.1 * jax.random.normal(k1, (c,), jnp.float32)
    beta = 0.1 * jax.random.normal(k2, (c,), jnp.float32)
    mean = 0.1 * jax.random.normal(k3, (c,), jnp.float32)
    var = jax.random.uniform(k4, (c,), jnp.float32, 0.5, 1.5)
    scale = gamma / jnp.sqrt(var + 1e-5)
    return scale, beta - mean * scale


def _conv_bn_folded(kw_key, kbn_key, kh, kwd, cin, cout):
    """Eval-mode BN folding: w <- w * scale (per out-channel), bias <- beta - mean*scale.
    Weights stored pre-cast to bf16 so forward does no per-call cast."""
    w = _make_conv(kw_key, kh, kwd, cin, cout)
    scale, bias = _make_bn(kbn_key, cout)
    return (w * scale[None, None, None, :]).astype(jnp.bfloat16), bias


def init_params(key):
    ks = jax.random.split(key, 32)
    p = {}
    # backbone stand-in (strides/dilations match PSPNet-modified ResNet layers)
    p['l0'] = _conv_bn_folded(ks[0], ks[1], 7, 7, 3, 8)
    p['l1'] = _conv_bn_folded(ks[2], ks[3], 3, 3, 8, 16)
    p['l2'] = _conv_bn_folded(ks[4], ks[5], 3, 3, 16, 32)
    p['l3'] = _conv_bn_folded(ks[6], ks[7], 3, 3, 32, 48)
    p['l4'] = _conv_bn_folded(ks[8], ks[9], 3, 3, 48, FEA_DIM)
    # PPM: per-bin 1x1 conv (no bias) + BN, folded and concatenated along N once
    ws, bs = [], []
    for i in range(len(BINS)):
        w = _make_conv(ks[10 + i], 1, 1, FEA_DIM, RED).reshape(FEA_DIM, RED)
        scale, bias = _make_bn(ks[14 + i], RED)
        ws.append((w * scale[None, :]).astype(jnp.bfloat16))
        bs.append(bias)
    p['ppm_w'] = jnp.concatenate(ws, axis=1)     # (FEA_DIM, n_bins*RED) bf16
    p['ppm_b'] = jnp.concatenate(bs, axis=0)     # (n_bins*RED,) f32
    # cls head: 3x3 conv (no bias) + BN + ReLU + [dropout=identity] + 1x1 conv (bias)
    p['cls0'] = _conv_bn_folded(ks[20], ks[21], 3, 3, 2 * FEA_DIM, CLS_MID)
    p['cls1_w'] = _make_conv(ks[22], 1, 1, CLS_MID, CLASSES).astype(jnp.bfloat16)
    p['cls1_b'] = 0.1 * jax.random.normal(ks[23], (CLASSES,), jnp.float32)
    return p


# ----------------------------------------------------------------------------
# Fused PPM: 1 pooling matmul + 1 conv/bias/ReLU matmul + 1 upsample matmul
# ----------------------------------------------------------------------------
def ppm_forward(x, ppm_w, ppm_b):
    Nf, Hf, Wf, Cf = x.shape
    HW = Hf * Wf
    n_bins = len(BINS)

    # ---- all adaptive average pools in one matmul: (Q, HW) @ (HW, Nf*Cf) ----
    P_all = np.concatenate([adaptive_pool_matrix(Hf, Wf, b) for b in BINS], axis=0)
    Q = P_all.shape[0]                                   # sum of bin^2
    x2 = x.transpose(1, 2, 0, 3).reshape(HW, Nf * Cf)    # lane-dense (N*C) columns
    pooled = pallas_matmul(jnp.asarray(P_all, dtype=jnp.bfloat16), x2)  # (Q, Nf*Cf)
    pooled = pooled.reshape(Q, Nf, Cf).reshape(Q * Nf, Cf)

    # ---- all 1x1 conv + (folded BN) bias + ReLU in one matmul ----
    feats = pallas_matmul(pooled, ppm_w, ppm_b, relu=True)  # (Q*Nf, n_bins*RED)

    # zero cross (bin-i rows x bin-j columns) terms so the fused upsample below is exact
    mask = np.zeros((Q, n_bins * RED), np.float32)
    off = 0
    for bi, b in enumerate(BINS):
        mask[off:off + b * b, bi * RED:(bi + 1) * RED] = 1.0
        off += b * b
    feats = feats.reshape(Q, Nf, n_bins * RED) * jnp.asarray(mask, jnp.bfloat16)[:, None, :]
    F_big = feats.reshape(Q, Nf * n_bins * RED)

    # ---- all bilinear upsamples to (Hf, Wf) in one matmul: (HW, Q) @ (Q, Nf*n_bins*RED) ----
    U_all = np.concatenate(
        [np.einsum('oi,pj->opij', _axis_weights(b, Hf), _axis_weights(b, Wf)
                   ).reshape(HW, b * b) for b in BINS], axis=1)          # (HW, Q)
    up = pallas_matmul(jnp.asarray(U_all, dtype=jnp.bfloat16), F_big)    # (HW, Nf*n_bins*RED)
    up = up.reshape(Hf, Wf, Nf, n_bins * RED).transpose(2, 0, 1, 3)      # (Nf, Hf, Wf, n_bins*RED)

    return jnp.concatenate([x, up], axis=-1)                             # (Nf, Hf, Wf, 2*FEA_DIM)


# ----------------------------------------------------------------------------
# Forward pass (eval mode)
# ----------------------------------------------------------------------------
def pspnet_forward(params, x_nchw):
    N, _, H_in, W_in = x_nchw.shape
    assert (H_in - 1) % 8 == 0 and (W_in - 1) % 8 == 0
    h = (H_in - 1) // 8 * ZOOM + 1
    w = (W_in - 1) // 8 * ZOOM + 1

    x = jnp.transpose(x_nchw, (0, 2, 3, 1)).astype(jnp.bfloat16)  # NCHW -> NHWC, bf16

    # layer0: 7x7 s2 conv + BN(folded) + ReLU + maxpool 3x3 s2
    w0, b0 = params['l0']
    x = conv2d_bias_relu(x, w0, b0, relu=True, stride=2, padding=3)
    x = maxpool_3x3_s2_p1(x)
    # layer1 .. layer4 (layer3: dilation 2, layer4: dilation 4, stride 1)
    w1, b1 = params['l1']
    x = conv2d_bias_relu(x, w1, b1, relu=True, stride=1, padding=1)
    w2, b2 = params['l2']
    x = conv2d_bias_relu(x, w2, b2, relu=True, stride=2, padding=1)
    w3, b3 = params['l3']
    x_tmp = conv2d_bias_relu(x, w3, b3, relu=True, stride=1, padding=2, dilation=2)
    w4, b4 = params['l4']
    x = conv2d_bias_relu(x_tmp, w4, b4, relu=True, stride=1, padding=4, dilation=4)

    # PPM (fused across bins) -> (N, Hf, Wf, 2*FEA_DIM)
    x = ppm_forward(x, params['ppm_w'], params['ppm_b'])

    # cls head (Dropout2d is identity in eval); final 1x1 conv emits f32 logits
    wc0, bc0 = params['cls0']
    x = conv2d_bias_relu(x, wc0, bc0, relu=True, stride=1, padding=1)
    x = conv2d_bias_relu(x, params['cls1_w'], params['cls1_b'], relu=False,
                         out_dtype=jnp.float32)

    # final bilinear upsample to (h, w), align_corners=True (separable, f32 logits out)
    if ZOOM != 1:
        x = bilinear_resize(x, h, w, out_dtype=jnp.float32)

    return jnp.transpose(x, (0, 3, 1, 2))                               # back to NCHW


if __name__ == "__main__":
    key = jax.random.PRNGKey(0)
    kp, kx = jax.random.split(key)
    params = init_params(kp)
    # input spatial must satisfy (S - 1) % 8 == 0
    x = jax.random.normal(kx, (2, 3, 17, 17), jnp.float32)
    fwd = jax.jit(pspnet_forward)
    out = fwd(params, x)
    out = jax.block_until_ready(out)
    assert out.shape == (2, CLASSES, 17, 17), out.shape
    assert bool(jnp.all(jnp.isfinite(out)))
    print("KERNEL_OK")
</pallas_src>

<mosaic_0001>
module attributes {stable_mosaic.version = 11 : i64} {
  func.func @_mm_fused_kernel(%arg0: i32, %arg1: i32, %arg2: i32, %arg3: memref<96x256xbf16, #tpu.memory_space<vmem>>, %arg4: memref<256x128xbf16, #tpu.memory_space<vmem>>, %arg5: memref<1x128xf32, #tpu.memory_space<vmem>>, %arg6: memref<96x128xbf16, #tpu.memory_space<vmem>>, %arg7: memref<96x128xf32, #tpu.memory_space<vmem>>) attributes {dimension_semantics = [#tpu.dimension_semantics<parallel>, #tpu.dimension_semantics<parallel>, #tpu.dimension_semantics<arbitrary>], iteration_bounds = array<i64: 2, 1, 1>, scalar_prefetch = 0 : i64, scratch_operands = 1 : i64, tpu.core_type = #tpu.core_type<tc>, window_params = [{transform_indices = @transform_0, window_bounds = array<i64: 96, 256>}, {transform_indices = @transform_1, window_bounds = array<i64: 256, 128>}, {transform_indices = @transform_2, window_bounds = array<i64: 1, 128>}, {transform_indices = @transform_3, window_bounds = array<i64: 96, 128>}]} {
    %c0_i32 = arith.constant 0 : i32
    %0 = arith.cmpi eq, %arg2, %c0_i32 : i32
    %1 = arith.extui %0 : i1 to i32
    %c0_i32_0 = arith.constant 0 : i32
    %2 = arith.cmpi ne, %1, %c0_i32_0 : i32
    scf.if %2 {
      %cst_10 = arith.constant 0.000000e+00 : f32
      %12 = vector.broadcast %cst_10 : f32 to vector<96x128xf32>
      %c0_11 = arith.constant 0 : index
      %c0_12 = arith.constant 0 : index
      %13 = vector.load %arg7[%c0_11, %c0_12] : memref<96x128xf32, #tpu.memory_space<vmem>>, vector<96x128xf32>
      tpu.vector_store %arg7[%c0_11, %c0_12], %12 {strides = array<i32>} : memref<96x128xf32, #tpu.memory_space<vmem>>, vector<96x128xf32>,
    } else {
    }
    %c0 = arith.constant 0 : index
    %c0_1 = arith.constant 0 : index
    %3 = vector.load %arg7[%c0, %c0_1] : memref<96x128xf32, #tpu.memory_space<vmem>>, vector<96x128xf32>
    %c0_2 = arith.constant 0 : index
    %c0_3 = arith.constant 0 : index
    %4 = vector.load %arg3[%c0_2, %c0_3] : memref<96x256xbf16, #tpu.memory_space<vmem>>, vector<96x256xbf16>
    %c0_4 = arith.constant 0 : index
    %c0_5 = arith.constant 0 : index
    %5 = vector.load %arg4[%c0_4, %c0_5] : memref<256x128xbf16, #tpu.memory_space<vmem>>, vector<256x128xbf16>
    %cst = arith.constant dense<0.000000e+00> : vector<96x128xf32>
    %6 = tpu.matmul %4, %5, %cst {dimension_numbers = #tpu.dot_dimension_numbers<[1], [0], [0], [1], [0, 0, 1, 1], [], []>} : vector<96x256xbf16>, vector<256x128xbf16>, vector<96x128xf32> -> vector<96x128xf32>
    %7 = arith.addf %3, %6 : vector<96x128xf32>
    %c0_6 = arith.constant 0 : index
    %c0_7 = arith.constant 0 : index
    %8 = vector.load %arg7[%c0_6, %c0_7] : memref<96x128xf32, #tpu.memory_space<vmem>>, vector<96x128xf32>
    tpu.vector_store %arg7[%c0_6, %c0_7], %7 {strides = array<i32>} : memref<96x128xf32, #tpu.memory_space<vmem>>, vector<96x128xf32>,
    %c0_i32_8 = arith.constant 0 : i32
    %9 = arith.cmpi eq, %arg2, %c0_i32_8 : i32
    %10 = arith.extui %9 : i1 to i32
    %c0_i32_9 = arith.constant 0 : i32
    %11 = arith.cmpi ne, %10, %c0_i32_9 : i32
    scf.if %11 {
      %c0_10 = arith.constant 0 : index
      %c0_11 = arith.constant 0 : index
      %12 = vector.load %arg7[%c0_10, %c0_11] : memref<96x128xf32, #tpu.memory_space<vmem>>, vector<96x128xf32>
      %c0_12 = arith.constant 0 : index
      %c0_13 = arith.constant 0 : index
      %13 = vector.load %arg5[%c0_12, %c0_13] : memref<1x128xf32, #tpu.memory_space<vmem>>, vector<1x128xf32>
      %14 = vector.broadcast %13 : vector<1x128xf32> to vector<96x128xf32>
      %15 = arith.addf %12, %14 : vector<96x128xf32>
      %cst_14 = arith.constant 0.000000e+00 : f32
      %16 = vector.broadcast %cst_14 : f32 to vector<96x128xf32>
      %17 = arith.maximumf %15, %16 : vector<96x128xf32>
      %18 = arith.truncf %17 : vector<96x128xf32> to vector<96x128xbf16>
      %c0_15 = arith.constant 0 : index
      %c0_16 = arith.constant 0 : index
      %19 = vector.load %arg6[%c0_15, %c0_16] : memref<96x128xbf16, #tpu.memory_space<vmem>>, vector<96x128xbf16>
      tpu.vector_store %arg6[%c0_15, %c0_16], %18 {strides = array<i32>} : memref<96x128xbf16, #tpu.memory_space<vmem>>, vector<96x128xbf16>,
    } else {
    }
    return
  }
  func.func @transform_0(%arg0: i32, %arg1: i32, %arg2: i32) -> (i32, i32) {
    %c0_i32 = arith.constant 0 : i32
    return %arg0, %arg2 : i32, i32
  }
  func.func @transform_1(%arg0: i32, %arg1: i32, %arg2: i32) -> (i32, i32) {
    %c0_i32 = arith.constant 0 : i32
    return %arg2, %arg1 : i32, i32
  }
  func.func @transform_2(%arg0: i32, %arg1: i32, %arg2: i32) -> (i32, i32) {
    %c0_i32 = arith.constant 0 : i32
    %c0_i32_0 = arith.constant 0 : i32
    return %c0_i32, %arg1 : i32, i32
  }
  func.func @transform_3(%arg0: i32, %arg1: i32, %arg2: i32) -> (i32, i32) {
    %c0_i32 = arith.constant 0 : i32
    return %arg0, %arg1 : i32, i32
  }
}

module attributes {stable_mosaic.version = 11 : i64} {
  func.func @_mm_fused_kernel(%arg0: i32, %arg1: i32, %arg2: i32, %arg3: memref<32x128xbf16, #tpu.memory_space<vmem>>, %arg4: memref<128x128xbf16, #tpu.memory_space<vmem>>, %arg5: memref<1x128xf32, #tpu.memory_space<vmem>>, %arg6: memref<32x128xbf16, #tpu.memory_space<vmem>>, %arg7: memref<32x128xf32, #tpu.memory_space<vmem>>) attributes {dimension_semantics = [#tpu.dimension_semantics<parallel>, #tpu.dimension_semantics<parallel>, #tpu.dimension_semantics<arbitrary>], iteration_bounds = array<i64: 2, 1, 1>, scalar_prefetch = 0 : i64, scratch_operands = 1 : i64, tpu.core_type = #tpu.core_type<tc>, window_params = [{transform_indices = @transform_0, window_bounds = array<i64: 32, 128>}, {transform_indices = @transform_1, window_bounds = array<i64: 128, 128>}, {transform_indices = @transform_2, window_bounds = array<i64: 1, 128>}, {transform_indices = @transform_3, window_bounds = array<i64: 32, 128>}]} {
    %c0_i32 = arith.constant 0 : i32
    %0 = arith.cmpi eq, %arg2, %c0_i32 : i32
    %1 = arith.extui %0 : i1 to i32
    %c0_i32_0 = arith.constant 0 : i32
    %2 = arith.cmpi ne, %1, %c0_i32_0 : i32
    scf.if %2 {
      %cst_10 = arith.constant 0.000000e+00 : f32
      %12 = vector.broadcast %cst_10 : f32 to vector<32x128xf32>
      %c0_11 = arith.constant 0 : index
      %c0_12 = arith.constant 0 : index
      %13 = vector.load %arg7[%c0_11, %c0_12] : memref<32x128xf32, #tpu.memory_space<vmem>>, vector<32x128xf32>
      tpu.vector_store %arg7[%c0_11, %c0_12], %12 {strides = array<i32>} : memref<32x128xf32, #tpu.memory_space<vmem>>, vector<32x128xf32>,
    } else {
    }
    %c0 = arith.constant 0 : index
    %c0_1 = arith.constant 0 : index
    %3 = vector.load %arg7[%c0, %c0_1] : memref<32x128xf32, #tpu.memory_space<vmem>>, vector<32x128xf32>
    %c0_2 = arith.constant 0 : index
    %c0_3 = arith.constant 0 : index
    %4 = vector.load %arg3[%c0_2, %c0_3] : memref<32x128xbf16, #tpu.memory_space<vmem>>, vector<32x128xbf16>
    %c0_4 = arith.constant 0 : index
    %c0_5 = arith.constant 0 : index
    %5 = vector.load %arg4[%c0_4, %c0_5] : memref<128x128xbf16, #tpu.memory_space<vmem>>, vector<128x128xbf16>
    %cst = arith.constant dense<0.000000e+00> : vector<32x128xf32>
    %6 = tpu.matmul %4, %5, %cst {dimension_numbers = #tpu.dot_dimension_numbers<[1], [0], [0], [1], [0, 0, 1, 1], [], []>} : vector<32x128xbf16>, vector<128x128xbf16>, vector<32x128xf32> -> vector<32x128xf32>
    %7 = arith.addf %3, %6 : vector<32x128xf32>
    %c0_6 = arith.constant 0 : index
    %c0_7 = arith.constant 0 : index
    %8 = vector.load %arg7[%c0_6, %c0_7] : memref<32x128xf32, #tpu.memory_space<vmem>>, vector<32x128xf32>
    tpu.vector_store %arg7[%c0_6, %c0_7], %7 {strides = array<i32>} : memref<32x128xf32, #tpu.memory_space<vmem>>, vector<32x128xf32>,
    %c0_i32_8 = arith.constant 0 : i32
    %9 = arith.cmpi eq, %arg2, %c0_i32_8 : i32
    %10 = arith.extui %9 : i1 to i32
    %c0_i32_9 = arith.constant 0 : i32
    %11 = arith.cmpi ne, %10, %c0_i32_9 : i32
    scf.if %11 {
      %c0_10 = arith.constant 0 : index
      %c0_11 = arith.constant 0 : index
      %12 = vector.load %arg7[%c0_10, %c0_11] : memref<32x128xf32, #tpu.memory_space<vmem>>, vector<32x128xf32>
      %c0_12 = arith.constant 0 : index
      %c0_13 = arith.constant 0 : index
      %13 = vector.load %arg5[%c0_12, %c0_13] : memref<1x128xf32, #tpu.memory_space<vmem>>, vector<1x128xf32>
      %14 = vector.broadcast %13 : vector<1x128xf32> to vector<32x128xf32>
      %15 = arith.addf %12, %14 : vector<32x128xf32>
      %cst_14 = arith.constant 0.000000e+00 : f32
      %16 = vector.broadcast %cst_14 : f32 to vector<32x128xf32>
      %17 = arith.maximumf %15, %16 : vector<32x128xf32>
      %18 = arith.truncf %17 : vector<32x128xf32> to vector<32x128xbf16>
      %c0_15 = arith.constant 0 : index
      %c0_16 = arith.constant 0 : index
      %19 = vector.load %arg6[%c0_15, %c0_16] : memref<32x128xbf16, #tpu.memory_space<vmem>>, vector<32x128xbf16>
      tpu.vector_store %arg6[%c0_15, %c0_16], %18 {strides = array<i32>} : memref<32x128xbf16, #tpu.memory_space<vmem>>, vector<32x128xbf16>,
    } else {
    }
    return
  }
  func.func @transform_0(%arg0: i32, %arg1: i32, %arg2: i32) -> (i32, i32) {
    %c0_i32 = arith.constant 0 : i32
    return %arg0, %arg2 : i32, i32
  }
  func.func @transform_1(%arg0: i32, %arg1: i32, %arg2: i32) -> (i32, i32) {
    %c0_i32 = arith.constant 0 : i32
    return %arg2, %arg1 : i32, i32
  }
  func.func @transform_2(%arg0: i32, %arg1: i32, %arg2: i32) -> (i32, i32) {
    %c0_i32 = arith.constant 0 : i32
    %c0_i32_0 = arith.constant 0 : i32
    return %c0_i32, %arg1 : i32, i32
  }
  func.func @transform_3(%arg0: i32, %arg1: i32, %arg2: i32) -> (i32, i32) {
    %c0_i32 = arith.constant 0 : i32
    return %arg0, %arg1 : i32, i32
  }
}

module attributes {stable_mosaic.version = 11 : i64} {
  func.func @_mm_fused_kernel(%arg0: i32, %arg1: i32, %arg2: i32, %arg3: memref<16x256xbf16, #tpu.memory_space<vmem>>, %arg4: memref<256x128xbf16, #tpu.memory_space<vmem>>, %arg5: memref<1x128xf32, #tpu.memory_space<vmem>>, %arg6: memref<16x128xbf16, #tpu.memory_space<vmem>>, %arg7: memref<16x128xf32, #tpu.memory_space<vmem>>) attributes {dimension_semantics = [#tpu.dimension_semantics<parallel>, #tpu.dimension_semantics<parallel>, #tpu.dimension_semantics<arbitrary>], iteration_bounds = array<i64: 2, 1, 1>, scalar_prefetch = 0 : i64, scratch_operands = 1 : i64, tpu.core_type = #tpu.core_type<tc>, window_params = [{transform_indices = @transform_0, window_bounds = array<i64: 16, 256>}, {transform_indices = @transform_1, window_bounds = array<i64: 256, 128>}, {transform_indices = @transform_2, window_bounds = array<i64: 1, 128>}, {transform_indices = @transform_3, window_bounds = array<i64: 16, 128>}]} {
    %c0_i32 = arith.constant 0 : i32
    %0 = arith.cmpi eq, %arg2, %c0_i32 : i32
    %1 = arith.extui %0 : i1 to i32
    %c0_i32_0 = arith.constant 0 : i32
    %2 = arith.cmpi ne, %1, %c0_i32_0 : i32
    scf.if %2 {
      %cst_10 = arith.constant 0.000000e+00 : f32
      %12 = vector.broadcast %cst_10 : f32 to vector<16x128xf32>
      %c0_11 = arith.constant 0 : index
      %c0_12 = arith.constant 0 : index
      %13 = vector.load %arg7[%c0_11, %c0_12] : memref<16x128xf32, #tpu.memory_space<vmem>>, vector<16x128xf32>
      tpu.vector_store %arg7[%c0_11, %c0_12], %12 {strides = array<i32>} : memref<16x128xf32, #tpu.memory_space<vmem>>, vector<16x128xf32>,
    } else {
    }
    %c0 = arith.constant 0 : index
    %c0_1 = arith.constant 0 : index
    %3 = vector.load %arg7[%c0, %c0_1] : memref<16x128xf32, #tpu.memory_space<vmem>>, vector<16x128xf32>
    %c0_2 = arith.constant 0 : index
    %c0_3 = arith.constant 0 : index
    %4 = vector.load %arg3[%c0_2, %c0_3] : memref<16x256xbf16, #tpu.memory_space<vmem>>, vector<16x256xbf16>
    %c0_4 = arith.constant 0 : index
    %c0_5 = arith.constant 0 : index
    %5 = vector.load %arg4[%c0_4, %c0_5] : memref<256x128xbf16, #tpu.memory_space<vmem>>, vector<256x128xbf16>
    %cst = arith.constant dense<0.000000e+00> : vector<16x128xf32>
    %6 = tpu.matmul %4, %5, %cst {dimension_numbers = #tpu.dot_dimension_numbers<[1], [0], [0], [1], [0, 0, 1, 1], [], []>} : vector<16x256xbf16>, vector<256x128xbf16>, vector<16x128xf32> -> vector<16x128xf32>
    %7 = arith.addf %3, %6 : vector<16x128xf32>
    %c0_6 = arith.constant 0 : index
    %c0_7 = arith.constant 0 : index
    %8 = vector.load %arg7[%c0_6, %c0_7] : memref<16x128xf32, #tpu.memory_space<vmem>>, vector<16x128xf32>
    tpu.vector_store %arg7[%c0_6, %c0_7], %7 {strides = array<i32>} : memref<16x128xf32, #tpu.memory_space<vmem>>, vector<16x128xf32>,
    %c0_i32_8 = arith.constant 0 : i32
    %9 = arith.cmpi eq, %arg2, %c0_i32_8 : i32
    %10 = arith.extui %9 : i1 to i32
    %c0_i32_9 = arith.constant 0 : i32
    %11 = arith.cmpi ne, %10, %c0_i32_9 : i32
    scf.if %11 {
      %c0_10 = arith.constant 0 : index
      %c0_11 = arith.constant 0 : index
      %12 = vector.load %arg7[%c0_10, %c0_11] : memref<16x128xf32, #tpu.memory_space<vmem>>, vector<16x128xf32>
      %c0_12 = arith.constant 0 : index
      %c0_13 = arith.constant 0 : index
      %13 = vector.load %arg5[%c0_12, %c0_13] : memref<1x128xf32, #tpu.memory_space<vmem>>, vector<1x128xf32>
      %14 = vector.broadcast %13 : vector<1x128xf32> to vector<16x128xf32>
      %15 = arith.addf %12, %14 : vector<16x128xf32>
      %cst_14 = arith.constant 0.000000e+00 : f32
      %16 = vector.broadcast %cst_14 : f32 to vector<16x128xf32>
      %17 = arith.maximumf %15, %16 : vector<16x128xf32>
      %18 = arith.truncf %17 : vector<16x128xf32> to vector<16x128xbf16>
      %c0_15 = arith.constant 0 : index
      %c0_16 = arith.constant 0 : index
      %19 = vector.load %arg6[%c0_15, %c0_16] : memref<16x128xbf16, #tpu.memory_space<vmem>>, vector<16x128xbf16>
      tpu.vector_store %arg6[%c0_15, %c0_16], %18 {strides = array<i32>} : memref<16x128xbf16, #tpu.memory_space<vmem>>, vector<16x128xbf16>,
    } else {
    }
    return
  }
  func.func @transform_0(%arg0: i32, %arg1: i32, %arg2: i32) -> (i32, i32) {
    %c0_i32 = arith.constant 0 : i32
    return %arg0, %arg2 : i32, i32
  }
  func.func @transform_1(%arg0: i32, %arg1: i32, %arg2: i32) -> (i32, i32) {
    %c0_i32 = arith.constant 0 : i32
    return %arg2, %arg1 : i32, i32
  }
  func.func @transform_2(%arg0: i32, %arg1: i32, %arg2: i32) -> (i32, i32) {
    %c0_i32 = arith.constant 0 : i32
    %c0_i32_0 = arith.constant 0 : i32
    return %c0_i32, %arg1 : i32, i32
  }
  func.func @transform_3(%arg0: i32, %arg1: i32, %arg2: i32) -> (i32, i32) {
    %c0_i32 = arith.constant 0 : i32
    return %arg0, %arg1 : i32, i32
  }
}

module attributes {stable_mosaic.version = 11 : i64} {
  func.func @_mm_fused_kernel(%arg0: i32, %arg1: i32, %arg2: i32, %arg3: memref<16x384xbf16, #tpu.memory_space<vmem>>, %arg4: memref<384x128xbf16, #tpu.memory_space<vmem>>, %arg5: memref<1x128xf32, #tpu.memory_space<vmem>>, %arg6: memref<16x128xbf16, #tpu.memory_space<vmem>>, %arg7: memref<16x128xf32, #tpu.memory_space<vmem>>) attributes {dimension_semantics = [#tpu.dimension_semantics<parallel>, #tpu.dimension_semantics<parallel>, #tpu.dimension_semantics<arbitrary>], iteration_bounds = array<i64: 2, 1, 1>, scalar_prefetch = 0 : i64, scratch_operands = 1 : i64, tpu.core_type = #tpu.core_type<tc>, window_params = [{transform_indices = @transform_0, window_bounds = array<i64: 16, 384>}, {transform_indices = @transform_1, window_bounds = array<i64: 384, 128>}, {transform_indices = @transform_2, window_bounds = array<i64: 1, 128>}, {transform_indices = @transform_3, window_bounds = array<i64: 16, 128>}]} {
    %c0_i32 = arith.constant 0 : i32
    %0 = arith.cmpi eq, %arg2, %c0_i32 : i32
    %1 = arith.extui %0 : i1 to i32
    %c0_i32_0 = arith.constant 0 : i32
    %2 = arith.cmpi ne, %1, %c0_i32_0 : i32
    scf.if %2 {
      %cst_10 = arith.constant 0.000000e+00 : f32
      %12 = vector.broadcast %cst_10 : f32 to vector<16x128xf32>
      %c0_11 = arith.constant 0 : index
      %c0_12 = arith.constant 0 : index
      %13 = vector.load %arg7[%c0_11, %c0_12] : memref<16x128xf32, #tpu.memory_space<vmem>>, vector<16x128xf32>
      tpu.vector_store %arg7[%c0_11, %c0_12], %12 {strides = array<i32>} : memref<16x128xf32, #tpu.memory_space<vmem>>, vector<16x128xf32>,
    } else {
    }
    %c0 = arith.constant 0 : index
    %c0_1 = arith.constant 0 : index
    %3 = vector.load %arg7[%c0, %c0_1] : memref<16x128xf32, #tpu.memory_space<vmem>>, vector<16x128xf32>
    %c0_2 = arith.constant 0 : index
    %c0_3 = arith.constant 0 : index
    %4 = vector.load %arg3[%c0_2, %c0_3] : memref<16x384xbf16, #tpu.memory_space<vmem>>, vector<16x384xbf16>
    %c0_4 = arith.constant 0 : index
    %c0_5 = arith.constant 0 : index
    %5 = vector.load %arg4[%c0_4, %c0_5] : memref<384x128xbf16, #tpu.memory_space<vmem>>, vector<384x128xbf16>
    %cst = arith.constant dense<0.000000e+00> : vector<16x128xf32>
    %6 = tpu.matmul %4, %5, %cst {dimension_numbers = #tpu.dot_dimension_numbers<[1], [0], [0], [1], [0, 0, 1, 1], [], []>} : vector<16x384xbf16>, vector<384x128xbf16>, vector<16x128xf32> -> vector<16x128xf32>
    %7 = arith.addf %3, %6 : vector<16x128xf32>
    %c0_6 = arith.constant 0 : index
    %c0_7 = arith.constant 0 : index
    %8 = vector.load %arg7[%c0_6, %c0_7] : memref<16x128xf32, #tpu.memory_space<vmem>>, vector<16x128xf32>
    tpu.vector_store %arg7[%c0_6, %c0_7], %7 {strides = array<i32>} : memref<16x128xf32, #tpu.memory_space<vmem>>, vector<16x128xf32>,
    %c0_i32_8 = arith.constant 0 : i32
    %9 = arith.cmpi eq, %arg2, %c0_i32_8 : i32
    %10 = arith.extui %9 : i1 to i32
    %c0_i32_9 = arith.constant 0 : i32
    %11 = arith.cmpi ne, %10, %c0_i32_9 : i32
    scf.if %11 {
      %c0_10 = arith.constant 0 : index
      %c0_11 = arith.constant 0 : index
      %12 = vector.load %arg7[%c0_10, %c0_11] : memref<16x128xf32, #tpu.memory_space<vmem>>, vector<16x128xf32>
      %c0_12 = arith.constant 0 : index
      %c0_13 = arith.constant 0 : index
      %13 = vector.load %arg5[%c0_12, %c0_13] : memref<1x128xf32, #tpu.memory_space<vmem>>, vector<1x128xf32>
      %14 = vector.broadcast %13 : vector<1x128xf32> to vector<16x128xf32>
      %15 = arith.addf %12, %14 : vector<16x128xf32>
      %cst_14 = arith.constant 0.000000e+00 : f32
      %16 = vector.broadcast %cst_14 : f32 to vector<16x128xf32>
      %17 = arith.maximumf %15, %16 : vector<16x128xf32>
      %18 = arith.truncf %17 : vector<16x128xf32> to vector<16x128xbf16>
      %c0_15 = arith.constant 0 : index
      %c0_16 = arith.constant 0 : index
      %19 = vector.load %arg6[%c0_15, %c0_16] : memref<16x128xbf16, #tpu.memory_space<vmem>>, vector<16x128xbf16>
      tpu.vector_store %arg6[%c0_15, %c0_16], %18 {strides = array<i32>} : memref<16x128xbf16, #tpu.memory_space<vmem>>, vector<16x128xbf16>,
    } else {
    }
    return
  }
  func.func @transform_0(%arg0: i32, %arg1: i32, %arg2: i32) -> (i32, i32) {
    %c0_i32 = arith.constant 0 : i32
    return %arg0, %arg2 : i32, i32
  }
  func.func @transform_1(%arg0: i32, %arg1: i32, %arg2: i32) -> (i32, i32) {
    %c0_i32 = arith.constant 0 : i32
    return %arg2, %arg1 : i32, i32
  }
  func.func @transform_2(%arg0: i32, %arg1: i32, %arg2: i32) -> (i32, i32) {
    %c0_i32 = arith.constant 0 : i32
    %c0_i32_0 = arith.constant 0 : i32
    return %c0_i32, %arg1 : i32, i32
  }
  func.func @transform_3(%arg0: i32, %arg1: i32, %arg2: i32) -> (i32, i32) {
    %c0_i32 = arith.constant 0 : i32
    return %arg0, %arg1 : i32, i32
  }
}

module attributes {stable_mosaic.version = 11 : i64} {
  func.func @_mm_fused_kernel(%arg0: i32, %arg1: i32, %arg2: i32, %arg3: memref<16x512xbf16, #tpu.memory_space<vmem>>, %arg4: memref<512x128xbf16, #tpu.memory_space<vmem>>, %arg5: memref<1x128xf32, #tpu.memory_space<vmem>>, %arg6: memref<16x128xbf16, #tpu.memory_space<vmem>>, %arg7: memref<16x128xf32, #tpu.memory_space<vmem>>) attributes {dimension_semantics = [#tpu.dimension_semantics<parallel>, #tpu.dimension_semantics<parallel>, #tpu.dimension_semantics<arbitrary>], iteration_bounds = array<i64: 2, 1, 1>, scalar_prefetch = 0 : i64, scratch_operands = 1 : i64, tpu.core_type = #tpu.core_type<tc>, window_params = [{transform_indices = @transform_0, window_bounds = array<i64: 16, 512>}, {transform_indices = @transform_1, window_bounds = array<i64: 512, 128>}, {transform_indices = @transform_2, window_bounds = array<i64: 1, 128>}, {transform_indices = @transform_3, window_bounds = array<i64: 16, 128>}]} {
    %c0_i32 = arith.constant 0 : i32
    %0 = arith.cmpi eq, %arg2, %c0_i32 : i32
    %1 = arith.extui %0 : i1 to i32
    %c0_i32_0 = arith.constant 0 : i32
    %2 = arith.cmpi ne, %1, %c0_i32_0 : i32
    scf.if %2 {
      %cst_10 = arith.constant 0.000000e+00 : f32
      %12 = vector.broadcast %cst_10 : f32 to vector<16x128xf32>
      %c0_11 = arith.constant 0 : index
      %c0_12 = arith.constant 0 : index
      %13 = vector.load %arg7[%c0_11, %c0_12] : memref<16x128xf32, #tpu.memory_space<vmem>>, vector<16x128xf32>
      tpu.vector_store %arg7[%c0_11, %c0_12], %12 {strides = array<i32>} : memref<16x128xf32, #tpu.memory_space<vmem>>, vector<16x128xf32>,
    } else {
    }
    %c0 = arith.constant 0 : index
    %c0_1 = arith.constant 0 : index
    %3 = vector.load %arg7[%c0, %c0_1] : memref<16x128xf32, #tpu.memory_space<vmem>>, vector<16x128xf32>
    %c0_2 = arith.constant 0 : index
    %c0_3 = arith.constant 0 : index
    %4 = vector.load %arg3[%c0_2, %c0_3] : memref<16x512xbf16, #tpu.memory_space<vmem>>, vector<16x512xbf16>
    %c0_4 = arith.constant 0 : index
    %c0_5 = arith.constant 0 : index
    %5 = vector.load %arg4[%c0_4, %c0_5] : memref<512x128xbf16, #tpu.memory_space<vmem>>, vector<512x128xbf16>
    %cst = arith.constant dense<0.000000e+00> : vector<16x128xf32>
    %6 = tpu.matmul %4, %5, %cst {dimension_numbers = #tpu.dot_dimension_numbers<[1], [0], [0], [1], [0, 0, 1, 1], [], []>} : vector<16x512xbf16>, vector<512x128xbf16>, vector<16x128xf32> -> vector<16x128xf32>
    %7 = arith.addf %3, %6 : vector<16x128xf32>
    %c0_6 = arith.constant 0 : index
    %c0_7 = arith.constant 0 : index
    %8 = vector.load %arg7[%c0_6, %c0_7] : memref<16x128xf32, #tpu.memory_space<vmem>>, vector<16x128xf32>
    tpu.vector_store %arg7[%c0_6, %c0_7], %7 {strides = array<i32>} : memref<16x128xf32, #tpu.memory_space<vmem>>, vector<16x128xf32>,
    %c0_i32_8 = arith.constant 0 : i32
    %9 = arith.cmpi eq, %arg2, %c0_i32_8 : i32
    %10 = arith.extui %9 : i1 to i32
    %c0_i32_9 = arith.constant 0 : i32
    %11 = arith.cmpi ne, %10, %c0_i32_9 : i32
    scf.if %11 {
      %c0_10 = arith.constant 0 : index
      %c0_11 = arith.constant 0 : index
      %12 = vector.load %arg7[%c0_10, %c0_11] : memref<16x128xf32, #tpu.memory_space<vmem>>, vector<16x128xf32>
      %c0_12 = arith.constant 0 : index
      %c0_13 = arith.constant 0 : index
      %13 = vector.load %arg5[%c0_12, %c0_13] : memref<1x128xf32, #tpu.memory_space<vmem>>, vector<1x128xf32>
      %14 = vector.broadcast %13 : vector<1x128xf32> to vector<16x128xf32>
      %15 = arith.addf %12, %14 : vector<16x128xf32>
      %cst_14 = arith.constant 0.000000e+00 : f32
      %16 = vector.broadcast %cst_14 : f32 to vector<16x128xf32>
      %17 = arith.maximumf %15, %16 : vector<16x128xf32>
      %18 = arith.truncf %17 : vector<16x128xf32> to vector<16x128xbf16>
      %c0_15 = arith.constant 0 : index
      %c0_16 = arith.constant 0 : index
      %19 = vector.load %arg6[%c0_15, %c0_16] : memref<16x128xbf16, #tpu.memory_space<vmem>>, vector<16x128xbf16>
      tpu.vector_store %arg6[%c0_15, %c0_16], %18 {strides = array<i32>} : memref<16x128xbf16, #tpu.memory_space<vmem>>, vector<16x128xbf16>,
    } else {
    }
    return
  }
  func.func @transform_0(%arg0: i32, %arg1: i32, %arg2: i32) -> (i32, i32) {
    %c0_i32 = arith.constant 0 : i32
    return %arg0, %arg2 : i32, i32
  }
  func.func @transform_1(%arg0: i32, %arg1: i32, %arg2: i32) -> (i32, i32) {
    %c0_i32 = arith.constant 0 : i32
    return %arg2, %arg1 : i32, i32
  }
  func.func @transform_2(%arg0: i32, %arg1: i32, %arg2: i32) -> (i32, i32) {
    %c0_i32 = arith.constant 0 : i32
    %c0_i32_0 = arith.constant 0 : i32
    return %c0_i32, %arg1 : i32, i32
  }
  func.func @transform_3(%arg0: i32, %arg1: i32, %arg2: i32) -> (i32, i32) {
    %c0_i32 = arith.constant 0 : i32
    return %arg0, %arg1 : i32, i32
  }
}

module attributes {stable_mosaic.version = 11 : i64} {
  func.func @_mm_fused_kernel(%arg0: i32, %arg1: i32, %arg2: i32, %arg3: memref<32x128xbf16, #tpu.memory_space<vmem>>, %arg4: memref<128x128xbf16, #tpu.memory_space<vmem>>, %arg5: memref<1x128xf32, #tpu.memory_space<vmem>>, %arg6: memref<32x128xbf16, #tpu.memory_space<vmem>>, %arg7: memref<32x128xf32, #tpu.memory_space<vmem>>) attributes {dimension_semantics = [#tpu.dimension_semantics<parallel>, #tpu.dimension_semantics<parallel>, #tpu.dimension_semantics<arbitrary>], iteration_bounds = array<i64: 2, 1, 1>, scalar_prefetch = 0 : i64, scratch_operands = 1 : i64, tpu.core_type = #tpu.core_type<tc>, window_params = [{transform_indices = @transform_0, window_bounds = array<i64: 32, 128>}, {transform_indices = @transform_1, window_bounds = array<i64: 128, 128>}, {transform_indices = @transform_2, window_bounds = array<i64: 1, 128>}, {transform_indices = @transform_3, window_bounds = array<i64: 32, 128>}]} {
    %c0_i32 = arith.constant 0 : i32
    %0 = arith.cmpi eq, %arg2, %c0_i32 : i32
    %1 = arith.extui %0 : i1 to i32
    %c0_i32_0 = arith.constant 0 : i32
    %2 = arith.cmpi ne, %1, %c0_i32_0 : i32
    scf.if %2 {
      %cst_10 = arith.constant 0.000000e+00 : f32
      %12 = vector.broadcast %cst_10 : f32 to vector<32x128xf32>
      %c0_11 = arith.constant 0 : index
      %c0_12 = arith.constant 0 : index
      %13 = vector.load %arg7[%c0_11, %c0_12] : memref<32x128xf32, #tpu.memory_space<vmem>>, vector<32x128xf32>
      tpu.vector_store %arg7[%c0_11, %c0_12], %12 {strides = array<i32>} : memref<32x128xf32, #tpu.memory_space<vmem>>, vector<32x128xf32>,
    } else {
    }
    %c0 = arith.constant 0 : index
    %c0_1 = arith.constant 0 : index
    %3 = vector.load %arg7[%c0, %c0_1] : memref<32x128xf32, #tpu.memory_space<vmem>>, vector<32x128xf32>
    %c0_2 = arith.constant 0 : index
    %c0_3 = arith.constant 0 : index
    %4 = vector.load %arg3[%c0_2, %c0_3] : memref<32x128xbf16, #tpu.memory_space<vmem>>, vector<32x128xbf16>
    %c0_4 = arith.constant 0 : index
    %c0_5 = arith.constant 0 : index
    %5 = vector.load %arg4[%c0_4, %c0_5] : memref<128x128xbf16, #tpu.memory_space<vmem>>, vector<128x128xbf16>
    %cst = arith.constant dense<0.000000e+00> : vector<32x128xf32>
    %6 = tpu.matmul %4, %5, %cst {dimension_numbers = #tpu.dot_dimension_numbers<[1], [0], [0], [1], [0, 0, 1, 1], [], []>} : vector<32x128xbf16>, vector<128x128xbf16>, vector<32x128xf32> -> vector<32x128xf32>
    %7 = arith.addf %3, %6 : vector<32x128xf32>
    %c0_6 = arith.constant 0 : index
    %c0_7 = arith.constant 0 : index
    %8 = vector.load %arg7[%c0_6, %c0_7] : memref<32x128xf32, #tpu.memory_space<vmem>>, vector<32x128xf32>
    tpu.vector_store %arg7[%c0_6, %c0_7], %7 {strides = array<i32>} : memref<32x128xf32, #tpu.memory_space<vmem>>, vector<32x128xf32>,
    %c0_i32_8 = arith.constant 0 : i32
    %9 = arith.cmpi eq, %arg2, %c0_i32_8 : i32
    %10 = arith.extui %9 : i1 to i32
    %c0_i32_9 = arith.constant 0 : i32
    %11 = arith.cmpi ne, %10, %c0_i32_9 : i32
    scf.if %11 {
      %c0_10 = arith.constant 0 : index
      %c0_11 = arith.constant 0 : index
      %12 = vector.load %arg7[%c0_10, %c0_11] : memref<32x128xf32, #tpu.memory_space<vmem>>, vector<32x128xf32>
      %c0_12 = arith.constant 0 : index
      %c0_13 = arith.constant 0 : index
      %13 = vector.load %arg5[%c0_12, %c0_13] : memref<1x128xf32, #tpu.memory_space<vmem>>, vector<1x128xf32>
      %14 = vector.broadcast %13 : vector<1x128xf32> to vector<32x128xf32>
      %15 = arith.addf %12, %14 : vector<32x128xf32>
      %16 = arith.truncf %15 : vector<32x128xf32> to vector<32x128xbf16>
      %c0_14 = arith.constant 0 : index
      %c0_15 = arith.constant 0 : index
      %17 = vector.load %arg6[%c0_14, %c0_15] : memref<32x128xbf16, #tpu.memory_space<vmem>>, vector<32x128xbf16>
      tpu.vector_store %arg6[%c0_14, %c0_15], %16 {strides = array<i32>} : memref<32x128xbf16, #tpu.memory_space<vmem>>, vector<32x128xbf16>,
    } else {
    }
    return
  }
  func.func @transform_0(%arg0: i32, %arg1: i32, %arg2: i32) -> (i32, i32) {
    %c0_i32 = arith.constant 0 : i32
    return %arg0, %arg2 : i32, i32
  }
  func.func @transform_1(%arg0: i32, %arg1: i32, %arg2: i32) -> (i32, i32) {
    %c0_i32 = arith.constant 0 : i32
    return %arg2, %arg1 : i32, i32
  }
  func.func @transform_2(%arg0: i32, %arg1: i32, %arg2: i32) -> (i32, i32) {
    %c0_i32 = arith.constant 0 : i32
    %c0_i32_0 = arith.constant 0 : i32
    return %c0_i32, %arg1 : i32, i32
  }
  func.func @transform_3(%arg0: i32, %arg1: i32, %arg2: i32) -> (i32, i32) {
    %c0_i32 = arith.constant 0 : i32
    return %arg0, %arg1 : i32, i32
  }
}

module attributes {stable_mosaic.version = 11 : i64} {
  func.func @_mm_fused_kernel(%arg0: i32, %arg1: i32, %arg2: i32, %arg3: memref<64x128xbf16, #tpu.memory_space<vmem>>, %arg4: memref<128x128xbf16, #tpu.memory_space<vmem>>, %arg5: memref<1x128xf32, #tpu.memory_space<vmem>>, %arg6: memref<64x128xbf16, #tpu.memory_space<vmem>>, %arg7: memref<64x128xf32, #tpu.memory_space<vmem>>) attributes {dimension_semantics = [#tpu.dimension_semantics<parallel>, #tpu.dimension_semantics<parallel>, #tpu.dimension_semantics<arbitrary>], iteration_bounds = array<i64: 2, 1, 1>, scalar_prefetch = 0 : i64, scratch_operands = 1 : i64, tpu.core_type = #tpu.core_type<tc>, window_params = [{transform_indices = @transform_0, window_bounds = array<i64: 64, 128>}, {transform_indices = @transform_1, window_bounds = array<i64: 128, 128>}, {transform_indices = @transform_2, window_bounds = array<i64: 1, 128>}, {transform_indices = @transform_3, window_bounds = array<i64: 64, 128>}]} {
    %c0_i32 = arith.constant 0 : i32
    %0 = arith.cmpi eq, %arg2, %c0_i32 : i32
    %1 = arith.extui %0 : i1 to i32
    %c0_i32_0 = arith.constant 0 : i32
    %2 = arith.cmpi ne, %1, %c0_i32_0 : i32
    scf.if %2 {
      %cst_10 = arith.constant 0.000000e+00 : f32
      %12 = vector.broadcast %cst_10 : f32 to vector<64x128xf32>
      %c0_11 = arith.constant 0 : index
      %c0_12 = arith.constant 0 : index
      %13 = vector.load %arg7[%c0_11, %c0_12] : memref<64x128xf32, #tpu.memory_space<vmem>>, vector<64x128xf32>
      tpu.vector_store %arg7[%c0_11, %c0_12], %12 {strides = array<i32>} : memref<64x128xf32, #tpu.memory_space<vmem>>, vector<64x128xf32>,
    } else {
    }
    %c0 = arith.constant 0 : index
    %c0_1 = arith.constant 0 : index
    %3 = vector.load %arg7[%c0, %c0_1] : memref<64x128xf32, #tpu.memory_space<vmem>>, vector<64x128xf32>
    %c0_2 = arith.constant 0 : index
    %c0_3 = arith.constant 0 : index
    %4 = vector.load %arg3[%c0_2, %c0_3] : memref<64x128xbf16, #tpu.memory_space<vmem>>, vector<64x128xbf16>
    %c0_4 = arith.constant 0 : index
    %c0_5 = arith.constant 0 : index
    %5 = vector.load %arg4[%c0_4, %c0_5] : memref<128x128xbf16, #tpu.memory_space<vmem>>, vector<128x128xbf16>
    %cst = arith.constant dense<0.000000e+00> : vector<64x128xf32>
    %6 = tpu.matmul %4, %5, %cst {dimension_numbers = #tpu.dot_dimension_numbers<[1], [0], [0], [1], [0, 0, 1, 1], [], []>} : vector<64x128xbf16>, vector<128x128xbf16>, vector<64x128xf32> -> vector<64x128xf32>
    %7 = arith.addf %3, %6 : vector<64x128xf32>
    %c0_6 = arith.constant 0 : index
    %c0_7 = arith.constant 0 : index
    %8 = vector.load %arg7[%c0_6, %c0_7] : memref<64x128xf32, #tpu.memory_space<vmem>>, vector<64x128xf32>
    tpu.vector_store %arg7[%c0_6, %c0_7], %7 {strides = array<i32>} : memref<64x128xf32, #tpu.memory_space<vmem>>, vector<64x128xf32>,
    %c0_i32_8 = arith.constant 0 : i32
    %9 = arith.cmpi eq, %arg2, %c0_i32_8 : i32
    %10 = arith.extui %9 : i1 to i32
    %c0_i32_9 = arith.constant 0 : i32
    %11 = arith.cmpi ne, %10, %c0_i32_9 : i32
    scf.if %11 {
      %c0_10 = arith.constant 0 : index
      %c0_11 = arith.constant 0 : index
      %12 = vector.load %arg7[%c0_10, %c0_11] : memref<64x128xf32, #tpu.memory_space<vmem>>, vector<64x128xf32>
      %c0_12 = arith.constant 0 : index
      %c0_13 = arith.constant 0 : index
      %13 = vector.load %arg5[%c0_12, %c0_13] : memref<1x128xf32, #tpu.memory_space<vmem>>, vector<1x128xf32>
      %14 = vector.broadcast %13 : vector<1x128xf32> to vector<64x128xf32>
      %15 = arith.addf %12, %14 : vector<64x128xf32>
      %cst_14 = arith.constant 0.000000e+00 : f32
      %16 = vector.broadcast %cst_14 : f32 to vector<64x128xf32>
      %17 = arith.maximumf %15, %16 : vector<64x128xf32>
      %18 = arith.truncf %17 : vector<64x128xf32> to vector<64x128xbf16>
      %c0_15 = arith.constant 0 : index
      %c0_16 = arith.constant 0 : index
      %19 = vector.load %arg6[%c0_15, %c0_16] : memref<64x128xbf16, #tpu.memory_space<vmem>>, vector<64x128xbf16>
      tpu.vector_store %arg6[%c0_15, %c0_16], %18 {strides = array<i32>} : memref<64x128xbf16, #tpu.memory_space<vmem>>, vector<64x128xbf16>,
    } else {
    }
    return
  }
  func.func @transform_0(%arg0: i32, %arg1: i32, %arg2: i32) -> (i32, i32) {
    %c0_i32 = arith.constant 0 : i32
    return %arg0, %arg2 : i32, i32
  }
  func.func @transform_1(%arg0: i32, %arg1: i32, %arg2: i32) -> (i32, i32) {
    %c0_i32 = arith.constant 0 : i32
    return %arg2, %arg1 : i32, i32
  }
  func.func @transform_2(%arg0: i32, %arg1: i32, %arg2: i32) -> (i32, i32) {
    %c0_i32 = arith.constant 0 : i32
    %c0_i32_0 = arith.constant 0 : i32
    return %c0_i32, %arg1 : i32, i32
  }
  func.func @transform_3(%arg0: i32, %arg1: i32, %arg2: i32) -> (i32, i32) {
    %c0_i32 = arith.constant 0 : i32
    return %arg0, %arg1 : i32, i32
  }
}

module attributes {stable_mosaic.version = 11 : i64} {
  func.func @_mm_fused_kernel(%arg0: i32, %arg1: i32, %arg2: i32, %arg3: memref<16x128xbf16, #tpu.memory_space<vmem>>, %arg4: memref<128x128xbf16, #tpu.memory_space<vmem>>, %arg5: memref<1x128xf32, #tpu.memory_space<vmem>>, %arg6: memref<16x128xbf16, #tpu.memory_space<vmem>>, %arg7: memref<16x128xf32, #tpu.memory_space<vmem>>) attributes {dimension_semantics = [#tpu.dimension_semantics<parallel>, #tpu.dimension_semantics<parallel>, #tpu.dimension_semantics<arbitrary>], iteration_bounds = array<i64: 1, 1, 1>, scalar_prefetch = 0 : i64, scratch_operands = 1 : i64, tpu.core_type = #tpu.core_type<tc>, window_params = [{transform_indices = @transform_0, window_bounds = array<i64: 16, 128>}, {transform_indices = @transform_1, window_bounds = array<i64: 128, 128>}, {transform_indices = @transform_2, window_bounds = array<i64: 1, 128>}, {transform_indices = @transform_3, window_bounds = array<i64: 16, 128>}]} {
    %c0_i32 = arith.constant 0 : i32
    %0 = arith.cmpi eq, %arg2, %c0_i32 : i32
    %1 = arith.extui %0 : i1 to i32
    %c0_i32_0 = arith.constant 0 : i32
    %2 = arith.cmpi ne, %1, %c0_i32_0 : i32
    scf.if %2 {
      %cst_10 = arith.constant 0.000000e+00 : f32
      %12 = vector.broadcast %cst_10 : f32 to vector<16x128xf32>
      %c0_11 = arith.constant 0 : index
      %c0_12 = arith.constant 0 : index
      %13 = vector.load %arg7[%c0_11, %c0_12] : memref<16x128xf32, #tpu.memory_space<vmem>>, vector<16x128xf32>
      tpu.vector_store %arg7[%c0_11, %c0_12], %12 {strides = array<i32>} : memref<16x128xf32, #tpu.memory_space<vmem>>, vector<16x128xf32>,
    } else {
    }
    %c0 = arith.constant 0 : index
    %c0_1 = arith.constant 0 : index
    %3 = vector.load %arg7[%c0, %c0_1] : memref<16x128xf32, #tpu.memory_space<vmem>>, vector<16x128xf32>
    %c0_2 = arith.constant 0 : index
    %c0_3 = arith.constant 0 : index
    %4 = vector.load %arg3[%c0_2, %c0_3] : memref<16x128xbf16, #tpu.memory_space<vmem>>, vector<16x128xbf16>
    %c0_4 = arith.constant 0 : index
    %c0_5 = arith.constant 0 : index
    %5 = vector.load %arg4[%c0_4, %c0_5] : memref<128x128xbf16, #tpu.memory_space<vmem>>, vector<128x128xbf16>
    %cst = arith.constant dense<0.000000e+00> : vector<16x128xf32>
    %6 = tpu.matmul %4, %5, %cst {dimension_numbers = #tpu.dot_dimension_numbers<[1], [0], [0], [1], [0, 0, 1, 1], [], []>} : vector<16x128xbf16>, vector<128x128xbf16>, vector<16x128xf32> -> vector<16x128xf32>
    %7 = arith.addf %3, %6 : vector<16x128xf32>
    %c0_6 = arith.constant 0 : index
    %c0_7 = arith.constant 0 : index
    %8 = vector.load %arg7[%c0_6, %c0_7] : memref<16x128xf32, #tpu.memory_space<vmem>>, vector<16x128xf32>
    tpu.vector_store %arg7[%c0_6, %c0_7], %7 {strides = array<i32>} : memref<16x128xf32, #tpu.memory_space<vmem>>, vector<16x128xf32>,
    %c0_i32_8 = arith.constant 0 : i32
    %9 = arith.cmpi eq, %arg2, %c0_i32_8 : i32
    %10 = arith.extui %9 : i1 to i32
    %c0_i32_9 = arith.constant 0 : i32
    %11 = arith.cmpi ne, %10, %c0_i32_9 : i32
    scf.if %11 {
      %c0_10 = arith.constant 0 : index
      %c0_11 = arith.constant 0 : index
      %12 = vector.load %arg7[%c0_10, %c0_11] : memref<16x128xf32, #tpu.memory_space<vmem>>, vector<16x128xf32>
      %c0_12 = arith.constant 0 : index
      %c0_13 = arith.constant 0 : index
      %13 = vector.load %arg5[%c0_12, %c0_13] : memref<1x128xf32, #tpu.memory_space<vmem>>, vector<1x128xf32>
      %14 = vector.broadcast %13 : vector<1x128xf32> to vector<16x128xf32>
      %15 = arith.addf %12, %14 : vector<16x128xf32>
      %16 = arith.truncf %15 : vector<16x128xf32> to vector<16x128xbf16>
      %c0_14 = arith.constant 0 : index
      %c0_15 = arith.constant 0 : index
      %17 = vector.load %arg6[%c0_14, %c0_15] : memref<16x128xbf16, #tpu.memory_space<vmem>>, vector<16x128xbf16>
      tpu.vector_store %arg6[%c0_14, %c0_15], %16 {strides = array<i32>} : memref<16x128xbf16, #tpu.memory_space<vmem>>, vector<16x128xbf16>,
    } else {
    }
    return
  }
  func.func @transform_0(%arg0: i32, %arg1: i32, %arg2: i32) -> (i32, i32) {
    %c0_i32 = arith.constant 0 : i32
    return %arg0, %arg2 : i32, i32
  }
  func.func @transform_1(%arg0: i32, %arg1: i32, %arg2: i32) -> (i32, i32) {
    %c0_i32 = arith.constant 0 : i32
    return %arg2, %arg1 : i32, i32
  }
  func.func @transform_2(%arg0: i32, %arg1: i32, %arg2: i32) -> (i32, i32) {
    %c0_i32 = arith.constant 0 : i32
    %c0_i32_0 = arith.constant 0 : i32
    return %c0_i32, %arg1 : i32, i32
  }
  func.func @transform_3(%arg0: i32, %arg1: i32, %arg2: i32) -> (i32, i32) {
    %c0_i32 = arith.constant 0 : i32
    return %arg0, %arg1 : i32, i32
  }
}

module attributes {stable_mosaic.version = 11 : i64} {
  func.func @_mm_fused_kernel(%arg0: i32, %arg1: i32, %arg2: i32, %arg3: memref<16x384xbf16, #tpu.memory_space<vmem>>, %arg4: memref<384x128xbf16, #tpu.memory_space<vmem>>, %arg5: memref<1x128xf32, #tpu.memory_space<vmem>>, %arg6: memref<16x128xbf16, #tpu.memory_space<vmem>>, %arg7: memref<16x128xf32, #tpu.memory_space<vmem>>) attributes {dimension_semantics = [#tpu.dimension_semantics<parallel>, #tpu.dimension_semantics<parallel>, #tpu.dimension_semantics<arbitrary>], iteration_bounds = array<i64: 2, 1, 3>, scalar_prefetch = 0 : i64, scratch_operands = 1 : i64, tpu.core_type = #tpu.core_type<tc>, window_params = [{transform_indices = @transform_0, window_bounds = array<i64: 16, 384>}, {transform_indices = @transform_1, window_bounds = array<i64: 384, 128>}, {transform_indices = @transform_2, window_bounds = array<i64: 1, 128>}, {transform_indices = @transform_3, window_bounds = array<i64: 16, 128>}]} {
    %c0_i32 = arith.constant 0 : i32
    %0 = arith.cmpi eq, %arg2, %c0_i32 : i32
    %1 = arith.extui %0 : i1 to i32
    %c0_i32_0 = arith.constant 0 : i32
    %2 = arith.cmpi ne, %1, %c0_i32_0 : i32
    scf.if %2 {
      %cst_9 = arith.constant 0.000000e+00 : f32
      %12 = vector.broadcast %cst_9 : f32 to vector<16x128xf32>
      %c0_10 = arith.constant 0 : index
      %c0_11 = arith.constant 0 : index
      %13 = vector.load %arg7[%c0_10, %c0_11] : memref<16x128xf32, #tpu.memory_space<vmem>>, vector<16x128xf32>
      tpu.vector_store %arg7[%c0_10, %c0_11], %12 {strides = array<i32>} : memref<16x128xf32, #tpu.memory_space<vmem>>, vector<16x128xf32>,
    } else {
    }
    %c0 = arith.constant 0 : index
    %c0_1 = arith.constant 0 : index
    %3 = vector.load %arg7[%c0, %c0_1] : memref<16x128xf32, #tpu.memory_space<vmem>>, vector<16x128xf32>
    %c0_2 = arith.constant 0 : index
    %c0_3 = arith.constant 0 : index
    %4 = vector.load %arg3[%c0_2, %c0_3] : memref<16x384xbf16, #tpu.memory_space<vmem>>, vector<16x384xbf16>
    %c0_4 = arith.constant 0 : index
    %c0_5 = arith.constant 0 : index
    %5 = vector.load %arg4[%c0_4, %c0_5] : memref<384x128xbf16, #tpu.memory_space<vmem>>, vector<384x128xbf16>
    %cst = arith.constant dense<0.000000e+00> : vector<16x128xf32>
    %6 = tpu.matmul %4, %5, %cst {dimension_numbers = #tpu.dot_dimension_numbers<[1], [0], [0], [1], [0, 0, 1, 1], [], []>} : vector<16x384xbf16>, vector<384x128xbf16>, vector<16x128xf32> -> vector<16x128xf32>
    %7 = arith.addf %3, %6 : vector<16x128xf32>
    %c0_6 = arith.constant 0 : index
    %c0_7 = arith.constant 0 : index
    %8 = vector.load %arg7[%c0_6, %c0_7] : memref<16x128xf32, #tpu.memory_space<vmem>>, vector<16x128xf32>
    tpu.vector_store %arg7[%c0_6, %c0_7], %7 {strides = array<i32>} : memref<16x128xf32, #tpu.memory_space<vmem>>, vector<16x128xf32>,
    %c2_i32 = arith.constant 2 : i32
    %9 = arith.cmpi eq, %arg2, %c2_i32 : i32
    %10 = arith.extui %9 : i1 to i32
    %c0_i32_8 = arith.constant 0 : i32
    %11 = arith.cmpi ne, %10, %c0_i32_8 : i32
    scf.if %11 {
      %c0_9 = arith.constant 0 : index
      %c0_10 = arith.constant 0 : index
      %12 = vector.load %arg7[%c0_9, %c0_10] : memref<16x128xf32, #tpu.memory_space<vmem>>, vector<16x128xf32>
      %c0_11 = arith.constant 0 : index
      %c0_12 = arith.constant 0 : index
      %13 = vector.load %arg5[%c0_11, %c0_12] : memref<1x128xf32, #tpu.memory_space<vmem>>, vector<1x128xf32>
      %14 = vector.broadcast %13 : vector<1x128xf32> to vector<16x128xf32>
      %15 = arith.addf %12, %14 : vector<16x128xf32>
      %cst_13 = arith.constant 0.000000e+00 : f32
      %16 = vector.broadcast %cst_13 : f32 to vector<16x128xf32>
      %17 = arith.maximumf %15, %16 : vector<16x128xf32>
      %18 = arith.truncf %17 : vector<16x128xf32> to vector<16x128xbf16>
      %c0_14 = arith.constant 0 : index
      %c0_15 = arith.constant 0 : index
      %19 = vector.load %arg6[%c0_14, %c0_15] : memref<16x128xbf16, #tpu.memory_space<vmem>>, vector<16x128xbf16>
      tpu.vector_store %arg6[%c0_14, %c0_15], %18 {strides = array<i32>} : memref<16x128xbf16, #tpu.memory_space<vmem>>, vector<16x128xbf16>,
    } else {
    }
    return
  }
  func.func @transform_0(%arg0: i32, %arg1: i32, %arg2: i32) -> (i32, i32) {
    %c0_i32 = arith.constant 0 : i32
    return %arg0, %arg2 : i32, i32
  }
  func.func @transform_1(%arg0: i32, %arg1: i32, %arg2: i32) -> (i32, i32) {
    %c0_i32 = arith.constant 0 : i32
    return %arg2, %arg1 : i32, i32
  }
  func.func @transform_2(%arg0: i32, %arg1: i32, %arg2: i32) -> (i32, i32) {
    %c0_i32 = arith.constant 0 : i32
    %c0_i32_0 = arith.constant 0 : i32
    return %c0_i32, %arg1 : i32, i32
  }
  func.func @transform_3(%arg0: i32, %arg1: i32, %arg2: i32) -> (i32, i32) {
    %c0_i32 = arith.constant 0 : i32
    return %arg0, %arg1 : i32, i32
  }
}

module attributes {stable_mosaic.version = 11 : i64} {
  func.func @_mm_fused_kernel(%arg0: i32, %arg1: i32, %arg2: i32, %arg3: memref<16x128xbf16, #tpu.memory_space<vmem>>, %arg4: memref<128x128xbf16, #tpu.memory_space<vmem>>, %arg5: memref<1x128xf32, #tpu.memory_space<vmem>>, %arg6: memref<16x128xf32, #tpu.memory_space<vmem>>, %arg7: memref<16x128xf32, #tpu.memory_space<vmem>>) attributes {dimension_semantics = [#tpu.dimension_semantics<parallel>, #tpu.dimension_semantics<parallel>, #tpu.dimension_semantics<arbitrary>], iteration_bounds = array<i64: 2, 1, 1>, scalar_prefetch = 0 : i64, scratch_operands = 1 : i64, tpu.core_type = #tpu.core_type<tc>, window_params = [{transform_indices = @transform_0, window_bounds = array<i64: 16, 128>}, {transform_indices = @transform_1, window_bounds = array<i64: 128, 128>}, {transform_indices = @transform_2, window_bounds = array<i64: 1, 128>}, {transform_indices = @transform_3, window_bounds = array<i64: 16, 128>}]} {
    %c0_i32 = arith.constant 0 : i32
    %0 = arith.cmpi eq, %arg2, %c0_i32 : i32
    %1 = arith.extui %0 : i1 to i32
    %c0_i32_0 = arith.constant 0 : i32
    %2 = arith.cmpi ne, %1, %c0_i32_0 : i32
    scf.if %2 {
      %cst_10 = arith.constant 0.000000e+00 : f32
      %12 = vector.broadcast %cst_10 : f32 to vector<16x128xf32>
      %c0_11 = arith.constant 0 : index
      %c0_12 = arith.constant 0 : index
      %13 = vector.load %arg7[%c0_11, %c0_12] : memref<16x128xf32, #tpu.memory_space<vmem>>, vector<16x128xf32>
      tpu.vector_store %arg7[%c0_11, %c0_12], %12 {strides = array<i32>} : memref<16x128xf32, #tpu.memory_space<vmem>>, vector<16x128xf32>,
    } else {
    }
    %c0 = arith.constant 0 : index
    %c0_1 = arith.constant 0 : index
    %3 = vector.load %arg7[%c0, %c0_1] : memref<16x128xf32, #tpu.memory_space<vmem>>, vector<16x128xf32>
    %c0_2 = arith.constant 0 : index
    %c0_3 = arith.constant 0 : index
    %4 = vector.load %arg3[%c0_2, %c0_3] : memref<16x128xbf16, #tpu.memory_space<vmem>>, vector<16x128xbf16>
    %c0_4 = arith.constant 0 : index
    %c0_5 = arith.constant 0 : index
    %5 = vector.load %arg4[%c0_4, %c0_5] : memref<128x128xbf16, #tpu.memory_space<vmem>>, vector<128x128xbf16>
    %cst = arith.constant dense<0.000000e+00> : vector<16x128xf32>
    %6 = tpu.matmul %4, %5, %cst {dimension_numbers = #tpu.dot_dimension_numbers<[1], [0], [0], [1], [0, 0, 1, 1], [], []>} : vector<16x128xbf16>, vector<128x128xbf16>, vector<16x128xf32> -> vector<16x128xf32>
    %7 = arith.addf %3, %6 : vector<16x128xf32>
    %c0_6 = arith.constant 0 : index
    %c0_7 = arith.constant 0 : index
    %8 = vector.load %arg7[%c0_6, %c0_7] : memref<16x128xf32, #tpu.memory_space<vmem>>, vector<16x128xf32>
    tpu.vector_store %arg7[%c0_6, %c0_7], %7 {strides = array<i32>} : memref<16x128xf32, #tpu.memory_space<vmem>>, vector<16x128xf32>,
    %c0_i32_8 = arith.constant 0 : i32
    %9 = arith.cmpi eq, %arg2, %c0_i32_8 : i32
    %10 = arith.extui %9 : i1 to i32
    %c0_i32_9 = arith.constant 0 : i32
    %11 = arith.cmpi ne, %10, %c0_i32_9 : i32
    scf.if %11 {
      %c0_10 = arith.constant 0 : index
      %c0_11 = arith.constant 0 : index
      %12 = vector.load %arg7[%c0_10, %c0_11] : memref<16x128xf32, #tpu.memory_space<vmem>>, vector<16x128xf32>
      %c0_12 = arith.constant 0 : index
      %c0_13 = arith.constant 0 : index
      %13 = vector.load %arg5[%c0_12, %c0_13] : memref<1x128xf32, #tpu.memory_space<vmem>>, vector<1x128xf32>
      %14 = vector.broadcast %13 : vector<1x128xf32> to vector<16x128xf32>
      %15 = arith.addf %12, %14 : vector<16x128xf32>
      %c0_14 = arith.constant 0 : index
      %c0_15 = arith.constant 0 : index
      %16 = vector.load %arg6[%c0_14, %c0_15] : memref<16x128xf32, #tpu.memory_space<vmem>>, vector<16x128xf32>
      tpu.vector_store %arg6[%c0_14, %c0_15], %15 {strides = array<i32>} : memref<16x128xf32, #tpu.memory_space<vmem>>, vector<16x128xf32>,
    } else {
    }
    return
  }
  func.func @transform_0(%arg0: i32, %arg1: i32, %arg2: i32) -> (i32, i32) {
    %c0_i32 = arith.constant 0 : i32
    return %arg0, %arg2 : i32, i32
  }
  func.func @transform_1(%arg0: i32, %arg1: i32, %arg2: i32) -> (i32, i32) {
    %c0_i32 = arith.constant 0 : i32
    return %arg2, %arg1 : i32, i32
  }
  func.func @transform_2(%arg0: i32, %arg1: i32, %arg2: i32) -> (i32, i32) {
    %c0_i32 = arith.constant 0 : i32
    %c0_i32_0 = arith.constant 0 : i32
    return %c0_i32, %arg1 : i32, i32
  }
  func.func @transform_3(%arg0: i32, %arg1: i32, %arg2: i32) -> (i32, i32) {
    %c0_i32 = arith.constant 0 : i32
    return %arg0, %arg1 : i32, i32
  }
}

module attributes {stable_mosaic.version = 11 : i64} {
  func.func @_mm_fused_kernel(%arg0: i32, %arg1: i32, %arg2: i32, %arg3: memref<16x128xbf16, #tpu.memory_space<vmem>>, %arg4: memref<128x128xbf16, #tpu.memory_space<vmem>>, %arg5: memref<1x128xf32, #tpu.memory_space<vmem>>, %arg6: memref<16x128xbf16, #tpu.memory_space<vmem>>, %arg7: memref<16x128xf32, #tpu.memory_space<vmem>>) attributes {dimension_semantics = [#tpu.dimension_semantics<parallel>, #tpu.dimension_semantics<parallel>, #tpu.dimension_semantics<arbitrary>], iteration_bounds = array<i64: 2, 1, 1>, scalar_prefetch = 0 : i64, scratch_operands = 1 : i64, tpu.core_type = #tpu.core_type<tc>, window_params = [{transform_indices = @transform_0, window_bounds = array<i64: 16, 128>}, {transform_indices = @transform_1, window_bounds = array<i64: 128, 128>}, {transform_indices = @transform_2, window_bounds = array<i64: 1, 128>}, {transform_indices = @transform_3, window_bounds = array<i64: 16, 128>}]} {
    %c0_i32 = arith.constant 0 : i32
    %0 = arith.cmpi eq, %arg2, %c0_i32 : i32
    %1 = arith.extui %0 : i1 to i32
    %c0_i32_0 = arith.constant 0 : i32
    %2 = arith.cmpi ne, %1, %c0_i32_0 : i32
    scf.if %2 {
      %cst_10 = arith.constant 0.000000e+00 : f32
      %12 = vector.broadcast %cst_10 : f32 to vector<16x128xf32>
      %c0_11 = arith.constant 0 : index
      %c0_12 = arith.constant 0 : index
      %13 = vector.load %arg7[%c0_11, %c0_12] : memref<16x128xf32, #tpu.memory_space<vmem>>, vector<16x128xf32>
      tpu.vector_store %arg7[%c0_11, %c0_12], %12 {strides = array<i32>} : memref<16x128xf32, #tpu.memory_space<vmem>>, vector<16x128xf32>,
    } else {
    }
    %c0 = arith.constant 0 : index
    %c0_1 = arith.constant 0 : index
    %3 = vector.load %arg7[%c0, %c0_1] : memref<16x128xf32, #tpu.memory_space<vmem>>, vector<16x128xf32>
    %c0_2 = arith.constant 0 : index
    %c0_3 = arith.constant 0 : index
    %4 = vector.load %arg3[%c0_2, %c0_3] : memref<16x128xbf16, #tpu.memory_space<vmem>>, vector<16x128xbf16>
    %c0_4 = arith.constant 0 : index
    %c0_5 = arith.constant 0 : index
    %5 = vector.load %arg4[%c0_4, %c0_5] : memref<128x128xbf16, #tpu.memory_space<vmem>>, vector<128x128xbf16>
    %cst = arith.constant dense<0.000000e+00> : vector<16x128xf32>
    %6 = tpu.matmul %4, %5, %cst {dimension_numbers = #tpu.dot_dimension_numbers<[1], [0], [0], [1], [0, 0, 1, 1], [], []>} : vector<16x128xbf16>, vector<128x128xbf16>, vector<16x128xf32> -> vector<16x128xf32>
    %7 = arith.addf %3, %6 : vector<16x128xf32>
    %c0_6 = arith.constant 0 : index
    %c0_7 = arith.constant 0 : index
    %8 = vector.load %arg7[%c0_6, %c0_7] : memref<16x128xf32, #tpu.memory_space<vmem>>, vector<16x128xf32>
    tpu.vector_store %arg7[%c0_6, %c0_7], %7 {strides = array<i32>} : memref<16x128xf32, #tpu.memory_space<vmem>>, vector<16x128xf32>,
    %c0_i32_8 = arith.constant 0 : i32
    %9 = arith.cmpi eq, %arg2, %c0_i32_8 : i32
    %10 = arith.extui %9 : i1 to i32
    %c0_i32_9 = arith.constant 0 : i32
    %11 = arith.cmpi ne, %10, %c0_i32_9 : i32
    scf.if %11 {
      %c0_10 = arith.constant 0 : index
      %c0_11 = arith.constant 0 : index
      %12 = vector.load %arg7[%c0_10, %c0_11] : memref<16x128xf32, #tpu.memory_space<vmem>>, vector<16x128xf32>
      %c0_12 = arith.constant 0 : index
      %c0_13 = arith.constant 0 : index
      %13 = vector.load %arg5[%c0_12, %c0_13] : memref<1x128xf32, #tpu.memory_space<vmem>>, vector<1x128xf32>
      %14 = vector.broadcast %13 : vector<1x128xf32> to vector<16x128xf32>
      %15 = arith.addf %12, %14 : vector<16x128xf32>
      %16 = arith.truncf %15 : vector<16x128xf32> to vector<16x128xbf16>
      %c0_14 = arith.constant 0 : index
      %c0_15 = arith.constant 0 : index
      %17 = vector.load %arg6[%c0_14, %c0_15] : memref<16x128xbf16, #tpu.memory_space<vmem>>, vector<16x128xbf16>
      tpu.vector_store %arg6[%c0_14, %c0_15], %16 {strides = array<i32>} : memref<16x128xbf16, #tpu.memory_space<vmem>>, vector<16x128xbf16>,
    } else {
    }
    return
  }
  func.func @transform_0(%arg0: i32, %arg1: i32, %arg2: i32) -> (i32, i32) {
    %c0_i32 = arith.constant 0 : i32
    return %arg0, %arg2 : i32, i32
  }
  func.func @transform_1(%arg0: i32, %arg1: i32, %arg2: i32) -> (i32, i32) {
    %c0_i32 = arith.constant 0 : i32
    return %arg2, %arg1 : i32, i32
  }
  func.func @transform_2(%arg0: i32, %arg1: i32, %arg2: i32) -> (i32, i32) {
    %c0_i32 = arith.constant 0 : i32
    %c0_i32_0 = arith.constant 0 : i32
    return %c0_i32, %arg1 : i32, i32
  }
  func.func @transform_3(%arg0: i32, %arg1: i32, %arg2: i32) -> (i32, i32) {
    %c0_i32 = arith.constant 0 : i32
    return %arg0, %arg1 : i32, i32
  }
}

module attributes {stable_mosaic.version = 11 : i64} {
  func.func @_mm_fused_kernel(%arg0: i32, %arg1: i32, %arg2: i32, %arg3: memref<16x128xbf16, #tpu.memory_space<vmem>>, %arg4: memref<128x128xbf16, #tpu.memory_space<vmem>>, %arg5: memref<1x128xf32, #tpu.memory_space<vmem>>, %arg6: memref<16x128xf32, #tpu.memory_space<vmem>>, %arg7: memref<16x128xf32, #tpu.memory_space<vmem>>) attributes {dimension_semantics = [#tpu.dimension_semantics<parallel>, #tpu.dimension_semantics<parallel>, #tpu.dimension_semantics<arbitrary>], iteration_bounds = array<i64: 2, 1, 1>, scalar_prefetch = 0 : i64, scratch_operands = 1 : i64, tpu.core_type = #tpu.core_type<tc>, window_params = [{transform_indices = @transform_0, window_bounds = array<i64: 16, 128>}, {transform_indices = @transform_1, window_bounds = array<i64: 128, 128>}, {transform_indices = @transform_2, window_bounds = array<i64: 1, 128>}, {transform_indices = @transform_3, window_bounds = array<i64: 16, 128>}]} {
    %c0_i32 = arith.constant 0 : i32
    %0 = arith.cmpi eq, %arg2, %c0_i32 : i32
    %1 = arith.extui %0 : i1 to i32
    %c0_i32_0 = arith.constant 0 : i32
    %2 = arith.cmpi ne, %1, %c0_i32_0 : i32
    scf.if %2 {
      %cst_10 = arith.constant 0.000000e+00 : f32
      %12 = vector.broadcast %cst_10 : f32 to vector<16x128xf32>
      %c0_11 = arith.constant 0 : index
      %c0_12 = arith.constant 0 : index
      %13 = vector.load %arg7[%c0_11, %c0_12] : memref<16x128xf32, #tpu.memory_space<vmem>>, vector<16x128xf32>
      tpu.vector_store %arg7[%c0_11, %c0_12], %12 {strides = array<i32>} : memref<16x128xf32, #tpu.memory_space<vmem>>, vector<16x128xf32>,
    } else {
    }
    %c0 = arith.constant 0 : index
    %c0_1 = arith.constant 0 : index
    %3 = vector.load %arg7[%c0, %c0_1] : memref<16x128xf32, #tpu.memory_space<vmem>>, vector<16x128xf32>
    %c0_2 = arith.constant 0 : index
    %c0_3 = arith.constant 0 : index
    %4 = vector.load %arg3[%c0_2, %c0_3] : memref<16x128xbf16, #tpu.memory_space<vmem>>, vector<16x128xbf16>
    %c0_4 = arith.constant 0 : index
    %c0_5 = arith.constant 0 : index
    %5 = vector.load %arg4[%c0_4, %c0_5] : memref<128x128xbf16, #tpu.memory_space<vmem>>, vector<128x128xbf16>
    %cst = arith.constant dense<0.000000e+00> : vector<16x128xf32>
    %6 = tpu.matmul %4, %5, %cst {dimension_numbers = #tpu.dot_dimension_numbers<[1], [0], [0], [1], [0, 0, 1, 1], [], []>} : vector<16x128xbf16>, vector<128x128xbf16>, vector<16x128xf32> -> vector<16x128xf32>
    %7 = arith.addf %3, %6 : vector<16x128xf32>
    %c0_6 = arith.constant 0 : index
    %c0_7 = arith.constant 0 : index
    %8 = vector.load %arg7[%c0_6, %c0_7] : memref<16x128xf32, #tpu.memory_space<vmem>>, vector<16x128xf32>
    tpu.vector_store %arg7[%c0_6, %c0_7], %7 {strides = array<i32>} : memref<16x128xf32, #tpu.memory_space<vmem>>, vector<16x128xf32>,
    %c0_i32_8 = arith.constant 0 : i32
    %9 = arith.cmpi eq, %arg2, %c0_i32_8 : i32
    %10 = arith.extui %9 : i1 to i32
    %c0_i32_9 = arith.constant 0 : i32
    %11 = arith.cmpi ne, %10, %c0_i32_9 : i32
    scf.if %11 {
      %c0_10 = arith.constant 0 : index
      %c0_11 = arith.constant 0 : index
      %12 = vector.load %arg7[%c0_10, %c0_11] : memref<16x128xf32, #tpu.memory_space<vmem>>, vector<16x128xf32>
      %c0_12 = arith.constant 0 : index
      %c0_13 = arith.constant 0 : index
      %13 = vector.load %arg5[%c0_12, %c0_13] : memref<1x128xf32, #tpu.memory_space<vmem>>, vector<1x128xf32>
      %14 = vector.broadcast %13 : vector<1x128xf32> to vector<16x128xf32>
      %15 = arith.addf %12, %14 : vector<16x128xf32>
      %c0_14 = arith.constant 0 : index
      %c0_15 = arith.constant 0 : index
      %16 = vector.load %arg6[%c0_14, %c0_15] : memref<16x128xf32, #tpu.memory_space<vmem>>, vector<16x128xf32>
      tpu.vector_store %arg6[%c0_14, %c0_15], %15 {strides = array<i32>} : memref<16x128xf32, #tpu.memory_space<vmem>>, vector<16x128xf32>,
    } else {
    }
    return
  }
  func.func @transform_0(%arg0: i32, %arg1: i32, %arg2: i32) -> (i32, i32) {
    %c0_i32 = arith.constant 0 : i32
    return %arg0, %arg2 : i32, i32
  }
  func.func @transform_1(%arg0: i32, %arg1: i32, %arg2: i32) -> (i32, i32) {
    %c0_i32 = arith.constant 0 : i32
    return %arg2, %arg1 : i32, i32
  }
  func.func @transform_2(%arg0: i32, %arg1: i32, %arg2: i32) -> (i32, i32) {
    %c0_i32 = arith.constant 0 : i32
    %c0_i32_0 = arith.constant 0 : i32
    return %c0_i32, %arg1 : i32, i32
  }
  func.func @transform_3(%arg0: i32, %arg1: i32, %arg2: i32) -> (i32, i32) {
    %c0_i32 = arith.constant 0 : i32
    return %arg0, %arg1 : i32, i32
  }
}

</mosaic_0001>

<llo_original>
// kernel: pspnet_forward.12
$region0: #{pspnet_forward.12}
  #allocation0 [shape = 'u32[]', space=smem, size = 0x4, offset = 0x4, fixed_abs, tag = 'smem constant byte address 0x4 - core index']
  #allocation1 [shape = 'u32[144,128]{1,0:T(1,128)}', space=vmem, size = 0x12000, scoped, tag = 'internal scratch']
  #allocation2 [shape = 'f32[96,128]{1,0:T(8,128)}', space=vmem, size = 0xc000, scoped, tag = 'scratch operand']
  %s0 = inlined_call_operand.vmem [shape: bf16[192,256], index: 0, kind: input, shape index: {}]
  %s1 = inlined_call_operand.vmem [shape: bf16[256,128], index: 1, kind: input, shape index: {}]
  %s2 = inlined_call_operand.vmem [shape: f32[1,128], index: 2, kind: input, shape index: {}]
  %s3 = inlined_call_operand.vmem [shape: bf16[192,128], index: 3, kind: output, shape index: {}]
  %s4 = sld [smem:[#allocation0]]
  $region53: #{pspnet_forward.12} parent=0
    _
  %s6 = ssub.s32 1, %s4
  %s7 = scalar_select 0, %s6, %s4
  loop: start=0, step=1, limit=4
  $region2: #{pspnet_forward.12} parent=0 // loop_pre_header
    _
  $region3: #{pspnet_forward.12} parent=0 // loop_header
    %s9 = sphi 0, %s13
    %p10 = scmp.ge.s32.totalorder %s9, 4
    %s16 = sphi 0, %s35
    %s17 = sphi 0, %s31
    %s18 = sphi 0, %s27
    %s19 = sphi 0, %s16
    %s20 = sphi 0, %s17
    %s21 = sphi 0, %s18
    %s22 = sphi 0, %s19
    %s23 = sphi 0, %s20
    %s24 = sphi 0, %s21
    %s40 = sphi 0, %s42
    %s43 = sphi 0, %s40
    %s44 = sphi 0, %s43
    %s60 = sphi 0, %s44
    %s68 = sphi 0, %s70
    %s71 = sphi 0, %s68
    %s72 = sphi 0, %s71
    %s88 = sphi 0, %s72
    %s94 = sphi 0, %s96
    %s97 = sphi 0, %s94
    %s98 = sphi 0, %s97
    %s114 = sphi 0, %s98
    %s122 = sphi 0, %s124
    %s125 = sphi 0, %s122
    %s126 = sphi 0, %s125
    %s142 = sphi 0, %s126
  $region4: #{pspnet_forward.12} parent=0 // loop_header_branch
    %12 = sbr.rel (%p10) target = $region8
  $region5: #{pspnet_forward.12} parent=0 // loop_body
    %s14 = ssub.s32 %s9, 1
    %s15 = ssub.s32 %s9, 2
    %s25 = sadd.s32 1, %s18
    %p26 = scmp.ge.s32.totalorder %s25, 1
    %s27 = scalar_select %p26, 0, %s25
    %s28 = sadd.s32 1, %s17
    %s29 = scalar_select %p26, %s28, %s17
    %p30 = scmp.ge.s32.totalorder %s29, 1
    %s31 = scalar_select %p30, 0, %s29
    %s32 = sadd.s32 1, %s16
    %s33 = scalar_select %p30, %s32, %s16
    %p34 = scmp.ge.s32.totalorder %s33, 2
    %s35 = scalar_select %p34, 0, %s33
    %s36 = ssub.s32 %s16, %s35
    %s37 = ssub.s32 %s18, %s27
    %s38 = sor.u32 %s36, %s37
    %p39 = scmp.eq.s32.totalorder %s38, 0
    %s41 = sadd.s32 %s40, 1
    %s42 = scalar_select %p39, %s40, %s41
    %p45 = pneg %p39
    %p46 = scmp.eq.s32.totalorder %s9, 1
    %p47 = por %p45, %p46
    %p48 = scmp.ne.s32.totalorder %s40, %s43
    %p49 = scmp.eq.s32.totalorder %s9, 0
    %p50 = por %p48, %p49
    %p51 = scmp.ne.s32.totalorder %s40, %s43
    %p52 = scmp.eq.s32.totalorder %s14, 1
    %p53 = por %p51, %p52
    %p54 = scmp.ne.s32.totalorder %s43, %s44
    %p55 = scmp.eq.s32.totalorder %s14, 0
    %p56 = por %p54, %p55
    %p57 = scmp.ne.s32.totalorder %s43, %s44
    %p58 = scmp.eq.s32.totalorder %s15, 1
    %p59 = por %p57, %p58
    %p61 = scmp.ne.s32.totalorder %s44, %s60
    %p62 = scmp.eq.s32.totalorder %s15, 0
    %p63 = por %p61, %p62
    %s64 = ssub.s32 %s18, %s27
    %s65 = ssub.s32 %s17, %s31
    %s66 = sor.u32 %s64, %s65
    %p67 = scmp.eq.s32.totalorder %s66, 0
    %s69 = sadd.s32 %s68, 1
    %s70 = scalar_select %p67, %s68, %s69
    %p73 = pneg %p67
    %p74 = scmp.eq.s32.totalorder %s9, 1
    %p75 = por %p73, %p74
    %p76 = scmp.ne.s32.totalorder %s68, %s71
    %p77 = scmp.eq.s32.totalorder %s9, 0
    %p78 = por %p76, %p77
    %p79 = scmp.ne.s32.totalorder %s68, %s71
    %p80 = scmp.eq.s32.totalorder %s14, 1
    %p81 = por %p79, %p80
    %p82 = scmp.ne.s32.totalorder %s71, %s72
    %p83 = scmp.eq.s32.totalorder %s14, 0
    %p84 = por %p82, %p83
    %p85 = scmp.ne.s32.totalorder %s71, %s72
    %p86 = scmp.eq.s32.totalorder %s15, 1
    %p87 = por %p85, %p86
    %p89 = scmp.ne.s32.totalorder %s72, %s88
    %p90 = scmp.eq.s32.totalorder %s15, 0
    %p91 = por %p89, %p90
    %s92 = ssub.s32 %s17, %s31
    %p93 = scmp.eq.s32.totalorder %s92, 0
    %s95 = sadd.s32 %s94, 1
    %s96 = scalar_select %p93, %s94, %s95
    %p99 = pneg %p93
    %p100 = scmp.eq.s32.totalorder %s9, 1
    %p101 = por %p99, %p100
    %p102 = scmp.ne.s32.totalorder %s94, %s97
    %p103 = scmp.eq.s32.totalorder %s9, 0
    %p104 = por %p102, %p103
    %p105 = scmp.ne.s32.totalorder %s94, %s97
    %p106 = scmp.eq.s32.totalorder %s14, 1
    %p107 = por %p105, %p106
    %p108 = scmp.ne.s32.totalorder %s97, %s98
    %p109 = scmp.eq.s32.totalorder %s14, 0
    %p110 = por %p108, %p109
    %p111 = scmp.ne.s32.totalorder %s97, %s98
    %p112 = scmp.eq.s32.totalorder %s15, 1
    %p113 = por %p111, %p112
    %p115 = scmp.ne.s32.totalorder %s98, %s114
    %p116 = scmp.eq.s32.totalorder %s15, 0
    %p117 = por %p115, %p116
    %s118 = ssub.s32 %s16, %s35
    %s119 = ssub.s32 %s17, %s31
    %s120 = sor.u32 %s118, %s119
    %p121 = scmp.eq.s32.totalorder %s120, 0
    %s123 = sadd.s32 %s122, 1
    %s124 = scalar_select %p121, %s122, %s123
    %p127 = pneg %p121
    %p128 = scmp.eq.s32.totalorder %s9, 1
    %p129 = por %p127, %p128
    %p130 = scmp.ne.s32.totalorder %s122, %s125
    %p131 = scmp.eq.s32.totalorder %s9, 0
    %p132 = por %p130, %p131
    %p133 = scmp.ne.s32.totalorder %s122, %s125
    %p134 = scmp.eq.s32.totalorder %s14, 1
    %p135 = por %p133, %p134
    %p136 = scmp.ne.s32.totalorder %s125, %s126
    %p137 = scmp.eq.s32.totalorder %s14, 0
    %p138 = por %p136, %p137
    %p139 = scmp.ne.s32.totalorder %s125, %s126
    %p140 = scmp.eq.s32.totalorder %s15, 1
    %p141 = por %p139, %p140
    %p143 = scmp.ne.s32.totalorder %s126, %s142
    %p144 = scmp.eq.s32.totalorder %s15, 0
    %p145 = por %p143, %p144
    %p146 = scmp.le.s32.totalorder 1, %s9
    %p147 = scmp.lt.s32.totalorder %s9, 3
    %p148 = pnand %p146, %p147
    %p149 = pneg %p148
    // Predicated region
    $region9: #{pspnet_forward.12} parent=5 // pred_check
      _
    $region10: #{pspnet_forward.12} parent=5 // pred_check_branch
      %151 = sbr.rel (%p148) target = $region12
    $region11: #{pspnet_forward.12} parent=5 // pred_region
      %s152 = ssub.s32 %s9, 1
      // Predicated region
      $region13: #{pspnet_forward.12} parent=11 // pred_check
        %p153 = pneg %p84
      $region14: #{pspnet_forward.12} parent=11 // pred_check_branch
        %155 = sbr.rel (%p153) target = $region16
      $region15: #{pspnet_forward.12} parent=11 // pred_region
        %s156 = smul.u32 32, %s21
        %p157 = scmp.lt.s32.totalorder %s156, 31
        %s158 = scalar_select %p157, %s156, 31
        %p159 = scmp.lt.s32.totalorder %s20, 0
        %s160 = scalar_select %p159, %s20, 0
        %s161 = sadd.s32 %s160, %s158
        %s162 = smul.addr %s161, 4
        %s163 = scalar_lea.vmem %s1, %s162
        %s164 = smul.u32 32, %s21
      $region16: #{pspnet_forward.12} parent=11 // pred_fallthru
        _
      // Predicated region
      $region17: #{pspnet_forward.12} parent=11 // pred_check
        %p165 = pneg %p110
      $region18: #{pspnet_forward.12} parent=11 // pred_check_branch
        %167 = sbr.rel (%p165) target = $region20
      $region19: #{pspnet_forward.12} parent=11 // pred_region
        %p168 = scmp.lt.s32.totalorder %s20, 0
        %s169 = scalar_select %p168, %s20, 0
        %s170 = scalar_lea.vmem %s2, %s169
      $region20: #{pspnet_forward.12} parent=11 // pred_fallthru
        _
    $region12: #{pspnet_forward.12} parent=5 // pred_fallthru
      _
    %p171 = scmp.lt.s32.totalorder %s9, 2
    // Predicated region
    $region21: #{pspnet_forward.12} parent=5 // pred_check
      %p172 = pneg %p171
    $region22: #{pspnet_forward.12} parent=5 // pred_check_branch
      %174 = sbr.rel (%p172) target = $region24
    $region23: #{pspnet_forward.12} parent=5 // pred_region
      // Predicated region
      $region25: #{pspnet_forward.12} parent=23 // pred_check
        %p175 = pneg %p50
      $region26: #{pspnet_forward.12} parent=23 // pred_check_branch
        %177 = sbr.rel (%p175) target = $region28
      $region27: #{pspnet_forward.12} parent=23 // pred_region
        %s178 = smul.u32 12, %s16
        %s179 = smul.u32 2, %s18
        %p180 = scmp.lt.s32.totalorder %s178, 23
        %s181 = scalar_select %p180, %s178, 23
        %p182 = scmp.lt.s32.totalorder %s179, 1
        %s183 = scalar_select %p182, %s179, 1
        %s184 = smul.addr %s181, 2
        %s185 = sadd.s32 %s183, %s184
        %s186 = smul.addr %s185, 4
        %s187 = scalar_lea.vmem %s0, %s186
        %s188 = smul.u32 12, %s16
        %s189 = smul.u32 2, %s18
      $region28: #{pspnet_forward.12} parent=23 // pred_fallthru
        _
    $region24: #{pspnet_forward.12} parent=5 // pred_fallthru
      _
    %p190 = scmp.le.s32.totalorder 1, %s9
    %p191 = scmp.lt.s32.totalorder %s9, 3
    %p192 = pnand %p190, %p191
    %p193 = pneg %p192
    // Predicated region
    $region29: #{pspnet_forward.12} parent=5 // pred_check
      _
    $region30: #{pspnet_forward.12} parent=5 // pred_check_branch
      %195 = sbr.rel (%p192) target = $region32
    $region31: #{pspnet_forward.12} parent=5 // pred_region
      %s196 = ssub.s32 %s9, 1
      %s197 = smul.u32 12, %s19
      %s198 = smul.u32 2, %s21
      %p199 = scmp.lt.s32.totalorder %s197, 23
      %s200 = scalar_select %p199, %s197, 23
      %p201 = scmp.lt.s32.totalorder %s198, 1
      %s202 = scalar_select %p201, %s198, 1
      %s203 = smul.addr %s200, 2
      %s204 = sadd.s32 %s202, %s203
      %s205 = smul.addr %s204, 4
      %s206 = scalar_lea.vmem %s0, %s205
      %p207 = pneg %p56
      %p208 = pneg %p53
      %s209 = smul.u32 32, %s21
      %p210 = scmp.lt.s32.totalorder %s209, 31
      %s211 = scalar_select %p210, %s209, 31
      %p212 = scmp.lt.s32.totalorder %s20, 0
      %s213 = scalar_select %p212, %s20, 0
      %s214 = sadd.s32 %s213, %s211
      %s215 = smul.addr %s214, 4
      %s216 = scalar_lea.vmem %s1, %s215
      %p217 = pneg %p84
      %p218 = pneg %p81
      %p219 = scmp.lt.s32.totalorder %s20, 0
      %s220 = scalar_select %p219, %s20, 0
      %s221 = scalar_lea.vmem %s2, %s220
      %p222 = pneg %p110
      %p223 = pneg %p107
      %p224 = pneg %p138
      %p225 = pneg %p135
      %s226 = smul.u32 12, %s19
      %p227 = scmp.lt.s32.totalorder %s226, 23
      %s228 = scalar_select %p227, %s226, 23
      %p229 = scmp.lt.s32.totalorder %s20, 0
      %s230 = scalar_select %p229, %s20, 0
      %s231 = sadd.s32 %s230, %s228
      %s232 = smul.addr %s231, 4
      %s233 = scalar_lea.vmem %s3, %s232
      %s234 = smul.u32 12, %s19
      %s235 = smul.u32 2, %s21
      %p236 = scmp.lt.s32.totalorder %s234, 23
      %s237 = scalar_select %p236, %s234, 23
      %p238 = scmp.lt.s32.totalorder %s235, 1
      %s239 = scalar_select %p238, %s235, 1
      %s240 = smul.addr %s237, 2
      %s241 = sadd.s32 %s239, %s240
      %s242 = smul.addr %s241, 4
      %s243 = scalar_lea.vmem %s0, %s242
      %s244 = smul.u32 12, %s19
      %s245 = smul.u32 2, %s21
      %s246 = smul.u32 32, %s21
      %p247 = scmp.lt.s32.totalorder %s246, 31
      %s248 = scalar_select %p247, %s246, 31
      %p249 = scmp.lt.s32.totalorder %s20, 0
      %s250 = scalar_select %p249, %s20, 0
      %s251 = sadd.s32 %s250, %s248
      %s252 = smul.addr %s251, 4
      %s253 = scalar_lea.vmem %s1, %s252
      %s254 = smul.u32 32, %s21
      %p255 = scmp.lt.s32.totalorder %s20, 0
      %s256 = scalar_select %p255, %s20, 0
      %s257 = scalar_lea.vmem %s2, %s256
      %s258 = smul.u32 12, %s19
      %p259 = scmp.lt.s32.totalorder %s258, 23
      %s260 = scalar_select %p259, %s258, 23
      %p261 = scmp.lt.s32.totalorder %s20, 0
      %s262 = scalar_select %p261, %s20, 0
      %s263 = sadd.s32 %s262, %s260
      %s264 = smul.addr %s263, 4
      %s265 = scalar_lea.vmem %s3, %s264
      %s266 = smul.u32 12, %s19
      %p268 = scmp.eq.s32.totalorder %s21, 0
      // Predicated region
      $region33: #{pspnet_forward.12} parent=31 // pred_check
        %p269 = pneg %p268
      $region34: #{pspnet_forward.12} parent=31 // pred_check_branch
        %271 = sbr.rel (%p269) target = $region36
      $region35: #{pspnet_forward.12} parent=31 // pred_region
        %272 = vst [vmem:[#allocation2] sm:$0xff] 0.0
        %273 = vst [vmem:[#allocation2 + $0x8] sm:$0xff] 0.0
        %274 = vst [vmem:[#allocation2 + $0x10] sm:$0xff] 0.0
        %275 = vst [vmem:[#allocation2 + $0x18] sm:$0xff] 0.0
        %276 = vst [vmem:[#allocation2 + $0x20] sm:$0xff] 0.0
        %277 = vst [vmem:[#allocation2 + $0x28] sm:$0xff] 0.0
        %278 = vst [vmem:[#allocation2 + $0x30] sm:$0xff] 0.0
        %279 = vst [vmem:[#allocation2 + $0x38] sm:$0xff] 0.0
        %280 = vst [vmem:[#allocation2 + $0x40] sm:$0xff] 0.0
        %281 = vst [vmem:[#allocation2 + $0x48] sm:$0xff] 0.0
        %282 = vst [vmem:[#allocation2 + $0x50] sm:$0xff] 0.0
        %283 = vst [vmem:[#allocation2 + $0x58] sm:$0xff] 0.0
      $region36: #{pspnet_forward.12} parent=31 // pred_fallthru
        _
      %v284 = vld [vmem:[#allocation2] sm:$0xff]
      %v285 = vld [vmem:[#allocation2 + $0x8] sm:$0xff]
      %v286 = vld [vmem:[#allocation2 + $0x10] sm:$0xff]
      %v287 = vld [vmem:[#allocation2 + $0x18] sm:$0xff]
      %v288 = vld [vmem:[#allocation2 + $0x20] sm:$0xff]
      %v289 = vld [vmem:[#allocation2 + $0x28] sm:$0xff]
      %v290 = vld [vmem:[#allocation2 + $0x30] sm:$0xff]
      %v291 = vld [vmem:[#allocation2 + $0x38] sm:$0xff]
      %v292 = vld [vmem:[#allocation2 + $0x40] sm:$0xff]
      %v293 = vld [vmem:[#allocation2 + $0x48] sm:$0xff]
      %v294 = vld [vmem:[#allocation2 + $0x50] sm:$0xff]
      %v295 = vld [vmem:[#allocation2 + $0x58] sm:$0xff]
      %v296 = vld [vmem:[%s243] sm:$0xff]
      %v297 = vld [vmem:[%s243 + $0x8] sm:$0xff]
      %v298 = vld [vmem:[%s243 + $0x10] sm:$0xff]
      %v299 = vld [vmem:[%s243 + $0x18] sm:$0xff]
      %v300 = vld [vmem:[%s243 + $0x20] sm:$0xff]
      %v301 = vld [vmem:[%s243 + $0x28] sm:$0xff]
      %v302 = vld [vmem:[%s243 + $0x30] sm:$0xff]
      %v303 = vld [vmem:[%s243 + $0x38] sm:$0xff]
      %v304 = vld [vmem:[%s243 + $0x40] sm:$0xff]
      %v305 = vld [vmem:[%s243 + $0x48] sm:$0xff]
      %v306 = vld [vmem:[%s243 + $0x50] sm:$0xff]
      %v307 = vld [vmem:[%s243 + $0x58] sm:$0xff]
      %v308 = vld [vmem:[%s253] sm:$0xf]
      %v309 = vld [vmem:[%s253 + $0x4] sm:$0xf]
      %v310 = vld [vmem:[%s253 + $0x8] sm:$0xf]
      %v311 = vld [vmem:[%s253 + $0xc] sm:$0xf]
      %v312 = vld [vmem:[%s253 + $0x10] sm:$0xf]
      %v313 = vld [vmem:[%s253 + $0x14] sm:$0xf]
      %v314 = vld [vmem:[%s253 + $0x18] sm:$0xf]
      %v315 = vld [vmem:[%s253 + $0x1c] sm:$0xf]
      %v316 = vld [vmem:[%s253 + $0x20] sm:$0xf]
      %v317 = vld [vmem:[%s253 + $0x24] sm:$0xf]
      %v318 = vld [vmem:[%s253 + $0x28] sm:$0xf]
      %v319 = vld [vmem:[%s253 + $0x2c] sm:$0xf]
      %v320 = vld [vmem:[%s253 + $0x30] sm:$0xf]
      %v321 = vld [vmem:[%s253 + $0x34] sm:$0xf]
      %v322 = vld [vmem:[%s253 + $0x38] sm:$0xf]
      %v323 = vld [vmem:[%s253 + $0x3c] sm:$0xf]
      %v324 = vld [vmem:[%s253 + $0x40] sm:$0xf]
      %v325 = vld [vmem:[%s253 + $0x44] sm:$0xf]
      %v326 = vld [vmem:[%s253 + $0x48] sm:$0xf]
      %v327 = vld [vmem:[%s253 + $0x4c] sm:$0xf]
      %v328 = vld [vmem:[%s253 + $0x50] sm:$0xf]
      %v329 = vld [vmem:[%s253 + $0x54] sm:$0xf]
      %v330 = vld [vmem:[%s253 + $0x58] sm:$0xf]
      %v331 = vld [vmem:[%s253 + $0x5c] sm:$0xf]
      %v332 = vld [vmem:[%s253 + $0x60] sm:$0xf]
      %v333 = vld [vmem:[%s253 + $0x64] sm:$0xf]
      %v334 = vld [vmem:[%s253 + $0x68] sm:$0xf]
      %v335 = vld [vmem:[%s253 + $0x6c] sm:$0xf]
      %v336 = vld [vmem:[%s253 + $0x70] sm:$0xf]
      %v337 = vld [vmem:[%s253 + $0x74] sm:$0xf]
      %v338 = vld [vmem:[%s253 + $0x78] sm:$0xf]
      %v339 = vld [vmem:[%s253 + $0x7c] sm:$0xf]
      %v352 = vunpack.c.l.b16 %v296
      %v353 = vunpack.c.h.b16 %v296
      %v354 = vunpack.c.l.b16 %v297
      %v355 = vunpack.c.h.b16 %v297
      %v356 = vunpack.c.l.b16 %v298
      %v357 = vunpack.c.h.b16 %v298
      %v358 = vunpack.c.l.b16 %v299
      %v359 = vunpack.c.h.b16 %v299
      %v360 = vunpack.c.l.b16 %v300
      %v361 = vunpack.c.h.b16 %v300
      %v362 = vunpack.c.l.b16 %v301
      %v363 = vunpack.c.h.b16 %v301
      %v364 = vunpack.c.l.b16 %v302
      %v365 = vunpack.c.h.b16 %v302
      %v366 = vunpack.c.l.b16 %v303
      %v367 = vunpack.c.h.b16 %v303
      %v368 = vunpack.c.l.b16 %v304
      %v369 = vunpack.c.h.b16 %v304
      %v370 = vunpack.c.l.b16 %v305
      %v371 = vunpack.c.h.b16 %v305
      %v372 = vunpack.c.l.b16 %v306
      %v373 = vunpack.c.h.b16 %v306
      %v374 = vunpack.c.l.b16 %v307
      %v375 = vunpack.c.h.b16 %v307
      %v376 = vpack.c.b16 %v354, %v352
      %v377 = vpack.c.b16 %v355, %v353
      %v378 = vpack.c.b16 %v358, %v356
      %v379 = vpack.c.b16 %v359, %v357
      %v380 = vpack.c.b16 %v362, %v360
      %v381 = vpack.c.b16 %v363, %v361
      %v382 = vpack.c.b16 %v366, %v364
      %v383 = vpack.c.b16 %v367, %v365
      %v384 = vpack.c.b16 %v370, %v368
      %v385 = vpack.c.b16 %v371, %v369
      %v386 = vpack.c.b16 %v374, %v372
      %v387 = vpack.c.b16 %v375, %v373
      %v432 = vunpack.c.l.b16 %v308
      %v433 = vunpack.c.l.b16 %v309
      %v434 = vunpack.c.l.b16 %v310
      %v435 = vunpack.c.l.b16 %v311
      %v436 = vunpack.c.l.b16 %v312
      %v437 = vunpack.c.l.b16 %v313
      %v438 = vunpack.c.l.b16 %v314
      %v439 = vunpack.c.l.b16 %v315
      %v440 = vunpack.c.l.b16 %v316
      %v441 = vunpack.c.l.b16 %v317
      %v442 = vunpack.c.l.b16 %v318
      %v443 = vunpack.c.l.b16 %v319
      %v444 = vunpack.c.l.b16 %v320
      %v445 = vunpack.c.l.b16 %v321
      %v446 = vunpack.c.l.b16 %v322
      %v447 = vunpack.c.l.b16 %v323
      %v448 = vunpack.c.l.b16 %v324
      %v449 = vunpack.c.l.b16 %v325
      %v450 = vunpack.c.l.b16 %v326
      %v451 = vunpack.c.l.b16 %v327
      %v452 = vunpack.c.l.b16 %v328
      %v453 = vunpack.c.l.b16 %v329
      %v454 = vunpack.c.l.b16 %v330
      %v455 = vunpack.c.l.b16 %v331
      %v456 = vunpack.c.l.b16 %v332
      %v457 = vunpack.c.l.b16 %v333
      %v458 = vunpack.c.l.b16 %v334
      %v459 = vunpack.c.l.b16 %v335
      %v460 = vunpack.c.l.b16 %v336
      %v461 = vunpack.c.l.b16 %v337
      %v462 = vunpack.c.l.b16 %v338
      %v463 = vunpack.c.l.b16 %v339
      %v464 = vpack.c.b16 %v433, %v432
      %v465 = vpack.c.b16 %v435, %v434
      %v466 = vpack.c.b16 %v437, %v436
      %v467 = vpack.c.b16 %v439, %v438
      %v468 = vpack.c.b16 %v441, %v440
      %v469 = vpack.c.b16 %v443, %v442
      %v470 = vpack.c.b16 %v445, %v444
      %v471 = vpack.c.b16 %v447, %v446
      %v472 = vpack.c.b16 %v449, %v448
      %v473 = vpack.c.b16 %v451, %v450
      %v474 = vpack.c.b16 %v453, %v452
      %v475 = vpack.c.b16 %v455, %v454
      %v476 = vpack.c.b16 %v457, %v456
      %v477 = vpack.c.b16 %v459, %v458
      %v478 = vpack.c.b16 %v461, %v460
      %v479 = vpack.c.b16 %v463, %v462
      %496 = vmatprep.subr.bf16.mxu0 0
      %497 = vmatpush1.bf16.msra.mxu0 %v471
      %498 = vmatprep.subr.bf16.mxu0 0
      %499 = vmatpush1.bf16.msra.mxu0 %v470
      %500 = vmatprep.subr.bf16.mxu0 0
      %501 = vmatpush1.bf16.msra.mxu0 %v469
      %502 = vmatprep.subr.bf16.mxu0 0
      %503 = vmatpush1.bf16.msra.mxu0 %v468
      %504 = vmatprep.subr.bf16.mxu0 0
      %505 = vmatpush1.bf16.msra.mxu0 %v467
      %506 = vmatprep.subr.bf16.mxu0 0
      %507 = vmatpush1.bf16.msra.mxu0 %v466
      %508 = vmatprep.subr.bf16.mxu0 0
      %509 = vmatpush1.bf16.msra.mxu0 %v465
      %510 = vmatprep.subr.bf16.mxu0 0
      %511 = vmatpush1.bf16.msra.mxu0 %v464
      %512 = vmatprep.subr.bf16.mxu0 0
      %513 = vmatpush2.bf16.msra.mxu0 %v479
      %514 = vmatprep.subr.bf16.mxu0 0
      %515 = vmatpush2.bf16.msra.mxu0 %v478
      %516 = vmatprep.subr.bf16.mxu0 0
      %517 = vmatpush2.bf16.msra.mxu0 %v477
      %518 = vmatprep.subr.bf16.mxu0 0
      %519 = vmatpush2.bf16.msra.mxu0 %v476
      %520 = vmatprep.subr.bf16.mxu0 0
      %521 = vmatpush2.bf16.msra.mxu0 %v475
      %522 = vmatprep.subr.bf16.mxu0 0
      %523 = vmatpush2.bf16.msra.mxu0 %v474
      %524 = vmatprep.subr.bf16.mxu0 0
      %525 = vmatpush2.bf16.msra.mxu0 %v473
      %526 = vmatprep.subr.bf16.mxu0 0
      %527 = vmatpush2.bf16.msra.mxu0 %v472
      %528 = vmatprep.mubr.bf16.mxu0 %v377
      %529 = vmatmul.mubr.bf16.gmra.mxu0 %v376
      %v530 = vpop.f32.mrf.mxu0
      %v531 = vadd.f32 0.0, %v530
      %v532 = vpop.f32.mrf.mxu0
      %v533 = vpop.f32.mrf.mxu0
      %v534 = vadd.f32 0.0, %v533
      %v535 = vpop.f32.mrf.mxu0
      %536 = vmatprep.mubr.bf16.mxu0 %v379
      %537 = vmatmul.mubr.bf16.gmra.mxu0 %v378
      %v538 = vpop.f32.mrf.mxu0
      %v539 = vadd.f32 0.0, %v538
      %v540 = vpop.f32.mrf.mxu0
      %v541 = vpop.f32.mrf.mxu0
      %v542 = vadd.f32 0.0, %v541
      %v543 = vpop.f32.mrf.mxu0
      %544 = vmatprep.mubr.bf16.mxu0 %v381
      %545 = vmatmul.mubr.bf16.gmra.mxu0 %v380
      %v546 = vpop.f32.mrf.mxu0
      %v547 = vadd.f32 0.0, %v546
      %v548 = vpop.f32.mrf.mxu0
      %v549 = vpop.f32.mrf.mxu0
      %v550 = vadd.f32 0.0, %v549
      %v551 = vpop.f32.mrf.mxu0
      %552 = vmatprep.mubr.bf16.mxu0 %v383
      %553 = vmatmul.mubr.bf16.gmra.mxu0 %v382
      %v554 = vpop.f32.mrf.mxu0
      %v555 = vadd.f32 0.0, %v554
      %v556 = vpop.f32.mrf.mxu0
      %v557 = vpop.f32.mrf.mxu0
      %v558 = vadd.f32 0.0, %v557
      %v559 = vpop.f32.mrf.mxu0
      %560 = vmatprep.mubr.bf16.mxu0 %v385
      %561 = vmatmul.mubr.bf16.gmra.mxu0 %v384
      %v562 = vpop.f32.mrf.mxu0
      %v563 = vadd.f32 0.0, %v562
      %v564 = vpop.f32.mrf.mxu0
      %v565 = vpop.f32.mrf.mxu0
      %v566 = vadd.f32 0.0, %v565
      %v567 = vpop.f32.mrf.mxu0
      %568 = vmatprep.mubr.bf16.mxu0 %v387
      %569 = vmatmul.mubr.bf16.gmra.mxu0 %v386
      %v570 = vpop.f32.mrf.mxu0
      %v571 = vadd.f32 0.0, %v570
      %v572 = vpop.f32.mrf.mxu0
      %v573 = vpop.f32.mrf.mxu0
      %v574 = vadd.f32 0.0, %v573
      %v575 = vpop.f32.mrf.mxu0
      %576 = vdwg.mxu0
      %v577 = vadd.f32 %v284, %v531
      %v578 = vadd.f32 %v285, %v534
      %v579 = vadd.f32 %v286, %v539
      %v580 = vadd.f32 %v287, %v542
      %v581 = vadd.f32 %v288, %v547
      %v582 = vadd.f32 %v289, %v550
      %v583 = vadd.f32 %v290, %v555
      %v584 = vadd.f32 %v291, %v558
      %v585 = vadd.f32 %v292, %v563
      %v586 = vadd.f32 %v293, %v566
      %v587 = vadd.f32 %v294, %v571
      %v588 = vadd.f32 %v295, %v574
      %589 = vst [vmem:[#allocation2] sm:$0xff] %v577
      %590 = vst [vmem:[#allocation2 + $0x8] sm:$0xff] %v578
      %591 = vst [vmem:[#allocation2 + $0x10] sm:$0xff] %v579
      %592 = vst [vmem:[#allocation2 + $0x18] sm:$0xff] %v580
      %593 = vst [vmem:[#allocation2 + $0x20] sm:$0xff] %v581
      %594 = vst [vmem:[#allocation2 + $0x28] sm:$0xff] %v582
      %595 = vst [vmem:[#allocation2 + $0x30] sm:$0xff] %v583
      %596 = vst [vmem:[#allocation2 + $0x38] sm:$0xff] %v584
      %597 = vst [vmem:[#allocation2 + $0x40] sm:$0xff] %v585
      %598 = vst [vmem:[#allocation2 + $0x48] sm:$0xff] %v586
      %599 = vst [vmem:[#allocation2 + $0x50] sm:$0xff] %v587
      %600 = vst [vmem:[#allocation2 + $0x58] sm:$0xff] %v588
      // Predicated region
      $region37: #{pspnet_forward.12} parent=31 // pred_check
        %p601 = pneg %p268
      $region38: #{pspnet_forward.12} parent=31 // pred_check_branch
        %603 = sbr.rel (%p601) target = $region40
      $region39: #{pspnet_forward.12} parent=31 // pred_region
        %v604 = vld [vmem:[#allocation2] sm:$0xff]
        %v605 = vld [vmem:[#allocation2 + $0x8] sm:$0xff]
        %v606 = vld [vmem:[#allocation2 + $0x10] sm:$0xff]
        %v607 = vld [vmem:[#allocation2 + $0x18] sm:$0xff]
        %v608 = vld [vmem:[#allocation2 + $0x20] sm:$0xff]
        %v609 = vld [vmem:[#allocation2 + $0x28] sm:$0xff]
        %v610 = vld [vmem:[#allocation2 + $0x30] sm:$0xff]
        %v611 = vld [vmem:[#allocation2 + $0x38] sm:$0xff]
        %v612 = vld [vmem:[#allocation2 + $0x40] sm:$0xff]
        %v613 = vld [vmem:[#allocation2 + $0x48] sm:$0xff]
        %v614 = vld [vmem:[#allocation2 + $0x50] sm:$0xff]
        %v615 = vld [vmem:[#allocation2 + $0x58] sm:$0xff]
        %v616 = vld [vmem:[%s257] sm:$0x1]
        %v618 = vlaneseq
        %v619 = vshrl.u32 %v618, 7
        %v620 = vsub.s32 0, %v619
        %v621 = vrot.slane %v616, %v620
        %v623 = vadd.f32 %v604, %v621
        %v624 = vadd.f32 %v605, %v621
        %v625 = vadd.f32 %v606, %v621
        %v626 = vadd.f32 %v607, %v621
        %v627 = vadd.f32 %v608, %v621
        %v628 = vadd.f32 %v609, %v621
        %v629 = vadd.f32 %v610, %v621
        %v630 = vadd.f32 %v611, %v621
        %v631 = vadd.f32 %v612, %v621
        %v632 = vadd.f32 %v613, %v621
        %v633 = vadd.f32 %v614, %v621
        %v634 = vadd.f32 %v615, %v621
        %v635 = vmax.f32 %v623, 0.0
        %v636 = vmax.f32 %v624, 0.0
        %v637 = vmax.f32 %v625, 0.0
        %v638 = vmax.f32 %v626, 0.0
        %v639 = vmax.f32 %v627, 0.0
        %v640 = vmax.f32 %v628, 0.0
        %v641 = vmax.f32 %v629, 0.0
        %v642 = vmax.f32 %v630, 0.0
        %v643 = vmax.f32 %v631, 0.0
        %v644 = vmax.f32 %v632, 0.0
        %v645 = vmax.f32 %v633, 0.0
        %v646 = vmax.f32 %v634, 0.0
        %v647 = vpack.c.bf16 %v636, %v635
        %v648 = vpack.c.bf16 %v638, %v637
        %v649 = vpack.c.bf16 %v640, %v639
        %v650 = vpack.c.bf16 %v642, %v641
        %v651 = vpack.c.bf16 %v644, %v643
        %v652 = vpack.c.bf16 %v646, %v645
        %v659 = vunpack.c.l.b16 %v647
        %v660 = vunpack.c.h.b16 %v647
        %v661 = vunpack.c.l.b16 %v648
        %v662 = vunpack.c.h.b16 %v648
        %v663 = vunpack.c.l.b16 %v649
        %v664 = vunpack.c.h.b16 %v649
        %v665 = vunpack.c.l.b16 %v650
        %v666 = vunpack.c.h.b16 %v650
        %v667 = vunpack.c.l.b16 %v651
        %v668 = vunpack.c.h.b16 %v651
        %v669 = vunpack.c.l.b16 %v652
        %v670 = vunpack.c.h.b16 %v652
        %v671 = vpack.c.b16 %v659, %v659
        %v672 = vpack.c.b16 %v660, %v660
        %v673 = vpack.c.b16 %v661, %v661
        %v674 = vpack.c.b16 %v662, %v662
        %v675 = vpack.c.b16 %v663, %v663
        %v676 = vpack.c.b16 %v664, %v664
        %v677 = vpack.c.b16 %v665, %v665
        %v678 = vpack.c.b16 %v666, %v666
        %v679 = vpack.c.b16 %v667, %v667
        %v680 = vpack.c.b16 %v668, %v668
        %v681 = vpack.c.b16 %v669, %v669
        %v682 = vpack.c.b16 %v670, %v670
        %695 = vst [vmem:[%s265] sm:$0xf] %v671
        %696 = vst [vmem:[%s265 + $0x4] sm:$0xf] %v672
        %697 = vst [vmem:[%s265 + $0x8] sm:$0xf] %v673
        %698 = vst [vmem:[%s265 + $0xc] sm:$0xf] %v674
        %699 = vst [vmem:[%s265 + $0x10] sm:$0xf] %v675
        %700 = vst [vmem:[%s265 + $0x14] sm:$0xf] %v676
        %701 = vst [vmem:[%s265 + $0x18] sm:$0xf] %v677
        %702 = vst [vmem:[%s265 + $0x1c] sm:$0xf] %v678
        %703 = vst [vmem:[%s265 + $0x20] sm:$0xf] %v679
        %704 = vst [vmem:[%s265 + $0x24] sm:$0xf] %v680
        %705 = vst [vmem:[%s265 + $0x28] sm:$0xf] %v681
        %706 = vst [vmem:[%s265 + $0x2c] sm:$0xf] %v682
      $region40: #{pspnet_forward.12} parent=31 // pred_fallthru
        _
      %s707 = smul.u32 12, %s19
      %p708 = scmp.lt.s32.totalorder %s707, 23
      %s709 = scalar_select %p708, %s707, 23
      %p710 = scmp.lt.s32.totalorder %s20, 0
      %s711 = scalar_select %p710, %s20, 0
      %s712 = sadd.s32 %s711, %s709
      %s713 = smul.addr %s712, 4
      %s714 = scalar_lea.vmem %s3, %s713
      // Predicated region
      $region41: #{pspnet_forward.12} parent=31 // pred_check
        %p715 = pneg %p135
      $region42: #{pspnet_forward.12} parent=31 // pred_check_branch
        %717 = sbr.rel (%p715) target = $region44
      $region43: #{pspnet_forward.12} parent=31 // pred_region
        %s718 = smul.u32 12, %s19
      $region44: #{pspnet_forward.12} parent=31 // pred_fallthru
        _
    $region32: #{pspnet_forward.12} parent=5 // pred_fallthru
      _
    %p719 = scmp.le.s32.totalorder 2, %s9
    // Predicated region
    $region45: #{pspnet_forward.12} parent=5 // pred_check
      %p720 = pneg %p719
    $region46: #{pspnet_forward.12} parent=5 // pred_check_branch
      %722 = sbr.rel (%p720) target = $region48
    $region47: #{pspnet_forward.12} parent=5 // pred_region
      %s723 = ssub.s32 %s9, 2
      // Predicated region
      $region49: #{pspnet_forward.12} parent=47 // pred_check
        %p724 = pneg %p141
      $region50: #{pspnet_forward.12} parent=47 // pred_check_branch
        %726 = sbr.rel (%p724) target = $region52
      $region51: #{pspnet_forward.12} parent=47 // pred_region
        %s727 = smul.u32 12, %s22
        %p728 = scmp.lt.s32.totalorder %s727, 23
        %s729 = scalar_select %p728, %s727, 23
        %p730 = scmp.lt.s32.totalorder %s23, 0
        %s731 = scalar_select %p730, %s23, 0
        %s732 = sadd.s32 %s731, %s729
        %s733 = smul.addr %s732, 4
        %s734 = scalar_lea.vmem %s3, %s733
      $region52: #{pspnet_forward.12} parent=47 // pred_fallthru
        _
    $region48: #{pspnet_forward.12} parent=5 // pred_fallthru
      _
  $region6: #{pspnet_forward.12} parent=0 // loop_footer
    %s13 = sadd.s32 1, %s9
  $region7: #{pspnet_forward.12} parent=0 // loop_footer_branch
    %8 = sbr.rel target = $region3
  $region8: #{pspnet_forward.12} parent=0 // loop_exit
    _

// kernel: pspnet_forward.13
$region0: #{pspnet_forward.13}
  #allocation0 [shape = 'u32[]', space=smem, size = 0x4, offset = 0x4, fixed_abs, tag = 'smem constant byte address 0x4 - core index']
  #allocation1 [shape = 'u32[144,128]{1,0:T(1,128)}', space=vmem, size = 0x12000, scoped, tag = 'internal scratch']
  #allocation2 [shape = 'f32[32,128]{1,0:T(8,128)}', space=vmem, size = 0x4000, scoped, tag = 'scratch operand']
  %s0 = inlined_call_operand.vmem [shape: bf16[64,128], index: 0, kind: input, shape index: {}]
  %s1 = inlined_call_operand.vmem [shape: bf16[128,128], index: 1, kind: input, shape index: {}]
  %s2 = inlined_call_operand.vmem [shape: f32[1,128], index: 2, kind: input, shape index: {}]
  %s3 = inlined_call_operand.vmem [shape: bf16[64,128], index: 3, kind: output, shape index: {}]
  %s4 = sld [smem:[#allocation0]]
  $region53: #{pspnet_forward.13} parent=0
    _
  %s6 = ssub.s32 1, %s4
  %s7 = scalar_select 0, %s6, %s4
  loop: start=0, step=1, limit=4
  $region2: #{pspnet_forward.13} parent=0 // loop_pre_header
    _
  $region3: #{pspnet_forward.13} parent=0 // loop_header
    %s9 = sphi 0, %s13
    %p10 = scmp.ge.s32.totalorder %s9, 4
    %s16 = sphi 0, %s35
    %s17 = sphi 0, %s31
    %s18 = sphi 0, %s27
    %s19 = sphi 0, %s16
    %s20 = sphi 0, %s17
    %s21 = sphi 0, %s18
    %s22 = sphi 0, %s19
    %s23 = sphi 0, %s20
    %s24 = sphi 0, %s21
    %s40 = sphi 0, %s42
    %s43 = sphi 0, %s40
    %s44 = sphi 0, %s43
    %s60 = sphi 0, %s44
    %s68 = sphi 0, %s70
    %s71 = sphi 0, %s68
    %s72 = sphi 0, %s71
    %s88 = sphi 0, %s72
    %s94 = sphi 0, %s96
    %s97 = sphi 0, %s94
    %s98 = sphi 0, %s97
    %s114 = sphi 0, %s98
    %s122 = sphi 0, %s124
    %s125 = sphi 0, %s122
    %s126 = sphi 0, %s125
    %s142 = sphi 0, %s126
  $region4: #{pspnet_forward.13} parent=0 // loop_header_branch
    %12 = sbr.rel (%p10) target = $region8
  $region5: #{pspnet_forward.13} parent=0 // loop_body
    %s14 = ssub.s32 %s9, 1
    %s15 = ssub.s32 %s9, 2
    %s25 = sadd.s32 1, %s18
    %p26 = scmp.ge.s32.totalorder %s25, 1
    %s27 = scalar_select %p26, 0, %s25
    %s28 = sadd.s32 1, %s17
    %s29 = scalar_select %p26, %s28, %s17
    %p30 = scmp.ge.s32.totalorder %s29, 1
    %s31 = scalar_select %p30, 0, %s29
    %s32 = sadd.s32 1, %s16
    %s33 = scalar_select %p30, %s32, %s16
    %p34 = scmp.ge.s32.totalorder %s33, 2
    %s35 = scalar_select %p34, 0, %s33
    %s36 = ssub.s32 %s16, %s35
    %s37 = ssub.s32 %s18, %s27
    %s38 = sor.u32 %s36, %s37
    %p39 = scmp.eq.s32.totalorder %s38, 0
    %s41 = sadd.s32 %s40, 1
    %s42 = scalar_select %p39, %s40, %s41
    %p45 = pneg %p39
    %p46 = scmp.eq.s32.totalorder %s9, 1
    %p47 = por %p45, %p46
    %p48 = scmp.ne.s32.totalorder %s40, %s43
    %p49 = scmp.eq.s32.totalorder %s9, 0
    %p50 = por %p48, %p49
    %p51 = scmp.ne.s32.totalorder %s40, %s43
    %p52 = scmp.eq.s32.totalorder %s14, 1
    %p53 = por %p51, %p52
    %p54 = scmp.ne.s32.totalorder %s43, %s44
    %p55 = scmp.eq.s32.totalorder %s14, 0
    %p56 = por %p54, %p55
    %p57 = scmp.ne.s32.totalorder %s43, %s44
    %p58 = scmp.eq.s32.totalorder %s15, 1
    %p59 = por %p57, %p58
    %p61 = scmp.ne.s32.totalorder %s44, %s60
    %p62 = scmp.eq.s32.totalorder %s15, 0
    %p63 = por %p61, %p62
    %s64 = ssub.s32 %s18, %s27
    %s65 = ssub.s32 %s17, %s31
    %s66 = sor.u32 %s64, %s65
    %p67 = scmp.eq.s32.totalorder %s66, 0
    %s69 = sadd.s32 %s68, 1
    %s70 = scalar_select %p67, %s68, %s69
    %p73 = pneg %p67
    %p74 = scmp.eq.s32.totalorder %s9, 1
    %p75 = por %p73, %p74
    %p76 = scmp.ne.s32.totalorder %s68, %s71
    %p77 = scmp.eq.s32.totalorder %s9, 0
    %p78 = por %p76, %p77
    %p79 = scmp.ne.s32.totalorder %s68, %s71
    %p80 = scmp.eq.s32.totalorder %s14, 1
    %p81 = por %p79, %p80
    %p82 = scmp.ne.s32.totalorder %s71, %s72
    %p83 = scmp.eq.s32.totalorder %s14, 0
    %p84 = por %p82, %p83
    %p85 = scmp.ne.s32.totalorder %s71, %s72
    %p86 = scmp.eq.s32.totalorder %s15, 1
    %p87 = por %p85, %p86
    %p89 = scmp.ne.s32.totalorder %s72, %s88
    %p90 = scmp.eq.s32.totalorder %s15, 0
    %p91 = por %p89, %p90
    %s92 = ssub.s32 %s17, %s31
    %p93 = scmp.eq.s32.totalorder %s92, 0
    %s95 = sadd.s32 %s94, 1
    %s96 = scalar_select %p93, %s94, %s95
    %p99 = pneg %p93
    %p100 = scmp.eq.s32.totalorder %s9, 1
    %p101 = por %p99, %p100
    %p102 = scmp.ne.s32.totalorder %s94, %s97
    %p103 = scmp.eq.s32.totalorder %s9, 0
    %p104 = por %p102, %p103
    %p105 = scmp.ne.s32.totalorder %s94, %s97
    %p106 = scmp.eq.s32.totalorder %s14, 1
    %p107 = por %p105, %p106
    %p108 = scmp.ne.s32.totalorder %s97, %s98
    %p109 = scmp.eq.s32.totalorder %s14, 0
    %p110 = por %p108, %p109
    %p111 = scmp.ne.s32.totalorder %s97, %s98
    %p112 = scmp.eq.s32.totalorder %s15, 1
    %p113 = por %p111, %p112
    %p115 = scmp.ne.s32.totalorder %s98, %s114
    %p116 = scmp.eq.s32.totalorder %s15, 0
    %p117 = por %p115, %p116
    %s118 = ssub.s32 %s16, %s35
    %s119 = ssub.s32 %s17, %s31
    %s120 = sor.u32 %s118, %s119
    %p121 = scmp.eq.s32.totalorder %s120, 0
    %s123 = sadd.s32 %s122, 1
    %s124 = scalar_select %p121, %s122, %s123
    %p127 = pneg %p121
    %p128 = scmp.eq.s32.totalorder %s9, 1
    %p129 = por %p127, %p128
    %p130 = scmp.ne.s32.totalorder %s122, %s125
    %p131 = scmp.eq.s32.totalorder %s9, 0
    %p132 = por %p130, %p131
    %p133 = scmp.ne.s32.totalorder %s122, %s125
    %p134 = scmp.eq.s32.totalorder %s14, 1
    %p135 = por %p133, %p134
    %p136 = scmp.ne.s32.totalorder %s125, %s126
    %p137 = scmp.eq.s32.totalorder %s14, 0
    %p138 = por %p136, %p137
    %p139 = scmp.ne.s32.totalorder %s125, %s126
    %p140 = scmp.eq.s32.totalorder %s15, 1
    %p141 = por %p139, %p140
    %p143 = scmp.ne.s32.totalorder %s126, %s142
    %p144 = scmp.eq.s32.totalorder %s15, 0
    %p145 = por %p143, %p144
    %p146 = scmp.le.s32.totalorder 1, %s9
    %p147 = scmp.lt.s32.totalorder %s9, 3
    %p148 = pnand %p146, %p147
    %p149 = pneg %p148
    // Predicated region
    $region9: #{pspnet_forward.13} parent=5 // pred_check
      _
    $region10: #{pspnet_forward.13} parent=5 // pred_check_branch
      %151 = sbr.rel (%p148) target = $region12
    $region11: #{pspnet_forward.13} parent=5 // pred_region
      %s152 = ssub.s32 %s9, 1
      // Predicated region
      $region13: #{pspnet_forward.13} parent=11 // pred_check
        %p153 = pneg %p84
      $region14: #{pspnet_forward.13} parent=11 // pred_check_branch
        %155 = sbr.rel (%p153) target = $region16
      $region15: #{pspnet_forward.13} parent=11 // pred_region
        %s156 = smul.u32 16, %s21
        %p157 = scmp.lt.s32.totalorder %s156, 15
        %s158 = scalar_select %p157, %s156, 15
        %p159 = scmp.lt.s32.totalorder %s20, 0
        %s160 = scalar_select %p159, %s20, 0
        %s161 = sadd.s32 %s160, %s158
        %s162 = smul.addr %s161, 4
        %s163 = scalar_lea.vmem %s1, %s162
        %s164 = smul.u32 16, %s21
      $region16: #{pspnet_forward.13} parent=11 // pred_fallthru
        _
      // Predicated region
      $region17: #{pspnet_forward.13} parent=11 // pred_check
        %p165 = pneg %p110
      $region18: #{pspnet_forward.13} parent=11 // pred_check_branch
        %167 = sbr.rel (%p165) target = $region20
      $region19: #{pspnet_forward.13} parent=11 // pred_region
        %p168 = scmp.lt.s32.totalorder %s20, 0
        %s169 = scalar_select %p168, %s20, 0
        %s170 = scalar_lea.vmem %s2, %s169
      $region20: #{pspnet_forward.13} parent=11 // pred_fallthru
        _
    $region12: #{pspnet_forward.13} parent=5 // pred_fallthru
      _
    %p171 = scmp.lt.s32.totalorder %s9, 2
    // Predicated region
    $region21: #{pspnet_forward.13} parent=5 // pred_check
      %p172 = pneg %p171
    $region22: #{pspnet_forward.13} parent=5 // pred_check_branch
      %174 = sbr.rel (%p172) target = $region24
    $region23: #{pspnet_forward.13} parent=5 // pred_region
      // Predicated region
      $region25: #{pspnet_forward.13} parent=23 // pred_check
        %p175 = pneg %p50
      $region26: #{pspnet_forward.13} parent=23 // pred_check_branch
        %177 = sbr.rel (%p175) target = $region28
      $region27: #{pspnet_forward.13} parent=23 // pred_region
        %s178 = smul.u32 4, %s16
        %p179 = scmp.lt.s32.totalorder %s178, 7
        %s180 = scalar_select %p179, %s178, 7
        %p181 = scmp.lt.s32.totalorder %s18, 0
        %s182 = scalar_select %p181, %s18, 0
        %s183 = sadd.s32 %s182, %s180
        %s184 = smul.addr %s183, 4
        %s185 = scalar_lea.vmem %s0, %s184
        %s186 = smul.u32 4, %s16
      $region28: #{pspnet_forward.13} parent=23 // pred_fallthru
        _
    $region24: #{pspnet_forward.13} parent=5 // pred_fallthru
      _
    %p187 = scmp.le.s32.totalorder 1, %s9
    %p188 = scmp.lt.s32.totalorder %s9, 3
    %p189 = pnand %p187, %p188
    %p190 = pneg %p189
    // Predicated region
    $region29: #{pspnet_forward.13} parent=5 // pred_check
      _
    $region30: #{pspnet_forward.13} parent=5 // pred_check_branch
      %192 = sbr.rel (%p189) target = $region32
    $region31: #{pspnet_forward.13} parent=5 // pred_region
      %s193 = ssub.s32 %s9, 1
      %s194 = smul.u32 4, %s19
      %p195 = scmp.lt.s32.totalorder %s194, 7
      %s196 = scalar_select %p195, %s194, 7
      %p197 = scmp.lt.s32.totalorder %s21, 0
      %s198 = scalar_select %p197, %s21, 0
      %s199 = sadd.s32 %s198, %s196
      %s200 = smul.addr %s199, 4
      %s201 = scalar_lea.vmem %s0, %s200
      %p202 = pneg %p56
      %p203 = pneg %p53
      %s204 = smul.u32 16, %s21
      %p205 = scmp.lt.s32.totalorder %s204, 15
      %s206 = scalar_select %p205, %s204, 15
      %p207 = scmp.lt.s32.totalorder %s20, 0
      %s208 = scalar_select %p207, %s20, 0
      %s209 = sadd.s32 %s208, %s206
      %s210 = smul.addr %s209, 4
      %s211 = scalar_lea.vmem %s1, %s210
      %p212 = pneg %p84
      %p213 = pneg %p81
      %p214 = scmp.lt.s32.totalorder %s20, 0
      %s215 = scalar_select %p214, %s20, 0
      %s216 = scalar_lea.vmem %s2, %s215
      %p217 = pneg %p110
      %p218 = pneg %p107
      %p219 = pneg %p138
      %p220 = pneg %p135
      %s221 = smul.u32 4, %s19
      %p222 = scmp.lt.s32.totalorder %s221, 7
      %s223 = scalar_select %p222, %s221, 7
      %p224 = scmp.lt.s32.totalorder %s20, 0
      %s225 = scalar_select %p224, %s20, 0
      %s226 = sadd.s32 %s225, %s223
      %s227 = smul.addr %s226, 4
      %s228 = scalar_lea.vmem %s3, %s227
      %s229 = smul.u32 4, %s19
      %p230 = scmp.lt.s32.totalorder %s229, 7
      %s231 = scalar_select %p230, %s229, 7
      %p232 = scmp.lt.s32.totalorder %s21, 0
      %s233 = scalar_select %p232, %s21, 0
      %s234 = sadd.s32 %s233, %s231
      %s235 = smul.addr %s234, 4
      %s236 = scalar_lea.vmem %s0, %s235
      %s237 = smul.u32 4, %s19
      %s238 = smul.u32 16, %s21
      %p239 = scmp.lt.s32.totalorder %s238, 15
      %s240 = scalar_select %p239, %s238, 15
      %p241 = scmp.lt.s32.totalorder %s20, 0
      %s242 = scalar_select %p241, %s20, 0
      %s243 = sadd.s32 %s242, %s240
      %s244 = smul.addr %s243, 4
      %s245 = scalar_lea.vmem %s1, %s244
      %s246 = smul.u32 16, %s21
      %p247 = scmp.lt.s32.totalorder %s20, 0
      %s248 = scalar_select %p247, %s20, 0
      %s249 = scalar_lea.vmem %s2, %s248
      %s250 = smul.u32 4, %s19
      %p251 = scmp.lt.s32.totalorder %s250, 7
      %s252 = scalar_select %p251, %s250, 7
      %p253 = scmp.lt.s32.totalorder %s20, 0
      %s254 = scalar_select %p253, %s20, 0
      %s255 = sadd.s32 %s254, %s252
      %s256 = smul.addr %s255, 4
      %s257 = scalar_lea.vmem %s3, %s256
      %s258 = smul.u32 4, %s19
      %p260 = scmp.eq.s32.totalorder %s21, 0
      // Predicated region
      $region33: #{pspnet_forward.13} parent=31 // pred_check
        %p261 = pneg %p260
      $region34: #{pspnet_forward.13} parent=31 // pred_check_branch
        %263 = sbr.rel (%p261) target = $region36
      $region35: #{pspnet_forward.13} parent=31 // pred_region
        %264 = vst [vmem:[#allocation2] sm:$0xff] 0.0
        %265 = vst [vmem:[#allocation2 + $0x8] sm:$0xff] 0.0
        %266 = vst [vmem:[#allocation2 + $0x10] sm:$0xff] 0.0
        %267 = vst [vmem:[#allocation2 + $0x18] sm:$0xff] 0.0
      $region36: #{pspnet_forward.13} parent=31 // pred_fallthru
        _
      %v268 = vld [vmem:[#allocation2] sm:$0xff]
      %v269 = vld [vmem:[#allocation2 + $0x8] sm:$0xff]
      %v270 = vld [vmem:[#allocation2 + $0x10] sm:$0xff]
      %v271 = vld [vmem:[#allocation2 + $0x18] sm:$0xff]
      %v272 = vld [vmem:[%s236] sm:$0xf]
      %v273 = vld [vmem:[%s236 + $0x4] sm:$0xf]
      %v274 = vld [vmem:[%s236 + $0x8] sm:$0xf]
      %v275 = vld [vmem:[%s236 + $0xc] sm:$0xf]
      %v276 = vld [vmem:[%s245] sm:$0xf]
      %v277 = vld [vmem:[%s245 + $0x4] sm:$0xf]
      %v278 = vld [vmem:[%s245 + $0x8] sm:$0xf]
      %v279 = vld [vmem:[%s245 + $0xc] sm:$0xf]
      %v280 = vld [vmem:[%s245 + $0x10] sm:$0xf]
      %v281 = vld [vmem:[%s245 + $0x14] sm:$0xf]
      %v282 = vld [vmem:[%s245 + $0x18] sm:$0xf]
      %v283 = vld [vmem:[%s245 + $0x1c] sm:$0xf]
      %v284 = vld [vmem:[%s245 + $0x20] sm:$0xf]
      %v285 = vld [vmem:[%s245 + $0x24] sm:$0xf]
      %v286 = vld [vmem:[%s245 + $0x28] sm:$0xf]
      %v287 = vld [vmem:[%s245 + $0x2c] sm:$0xf]
      %v288 = vld [vmem:[%s245 + $0x30] sm:$0xf]
      %v289 = vld [vmem:[%s245 + $0x34] sm:$0xf]
      %v290 = vld [vmem:[%s245 + $0x38] sm:$0xf]
      %v291 = vld [vmem:[%s245 + $0x3c] sm:$0xf]
      %v296 = vunpack.c.l.b16 %v272
      %v297 = vunpack.c.l.b16 %v273
      %v298 = vunpack.c.l.b16 %v274
      %v299 = vunpack.c.l.b16 %v275
      %v300 = vpack.c.b16 %v297, %v296
      %v301 = vpack.c.b16 %v299, %v298
      %v320 = vunpack.c.l.b16 %v276
      %v321 = vunpack.c.l.b16 %v277
      %v322 = vunpack.c.l.b16 %v278
      %v323 = vunpack.c.l.b16 %v279
      %v324 = vunpack.c.l.b16 %v280
      %v325 = vunpack.c.l.b16 %v281
      %v326 = vunpack.c.l.b16 %v282
      %v327 = vunpack.c.l.b16 %v283
      %v328 = vunpack.c.l.b16 %v284
      %v329 = vunpack.c.l.b16 %v285
      %v330 = vunpack.c.l.b16 %v286
      %v331 = vunpack.c.l.b16 %v287
      %v332 = vunpack.c.l.b16 %v288
      %v333 = vunpack.c.l.b16 %v289
      %v334 = vunpack.c.l.b16 %v290
      %v335 = vunpack.c.l.b16 %v291
      %v336 = vpack.c.b16 %v321, %v320
      %v337 = vpack.c.b16 %v323, %v322
      %v338 = vpack.c.b16 %v325, %v324
      %v339 = vpack.c.b16 %v327, %v326
      %v340 = vpack.c.b16 %v329, %v328
      %v341 = vpack.c.b16 %v331, %v330
      %v342 = vpack.c.b16 %v333, %v332
      %v343 = vpack.c.b16 %v335, %v334
      %352 = vmatprep.subr.bf16.mxu0 0
      %353 = vmatpush1.bf16.msra.mxu0 %v343
      %354 = vmatprep.subr.bf16.mxu0 0
      %355 = vmatpush1.bf16.msra.mxu0 %v342
      %356 = vmatprep.subr.bf16.mxu0 0
      %357 = vmatpush1.bf16.msra.mxu0 %v341
      %358 = vmatprep.subr.bf16.mxu0 0
      %359 = vmatpush1.bf16.msra.mxu0 %v340
      %360 = vmatprep.subr.bf16.mxu0 0
      %361 = vmatpush1.bf16.msra.mxu0 %v339
      %362 = vmatprep.subr.bf16.mxu0 0
      %363 = vmatpush1.bf16.msra.mxu0 %v338
      %364 = vmatprep.subr.bf16.mxu0 0
      %365 = vmatpush1.bf16.msra.mxu0 %v337
      %366 = vmatprep.subr.bf16.mxu0 0
      %367 = vmatpush1.bf16.msra.mxu0 %v336
      %368 = vmatprep.subr.bf16.mxu0 0
      %369 = vmatpush2.bf16.msra.mxu0 0
      %370 = vmatprep.subr.bf16.mxu0 0
      %371 = vmatpush2.bf16.msra.mxu0 0
      %372 = vmatprep.subr.bf16.mxu0 0
      %373 = vmatpush2.bf16.msra.mxu0 0
      %374 = vmatprep.subr.bf16.mxu0 0
      %375 = vmatpush2.bf16.msra.mxu0 0
      %376 = vmatprep.subr.bf16.mxu0 0
      %377 = vmatpush2.bf16.msra.mxu0 0
      %378 = vmatprep.subr.bf16.mxu0 0
      %379 = vmatpush2.bf16.msra.mxu0 0
      %380 = vmatprep.subr.bf16.mxu0 0
      %381 = vmatpush2.bf16.msra.mxu0 0
      %382 = vmatprep.subr.bf16.mxu0 0
      %383 = vmatpush2.bf16.msra.mxu0 0
      %384 = vmatprep.mubr.bf16.mxu0 0
      %385 = vmatmul.mubr.bf16.gmra.mxu0 %v300
      %v386 = vpop.f32.mrf.mxu0
      %v387 = vadd.f32 0.0, %v386
      %v388 = vpop.f32.mrf.mxu0
      %v389 = vpop.f32.mrf.mxu0
      %v390 = vadd.f32 0.0, %v389
      %v391 = vpop.f32.mrf.mxu0
      %392 = vmatprep.mubr.bf16.mxu0 0
      %393 = vmatmul.mubr.bf16.gmra.mxu0 %v301
      %v394 = vpop.f32.mrf.mxu0
      %v395 = vadd.f32 0.0, %v394
      %v396 = vpop.f32.mrf.mxu0
      %v397 = vpop.f32.mrf.mxu0
      %v398 = vadd.f32 0.0, %v397
      %v399 = vpop.f32.mrf.mxu0
      %400 = vdwg.mxu0
      %v401 = vadd.f32 %v268, %v387
      %v402 = vadd.f32 %v269, %v390
      %v403 = vadd.f32 %v270, %v395
      %v404 = vadd.f32 %v271, %v398
      %405 = vst [vmem:[#allocation2] sm:$0xff] %v401
      %406 = vst [vmem:[#allocation2 + $0x8] sm:$0xff] %v402
      %407 = vst [vmem:[#allocation2 + $0x10] sm:$0xff] %v403
      %408 = vst [vmem:[#allocation2 + $0x18] sm:$0xff] %v404
      // Predicated region
      $region37: #{pspnet_forward.13} parent=31 // pred_check
        %p409 = pneg %p260
      $region38: #{pspnet_forward.13} parent=31 // pred_check_branch
        %411 = sbr.rel (%p409) target = $region40
      $region39: #{pspnet_forward.13} parent=31 // pred_region
        %v412 = vld [vmem:[#allocation2] sm:$0xff]
        %v413 = vld [vmem:[#allocation2 + $0x8] sm:$0xff]
        %v414 = vld [vmem:[#allocation2 + $0x10] sm:$0xff]
        %v415 = vld [vmem:[#allocation2 + $0x18] sm:$0xff]
        %v416 = vld [vmem:[%s249] sm:$0x1]
        %v418 = vlaneseq
        %v419 = vshrl.u32 %v418, 7
        %v420 = vsub.s32 0, %v419
        %v421 = vrot.slane %v416, %v420
        %v423 = vadd.f32 %v412, %v421
        %v424 = vadd.f32 %v413, %v421
        %v425 = vadd.f32 %v414, %v421
        %v426 = vadd.f32 %v415, %v421
        %v427 = vmax.f32 %v423, 0.0
        %v428 = vmax.f32 %v424, 0.0
        %v429 = vmax.f32 %v425, 0.0
        %v430 = vmax.f32 %v426, 0.0
        %v431 = vpack.c.bf16 %v428, %v427
        %v432 = vpack.c.bf16 %v430, %v429
        %v435 = vunpack.c.l.b16 %v431
        %v436 = vunpack.c.h.b16 %v431
        %v437 = vunpack.c.l.b16 %v432
        %v438 = vunpack.c.h.b16 %v432
        %v439 = vpack.c.b16 %v435, %v435
        %v440 = vpack.c.b16 %v436, %v436
        %v441 = vpack.c.b16 %v437, %v437
        %v442 = vpack.c.b16 %v438, %v438
        %447 = vst [vmem:[%s257] sm:$0xf] %v439
        %448 = vst [vmem:[%s257 + $0x4] sm:$0xf] %v440
        %449 = vst [vmem:[%s257 + $0x8] sm:$0xf] %v441
        %450 = vst [vmem:[%s257 + $0xc] sm:$0xf] %v442
      $region40: #{pspnet_forward.13} parent=31 // pred_fallthru
        _
      %s451 = smul.u32 4, %s19
      %p452 = scmp.lt.s32.totalorder %s451, 7
      %s453 = scalar_select %p452, %s451, 7
      %p454 = scmp.lt.s32.totalorder %s20, 0
      %s455 = scalar_select %p454, %s20, 0
      %s456 = sadd.s32 %s455, %s453
      %s457 = smul.addr %s456, 4
      %s458 = scalar_lea.vmem %s3, %s457
      // Predicated region
      $region41: #{pspnet_forward.13} parent=31 // pred_check
        %p459 = pneg %p135
      $region42: #{pspnet_forward.13} parent=31 // pred_check_branch
        %461 = sbr.rel (%p459) target = $region44
      $region43: #{pspnet_forward.13} parent=31 // pred_region
        %s462 = smul.u32 4, %s19
      $region44: #{pspnet_forward.13} parent=31 // pred_fallthru
        _
    $region32: #{pspnet_forward.13} parent=5 // pred_fallthru
      _
    %p463 = scmp.le.s32.totalorder 2, %s9
    // Predicated region
    $region45: #{pspnet_forward.13} parent=5 // pred_check
      %p464 = pneg %p463
    $region46: #{pspnet_forward.13} parent=5 // pred_check_branch
      %466 = sbr.rel (%p464) target = $region48
    $region47: #{pspnet_forward.13} parent=5 // pred_region
      %s467 = ssub.s32 %s9, 2
      // Predicated region
      $region49: #{pspnet_forward.13} parent=47 // pred_check
        %p468 = pneg %p141
      $region50: #{pspnet_forward.13} parent=47 // pred_check_branch
        %470 = sbr.rel (%p468) target = $region52
      $region51: #{pspnet_forward.13} parent=47 // pred_region
        %s471 = smul.u32 4, %s22
        %p472 = scmp.lt.s32.totalorder %s471, 7
        %s473 = scalar_select %p472, %s471, 7
        %p474 = scmp.lt.s32.totalorder %s23, 0
        %s475 = scalar_select %p474, %s23, 0
        %s476 = sadd.s32 %s475, %s473
        %s477 = smul.addr %s476, 4
        %s478 = scalar_lea.vmem %s3, %s477
      $region52: #{pspnet_forward.13} parent=47 // pred_fallthru
        _
    $region48: #{pspnet_forward.13} parent=5 // pred_fallthru
      _
  $region6: #{pspnet_forward.13} parent=0 // loop_footer
    %s13 = sadd.s32 1, %s9
  $region7: #{pspnet_forward.13} parent=0 // loop_footer_branch
    %8 = sbr.rel target = $region3
  $region8: #{pspnet_forward.13} parent=0 // loop_exit
    _

// kernel: pspnet_forward.14
$region0: #{pspnet_forward.14}
  #allocation0 [shape = 'u32[]', space=smem, size = 0x4, offset = 0x4, fixed_abs, tag = 'smem constant byte address 0x4 - core index']
  #allocation1 [shape = 'u32[144,128]{1,0:T(1,128)}', space=vmem, size = 0x12000, scoped, tag = 'internal scratch']
  #allocation2 [shape = 'f32[16,128]{1,0:T(8,128)}', space=vmem, size = 0x2000, scoped, tag = 'scratch operand']
  %s0 = inlined_call_operand.vmem [shape: bf16[32,256], index: 0, kind: input, shape index: {}]
  %s1 = inlined_call_operand.vmem [shape: bf16[256,128], index: 1, kind: input, shape index: {}]
  %s2 = inlined_call_operand.vmem [shape: f32[1,128], index: 2, kind: input, shape index: {}]
  %s3 = inlined_call_operand.vmem [shape: bf16[32,128], index: 3, kind: output, shape index: {}]
  %s4 = sld [smem:[#allocation0]]
  $region53: #{pspnet_forward.14} parent=0
    _
  %s6 = ssub.s32 1, %s4
  %s7 = scalar_select 0, %s6, %s4
  loop: start=0, step=1, limit=4
  $region2: #{pspnet_forward.14} parent=0 // loop_pre_header
    _
  $region3: #{pspnet_forward.14} parent=0 // loop_header
    %s9 = sphi 0, %s13
    %p10 = scmp.ge.s32.totalorder %s9, 4
    %s16 = sphi 0, %s35
    %s17 = sphi 0, %s31
    %s18 = sphi 0, %s27
    %s19 = sphi 0, %s16
    %s20 = sphi 0, %s17
    %s21 = sphi 0, %s18
    %s22 = sphi 0, %s19
    %s23 = sphi 0, %s20
    %s24 = sphi 0, %s21
    %s40 = sphi 0, %s42
    %s43 = sphi 0, %s40
    %s44 = sphi 0, %s43
    %s60 = sphi 0, %s44
    %s68 = sphi 0, %s70
    %s71 = sphi 0, %s68
    %s72 = sphi 0, %s71
    %s88 = sphi 0, %s72
    %s94 = sphi 0, %s96
    %s97 = sphi 0, %s94
    %s98 = sphi 0, %s97
    %s114 = sphi 0, %s98
    %s122 = sphi 0, %s124
    %s125 = sphi 0, %s122
    %s126 = sphi 0, %s125
    %s142 = sphi 0, %s126
  $region4: #{pspnet_forward.14} parent=0 // loop_header_branch
    %12 = sbr.rel (%p10) target = $region8
  $region5: #{pspnet_forward.14} parent=0 // loop_body
    %s14 = ssub.s32 %s9, 1
    %s15 = ssub.s32 %s9, 2
    %s25 = sadd.s32 1, %s18
    %p26 = scmp.ge.s32.totalorder %s25, 1
    %s27 = scalar_select %p26, 0, %s25
    %s28 = sadd.s32 1, %s17
    %s29 = scalar_select %p26, %s28, %s17
    %p30 = scmp.ge.s32.totalorder %s29, 1
    %s31 = scalar_select %p30, 0, %s29
    %s32 = sadd.s32 1, %s16
    %s33 = scalar_select %p30, %s32, %s16
    %p34 = scmp.ge.s32.totalorder %s33, 2
    %s35 = scalar_select %p34, 0, %s33
    %s36 = ssub.s32 %s16, %s35
    %s37 = ssub.s32 %s18, %s27
    %s38 = sor.u32 %s36, %s37
    %p39 = scmp.eq.s32.totalorder %s38, 0
    %s41 = sadd.s32 %s40, 1
    %s42 = scalar_select %p39, %s40, %s41
    %p45 = pneg %p39
    %p46 = scmp.eq.s32.totalorder %s9, 1
    %p47 = por %p45, %p46
    %p48 = scmp.ne.s32.totalorder %s40, %s43
    %p49 = scmp.eq.s32.totalorder %s9, 0
    %p50 = por %p48, %p49
    %p51 = scmp.ne.s32.totalorder %s40, %s43
    %p52 = scmp.eq.s32.totalorder %s14, 1
    %p53 = por %p51, %p52
    %p54 = scmp.ne.s32.totalorder %s43, %s44
    %p55 = scmp.eq.s32.totalorder %s14, 0
    %p56 = por %p54, %p55
    %p57 = scmp.ne.s32.totalorder %s43, %s44
    %p58 = scmp.eq.s32.totalorder %s15, 1
    %p59 = por %p57, %p58
    %p61 = scmp.ne.s32.totalorder %s44, %s60
    %p62 = scmp.eq.s32.totalorder %s15, 0
    %p63 = por %p61, %p62
    %s64 = ssub.s32 %s18, %s27
    %s65 = ssub.s32 %s17, %s31
    %s66 = sor.u32 %s64, %s65
    %p67 = scmp.eq.s32.totalorder %s66, 0
    %s69 = sadd.s32 %s68, 1
    %s70 = scalar_select %p67, %s68, %s69
    %p73 = pneg %p67
    %p74 = scmp.eq.s32.totalorder %s9, 1
    %p75 = por %p73, %p74
    %p76 = scmp.ne.s32.totalorder %s68, %s71
    %p77 = scmp.eq.s32.totalorder %s9, 0
    %p78 = por %p76, %p77
    %p79 = scmp.ne.s32.totalorder %s68, %s71
    %p80 = scmp.eq.s32.totalorder %s14, 1
    %p81 = por %p79, %p80
    %p82 = scmp.ne.s32.totalorder %s71, %s72
    %p83 = scmp.eq.s32.totalorder %s14, 0
    %p84 = por %p82, %p83
    %p85 = scmp.ne.s32.totalorder %s71, %s72
    %p86 = scmp.eq.s32.totalorder %s15, 1
    %p87 = por %p85, %p86
    %p89 = scmp.ne.s32.totalorder %s72, %s88
    %p90 = scmp.eq.s32.totalorder %s15, 0
    %p91 = por %p89, %p90
    %s92 = ssub.s32 %s17, %s31
    %p93 = scmp.eq.s32.totalorder %s92, 0
    %s95 = sadd.s32 %s94, 1
    %s96 = scalar_select %p93, %s94, %s95
    %p99 = pneg %p93
    %p100 = scmp.eq.s32.totalorder %s9, 1
    %p101 = por %p99, %p100
    %p102 = scmp.ne.s32.totalorder %s94, %s97
    %p103 = scmp.eq.s32.totalorder %s9, 0
    %p104 = por %p102, %p103
    %p105 = scmp.ne.s32.totalorder %s94, %s97
    %p106 = scmp.eq.s32.totalorder %s14, 1
    %p107 = por %p105, %p106
    %p108 = scmp.ne.s32.totalorder %s97, %s98
    %p109 = scmp.eq.s32.totalorder %s14, 0
    %p110 = por %p108, %p109
    %p111 = scmp.ne.s32.totalorder %s97, %s98
    %p112 = scmp.eq.s32.totalorder %s15, 1
    %p113 = por %p111, %p112
    %p115 = scmp.ne.s32.totalorder %s98, %s114
    %p116 = scmp.eq.s32.totalorder %s15, 0
    %p117 = por %p115, %p116
    %s118 = ssub.s32 %s16, %s35
    %s119 = ssub.s32 %s17, %s31
    %s120 = sor.u32 %s118, %s119
    %p121 = scmp.eq.s32.totalorder %s120, 0
    %s123 = sadd.s32 %s122, 1
    %s124 = scalar_select %p121, %s122, %s123
    %p127 = pneg %p121
    %p128 = scmp.eq.s32.totalorder %s9, 1
    %p129 = por %p127, %p128
    %p130 = scmp.ne.s32.totalorder %s122, %s125
    %p131 = scmp.eq.s32.totalorder %s9, 0
    %p132 = por %p130, %p131
    %p133 = scmp.ne.s32.totalorder %s122, %s125
    %p134 = scmp.eq.s32.totalorder %s14, 1
    %p135 = por %p133, %p134
    %p136 = scmp.ne.s32.totalorder %s125, %s126
    %p137 = scmp.eq.s32.totalorder %s14, 0
    %p138 = por %p136, %p137
    %p139 = scmp.ne.s32.totalorder %s125, %s126
    %p140 = scmp.eq.s32.totalorder %s15, 1
    %p141 = por %p139, %p140
    %p143 = scmp.ne.s32.totalorder %s126, %s142
    %p144 = scmp.eq.s32.totalorder %s15, 0
    %p145 = por %p143, %p144
    %p146 = scmp.le.s32.totalorder 1, %s9
    %p147 = scmp.lt.s32.totalorder %s9, 3
    %p148 = pnand %p146, %p147
    %p149 = pneg %p148
    // Predicated region
    $region9: #{pspnet_forward.14} parent=5 // pred_check
      _
    $region10: #{pspnet_forward.14} parent=5 // pred_check_branch
      %151 = sbr.rel (%p148) target = $region12
    $region11: #{pspnet_forward.14} parent=5 // pred_region
      %s152 = ssub.s32 %s9, 1
      // Predicated region
      $region13: #{pspnet_forward.14} parent=11 // pred_check
        %p153 = pneg %p84
      $region14: #{pspnet_forward.14} parent=11 // pred_check_branch
        %155 = sbr.rel (%p153) target = $region16
      $region15: #{pspnet_forward.14} parent=11 // pred_region
        %s156 = smul.u32 32, %s21
        %p157 = scmp.lt.s32.totalorder %s156, 31
        %s158 = scalar_select %p157, %s156, 31
        %p159 = scmp.lt.s32.totalorder %s20, 0
        %s160 = scalar_select %p159, %s20, 0
        %s161 = sadd.s32 %s160, %s158
        %s162 = smul.addr %s161, 4
        %s163 = scalar_lea.vmem %s1, %s162
        %s164 = smul.u32 32, %s21
      $region16: #{pspnet_forward.14} parent=11 // pred_fallthru
        _
      // Predicated region
      $region17: #{pspnet_forward.14} parent=11 // pred_check
        %p165 = pneg %p110
      $region18: #{pspnet_forward.14} parent=11 // pred_check_branch
        %167 = sbr.rel (%p165) target = $region20
      $region19: #{pspnet_forward.14} parent=11 // pred_region
        %p168 = scmp.lt.s32.totalorder %s20, 0
        %s169 = scalar_select %p168, %s20, 0
        %s170 = scalar_lea.vmem %s2, %s169
      $region20: #{pspnet_forward.14} parent=11 // pred_fallthru
        _
    $region12: #{pspnet_forward.14} parent=5 // pred_fallthru
      _
    %p171 = scmp.lt.s32.totalorder %s9, 2
    // Predicated region
    $region21: #{pspnet_forward.14} parent=5 // pred_check
      %p172 = pneg %p171
    $region22: #{pspnet_forward.14} parent=5 // pred_check_branch
      %174 = sbr.rel (%p172) target = $region24
    $region23: #{pspnet_forward.14} parent=5 // pred_region
      // Predicated region
      $region25: #{pspnet_forward.14} parent=23 // pred_check
        %p175 = pneg %p50
      $region26: #{pspnet_forward.14} parent=23 // pred_check_branch
        %177 = sbr.rel (%p175) target = $region28
      $region27: #{pspnet_forward.14} parent=23 // pred_region
        %s178 = smul.u32 2, %s16
        %s179 = smul.u32 2, %s18
        %p180 = scmp.lt.s32.totalorder %s178, 3
        %s181 = scalar_select %p180, %s178, 3
        %p182 = scmp.lt.s32.totalorder %s179, 1
        %s183 = scalar_select %p182, %s179, 1
        %s184 = smul.addr %s181, 2
        %s185 = sadd.s32 %s183, %s184
        %s186 = smul.addr %s185, 4
        %s187 = scalar_lea.vmem %s0, %s186
        %s188 = smul.u32 2, %s16
        %s189 = smul.u32 2, %s18
      $region28: #{pspnet_forward.14} parent=23 // pred_fallthru
        _
    $region24: #{pspnet_forward.14} parent=5 // pred_fallthru
      _
    %p190 = scmp.le.s32.totalorder 1, %s9
    %p191 = scmp.lt.s32.totalorder %s9, 3
    %p192 = pnand %p190, %p191
    %p193 = pneg %p192
    // Predicated region
    $region29: #{pspnet_forward.14} parent=5 // pred_check
      _
    $region30: #{pspnet_forward.14} parent=5 // pred_check_branch
      %195 = sbr.rel (%p192) target = $region32
    $region31: #{pspnet_forward.14} parent=5 // pred_region
      %s196 = ssub.s32 %s9, 1
      %s197 = smul.u32 2, %s19
      %s198 = smul.u32 2, %s21
      %p199 = scmp.lt.s32.totalorder %s197, 3
      %s200 = scalar_select %p199, %s197, 3
      %p201 = scmp.lt.s32.totalorder %s198, 1
      %s202 = scalar_select %p201, %s198, 1
      %s203 = smul.addr %s200, 2
      %s204 = sadd.s32 %s202, %s203
      %s205 = smul.addr %s204, 4
      %s206 = scalar_lea.vmem %s0, %s205
      %p207 = pneg %p56
      %p208 = pneg %p53
      %s209 = smul.u32 32, %s21
      %p210 = scmp.lt.s32.totalorder %s209, 31
      %s211 = scalar_select %p210, %s209, 31
      %p212 = scmp.lt.s32.totalorder %s20, 0
      %s213 = scalar_select %p212, %s20, 0
      %s214 = sadd.s32 %s213, %s211
      %s215 = smul.addr %s214, 4
      %s216 = scalar_lea.vmem %s1, %s215
      %p217 = pneg %p84
      %p218 = pneg %p81
      %p219 = scmp.lt.s32.totalorder %s20, 0
      %s220 = scalar_select %p219, %s20, 0
      %s221 = scalar_lea.vmem %s2, %s220
      %p222 = pneg %p110
      %p223 = pneg %p107
      %p224 = pneg %p138
      %p225 = pneg %p135
      %s226 = smul.u32 2, %s19
      %p227 = scmp.lt.s32.totalorder %s226, 3
      %s228 = scalar_select %p227, %s226, 3
      %p229 = scmp.lt.s32.totalorder %s20, 0
      %s230 = scalar_select %p229, %s20, 0
      %s231 = sadd.s32 %s230, %s228
      %s232 = smul.addr %s231, 4
      %s233 = scalar_lea.vmem %s3, %s232
      %s234 = smul.u32 2, %s19
      %s235 = smul.u32 2, %s21
      %p236 = scmp.lt.s32.totalorder %s234, 3
      %s237 = scalar_select %p236, %s234, 3
      %p238 = scmp.lt.s32.totalorder %s235, 1
      %s239 = scalar_select %p238, %s235, 1
      %s240 = smul.addr %s237, 2
      %s241 = sadd.s32 %s239, %s240
      %s242 = smul.addr %s241, 4
      %s243 = scalar_lea.vmem %s0, %s242
      %s244 = smul.u32 2, %s19
      %s245 = smul.u32 2, %s21
      %s246 = smul.u32 32, %s21
      %p247 = scmp.lt.s32.totalorder %s246, 31
      %s248 = scalar_select %p247, %s246, 31
      %p249 = scmp.lt.s32.totalorder %s20, 0
      %s250 = scalar_select %p249, %s20, 0
      %s251 = sadd.s32 %s250, %s248
      %s252 = smul.addr %s251, 4
      %s253 = scalar_lea.vmem %s1, %s252
      %s254 = smul.u32 32, %s21
      %p255 = scmp.lt.s32.totalorder %s20, 0
      %s256 = scalar_select %p255, %s20, 0
      %s257 = scalar_lea.vmem %s2, %s256
      %s258 = smul.u32 2, %s19
      %p259 = scmp.lt.s32.totalorder %s258, 3
      %s260 = scalar_select %p259, %s258, 3
      %p261 = scmp.lt.s32.totalorder %s20, 0
      %s262 = scalar_select %p261, %s20, 0
      %s263 = sadd.s32 %s262, %s260
      %s264 = smul.addr %s263, 4
      %s265 = scalar_lea.vmem %s3, %s264
      %s266 = smul.u32 2, %s19
      %p268 = scmp.eq.s32.totalorder %s21, 0
      // Predicated region
      $region33: #{pspnet_forward.14} parent=31 // pred_check
        %p269 = pneg %p268
      $region34: #{pspnet_forward.14} parent=31 // pred_check_branch
        %271 = sbr.rel (%p269) target = $region36
      $region35: #{pspnet_forward.14} parent=31 // pred_region
        %272 = vst [vmem:[#allocation2] sm:$0xff] 0.0
        %273 = vst [vmem:[#allocation2 + $0x8] sm:$0xff] 0.0
      $region36: #{pspnet_forward.14} parent=31 // pred_fallthru
        _
      %v274 = vld [vmem:[#allocation2] sm:$0xff]
      %v275 = vld [vmem:[#allocation2 + $0x8] sm:$0xff]
      %v276 = vld [vmem:[%s243] sm:$0xff]
      %v277 = vld [vmem:[%s243 + $0x8] sm:$0xff]
      %v278 = vld [vmem:[%s253] sm:$0xf]
      %v279 = vld [vmem:[%s253 + $0x4] sm:$0xf]
      %v280 = vld [vmem:[%s253 + $0x8] sm:$0xf]
      %v281 = vld [vmem:[%s253 + $0xc] sm:$0xf]
      %v282 = vld [vmem:[%s253 + $0x10] sm:$0xf]
      %v283 = vld [vmem:[%s253 + $0x14] sm:$0xf]
      %v284 = vld [vmem:[%s253 + $0x18] sm:$0xf]
      %v285 = vld [vmem:[%s253 + $0x1c] sm:$0xf]
      %v286 = vld [vmem:[%s253 + $0x20] sm:$0xf]
      %v287 = vld [vmem:[%s253 + $0x24] sm:$0xf]
      %v288 = vld [vmem:[%s253 + $0x28] sm:$0xf]
      %v289 = vld [vmem:[%s253 + $0x2c] sm:$0xf]
      %v290 = vld [vmem:[%s253 + $0x30] sm:$0xf]
      %v291 = vld [vmem:[%s253 + $0x34] sm:$0xf]
      %v292 = vld [vmem:[%s253 + $0x38] sm:$0xf]
      %v293 = vld [vmem:[%s253 + $0x3c] sm:$0xf]
      %v294 = vld [vmem:[%s253 + $0x40] sm:$0xf]
      %v295 = vld [vmem:[%s253 + $0x44] sm:$0xf]
      %v296 = vld [vmem:[%s253 + $0x48] sm:$0xf]
      %v297 = vld [vmem:[%s253 + $0x4c] sm:$0xf]
      %v298 = vld [vmem:[%s253 + $0x50] sm:$0xf]
      %v299 = vld [vmem:[%s253 + $0x54] sm:$0xf]
      %v300 = vld [vmem:[%s253 + $0x58] sm:$0xf]
      %v301 = vld [vmem:[%s253 + $0x5c] sm:$0xf]
      %v302 = vld [vmem:[%s253 + $0x60] sm:$0xf]
      %v303 = vld [vmem:[%s253 + $0x64] sm:$0xf]
      %v304 = vld [vmem:[%s253 + $0x68] sm:$0xf]
      %v305 = vld [vmem:[%s253 + $0x6c] sm:$0xf]
      %v306 = vld [vmem:[%s253 + $0x70] sm:$0xf]
      %v307 = vld [vmem:[%s253 + $0x74] sm:$0xf]
      %v308 = vld [vmem:[%s253 + $0x78] sm:$0xf]
      %v309 = vld [vmem:[%s253 + $0x7c] sm:$0xf]
      %v312 = vunpack.c.l.b16 %v276
      %v313 = vunpack.c.h.b16 %v276
      %v314 = vunpack.c.l.b16 %v277
      %v315 = vunpack.c.h.b16 %v277
      %v316 = vpack.c.b16 %v314, %v312
      %v317 = vpack.c.b16 %v315, %v313
      %v352 = vunpack.c.l.b16 %v278
      %v353 = vunpack.c.l.b16 %v279
      %v354 = vunpack.c.l.b16 %v280
      %v355 = vunpack.c.l.b16 %v281
      %v356 = vunpack.c.l.b16 %v282
      %v357 = vunpack.c.l.b16 %v283
      %v358 = vunpack.c.l.b16 %v284
      %v359 = vunpack.c.l.b16 %v285
      %v360 = vunpack.c.l.b16 %v286
      %v361 = vunpack.c.l.b16 %v287
      %v362 = vunpack.c.l.b16 %v288
      %v363 = vunpack.c.l.b16 %v289
      %v364 = vunpack.c.l.b16 %v290
      %v365 = vunpack.c.l.b16 %v291
      %v366 = vunpack.c.l.b16 %v292
      %v367 = vunpack.c.l.b16 %v293
      %v368 = vunpack.c.l.b16 %v294
      %v369 = vunpack.c.l.b16 %v295
      %v370 = vunpack.c.l.b16 %v296
      %v371 = vunpack.c.l.b16 %v297
      %v372 = vunpack.c.l.b16 %v298
      %v373 = vunpack.c.l.b16 %v299
      %v374 = vunpack.c.l.b16 %v300
      %v375 = vunpack.c.l.b16 %v301
      %v376 = vunpack.c.l.b16 %v302
      %v377 = vunpack.c.l.b16 %v303
      %v378 = vunpack.c.l.b16 %v304
      %v379 = vunpack.c.l.b16 %v305
      %v380 = vunpack.c.l.b16 %v306
      %v381 = vunpack.c.l.b16 %v307
      %v382 = vunpack.c.l.b16 %v308
      %v383 = vunpack.c.l.b16 %v309
      %v384 = vpack.c.b16 %v353, %v352
      %v385 = vpack.c.b16 %v355, %v354
      %v386 = vpack.c.b16 %v357, %v356
      %v387 = vpack.c.b16 %v359, %v358
      %v388 = vpack.c.b16 %v361, %v360
      %v389 = vpack.c.b16 %v363, %v362
      %v390 = vpack.c.b16 %v365, %v364
      %v391 = vpack.c.b16 %v367, %v366
      %v392 = vpack.c.b16 %v369, %v368
      %v393 = vpack.c.b16 %v371, %v370
      %v394 = vpack.c.b16 %v373, %v372
      %v395 = vpack.c.b16 %v375, %v374
      %v396 = vpack.c.b16 %v377, %v376
      %v397 = vpack.c.b16 %v379, %v378
      %v398 = vpack.c.b16 %v381, %v380
      %v399 = vpack.c.b16 %v383, %v382
      %416 = vmatprep.subr.bf16.mxu0 0
      %417 = vmatpush1.bf16.msra.mxu0 %v391
      %418 = vmatprep.subr.bf16.mxu0 0
      %419 = vmatpush1.bf16.msra.mxu0 %v390
      %420 = vmatprep.subr.bf16.mxu0 0
      %421 = vmatpush1.bf16.msra.mxu0 %v389
      %422 = vmatprep.subr.bf16.mxu0 0
      %423 = vmatpush1.bf16.msra.mxu0 %v388
      %424 = vmatprep.subr.bf16.mxu0 0
      %425 = vmatpush1.bf16.msra.mxu0 %v387
      %426 = vmatprep.subr.bf16.mxu0 0
      %427 = vmatpush1.bf16.msra.mxu0 %v386
      %428 = vmatprep.subr.bf16.mxu0 0
      %429 = vmatpush1.bf16.msra.mxu0 %v385
      %430 = vmatprep.subr.bf16.mxu0 0
      %431 = vmatpush1.bf16.msra.mxu0 %v384
      %432 = vmatprep.subr.bf16.mxu0 0
      %433 = vmatpush2.bf16.msra.mxu0 %v399
      %434 = vmatprep.subr.bf16.mxu0 0
      %435 = vmatpush2.bf16.msra.mxu0 %v398
      %436 = vmatprep.subr.bf16.mxu0 0
      %437 = vmatpush2.bf16.msra.mxu0 %v397
      %438 = vmatprep.subr.bf16.mxu0 0
      %439 = vmatpush2.bf16.msra.mxu0 %v396
      %440 = vmatprep.subr.bf16.mxu0 0
      %441 = vmatpush2.bf16.msra.mxu0 %v395
      %442 = vmatprep.subr.bf16.mxu0 0
      %443 = vmatpush2.bf16.msra.mxu0 %v394
      %444 = vmatprep.subr.bf16.mxu0 0
      %445 = vmatpush2.bf16.msra.mxu0 %v393
      %446 = vmatprep.subr.bf16.mxu0 0
      %447 = vmatpush2.bf16.msra.mxu0 %v392
      %448 = vmatprep.mubr.bf16.mxu0 %v317
      %449 = vmatmul.mubr.bf16.gmra.mxu0 %v316
      %v450 = vpop.f32.mrf.mxu0
      %v451 = vadd.f32 0.0, %v450
      %v452 = vpop.f32.mrf.mxu0
      %v453 = vpop.f32.mrf.mxu0
      %v454 = vadd.f32 0.0, %v453
      %v455 = vpop.f32.mrf.mxu0
      %456 = vdwg.mxu0
      %v457 = vadd.f32 %v274, %v451
      %v458 = vadd.f32 %v275, %v454
      %459 = vst [vmem:[#allocation2] sm:$0xff] %v457
      %460 = vst [vmem:[#allocation2 + $0x8] sm:$0xff] %v458
      // Predicated region
      $region37: #{pspnet_forward.14} parent=31 // pred_check
        %p461 = pneg %p268
      $region38: #{pspnet_forward.14} parent=31 // pred_check_branch
        %463 = sbr.rel (%p461) target = $region40
      $region39: #{pspnet_forward.14} parent=31 // pred_region
        %v464 = vld [vmem:[#allocation2] sm:$0xff]
        %v465 = vld [vmem:[#allocation2 + $0x8] sm:$0xff]
        %v466 = vld [vmem:[%s257] sm:$0x1]
        %v468 = vlaneseq
        %v469 = vshrl.u32 %v468, 7
        %v470 = vsub.s32 0, %v469
        %v471 = vrot.slane %v466, %v470
        %v473 = vadd.f32 %v464, %v471
        %v474 = vadd.f32 %v465, %v471
        %v475 = vmax.f32 %v473, 0.0
        %v476 = vmax.f32 %v474, 0.0
        %v477 = vpack.c.bf16 %v476, %v475
        %v479 = vunpack.c.l.b16 %v477
        %v480 = vunpack.c.h.b16 %v477
        %v481 = vpack.c.b16 %v479, %v479
        %v482 = vpack.c.b16 %v480, %v480
        %485 = vst [vmem:[%s265] sm:$0xf] %v481
        %486 = vst [vmem:[%s265 + $0x4] sm:$0xf] %v482
      $region40: #{pspnet_forward.14} parent=31 // pred_fallthru
        _
      %s487 = smul.u32 2, %s19
      %p488 = scmp.lt.s32.totalorder %s487, 3
      %s489 = scalar_select %p488, %s487, 3
      %p490 = scmp.lt.s32.totalorder %s20, 0
      %s491 = scalar_select %p490, %s20, 0
      %s492 = sadd.s32 %s491, %s489
      %s493 = smul.addr %s492, 4
      %s494 = scalar_lea.vmem %s3, %s493
      // Predicated region
      $region41: #{pspnet_forward.14} parent=31 // pred_check
        %p495 = pneg %p135
      $region42: #{pspnet_forward.14} parent=31 // pred_check_branch
        %497 = sbr.rel (%p495) target = $region44
      $region43: #{pspnet_forward.14} parent=31 // pred_region
        %s498 = smul.u32 2, %s19
      $region44: #{pspnet_forward.14} parent=31 // pred_fallthru
        _
    $region32: #{pspnet_forward.14} parent=5 // pred_fallthru
      _
    %p499 = scmp.le.s32.totalorder 2, %s9
    // Predicated region
    $region45: #{pspnet_forward.14} parent=5 // pred_check
      %p500 = pneg %p499
    $region46: #{pspnet_forward.14} parent=5 // pred_check_branch
      %502 = sbr.rel (%p500) target = $region48
    $region47: #{pspnet_forward.14} parent=5 // pred_region
      %s503 = ssub.s32 %s9, 2
      // Predicated region
      $region49: #{pspnet_forward.14} parent=47 // pred_check
        %p504 = pneg %p141
      $region50: #{pspnet_forward.14} parent=47 // pred_check_branch
        %506 = sbr.rel (%p504) target = $region52
      $region51: #{pspnet_forward.14} parent=47 // pred_region
        %s507 = smul.u32 2, %s22
        %p508 = scmp.lt.s32.totalorder %s507, 3
        %s509 = scalar_select %p508, %s507, 3
        %p510 = scmp.lt.s32.totalorder %s23, 0
        %s511 = scalar_select %p510, %s23, 0
        %s512 = sadd.s32 %s511, %s509
        %s513 = smul.addr %s512, 4
        %s514 = scalar_lea.vmem %s3, %s513
      $region52: #{pspnet_forward.14} parent=47 // pred_fallthru
        _
    $region48: #{pspnet_forward.14} parent=5 // pred_fallthru
      _
  $region6: #{pspnet_forward.14} parent=0 // loop_footer
    %s13 = sadd.s32 1, %s9
  $region7: #{pspnet_forward.14} parent=0 // loop_footer_branch
    %8 = sbr.rel target = $region3
  $region8: #{pspnet_forward.14} parent=0 // loop_exit
    _

// kernel: pspnet_forward.15
$region0: #{pspnet_forward.15}
  #allocation0 [shape = 'u32[]', space=smem, size = 0x4, offset = 0x4, fixed_abs, tag = 'smem constant byte address 0x4 - core index']
  #allocation1 [shape = 'u32[144,128]{1,0:T(1,128)}', space=vmem, size = 0x12000, scoped, tag = 'internal scratch']
  #allocation2 [shape = 'f32[16,128]{1,0:T(8,128)}', space=vmem, size = 0x2000, scoped, tag = 'scratch operand']
  %s0 = inlined_call_operand.vmem [shape: bf16[32,384], index: 0, kind: input, shape index: {}]
  %s1 = inlined_call_operand.vmem [shape: bf16[384,128], index: 1, kind: input, shape index: {}]
  %s2 = inlined_call_operand.vmem [shape: f32[1,128], index: 2, kind: input, shape index: {}]
  %s3 = inlined_call_operand.vmem [shape: bf16[32,128], index: 3, kind: output, shape index: {}]
  %s4 = sld [smem:[#allocation0]]
  $region53: #{pspnet_forward.15} parent=0
    _
  %s6 = ssub.s32 1, %s4
  %s7 = scalar_select 0, %s6, %s4
  loop: start=0, step=1, limit=4
  $region2: #{pspnet_forward.15} parent=0 // loop_pre_header
    _
  $region3: #{pspnet_forward.15} parent=0 // loop_header
    %s9 = sphi 0, %s13
    %p10 = scmp.ge.s32.totalorder %s9, 4
    %s16 = sphi 0, %s35
    %s17 = sphi 0, %s31
    %s18 = sphi 0, %s27
    %s19 = sphi 0, %s16
    %s20 = sphi 0, %s17
    %s21 = sphi 0, %s18
    %s22 = sphi 0, %s19
    %s23 = sphi 0, %s20
    %s24 = sphi 0, %s21
    %s40 = sphi 0, %s42
    %s43 = sphi 0, %s40
    %s44 = sphi 0, %s43
    %s60 = sphi 0, %s44
    %s68 = sphi 0, %s70
    %s71 = sphi 0, %s68
    %s72 = sphi 0, %s71
    %s88 = sphi 0, %s72
    %s94 = sphi 0, %s96
    %s97 = sphi 0, %s94
    %s98 = sphi 0, %s97
    %s114 = sphi 0, %s98
    %s122 = sphi 0, %s124
    %s125 = sphi 0, %s122
    %s126 = sphi 0, %s125
    %s142 = sphi 0, %s126
  $region4: #{pspnet_forward.15} parent=0 // loop_header_branch
    %12 = sbr.rel (%p10) target = $region8
  $region5: #{pspnet_forward.15} parent=0 // loop_body
    %s14 = ssub.s32 %s9, 1
    %s15 = ssub.s32 %s9, 2
    %s25 = sadd.s32 1, %s18
    %p26 = scmp.ge.s32.totalorder %s25, 1
    %s27 = scalar_select %p26, 0, %s25
    %s28 = sadd.s32 1, %s17
    %s29 = scalar_select %p26, %s28, %s17
    %p30 = scmp.ge.s32.totalorder %s29, 1
    %s31 = scalar_select %p30, 0, %s29
    %s32 = sadd.s32 1, %s16
    %s33 = scalar_select %p30, %s32, %s16
    %p34 = scmp.ge.s32.totalorder %s33, 2
    %s35 = scalar_select %p34, 0, %s33
    %s36 = ssub.s32 %s16, %s35
    %s37 = ssub.s32 %s18, %s27
    %s38 = sor.u32 %s36, %s37
    %p39 = scmp.eq.s32.totalorder %s38, 0
    %s41 = sadd.s32 %s40, 1
    %s42 = scalar_select %p39, %s40, %s41
    %p45 = pneg %p39
    %p46 = scmp.eq.s32.totalorder %s9, 1
    %p47 = por %p45, %p46
    %p48 = scmp.ne.s32.totalorder %s40, %s43
    %p49 = scmp.eq.s32.totalorder %s9, 0
    %p50 = por %p48, %p49
    %p51 = scmp.ne.s32.totalorder %s40, %s43
    %p52 = scmp.eq.s32.totalorder %s14, 1
    %p53 = por %p51, %p52
    %p54 = scmp.ne.s32.totalorder %s43, %s44
    %p55 = scmp.eq.s32.totalorder %s14, 0
    %p56 = por %p54, %p55
    %p57 = scmp.ne.s32.totalorder %s43, %s44
    %p58 = scmp.eq.s32.totalorder %s15, 1
    %p59 = por %p57, %p58
    %p61 = scmp.ne.s32.totalorder %s44, %s60
    %p62 = scmp.eq.s32.totalorder %s15, 0
    %p63 = por %p61, %p62
    %s64 = ssub.s32 %s18, %s27
    %s65 = ssub.s32 %s17, %s31
    %s66 = sor.u32 %s64, %s65
    %p67 = scmp.eq.s32.totalorder %s66, 0
    %s69 = sadd.s32 %s68, 1
    %s70 = scalar_select %p67, %s68, %s69
    %p73 = pneg %p67
    %p74 = scmp.eq.s32.totalorder %s9, 1
    %p75 = por %p73, %p74
    %p76 = scmp.ne.s32.totalorder %s68, %s71
    %p77 = scmp.eq.s32.totalorder %s9, 0
    %p78 = por %p76, %p77
    %p79 = scmp.ne.s32.totalorder %s68, %s71
    %p80 = scmp.eq.s32.totalorder %s14, 1
    %p81 = por %p79, %p80
    %p82 = scmp.ne.s32.totalorder %s71, %s72
    %p83 = scmp.eq.s32.totalorder %s14, 0
    %p84 = por %p82, %p83
    %p85 = scmp.ne.s32.totalorder %s71, %s72
    %p86 = scmp.eq.s32.totalorder %s15, 1
    %p87 = por %p85, %p86
    %p89 = scmp.ne.s32.totalorder %s72, %s88
    %p90 = scmp.eq.s32.totalorder %s15, 0
    %p91 = por %p89, %p90
    %s92 = ssub.s32 %s17, %s31
    %p93 = scmp.eq.s32.totalorder %s92, 0
    %s95 = sadd.s32 %s94, 1
    %s96 = scalar_select %p93, %s94, %s95
    %p99 = pneg %p93
    %p100 = scmp.eq.s32.totalorder %s9, 1
    %p101 = por %p99, %p100
    %p102 = scmp.ne.s32.totalorder %s94, %s97
    %p103 = scmp.eq.s32.totalorder %s9, 0
    %p104 = por %p102, %p103
    %p105 = scmp.ne.s32.totalorder %s94, %s97
    %p106 = scmp.eq.s32.totalorder %s14, 1
    %p107 = por %p105, %p106
    %p108 = scmp.ne.s32.totalorder %s97, %s98
    %p109 = scmp.eq.s32.totalorder %s14, 0
    %p110 = por %p108, %p109
    %p111 = scmp.ne.s32.totalorder %s97, %s98
    %p112 = scmp.eq.s32.totalorder %s15, 1
    %p113 = por %p111, %p112
    %p115 = scmp.ne.s32.totalorder %s98, %s114
    %p116 = scmp.eq.s32.totalorder %s15, 0
    %p117 = por %p115, %p116
    %s118 = ssub.s32 %s16, %s35
    %s119 = ssub.s32 %s17, %s31
    %s120 = sor.u32 %s118, %s119
    %p121 = scmp.eq.s32.totalorder %s120, 0
    %s123 = sadd.s32 %s122, 1
    %s124 = scalar_select %p121, %s122, %s123
    %p127 = pneg %p121
    %p128 = scmp.eq.s32.totalorder %s9, 1
    %p129 = por %p127, %p128
    %p130 = scmp.ne.s32.totalorder %s122, %s125
    %p131 = scmp.eq.s32.totalorder %s9, 0
    %p132 = por %p130, %p131
    %p133 = scmp.ne.s32.totalorder %s122, %s125
    %p134 = scmp.eq.s32.totalorder %s14, 1
    %p135 = por %p133, %p134
    %p136 = scmp.ne.s32.totalorder %s125, %s126
    %p137 = scmp.eq.s32.totalorder %s14, 0
    %p138 = por %p136, %p137
    %p139 = scmp.ne.s32.totalorder %s125, %s126
    %p140 = scmp.eq.s32.totalorder %s15, 1
    %p141 = por %p139, %p140
    %p143 = scmp.ne.s32.totalorder %s126, %s142
    %p144 = scmp.eq.s32.totalorder %s15, 0
    %p145 = por %p143, %p144
    %p146 = scmp.le.s32.totalorder 1, %s9
    %p147 = scmp.lt.s32.totalorder %s9, 3
    %p148 = pnand %p146, %p147
    %p149 = pneg %p148
    // Predicated region
    $region9: #{pspnet_forward.15} parent=5 // pred_check
      _
    $region10: #{pspnet_forward.15} parent=5 // pred_check_branch
      %151 = sbr.rel (%p148) target = $region12
    $region11: #{pspnet_forward.15} parent=5 // pred_region
      %s152 = ssub.s32 %s9, 1
      // Predicated region
      $region13: #{pspnet_forward.15} parent=11 // pred_check
        %p153 = pneg %p84
      $region14: #{pspnet_forward.15} parent=11 // pred_check_branch
        %155 = sbr.rel (%p153) target = $region16
      $region15: #{pspnet_forward.15} parent=11 // pred_region
        %s156 = smul.u32 48, %s21
        %p157 = scmp.lt.s32.totalorder %s156, 47
        %s158 = scalar_select %p157, %s156, 47
        %p159 = scmp.lt.s32.totalorder %s20, 0
        %s160 = scalar_select %p159, %s20, 0
        %s161 = sadd.s32 %s160, %s158
        %s162 = smul.addr %s161, 4
        %s163 = scalar_lea.vmem %s1, %s162
        %s164 = smul.u32 48, %s21
      $region16: #{pspnet_forward.15} parent=11 // pred_fallthru
        _
      // Predicated region
      $region17: #{pspnet_forward.15} parent=11 // pred_check
        %p165 = pneg %p110
      $region18: #{pspnet_forward.15} parent=11 // pred_check_branch
        %167 = sbr.rel (%p165) target = $region20
      $region19: #{pspnet_forward.15} parent=11 // pred_region
        %p168 = scmp.lt.s32.totalorder %s20, 0
        %s169 = scalar_select %p168, %s20, 0
        %s170 = scalar_lea.vmem %s2, %s169
      $region20: #{pspnet_forward.15} parent=11 // pred_fallthru
        _
    $region12: #{pspnet_forward.15} parent=5 // pred_fallthru
      _
    %p171 = scmp.lt.s32.totalorder %s9, 2
    // Predicated region
    $region21: #{pspnet_forward.15} parent=5 // pred_check
      %p172 = pneg %p171
    $region22: #{pspnet_forward.15} parent=5 // pred_check_branch
      %174 = sbr.rel (%p172) target = $region24
    $region23: #{pspnet_forward.15} parent=5 // pred_region
      // Predicated region
      $region25: #{pspnet_forward.15} parent=23 // pred_check
        %p175 = pneg %p50
      $region26: #{pspnet_forward.15} parent=23 // pred_check_branch
        %177 = sbr.rel (%p175) target = $region28
      $region27: #{pspnet_forward.15} parent=23 // pred_region
        %s178 = smul.u32 2, %s16
        %s179 = smul.u32 3, %s18
        %p180 = scmp.lt.s32.totalorder %s178, 3
        %s181 = scalar_select %p180, %s178, 3
        %p182 = scmp.lt.s32.totalorder %s179, 2
        %s183 = scalar_select %p182, %s179, 2
        %s184 = smul.addr %s181, 3
        %s185 = sadd.s32 %s183, %s184
        %s186 = smul.addr %s185, 4
        %s187 = scalar_lea.vmem %s0, %s186
        %s188 = smul.u32 2, %s16
        %s189 = smul.u32 3, %s18
      $region28: #{pspnet_forward.15} parent=23 // pred_fallthru
        _
    $region24: #{pspnet_forward.15} parent=5 // pred_fallthru
      _
    %p190 = scmp.le.s32.totalorder 1, %s9
    %p191 = scmp.lt.s32.totalorder %s9, 3
    %p192 = pnand %p190, %p191
    %p193 = pneg %p192
    // Predicated region
    $region29: #{pspnet_forward.15} parent=5 // pred_check
      _
    $region30: #{pspnet_forward.15} parent=5 // pred_check_branch
      %195 = sbr.rel (%p192) target = $region32
    $region31: #{pspnet_forward.15} parent=5 // pred_region
      %s196 = ssub.s32 %s9, 1
      %s197 = smul.u32 2, %s19
      %s198 = smul.u32 3, %s21
      %p199 = scmp.lt.s32.totalorder %s197, 3
      %s200 = scalar_select %p199, %s197, 3
      %p201 = scmp.lt.s32.totalorder %s198, 2
      %s202 = scalar_select %p201, %s198, 2
      %s203 = smul.addr %s200, 3
      %s204 = sadd.s32 %s202, %s203
      %s205 = smul.addr %s204, 4
      %s206 = scalar_lea.vmem %s0, %s205
      %p207 = pneg %p56
      %p208 = pneg %p53
      %s209 = smul.u32 48, %s21
      %p210 = scmp.lt.s32.totalorder %s209, 47
      %s211 = scalar_select %p210, %s209, 47
      %p212 = scmp.lt.s32.totalorder %s20, 0
      %s213 = scalar_select %p212, %s20, 0
      %s214 = sadd.s32 %s213, %s211
      %s215 = smul.addr %s214, 4
      %s216 = scalar_lea.vmem %s1, %s215
      %p217 = pneg %p84
      %p218 = pneg %p81
      %p219 = scmp.lt.s32.totalorder %s20, 0
      %s220 = scalar_select %p219, %s20, 0
      %s221 = scalar_lea.vmem %s2, %s220
      %p222 = pneg %p110
      %p223 = pneg %p107
      %p224 = pneg %p138
      %p225 = pneg %p135
      %s226 = smul.u32 2, %s19
      %p227 = scmp.lt.s32.totalorder %s226, 3
      %s228 = scalar_select %p227, %s226, 3
      %p229 = scmp.lt.s32.totalorder %s20, 0
      %s230 = scalar_select %p229, %s20, 0
      %s231 = sadd.s32 %s230, %s228
      %s232 = smul.addr %s231, 4
      %s233 = scalar_lea.vmem %s3, %s232
      %s234 = smul.u32 2, %s19
      %s235 = smul.u32 3, %s21
      %p236 = scmp.lt.s32.totalorder %s234, 3
      %s237 = scalar_select %p236, %s234, 3
      %p238 = scmp.lt.s32.totalorder %s235, 2
      %s239 = scalar_select %p238, %s235, 2
      %s240 = smul.addr %s237, 3
      %s241 = sadd.s32 %s239, %s240
      %s242 = smul.addr %s241, 4
      %s243 = scalar_lea.vmem %s0, %s242
      %s244 = smul.u32 2, %s19
      %s245 = smul.u32 3, %s21
      %s246 = smul.u32 48, %s21
      %p247 = scmp.lt.s32.totalorder %s246, 47
      %s248 = scalar_select %p247, %s246, 47
      %p249 = scmp.lt.s32.totalorder %s20, 0
      %s250 = scalar_select %p249, %s20, 0
      %s251 = sadd.s32 %s250, %s248
      %s252 = smul.addr %s251, 4
      %s253 = scalar_lea.vmem %s1, %s252
      %s254 = smul.u32 48, %s21
      %p255 = scmp.lt.s32.totalorder %s20, 0
      %s256 = scalar_select %p255, %s20, 0
      %s257 = scalar_lea.vmem %s2, %s256
      %s258 = smul.u32 2, %s19
      %p259 = scmp.lt.s32.totalorder %s258, 3
      %s260 = scalar_select %p259, %s258, 3
      %p261 = scmp.lt.s32.totalorder %s20, 0
      %s262 = scalar_select %p261, %s20, 0
      %s263 = sadd.s32 %s262, %s260
      %s264 = smul.addr %s263, 4
      %s265 = scalar_lea.vmem %s3, %s264
      %s266 = smul.u32 2, %s19
      %p268 = scmp.eq.s32.totalorder %s21, 0
      // Predicated region
      $region33: #{pspnet_forward.15} parent=31 // pred_check
        %p269 = pneg %p268
      $region34: #{pspnet_forward.15} parent=31 // pred_check_branch
        %271 = sbr.rel (%p269) target = $region36
      $region35: #{pspnet_forward.15} parent=31 // pred_region
        %272 = vst [vmem:[#allocation2] sm:$0xff] 0.0
        %273 = vst [vmem:[#allocation2 + $0x8] sm:$0xff] 0.0
      $region36: #{pspnet_forward.15} parent=31 // pred_fallthru
        _
      %v274 = vld [vmem:[#allocation2] sm:$0xff]
      %v275 = vld [vmem:[#allocation2 + $0x8] sm:$0xff]
      %v276 = vld [vmem:[%s243] sm:$0xff]
      %v277 = vld [vmem:[%s243 + $0x8] sm:$0xf]
      %v278 = vld [vmem:[%s243 + $0xc] sm:$0xff]
      %v279 = vld [vmem:[%s243 + $0x14] sm:$0xf]
      %v280 = vld [vmem:[%s253] sm:$0xf]
      %v281 = vld [vmem:[%s253 + $0x4] sm:$0xf]
      %v282 = vld [vmem:[%s253 + $0x8] sm:$0xf]
      %v283 = vld [vmem:[%s253 + $0xc] sm:$0xf]
      %v284 = vld [vmem:[%s253 + $0x10] sm:$0xf]
      %v285 = vld [vmem:[%s253 + $0x14] sm:$0xf]
      %v286 = vld [vmem:[%s253 + $0x18] sm:$0xf]
      %v287 = vld [vmem:[%s253 + $0x1c] sm:$0xf]
      %v288 = vld [vmem:[%s253 + $0x20] sm:$0xf]
      %v289 = vld [vmem:[%s253 + $0x24] sm:$0xf]
      %v290 = vld [vmem:[%s253 + $0x28] sm:$0xf]
      %v291 = vld [vmem:[%s253 + $0x2c] sm:$0xf]
      %v292 = vld [vmem:[%s253 + $0x30] sm:$0xf]
      %v293 = vld [vmem:[%s253 + $0x34] sm:$0xf]
      %v294 = vld [vmem:[%s253 + $0x38] sm:$0xf]
      %v295 = vld [vmem:[%s253 + $0x3c] sm:$0xf]
      %v296 = vld [vmem:[%s253 + $0x40] sm:$0xf]
      %v297 = vld [vmem:[%s253 + $0x44] sm:$0xf]
      %v298 = vld [vmem:[%s253 + $0x48] sm:$0xf]
      %v299 = vld [vmem:[%s253 + $0x4c] sm:$0xf]
      %v300 = vld [vmem:[%s253 + $0x50] sm:$0xf]
      %v301 = vld [vmem:[%s253 + $0x54] sm:$0xf]
      %v302 = vld [vmem:[%s253 + $0x58] sm:$0xf]
      %v303 = vld [vmem:[%s253 + $0x5c] sm:$0xf]
      %v304 = vld [vmem:[%s253 + $0x60] sm:$0xf]
      %v305 = vld [vmem:[%s253 + $0x64] sm:$0xf]
      %v306 = vld [vmem:[%s253 + $0x68] sm:$0xf]
      %v307 = vld [vmem:[%s253 + $0x6c] sm:$0xf]
      %v308 = vld [vmem:[%s253 + $0x70] sm:$0xf]
      %v309 = vld [vmem:[%s253 + $0x74] sm:$0xf]
      %v310 = vld [vmem:[%s253 + $0x78] sm:$0xf]
      %v311 = vld [vmem:[%s253 + $0x7c] sm:$0xf]
      %v312 = vld [vmem:[%s253 + $0x80] sm:$0xf]
      %v313 = vld [vmem:[%s253 + $0x84] sm:$0xf]
      %v314 = vld [vmem:[%s253 + $0x88] sm:$0xf]
      %v315 = vld [vmem:[%s253 + $0x8c] sm:$0xf]
      %v316 = vld [vmem:[%s253 + $0x90] sm:$0xf]
      %v317 = vld [vmem:[%s253 + $0x94] sm:$0xf]
      %v318 = vld [vmem:[%s253 + $0x98] sm:$0xf]
      %v319 = vld [vmem:[%s253 + $0x9c] sm:$0xf]
      %v320 = vld [vmem:[%s253 + $0xa0] sm:$0xf]
      %v321 = vld [vmem:[%s253 + $0xa4] sm:$0xf]
      %v322 = vld [vmem:[%s253 + $0xa8] sm:$0xf]
      %v323 = vld [vmem:[%s253 + $0xac] sm:$0xf]
      %v324 = vld [vmem:[%s253 + $0xb0] sm:$0xf]
      %v325 = vld [vmem:[%s253 + $0xb4] sm:$0xf]
      %v326 = vld [vmem:[%s253 + $0xb8] sm:$0xf]
      %v327 = vld [vmem:[%s253 + $0xbc] sm:$0xf]
      %v332 = vunpack.c.l.b16 %v276
      %v333 = vunpack.c.h.b16 %v276
      %v334 = vunpack.c.l.b16 %v277
      %v335 = vunpack.c.l.b16 %v278
      %v336 = vunpack.c.h.b16 %v278
      %v337 = vunpack.c.l.b16 %v279
      %v338 = vpack.c.b16 %v335, %v332
      %v339 = vpack.c.b16 %v336, %v333
      %v340 = vpack.c.b16 %v337, %v334
      %v392 = vunpack.c.l.b16 %v280
      %v393 = vunpack.c.l.b16 %v281
      %v394 = vunpack.c.l.b16 %v282
      %v395 = vunpack.c.l.b16 %v283
      %v396 = vunpack.c.l.b16 %v284
      %v397 = vunpack.c.l.b16 %v285
      %v398 = vunpack.c.l.b16 %v286
      %v399 = vunpack.c.l.b16 %v287
      %v400 = vunpack.c.l.b16 %v288
      %v401 = vunpack.c.l.b16 %v289
      %v402 = vunpack.c.l.b16 %v290
      %v403 = vunpack.c.l.b16 %v291
      %v404 = vunpack.c.l.b16 %v292
      %v405 = vunpack.c.l.b16 %v293
      %v406 = vunpack.c.l.b16 %v294
      %v407 = vunpack.c.l.b16 %v295
      %v408 = vunpack.c.l.b16 %v296
      %v409 = vunpack.c.l.b16 %v297
      %v410 = vunpack.c.l.b16 %v298
      %v411 = vunpack.c.l.b16 %v299
      %v412 = vunpack.c.l.b16 %v300
      %v413 = vunpack.c.l.b16 %v301
      %v414 = vunpack.c.l.b16 %v302
      %v415 = vunpack.c.l.b16 %v303
      %v416 = vunpack.c.l.b16 %v304
      %v417 = vunpack.c.l.b16 %v305
      %v418 = vunpack.c.l.b16 %v306
      %v419 = vunpack.c.l.b16 %v307
      %v420 = vunpack.c.l.b16 %v308
      %v421 = vunpack.c.l.b16 %v309
      %v422 = vunpack.c.l.b16 %v310
      %v423 = vunpack.c.l.b16 %v311
      %v424 = vunpack.c.l.b16 %v312
      %v425 = vunpack.c.l.b16 %v313
      %v426 = vunpack.c.l.b16 %v314
      %v427 = vunpack.c.l.b16 %v315
      %v428 = vunpack.c.l.b16 %v316
      %v429 = vunpack.c.l.b16 %v317
      %v430 = vunpack.c.l.b16 %v318
      %v431 = vunpack.c.l.b16 %v319
      %v432 = vunpack.c.l.b16 %v320
      %v433 = vunpack.c.l.b16 %v321
      %v434 = vunpack.c.l.b16 %v322
      %v435 = vunpack.c.l.b16 %v323
      %v436 = vunpack.c.l.b16 %v324
      %v437 = vunpack.c.l.b16 %v325
      %v438 = vunpack.c.l.b16 %v326
      %v439 = vunpack.c.l.b16 %v327
      %v440 = vpack.c.b16 %v393, %v392
      %v441 = vpack.c.b16 %v395, %v394
      %v442 = vpack.c.b16 %v397, %v396
      %v443 = vpack.c.b16 %v399, %v398
      %v444 = vpack.c.b16 %v401, %v400
      %v445 = vpack.c.b16 %v403, %v402
      %v446 = vpack.c.b16 %v405, %v404
      %v447 = vpack.c.b16 %v407, %v406
      %v448 = vpack.c.b16 %v409, %v408
      %v449 = vpack.c.b16 %v411, %v410
      %v450 = vpack.c.b16 %v413, %v412
      %v451 = vpack.c.b16 %v415, %v414
      %v452 = vpack.c.b16 %v417, %v416
      %v453 = vpack.c.b16 %v419, %v418
      %v454 = vpack.c.b16 %v421, %v420
      %v455 = vpack.c.b16 %v423, %v422
      %v456 = vpack.c.b16 %v425, %v424
      %v457 = vpack.c.b16 %v427, %v426
      %v458 = vpack.c.b16 %v429, %v428
      %v459 = vpack.c.b16 %v431, %v430
      %v460 = vpack.c.b16 %v433, %v432
      %v461 = vpack.c.b16 %v435, %v434
      %v462 = vpack.c.b16 %v437, %v436
      %v463 = vpack.c.b16 %v439, %v438
      %488 = vmatprep.subr.bf16.mxu0 0
      %489 = vmatpush1.bf16.msra.mxu0 %v447
      %490 = vmatprep.subr.bf16.mxu0 0
      %491 = vmatpush1.bf16.msra.mxu0 %v446
      %492 = vmatprep.subr.bf16.mxu0 0
      %493 = vmatpush1.bf16.msra.mxu0 %v445
      %494 = vmatprep.subr.bf16.mxu0 0
      %495 = vmatpush1.bf16.msra.mxu0 %v444
      %496 = vmatprep.subr.bf16.mxu0 0
      %497 = vmatpush1.bf16.msra.mxu0 %v443
      %498 = vmatprep.subr.bf16.mxu0 0
      %499 = vmatpush1.bf16.msra.mxu0 %v442
      %500 = vmatprep.subr.bf16.mxu0 0
      %501 = vmatpush1.bf16.msra.mxu0 %v441
      %502 = vmatprep.subr.bf16.mxu0 0
      %503 = vmatpush1.bf16.msra.mxu0 %v440
      %504 = vmatprep.subr.bf16.mxu0 0
      %505 = vmatpush2.bf16.msra.mxu0 %v455
      %506 = vmatprep.subr.bf16.mxu0 0
      %507 = vmatpush2.bf16.msra.mxu0 %v454
      %508 = vmatprep.subr.bf16.mxu0 0
      %509 = vmatpush2.bf16.msra.mxu0 %v453
      %510 = vmatprep.subr.bf16.mxu0 0
      %511 = vmatpush2.bf16.msra.mxu0 %v452
      %512 = vmatprep.subr.bf16.mxu0 0
      %513 = vmatpush2.bf16.msra.mxu0 %v451
      %514 = vmatprep.subr.bf16.mxu0 0
      %515 = vmatpush2.bf16.msra.mxu0 %v450
      %516 = vmatprep.subr.bf16.mxu0 0
      %517 = vmatpush2.bf16.msra.mxu0 %v449
      %518 = vmatprep.subr.bf16.mxu0 0
      %519 = vmatpush2.bf16.msra.mxu0 %v448
      %520 = vmatprep.mubr.bf16.mxu0 %v339
      %521 = vmatmul.mubr.bf16.gmra.mxu0 %v338
      %v522 = vpop.f32.mrf.mxu0
      %v523 = vadd.f32 0.0, %v522
      %v524 = vpop.f32.mrf.mxu0
      %v525 = vpop.f32.mrf.mxu0
      %v526 = vadd.f32 0.0, %v525
      %v527 = vpop.f32.mrf.mxu0
      %528 = vdwg.mxu0
      %529 = vmatprep.subr.bf16.mxu0 0
      %530 = vmatpush1.bf16.msra.mxu0 %v463
      %531 = vmatprep.subr.bf16.mxu0 0
      %532 = vmatpush1.bf16.msra.mxu0 %v462
      %533 = vmatprep.subr.bf16.mxu0 0
      %534 = vmatpush1.bf16.msra.mxu0 %v461
      %535 = vmatprep.subr.bf16.mxu0 0
      %536 = vmatpush1.bf16.msra.mxu0 %v460
      %537 = vmatprep.subr.bf16.mxu0 0
      %538 = vmatpush1.bf16.msra.mxu0 %v459
      %539 = vmatprep.subr.bf16.mxu0 0
      %540 = vmatpush1.bf16.msra.mxu0 %v458
      %541 = vmatprep.subr.bf16.mxu0 0
      %542 = vmatpush1.bf16.msra.mxu0 %v457
      %543 = vmatprep.subr.bf16.mxu0 0
      %544 = vmatpush1.bf16.msra.mxu0 %v456
      %545 = vmatprep.subr.bf16.mxu0 0
      %546 = vmatpush2.bf16.msra.mxu0 0
      %547 = vmatprep.subr.bf16.mxu0 0
      %548 = vmatpush2.bf16.msra.mxu0 0
      %549 = vmatprep.subr.bf16.mxu0 0
      %550 = vmatpush2.bf16.msra.mxu0 0
      %551 = vmatprep.subr.bf16.mxu0 0
      %552 = vmatpush2.bf16.msra.mxu0 0
      %553 = vmatprep.subr.bf16.mxu0 0
      %554 = vmatpush2.bf16.msra.mxu0 0
      %555 = vmatprep.subr.bf16.mxu0 0
      %556 = vmatpush2.bf16.msra.mxu0 0
      %557 = vmatprep.subr.bf16.mxu0 0
      %558 = vmatpush2.bf16.msra.mxu0 0
      %559 = vmatprep.subr.bf16.mxu0 0
      %560 = vmatpush2.bf16.msra.mxu0 0
      %561 = vmatprep.mubr.bf16.mxu0 0
      %562 = vmatmul.mubr.bf16.gmra.mxu0 %v340
      %v563 = vpop.f32.mrf.mxu0
      %v564 = vadd.f32 %v523, %v563
      %v565 = vpop.f32.mrf.mxu0
      %v566 = vpop.f32.mrf.mxu0
      %v567 = vadd.f32 %v526, %v566
      %v568 = vpop.f32.mrf.mxu0
      %569 = vdwg.mxu0
      %v570 = vadd.f32 %v274, %v564
      %v571 = vadd.f32 %v275, %v567
      %572 = vst [vmem:[#allocation2] sm:$0xff] %v570
      %573 = vst [vmem:[#allocation2 + $0x8] sm:$0xff] %v571
      // Predicated region
      $region37: #{pspnet_forward.15} parent=31 // pred_check
        %p574 = pneg %p268
      $region38: #{pspnet_forward.15} parent=31 // pred_check_branch
        %576 = sbr.rel (%p574) target = $region40
      $region39: #{pspnet_forward.15} parent=31 // pred_region
        %v577 = vld [vmem:[#allocation2] sm:$0xff]
        %v578 = vld [vmem:[#allocation2 + $0x8] sm:$0xff]
        %v579 = vld [vmem:[%s257] sm:$0x1]
        %v581 = vlaneseq
        %v582 = vshrl.u32 %v581, 7
        %v583 = vsub.s32 0, %v582
        %v584 = vrot.slane %v579, %v583
        %v586 = vadd.f32 %v577, %v584
        %v587 = vadd.f32 %v578, %v584
        %v588 = vmax.f32 %v586, 0.0
        %v589 = vmax.f32 %v587, 0.0
        %v590 = vpack.c.bf16 %v589, %v588
        %v592 = vunpack.c.l.b16 %v590
        %v593 = vunpack.c.h.b16 %v590
        %v594 = vpack.c.b16 %v592, %v592
        %v595 = vpack.c.b16 %v593, %v593
        %598 = vst [vmem:[%s265] sm:$0xf] %v594
        %599 = vst [vmem:[%s265 + $0x4] sm:$0xf] %v595
      $region40: #{pspnet_forward.15} parent=31 // pred_fallthru
        _
      %s600 = smul.u32 2, %s19
      %p601 = scmp.lt.s32.totalorder %s600, 3
      %s602 = scalar_select %p601, %s600, 3
      %p603 = scmp.lt.s32.totalorder %s20, 0
      %s604 = scalar_select %p603, %s20, 0
      %s605 = sadd.s32 %s604, %s602
      %s606 = smul.addr %s605, 4
      %s607 = scalar_lea.vmem %s3, %s606
      // Predicated region
      $region41: #{pspnet_forward.15} parent=31 // pred_check
        %p608 = pneg %p135
      $region42: #{pspnet_forward.15} parent=31 // pred_check_branch
        %610 = sbr.rel (%p608) target = $region44
      $region43: #{pspnet_forward.15} parent=31 // pred_region
        %s611 = smul.u32 2, %s19
      $region44: #{pspnet_forward.15} parent=31 // pred_fallthru
        _
    $region32: #{pspnet_forward.15} parent=5 // pred_fallthru
      _
    %p612 = scmp.le.s32.totalorder 2, %s9
    // Predicated region
    $region45: #{pspnet_forward.15} parent=5 // pred_check
      %p613 = pneg %p612
    $region46: #{pspnet_forward.15} parent=5 // pred_check_branch
      %615 = sbr.rel (%p613) target = $region48
    $region47: #{pspnet_forward.15} parent=5 // pred_region
      %s616 = ssub.s32 %s9, 2
      // Predicated region
      $region49: #{pspnet_forward.15} parent=47 // pred_check
        %p617 = pneg %p141
      $region50: #{pspnet_forward.15} parent=47 // pred_check_branch
        %619 = sbr.rel (%p617) target = $region52
      $region51: #{pspnet_forward.15} parent=47 // pred_region
        %s620 = smul.u32 2, %s22
        %p621 = scmp.lt.s32.totalorder %s620, 3
        %s622 = scalar_select %p621, %s620, 3
        %p623 = scmp.lt.s32.totalorder %s23, 0
        %s624 = scalar_select %p623, %s23, 0
        %s625 = sadd.s32 %s624, %s622
        %s626 = smul.addr %s625, 4
        %s627 = scalar_lea.vmem %s3, %s626
      $region52: #{pspnet_forward.15} parent=47 // pred_fallthru
        _
    $region48: #{pspnet_forward.15} parent=5 // pred_fallthru
      _
  $region6: #{pspnet_forward.15} parent=0 // loop_footer
    %s13 = sadd.s32 1, %s9
  $region7: #{pspnet_forward.15} parent=0 // loop_footer_branch
    %8 = sbr.rel target = $region3
  $region8: #{pspnet_forward.15} parent=0 // loop_exit
    _

// kernel: pspnet_forward.16
$region0: #{pspnet_forward.16}
  #allocation0 [shape = 'u32[]', space=smem, size = 0x4, offset = 0x4, fixed_abs, tag = 'smem constant byte address 0x4 - core index']
  #allocation1 [shape = 'u32[144,128]{1,0:T(1,128)}', space=vmem, size = 0x12000, scoped, tag = 'internal scratch']
  #allocation2 [shape = 'f32[16,128]{1,0:T(8,128)}', space=vmem, size = 0x2000, scoped, tag = 'scratch operand']
  %s0 = inlined_call_operand.vmem [shape: bf16[32,512], index: 0, kind: input, shape index: {}]
  %s1 = inlined_call_operand.vmem [shape: bf16[512,128], index: 1, kind: input, shape index: {}]
  %s2 = inlined_call_operand.vmem [shape: f32[1,128], index: 2, kind: input, shape index: {}]
  %s3 = inlined_call_operand.vmem [shape: bf16[32,128], index: 3, kind: output, shape index: {}]
  %s4 = sld [smem:[#allocation0]]
  $region53: #{pspnet_forward.16} parent=0
    _
  %s6 = ssub.s32 1, %s4
  %s7 = scalar_select 0, %s6, %s4
  loop: start=0, step=1, limit=4
  $region2: #{pspnet_forward.16} parent=0 // loop_pre_header
    _
  $region3: #{pspnet_forward.16} parent=0 // loop_header
    %s9 = sphi 0, %s13
    %p10 = scmp.ge.s32.totalorder %s9, 4
    %s16 = sphi 0, %s35
    %s17 = sphi 0, %s31
    %s18 = sphi 0, %s27
    %s19 = sphi 0, %s16
    %s20 = sphi 0, %s17
    %s21 = sphi 0, %s18
    %s22 = sphi 0, %s19
    %s23 = sphi 0, %s20
    %s24 = sphi 0, %s21
    %s40 = sphi 0, %s42
    %s43 = sphi 0, %s40
    %s44 = sphi 0, %s43
    %s60 = sphi 0, %s44
    %s68 = sphi 0, %s70
    %s71 = sphi 0, %s68
    %s72 = sphi 0, %s71
    %s88 = sphi 0, %s72
    %s94 = sphi 0, %s96
    %s97 = sphi 0, %s94
    %s98 = sphi 0, %s97
    %s114 = sphi 0, %s98
    %s122 = sphi 0, %s124
    %s125 = sphi 0, %s122
    %s126 = sphi 0, %s125
    %s142 = sphi 0, %s126
  $region4: #{pspnet_forward.16} parent=0 // loop_header_branch
    %12 = sbr.rel (%p10) target = $region8
  $region5: #{pspnet_forward.16} parent=0 // loop_body
    %s14 = ssub.s32 %s9, 1
    %s15 = ssub.s32 %s9, 2
    %s25 = sadd.s32 1, %s18
    %p26 = scmp.ge.s32.totalorder %s25, 1
    %s27 = scalar_select %p26, 0, %s25
    %s28 = sadd.s32 1, %s17
    %s29 = scalar_select %p26, %s28, %s17
    %p30 = scmp.ge.s32.totalorder %s29, 1
    %s31 = scalar_select %p30, 0, %s29
    %s32 = sadd.s32 1, %s16
    %s33 = scalar_select %p30, %s32, %s16
    %p34 = scmp.ge.s32.totalorder %s33, 2
    %s35 = scalar_select %p34, 0, %s33
    %s36 = ssub.s32 %s16, %s35
    %s37 = ssub.s32 %s18, %s27
    %s38 = sor.u32 %s36, %s37
    %p39 = scmp.eq.s32.totalorder %s38, 0
    %s41 = sadd.s32 %s40, 1
    %s42 = scalar_select %p39, %s40, %s41
    %p45 = pneg %p39
    %p46 = scmp.eq.s32.totalorder %s9, 1
    %p47 = por %p45, %p46
    %p48 = scmp.ne.s32.totalorder %s40, %s43
    %p49 = scmp.eq.s32.totalorder %s9, 0
    %p50 = por %p48, %p49
    %p51 = scmp.ne.s32.totalorder %s40, %s43
    %p52 = scmp.eq.s32.totalorder %s14, 1
    %p53 = por %p51, %p52
    %p54 = scmp.ne.s32.totalorder %s43, %s44
    %p55 = scmp.eq.s32.totalorder %s14, 0
    %p56 = por %p54, %p55
    %p57 = scmp.ne.s32.totalorder %s43, %s44
    %p58 = scmp.eq.s32.totalorder %s15, 1
    %p59 = por %p57, %p58
    %p61 = scmp.ne.s32.totalorder %s44, %s60
    %p62 = scmp.eq.s32.totalorder %s15, 0
    %p63 = por %p61, %p62
    %s64 = ssub.s32 %s18, %s27
    %s65 = ssub.s32 %s17, %s31
    %s66 = sor.u32 %s64, %s65
    %p67 = scmp.eq.s32.totalorder %s66, 0
    %s69 = sadd.s32 %s68, 1
    %s70 = scalar_select %p67, %s68, %s69
    %p73 = pneg %p67
    %p74 = scmp.eq.s32.totalorder %s9, 1
    %p75 = por %p73, %p74
    %p76 = scmp.ne.s32.totalorder %s68, %s71
    %p77 = scmp.eq.s32.totalorder %s9, 0
    %p78 = por %p76, %p77
    %p79 = scmp.ne.s32.totalorder %s68, %s71
    %p80 = scmp.eq.s32.totalorder %s14, 1
    %p81 = por %p79, %p80
    %p82 = scmp.ne.s32.totalorder %s71, %s72
    %p83 = scmp.eq.s32.totalorder %s14, 0
    %p84 = por %p82, %p83
    %p85 = scmp.ne.s32.totalorder %s71, %s72
    %p86 = scmp.eq.s32.totalorder %s15, 1
    %p87 = por %p85, %p86
    %p89 = scmp.ne.s32.totalorder %s72, %s88
    %p90 = scmp.eq.s32.totalorder %s15, 0
    %p91 = por %p89, %p90
    %s92 = ssub.s32 %s17, %s31
    %p93 = scmp.eq.s32.totalorder %s92, 0
    %s95 = sadd.s32 %s94, 1
    %s96 = scalar_select %p93, %s94, %s95
    %p99 = pneg %p93
    %p100 = scmp.eq.s32.totalorder %s9, 1
    %p101 = por %p99, %p100
    %p102 = scmp.ne.s32.totalorder %s94, %s97
    %p103 = scmp.eq.s32.totalorder %s9, 0
    %p104 = por %p102, %p103
    %p105 = scmp.ne.s32.totalorder %s94, %s97
    %p106 = scmp.eq.s32.totalorder %s14, 1
    %p107 = por %p105, %p106
    %p108 = scmp.ne.s32.totalorder %s97, %s98
    %p109 = scmp.eq.s32.totalorder %s14, 0
    %p110 = por %p108, %p109
    %p111 = scmp.ne.s32.totalorder %s97, %s98
    %p112 = scmp.eq.s32.totalorder %s15, 1
    %p113 = por %p111, %p112
    %p115 = scmp.ne.s32.totalorder %s98, %s114
    %p116 = scmp.eq.s32.totalorder %s15, 0
    %p117 = por %p115, %p116
    %s118 = ssub.s32 %s16, %s35
    %s119 = ssub.s32 %s17, %s31
    %s120 = sor.u32 %s118, %s119
    %p121 = scmp.eq.s32.totalorder %s120, 0
    %s123 = sadd.s32 %s122, 1
    %s124 = scalar_select %p121, %s122, %s123
    %p127 = pneg %p121
    %p128 = scmp.eq.s32.totalorder %s9, 1
    %p129 = por %p127, %p128
    %p130 = scmp.ne.s32.totalorder %s122, %s125
    %p131 = scmp.eq.s32.totalorder %s9, 0
    %p132 = por %p130, %p131
    %p133 = scmp.ne.s32.totalorder %s122, %s125
    %p134 = scmp.eq.s32.totalorder %s14, 1
    %p135 = por %p133, %p134
    %p136 = scmp.ne.s32.totalorder %s125, %s126
    %p137 = scmp.eq.s32.totalorder %s14, 0
    %p138 = por %p136, %p137
    %p139 = scmp.ne.s32.totalorder %s125, %s126
    %p140 = scmp.eq.s32.totalorder %s15, 1
    %p141 = por %p139, %p140
    %p143 = scmp.ne.s32.totalorder %s126, %s142
    %p144 = scmp.eq.s32.totalorder %s15, 0
    %p145 = por %p143, %p144
    %p146 = scmp.le.s32.totalorder 1, %s9
    %p147 = scmp.lt.s32.totalorder %s9, 3
    %p148 = pnand %p146, %p147
    %p149 = pneg %p148
    // Predicated region
    $region9: #{pspnet_forward.16} parent=5 // pred_check
      _
    $region10: #{pspnet_forward.16} parent=5 // pred_check_branch
      %151 = sbr.rel (%p148) target = $region12
    $region11: #{pspnet_forward.16} parent=5 // pred_region
      %s152 = ssub.s32 %s9, 1
      // Predicated region
      $region13: #{pspnet_forward.16} parent=11 // pred_check
        %p153 = pneg %p84
      $region14: #{pspnet_forward.16} parent=11 // pred_check_branch
        %155 = sbr.rel (%p153) target = $region16
      $region15: #{pspnet_forward.16} parent=11 // pred_region
        %s156 = smul.u32 64, %s21
        %p157 = scmp.lt.s32.totalorder %s156, 63
        %s158 = scalar_select %p157, %s156, 63
        %p159 = scmp.lt.s32.totalorder %s20, 0
        %s160 = scalar_select %p159, %s20, 0
        %s161 = sadd.s32 %s160, %s158
        %s162 = smul.addr %s161, 4
        %s163 = scalar_lea.vmem %s1, %s162
        %s164 = smul.u32 64, %s21
      $region16: #{pspnet_forward.16} parent=11 // pred_fallthru
        _
      // Predicated region
      $region17: #{pspnet_forward.16} parent=11 // pred_check
        %p165 = pneg %p110
      $region18: #{pspnet_forward.16} parent=11 // pred_check_branch
        %167 = sbr.rel (%p165) target = $region20
      $region19: #{pspnet_forward.16} parent=11 // pred_region
        %p168 = scmp.lt.s32.totalorder %s20, 0
        %s169 = scalar_select %p168, %s20, 0
        %s170 = scalar_lea.vmem %s2, %s169
      $region20: #{pspnet_forward.16} parent=11 // pred_fallthru
        _
    $region12: #{pspnet_forward.16} parent=5 // pred_fallthru
      _
    %p171 = scmp.lt.s32.totalorder %s9, 2
    // Predicated region
    $region21: #{pspnet_forward.16} parent=5 // pred_check
      %p172 = pneg %p171
    $region22: #{pspnet_forward.16} parent=5 // pred_check_branch
      %174 = sbr.rel (%p172) target = $region24
    $region23: #{pspnet_forward.16} parent=5 // pred_region
      // Predicated region
      $region25: #{pspnet_forward.16} parent=23 // pred_check
        %p175 = pneg %p50
      $region26: #{pspnet_forward.16} parent=23 // pred_check_branch
        %177 = sbr.rel (%p175) target = $region28
      $region27: #{pspnet_forward.16} parent=23 // pred_region
        %s178 = smul.u32 2, %s16
        %s179 = smul.u32 4, %s18
        %p180 = scmp.lt.s32.totalorder %s178, 3
        %s181 = scalar_select %p180, %s178, 3
        %p182 = scmp.lt.s32.totalorder %s179, 3
        %s183 = scalar_select %p182, %s179, 3
        %s184 = smul.addr %s181, 4
        %s185 = sadd.s32 %s183, %s184
        %s186 = smul.addr %s185, 4
        %s187 = scalar_lea.vmem %s0, %s186
        %s188 = smul.u32 2, %s16
        %s189 = smul.u32 4, %s18
      $region28: #{pspnet_forward.16} parent=23 // pred_fallthru
        _
    $region24: #{pspnet_forward.16} parent=5 // pred_fallthru
      _
    %p190 = scmp.le.s32.totalorder 1, %s9
    %p191 = scmp.lt.s32.totalorder %s9, 3
    %p192 = pnand %p190, %p191
    %p193 = pneg %p192
    // Predicated region
    $region29: #{pspnet_forward.16} parent=5 // pred_check
      _
    $region30: #{pspnet_forward.16} parent=5 // pred_check_branch
      %195 = sbr.rel (%p192) target = $region32
    $region31: #{pspnet_forward.16} parent=5 // pred_region
      %s196 = ssub.s32 %s9, 1
      %s197 = smul.u32 2, %s19
      %s198 = smul.u32 4, %s21
      %p199 = scmp.lt.s32.totalorder %s197, 3
      %s200 = scalar_select %p199, %s197, 3
      %p201 = scmp.lt.s32.totalorder %s198, 3
      %s202 = scalar_select %p201, %s198, 3
      %s203 = smul.addr %s200, 4
      %s204 = sadd.s32 %s202, %s203
      %s205 = smul.addr %s204, 4
      %s206 = scalar_lea.vmem %s0, %s205
      %p207 = pneg %p56
      %p208 = pneg %p53
      %s209 = smul.u32 64, %s21
      %p210 = scmp.lt.s32.totalorder %s209, 63
      %s211 = scalar_select %p210, %s209, 63
      %p212 = scmp.lt.s32.totalorder %s20, 0
      %s213 = scalar_select %p212, %s20, 0
      %s214 = sadd.s32 %s213, %s211
      %s215 = smul.addr %s214, 4
      %s216 = scalar_lea.vmem %s1, %s215
      %p217 = pneg %p84
      %p218 = pneg %p81
      %p219 = scmp.lt.s32.totalorder %s20, 0
      %s220 = scalar_select %p219, %s20, 0
      %s221 = scalar_lea.vmem %s2, %s220
      %p222 = pneg %p110
      %p223 = pneg %p107
      %p224 = pneg %p138
      %p225 = pneg %p135
      %s226 = smul.u32 2, %s19
      %p227 = scmp.lt.s32.totalorder %s226, 3
      %s228 = scalar_select %p227, %s226, 3
      %p229 = scmp.lt.s32.totalorder %s20, 0
      %s230 = scalar_select %p229, %s20, 0
      %s231 = sadd.s32 %s230, %s228
      %s232 = smul.addr %s231, 4
      %s233 = scalar_lea.vmem %s3, %s232
      %s234 = smul.u32 2, %s19
      %s235 = smul.u32 4, %s21
      %p236 = scmp.lt.s32.totalorder %s234, 3
      %s237 = scalar_select %p236, %s234, 3
      %p238 = scmp.lt.s32.totalorder %s235, 3
      %s239 = scalar_select %p238, %s235, 3
      %s240 = smul.addr %s237, 4
      %s241 = sadd.s32 %s239, %s240
      %s242 = smul.addr %s241, 4
      %s243 = scalar_lea.vmem %s0, %s242
      %s244 = smul.u32 2, %s19
      %s245 = smul.u32 4, %s21
      %s246 = smul.u32 64, %s21
      %p247 = scmp.lt.s32.totalorder %s246, 63
      %s248 = scalar_select %p247, %s246, 63
      %p249 = scmp.lt.s32.totalorder %s20, 0
      %s250 = scalar_select %p249, %s20, 0
      %s251 = sadd.s32 %s250, %s248
      %s252 = smul.addr %s251, 4
      %s253 = scalar_lea.vmem %s1, %s252
      %s254 = smul.u32 64, %s21
      %p255 = scmp.lt.s32.totalorder %s20, 0
      %s256 = scalar_select %p255, %s20, 0
      %s257 = scalar_lea.vmem %s2, %s256
      %s258 = smul.u32 2, %s19
      %p259 = scmp.lt.s32.totalorder %s258, 3
      %s260 = scalar_select %p259, %s258, 3
      %p261 = scmp.lt.s32.totalorder %s20, 0
      %s262 = scalar_select %p261, %s20, 0
      %s263 = sadd.s32 %s262, %s260
      %s264 = smul.addr %s263, 4
      %s265 = scalar_lea.vmem %s3, %s264
      %s266 = smul.u32 2, %s19
      %p268 = scmp.eq.s32.totalorder %s21, 0
      // Predicated region
      $region33: #{pspnet_forward.16} parent=31 // pred_check
        %p269 = pneg %p268
      $region34: #{pspnet_forward.16} parent=31 // pred_check_branch
        %271 = sbr.rel (%p269) target = $region36
      $region35: #{pspnet_forward.16} parent=31 // pred_region
        %272 = vst [vmem:[#allocation2] sm:$0xff] 0.0
        %273 = vst [vmem:[#allocation2 + $0x8] sm:$0xff] 0.0
      $region36: #{pspnet_forward.16} parent=31 // pred_fallthru
        _
      %v274 = vld [vmem:[#allocation2] sm:$0xff]
      %v275 = vld [vmem:[#allocation2 + $0x8] sm:$0xff]
      %v276 = vld [vmem:[%s243] sm:$0xff]
      %v277 = vld [vmem:[%s243 + $0x8] sm:$0xff]
      %v278 = vld [vmem:[%s243 + $0x10] sm:$0xff]
      %v279 = vld [vmem:[%s243 + $0x18] sm:$0xff]
      %v280 = vld [vmem:[%s253] sm:$0xf]
      %v281 = vld [vmem:[%s253 + $0x4] sm:$0xf]
      %v282 = vld [vmem:[%s253 + $0x8] sm:$0xf]
      %v283 = vld [vmem:[%s253 + $0xc] sm:$0xf]
      %v284 = vld [vmem:[%s253 + $0x10] sm:$0xf]
      %v285 = vld [vmem:[%s253 + $0x14] sm:$0xf]
      %v286 = vld [vmem:[%s253 + $0x18] sm:$0xf]
      %v287 = vld [vmem:[%s253 + $0x1c] sm:$0xf]
      %v288 = vld [vmem:[%s253 + $0x20] sm:$0xf]
      %v289 = vld [vmem:[%s253 + $0x24] sm:$0xf]
      %v290 = vld [vmem:[%s253 + $0x28] sm:$0xf]
      %v291 = vld [vmem:[%s253 + $0x2c] sm:$0xf]
      %v292 = vld [vmem:[%s253 + $0x30] sm:$0xf]
      %v293 = vld [vmem:[%s253 + $0x34] sm:$0xf]
      %v294 = vld [vmem:[%s253 + $0x38] sm:$0xf]
      %v295 = vld [vmem:[%s253 + $0x3c] sm:$0xf]
      %v296 = vld [vmem:[%s253 + $0x40] sm:$0xf]
      %v297 = vld [vmem:[%s253 + $0x44] sm:$0xf]
      %v298 = vld [vmem:[%s253 + $0x48] sm:$0xf]
      %v299 = vld [vmem:[%s253 + $0x4c] sm:$0xf]
      %v300 = vld [vmem:[%s253 + $0x50] sm:$0xf]
      %v301 = vld [vmem:[%s253 + $0x54] sm:$0xf]
      %v302 = vld [vmem:[%s253 + $0x58] sm:$0xf]
      %v303 = vld [vmem:[%s253 + $0x5c] sm:$0xf]
      %v304 = vld [vmem:[%s253 + $0x60] sm:$0xf]
      %v305 = vld [vmem:[%s253 + $0x64] sm:$0xf]
      %v306 = vld [vmem:[%s253 + $0x68] sm:$0xf]
      %v307 = vld [vmem:[%s253 + $0x6c] sm:$0xf]
      %v308 = vld [vmem:[%s253 + $0x70] sm:$0xf]
      %v309 = vld [vmem:[%s253 + $0x74] sm:$0xf]
      %v310 = vld [vmem:[%s253 + $0x78] sm:$0xf]
      %v311 = vld [vmem:[%s253 + $0x7c] sm:$0xf]
      %v312 = vld [vmem:[%s253 + $0x80] sm:$0xf]
      %v313 = vld [vmem:[%s253 + $0x84] sm:$0xf]
      %v314 = vld [vmem:[%s253 + $0x88] sm:$0xf]
      %v315 = vld [vmem:[%s253 + $0x8c] sm:$0xf]
      %v316 = vld [vmem:[%s253 + $0x90] sm:$0xf]
      %v317 = vld [vmem:[%s253 + $0x94] sm:$0xf]
      %v318 = vld [vmem:[%s253 + $0x98] sm:$0xf]
      %v319 = vld [vmem:[%s253 + $0x9c] sm:$0xf]
      %v320 = vld [vmem:[%s253 + $0xa0] sm:$0xf]
      %v321 = vld [vmem:[%s253 + $0xa4] sm:$0xf]
      %v322 = vld [vmem:[%s253 + $0xa8] sm:$0xf]
      %v323 = vld [vmem:[%s253 + $0xac] sm:$0xf]
      %v324 = vld [vmem:[%s253 + $0xb0] sm:$0xf]
      %v325 = vld [vmem:[%s253 + $0xb4] sm:$0xf]
      %v326 = vld [vmem:[%s253 + $0xb8] sm:$0xf]
      %v327 = vld [vmem:[%s253 + $0xbc] sm:$0xf]
      %v328 = vld [vmem:[%s253 + $0xc0] sm:$0xf]
      %v329 = vld [vmem:[%s253 + $0xc4] sm:$0xf]
      %v330 = vld [vmem:[%s253 + $0xc8] sm:$0xf]
      %v331 = vld [vmem:[%s253 + $0xcc] sm:$0xf]
      %v332 = vld [vmem:[%s253 + $0xd0] sm:$0xf]
      %v333 = vld [vmem:[%s253 + $0xd4] sm:$0xf]
      %v334 = vld [vmem:[%s253 + $0xd8] sm:$0xf]
      %v335 = vld [vmem:[%s253 + $0xdc] sm:$0xf]
      %v336 = vld [vmem:[%s253 + $0xe0] sm:$0xf]
      %v337 = vld [vmem:[%s253 + $0xe4] sm:$0xf]
      %v338 = vld [vmem:[%s253 + $0xe8] sm:$0xf]
      %v339 = vld [vmem:[%s253 + $0xec] sm:$0xf]
      %v340 = vld [vmem:[%s253 + $0xf0] sm:$0xf]
      %v341 = vld [vmem:[%s253 + $0xf4] sm:$0xf]
      %v342 = vld [vmem:[%s253 + $0xf8] sm:$0xf]
      %v343 = vld [vmem:[%s253 + $0xfc] sm:$0xf]
      %v348 = vunpack.c.l.b16 %v276
      %v349 = vunpack.c.h.b16 %v276
      %v350 = vunpack.c.l.b16 %v277
      %v351 = vunpack.c.h.b16 %v277
      %v352 = vunpack.c.l.b16 %v278
      %v353 = vunpack.c.h.b16 %v278
      %v354 = vunpack.c.l.b16 %v279
      %v355 = vunpack.c.h.b16 %v279
      %v356 = vpack.c.b16 %v352, %v348
      %v357 = vpack.c.b16 %v353, %v349
      %v358 = vpack.c.b16 %v354, %v350
      %v359 = vpack.c.b16 %v355, %v351
      %v428 = vunpack.c.l.b16 %v280
      %v429 = vunpack.c.l.b16 %v281
      %v430 = vunpack.c.l.b16 %v282
      %v431 = vunpack.c.l.b16 %v283
      %v432 = vunpack.c.l.b16 %v284
      %v433 = vunpack.c.l.b16 %v285
      %v434 = vunpack.c.l.b16 %v286
      %v435 = vunpack.c.l.b16 %v287
      %v436 = vunpack.c.l.b16 %v288
      %v437 = vunpack.c.l.b16 %v289
      %v438 = vunpack.c.l.b16 %v290
      %v439 = vunpack.c.l.b16 %v291
      %v440 = vunpack.c.l.b16 %v292
      %v441 = vunpack.c.l.b16 %v293
      %v442 = vunpack.c.l.b16 %v294
      %v443 = vunpack.c.l.b16 %v295
      %v444 = vunpack.c.l.b16 %v296
      %v445 = vunpack.c.l.b16 %v297
      %v446 = vunpack.c.l.b16 %v298
      %v447 = vunpack.c.l.b16 %v299
      %v448 = vunpack.c.l.b16 %v300
      %v449 = vunpack.c.l.b16 %v301
      %v450 = vunpack.c.l.b16 %v302
      %v451 = vunpack.c.l.b16 %v303
      %v452 = vunpack.c.l.b16 %v304
      %v453 = vunpack.c.l.b16 %v305
      %v454 = vunpack.c.l.b16 %v306
      %v455 = vunpack.c.l.b16 %v307
      %v456 = vunpack.c.l.b16 %v308
      %v457 = vunpack.c.l.b16 %v309
      %v458 = vunpack.c.l.b16 %v310
      %v459 = vunpack.c.l.b16 %v311
      %v460 = vunpack.c.l.b16 %v312
      %v461 = vunpack.c.l.b16 %v313
      %v462 = vunpack.c.l.b16 %v314
      %v463 = vunpack.c.l.b16 %v315
      %v464 = vunpack.c.l.b16 %v316
      %v465 = vunpack.c.l.b16 %v317
      %v466 = vunpack.c.l.b16 %v318
      %v467 = vunpack.c.l.b16 %v319
      %v468 = vunpack.c.l.b16 %v320
      %v469 = vunpack.c.l.b16 %v321
      %v470 = vunpack.c.l.b16 %v322
      %v471 = vunpack.c.l.b16 %v323
      %v472 = vunpack.c.l.b16 %v324
      %v473 = vunpack.c.l.b16 %v325
      %v474 = vunpack.c.l.b16 %v326
      %v475 = vunpack.c.l.b16 %v327
      %v476 = vunpack.c.l.b16 %v328
      %v477 = vunpack.c.l.b16 %v329
      %v478 = vunpack.c.l.b16 %v330
      %v479 = vunpack.c.l.b16 %v331
      %v480 = vunpack.c.l.b16 %v332
      %v481 = vunpack.c.l.b16 %v333
      %v482 = vunpack.c.l.b16 %v334
      %v483 = vunpack.c.l.b16 %v335
      %v484 = vunpack.c.l.b16 %v336
      %v485 = vunpack.c.l.b16 %v337
      %v486 = vunpack.c.l.b16 %v338
      %v487 = vunpack.c.l.b16 %v339
      %v488 = vunpack.c.l.b16 %v340
      %v489 = vunpack.c.l.b16 %v341
      %v490 = vunpack.c.l.b16 %v342
      %v491 = vunpack.c.l.b16 %v343
      %v492 = vpack.c.b16 %v429, %v428
      %v493 = vpack.c.b16 %v431, %v430
      %v494 = vpack.c.b16 %v433, %v432
      %v495 = vpack.c.b16 %v435, %v434
      %v496 = vpack.c.b16 %v437, %v436
      %v497 = vpack.c.b16 %v439, %v438
      %v498 = vpack.c.b16 %v441, %v440
      %v499 = vpack.c.b16 %v443, %v442
      %v500 = vpack.c.b16 %v445, %v444
      %v501 = vpack.c.b16 %v447, %v446
      %v502 = vpack.c.b16 %v449, %v448
      %v503 = vpack.c.b16 %v451, %v450
      %v504 = vpack.c.b16 %v453, %v452
      %v505 = vpack.c.b16 %v455, %v454
      %v506 = vpack.c.b16 %v457, %v456
      %v507 = vpack.c.b16 %v459, %v458
      %v508 = vpack.c.b16 %v461, %v460
      %v509 = vpack.c.b16 %v463, %v462
      %v510 = vpack.c.b16 %v465, %v464
      %v511 = vpack.c.b16 %v467, %v466
      %v512 = vpack.c.b16 %v469, %v468
      %v513 = vpack.c.b16 %v471, %v470
      %v514 = vpack.c.b16 %v473, %v472
      %v515 = vpack.c.b16 %v475, %v474
      %v516 = vpack.c.b16 %v477, %v476
      %v517 = vpack.c.b16 %v479, %v478
      %v518 = vpack.c.b16 %v481, %v480
      %v519 = vpack.c.b16 %v483, %v482
      %v520 = vpack.c.b16 %v485, %v484
      %v521 = vpack.c.b16 %v487, %v486
      %v522 = vpack.c.b16 %v489, %v488
      %v523 = vpack.c.b16 %v491, %v490
      %556 = vmatprep.subr.bf16.mxu0 0
      %557 = vmatpush1.bf16.msra.mxu0 %v499
      %558 = vmatprep.subr.bf16.mxu0 0
      %559 = vmatpush1.bf16.msra.mxu0 %v498
      %560 = vmatprep.subr.bf16.mxu0 0
      %561 = vmatpush1.bf16.msra.mxu0 %v497
      %562 = vmatprep.subr.bf16.mxu0 0
      %563 = vmatpush1.bf16.msra.mxu0 %v496
      %564 = vmatprep.subr.bf16.mxu0 0
      %565 = vmatpush1.bf16.msra.mxu0 %v495
      %566 = vmatprep.subr.bf16.mxu0 0
      %567 = vmatpush1.bf16.msra.mxu0 %v494
      %568 = vmatprep.subr.bf16.mxu0 0
      %569 = vmatpush1.bf16.msra.mxu0 %v493
      %570 = vmatprep.subr.bf16.mxu0 0
      %571 = vmatpush1.bf16.msra.mxu0 %v492
      %572 = vmatprep.subr.bf16.mxu0 0
      %573 = vmatpush2.bf16.msra.mxu0 %v507
      %574 = vmatprep.subr.bf16.mxu0 0
      %575 = vmatpush2.bf16.msra.mxu0 %v506
      %576 = vmatprep.subr.bf16.mxu0 0
      %577 = vmatpush2.bf16.msra.mxu0 %v505
      %578 = vmatprep.subr.bf16.mxu0 0
      %579 = vmatpush2.bf16.msra.mxu0 %v504
      %580 = vmatprep.subr.bf16.mxu0 0
      %581 = vmatpush2.bf16.msra.mxu0 %v503
      %582 = vmatprep.subr.bf16.mxu0 0
      %583 = vmatpush2.bf16.msra.mxu0 %v502
      %584 = vmatprep.subr.bf16.mxu0 0
      %585 = vmatpush2.bf16.msra.mxu0 %v501
      %586 = vmatprep.subr.bf16.mxu0 0
      %587 = vmatpush2.bf16.msra.mxu0 %v500
      %588 = vmatprep.mubr.bf16.mxu0 %v357
      %589 = vmatmul.mubr.bf16.gmra.mxu0 %v356
      %v590 = vpop.f32.mrf.mxu0
      %v591 = vadd.f32 0.0, %v590
      %v592 = vpop.f32.mrf.mxu0
      %v593 = vpop.f32.mrf.mxu0
      %v594 = vadd.f32 0.0, %v593
      %v595 = vpop.f32.mrf.mxu0
      %596 = vdwg.mxu0
      %597 = vmatprep.subr.bf16.mxu0 0
      %598 = vmatpush1.bf16.msra.mxu0 %v515
      %599 = vmatprep.subr.bf16.mxu0 0
      %600 = vmatpush1.bf16.msra.mxu0 %v514
      %601 = vmatprep.subr.bf16.mxu0 0
      %602 = vmatpush1.bf16.msra.mxu0 %v513
      %603 = vmatprep.subr.bf16.mxu0 0
      %604 = vmatpush1.bf16.msra.mxu0 %v512
      %605 = vmatprep.subr.bf16.mxu0 0
      %606 = vmatpush1.bf16.msra.mxu0 %v511
      %607 = vmatprep.subr.bf16.mxu0 0
      %608 = vmatpush1.bf16.msra.mxu0 %v510
      %609 = vmatprep.subr.bf16.mxu0 0
      %610 = vmatpush1.bf16.msra.mxu0 %v509
      %611 = vmatprep.subr.bf16.mxu0 0
      %612 = vmatpush1.bf16.msra.mxu0 %v508
      %613 = vmatprep.subr.bf16.mxu0 0
      %614 = vmatpush2.bf16.msra.mxu0 %v523
      %615 = vmatprep.subr.bf16.mxu0 0
      %616 = vmatpush2.bf16.msra.mxu0 %v522
      %617 = vmatprep.subr.bf16.mxu0 0
      %618 = vmatpush2.bf16.msra.mxu0 %v521
      %619 = vmatprep.subr.bf16.mxu0 0
      %620 = vmatpush2.bf16.msra.mxu0 %v520
      %621 = vmatprep.subr.bf16.mxu0 0
      %622 = vmatpush2.bf16.msra.mxu0 %v519
      %623 = vmatprep.subr.bf16.mxu0 0
      %624 = vmatpush2.bf16.msra.mxu0 %v518
      %625 = vmatprep.subr.bf16.mxu0 0
      %626 = vmatpush2.bf16.msra.mxu0 %v517
      %627 = vmatprep.subr.bf16.mxu0 0
      %628 = vmatpush2.bf16.msra.mxu0 %v516
      %629 = vmatprep.mubr.bf16.mxu0 %v359
      %630 = vmatmul.mubr.bf16.gmra.mxu0 %v358
      %v631 = vpop.f32.mrf.mxu0
      %v632 = vadd.f32 %v591, %v631
      %v633 = vpop.f32.mrf.mxu0
      %v634 = vpop.f32.mrf.mxu0
      %v635 = vadd.f32 %v594, %v634
      %v636 = vpop.f32.mrf.mxu0
      %637 = vdwg.mxu0
      %v638 = vadd.f32 %v274, %v632
      %v639 = vadd.f32 %v275, %v635
      %640 = vst [vmem:[#allocation2] sm:$0xff] %v638
      %641 = vst [vmem:[#allocation2 + $0x8] sm:$0xff] %v639
      // Predicated region
      $region37: #{pspnet_forward.16} parent=31 // pred_check
        %p642 = pneg %p268
      $region38: #{pspnet_forward.16} parent=31 // pred_check_branch
        %644 = sbr.rel (%p642) target = $region40
      $region39: #{pspnet_forward.16} parent=31 // pred_region
        %v645 = vld [vmem:[#allocation2] sm:$0xff]
        %v646 = vld [vmem:[#allocation2 + $0x8] sm:$0xff]
        %v647 = vld [vmem:[%s257] sm:$0x1]
        %v649 = vlaneseq
        %v650 = vshrl.u32 %v649, 7
        %v651 = vsub.s32 0, %v650
        %v652 = vrot.slane %v647, %v651
        %v654 = vadd.f32 %v645, %v652
        %v655 = vadd.f32 %v646, %v652
        %v656 = vmax.f32 %v654, 0.0
        %v657 = vmax.f32 %v655, 0.0
        %v658 = vpack.c.bf16 %v657, %v656
        %v660 = vunpack.c.l.b16 %v658
        %v661 = vunpack.c.h.b16 %v658
        %v662 = vpack.c.b16 %v660, %v660
        %v663 = vpack.c.b16 %v661, %v661
        %666 = vst [vmem:[%s265] sm:$0xf] %v662
        %667 = vst [vmem:[%s265 + $0x4] sm:$0xf] %v663
      $region40: #{pspnet_forward.16} parent=31 // pred_fallthru
        _
      %s668 = smul.u32 2, %s19
      %p669 = scmp.lt.s32.totalorder %s668, 3
      %s670 = scalar_select %p669, %s668, 3
      %p671 = scmp.lt.s32.totalorder %s20, 0
      %s672 = scalar_select %p671, %s20, 0
      %s673 = sadd.s32 %s672, %s670
      %s674 = smul.addr %s673, 4
      %s675 = scalar_lea.vmem %s3, %s674
      // Predicated region
      $region41: #{pspnet_forward.16} parent=31 // pred_check
        %p676 = pneg %p135
      $region42: #{pspnet_forward.16} parent=31 // pred_check_branch
        %678 = sbr.rel (%p676) target = $region44
      $region43: #{pspnet_forward.16} parent=31 // pred_region
        %s679 = smul.u32 2, %s19
      $region44: #{pspnet_forward.16} parent=31 // pred_fallthru
        _
    $region32: #{pspnet_forward.16} parent=5 // pred_fallthru
      _
    %p680 = scmp.le.s32.totalorder 2, %s9
    // Predicated region
    $region45: #{pspnet_forward.16} parent=5 // pred_check
      %p681 = pneg %p680
    $region46: #{pspnet_forward.16} parent=5 // pred_check_branch
      %683 = sbr.rel (%p681) target = $region48
    $region47: #{pspnet_forward.16} parent=5 // pred_region
      %s684 = ssub.s32 %s9, 2
      // Predicated region
      $region49: #{pspnet_forward.16} parent=47 // pred_check
        %p685 = pneg %p141
      $region50: #{pspnet_forward.16} parent=47 // pred_check_branch
        %687 = sbr.rel (%p685) target = $region52
      $region51: #{pspnet_forward.16} parent=47 // pred_region
        %s688 = smul.u32 2, %s22
        %p689 = scmp.lt.s32.totalorder %s688, 3
        %s690 = scalar_select %p689, %s688, 3
        %p691 = scmp.lt.s32.totalorder %s23, 0
        %s692 = scalar_select %p691, %s23, 0
        %s693 = sadd.s32 %s692, %s690
        %s694 = smul.addr %s693, 4
        %s695 = scalar_lea.vmem %s3, %s694
      $region52: #{pspnet_forward.16} parent=47 // pred_fallthru
        _
    $region48: #{pspnet_forward.16} parent=5 // pred_fallthru
      _
  $region6: #{pspnet_forward.16} parent=0 // loop_footer
    %s13 = sadd.s32 1, %s9
  $region7: #{pspnet_forward.16} parent=0 // loop_footer_branch
    %8 = sbr.rel target = $region3
  $region8: #{pspnet_forward.16} parent=0 // loop_exit
    _

// kernel: pspnet_forward.17
$region0: #{pspnet_forward.17}
  #allocation0 [shape = 'u32[]', space=smem, size = 0x4, offset = 0x4, fixed_abs, tag = 'smem constant byte address 0x4 - core index']
  #allocation1 [shape = 'u32[144,128]{1,0:T(1,128)}', space=vmem, size = 0x12000, scoped, tag = 'internal scratch']
  #allocation2 [shape = 'f32[32,128]{1,0:T(8,128)}', space=vmem, size = 0x4000, scoped, tag = 'scratch operand']
  %s0 = inlined_call_operand.vmem [shape: bf16[64,128], index: 0, kind: input, shape index: {}]
  %s1 = inlined_call_operand.vmem [shape: bf16[128,128], index: 1, kind: input, shape index: {}]
  %s2 = inlined_call_operand.vmem [shape: f32[1,128], index: 2, kind: input, shape index: {}]
  %s3 = inlined_call_operand.vmem [shape: bf16[64,128], index: 3, kind: output, shape index: {}]
  %s4 = sld [smem:[#allocation0]]
  $region53: #{pspnet_forward.17} parent=0
    _
  %s6 = ssub.s32 1, %s4
  %s7 = scalar_select 0, %s6, %s4
  loop: start=0, step=1, limit=4
  $region2: #{pspnet_forward.17} parent=0 // loop_pre_header
    _
  $region3: #{pspnet_forward.17} parent=0 // loop_header
    %s9 = sphi 0, %s13
    %p10 = scmp.ge.s32.totalorder %s9, 4
    %s16 = sphi 0, %s35
    %s17 = sphi 0, %s31
    %s18 = sphi 0, %s27
    %s19 = sphi 0, %s16
    %s20 = sphi 0, %s17
    %s21 = sphi 0, %s18
    %s22 = sphi 0, %s19
    %s23 = sphi 0, %s20
    %s24 = sphi 0, %s21
    %s40 = sphi 0, %s42
    %s43 = sphi 0, %s40
    %s44 = sphi 0, %s43
    %s60 = sphi 0, %s44
    %s68 = sphi 0, %s70
    %s71 = sphi 0, %s68
    %s72 = sphi 0, %s71
    %s88 = sphi 0, %s72
    %s94 = sphi 0, %s96
    %s97 = sphi 0, %s94
    %s98 = sphi 0, %s97
    %s114 = sphi 0, %s98
    %s122 = sphi 0, %s124
    %s125 = sphi 0, %s122
    %s126 = sphi 0, %s125
    %s142 = sphi 0, %s126
  $region4: #{pspnet_forward.17} parent=0 // loop_header_branch
    %12 = sbr.rel (%p10) target = $region8
  $region5: #{pspnet_forward.17} parent=0 // loop_body
    %s14 = ssub.s32 %s9, 1
    %s15 = ssub.s32 %s9, 2
    %s25 = sadd.s32 1, %s18
    %p26 = scmp.ge.s32.totalorder %s25, 1
    %s27 = scalar_select %p26, 0, %s25
    %s28 = sadd.s32 1, %s17
    %s29 = scalar_select %p26, %s28, %s17
    %p30 = scmp.ge.s32.totalorder %s29, 1
    %s31 = scalar_select %p30, 0, %s29
    %s32 = sadd.s32 1, %s16
    %s33 = scalar_select %p30, %s32, %s16
    %p34 = scmp.ge.s32.totalorder %s33, 2
    %s35 = scalar_select %p34, 0, %s33
    %s36 = ssub.s32 %s16, %s35
    %s37 = ssub.s32 %s18, %s27
    %s38 = sor.u32 %s36, %s37
    %p39 = scmp.eq.s32.totalorder %s38, 0
    %s41 = sadd.s32 %s40, 1
    %s42 = scalar_select %p39, %s40, %s41
    %p45 = pneg %p39
    %p46 = scmp.eq.s32.totalorder %s9, 1
    %p47 = por %p45, %p46
    %p48 = scmp.ne.s32.totalorder %s40, %s43
    %p49 = scmp.eq.s32.totalorder %s9, 0
    %p50 = por %p48, %p49
    %p51 = scmp.ne.s32.totalorder %s40, %s43
    %p52 = scmp.eq.s32.totalorder %s14, 1
    %p53 = por %p51, %p52
    %p54 = scmp.ne.s32.totalorder %s43, %s44
    %p55 = scmp.eq.s32.totalorder %s14, 0
    %p56 = por %p54, %p55
    %p57 = scmp.ne.s32.totalorder %s43, %s44
    %p58 = scmp.eq.s32.totalorder %s15, 1
    %p59 = por %p57, %p58
    %p61 = scmp.ne.s32.totalorder %s44, %s60
    %p62 = scmp.eq.s32.totalorder %s15, 0
    %p63 = por %p61, %p62
    %s64 = ssub.s32 %s18, %s27
    %s65 = ssub.s32 %s17, %s31
    %s66 = sor.u32 %s64, %s65
    %p67 = scmp.eq.s32.totalorder %s66, 0
    %s69 = sadd.s32 %s68, 1
    %s70 = scalar_select %p67, %s68, %s69
    %p73 = pneg %p67
    %p74 = scmp.eq.s32.totalorder %s9, 1
    %p75 = por %p73, %p74
    %p76 = scmp.ne.s32.totalorder %s68, %s71
    %p77 = scmp.eq.s32.totalorder %s9, 0
    %p78 = por %p76, %p77
    %p79 = scmp.ne.s32.totalorder %s68, %s71
    %p80 = scmp.eq.s32.totalorder %s14, 1
    %p81 = por %p79, %p80
    %p82 = scmp.ne.s32.totalorder %s71, %s72
    %p83 = scmp.eq.s32.totalorder %s14, 0
    %p84 = por %p82, %p83
    %p85 = scmp.ne.s32.totalorder %s71, %s72
    %p86 = scmp.eq.s32.totalorder %s15, 1
    %p87 = por %p85, %p86
    %p89 = scmp.ne.s32.totalorder %s72, %s88
    %p90 = scmp.eq.s32.totalorder %s15, 0
    %p91 = por %p89, %p90
    %s92 = ssub.s32 %s17, %s31
    %p93 = scmp.eq.s32.totalorder %s92, 0
    %s95 = sadd.s32 %s94, 1
    %s96 = scalar_select %p93, %s94, %s95
    %p99 = pneg %p93
    %p100 = scmp.eq.s32.totalorder %s9, 1
    %p101 = por %p99, %p100
    %p102 = scmp.ne.s32.totalorder %s94, %s97
    %p103 = scmp.eq.s32.totalorder %s9, 0
    %p104 = por %p102, %p103
    %p105 = scmp.ne.s32.totalorder %s94, %s97
    %p106 = scmp.eq.s32.totalorder %s14, 1
    %p107 = por %p105, %p106
    %p108 = scmp.ne.s32.totalorder %s97, %s98
    %p109 = scmp.eq.s32.totalorder %s14, 0
    %p110 = por %p108, %p109
    %p111 = scmp.ne.s32.totalorder %s97, %s98
    %p112 = scmp.eq.s32.totalorder %s15, 1
    %p113 = por %p111, %p112
    %p115 = scmp.ne.s32.totalorder %s98, %s114
    %p116 = scmp.eq.s32.totalorder %s15, 0
    %p117 = por %p115, %p116
    %s118 = ssub.s32 %s16, %s35
    %s119 = ssub.s32 %s17, %s31
    %s120 = sor.u32 %s118, %s119
    %p121 = scmp.eq.s32.totalorder %s120, 0
    %s123 = sadd.s32 %s122, 1
    %s124 = scalar_select %p121, %s122, %s123
    %p127 = pneg %p121
    %p128 = scmp.eq.s32.totalorder %s9, 1
    %p129 = por %p127, %p128
    %p130 = scmp.ne.s32.totalorder %s122, %s125
    %p131 = scmp.eq.s32.totalorder %s9, 0
    %p132 = por %p130, %p131
    %p133 = scmp.ne.s32.totalorder %s122, %s125
    %p134 = scmp.eq.s32.totalorder %s14, 1
    %p135 = por %p133, %p134
    %p136 = scmp.ne.s32.totalorder %s125, %s126
    %p137 = scmp.eq.s32.totalorder %s14, 0
    %p138 = por %p136, %p137
    %p139 = scmp.ne.s32.totalorder %s125, %s126
    %p140 = scmp.eq.s32.totalorder %s15, 1
    %p141 = por %p139, %p140
    %p143 = scmp.ne.s32.totalorder %s126, %s142
    %p144 = scmp.eq.s32.totalorder %s15, 0
    %p145 = por %p143, %p144
    %p146 = scmp.le.s32.totalorder 1, %s9
    %p147 = scmp.lt.s32.totalorder %s9, 3
    %p148 = pnand %p146, %p147
    %p149 = pneg %p148
    // Predicated region
    $region9: #{pspnet_forward.17} parent=5 // pred_check
      _
    $region10: #{pspnet_forward.17} parent=5 // pred_check_branch
      %151 = sbr.rel (%p148) target = $region12
    $region11: #{pspnet_forward.17} parent=5 // pred_region
      %s152 = ssub.s32 %s9, 1
      // Predicated region
      $region13: #{pspnet_forward.17} parent=11 // pred_check
        %p153 = pneg %p84
      $region14: #{pspnet_forward.17} parent=11 // pred_check_branch
        %155 = sbr.rel (%p153) target = $region16
      $region15: #{pspnet_forward.17} parent=11 // pred_region
        %s156 = smul.u32 16, %s21
        %p157 = scmp.lt.s32.totalorder %s156, 15
        %s158 = scalar_select %p157, %s156, 15
        %p159 = scmp.lt.s32.totalorder %s20, 0
        %s160 = scalar_select %p159, %s20, 0
        %s161 = sadd.s32 %s160, %s158
        %s162 = smul.addr %s161, 4
        %s163 = scalar_lea.vmem %s1, %s162
        %s164 = smul.u32 16, %s21
      $region16: #{pspnet_forward.17} parent=11 // pred_fallthru
        _
      // Predicated region
      $region17: #{pspnet_forward.17} parent=11 // pred_check
        %p165 = pneg %p110
      $region18: #{pspnet_forward.17} parent=11 // pred_check_branch
        %167 = sbr.rel (%p165) target = $region20
      $region19: #{pspnet_forward.17} parent=11 // pred_region
        %p168 = scmp.lt.s32.totalorder %s20, 0
        %s169 = scalar_select %p168, %s20, 0
        %s170 = scalar_lea.vmem %s2, %s169
      $region20: #{pspnet_forward.17} parent=11 // pred_fallthru
        _
    $region12: #{pspnet_forward.17} parent=5 // pred_fallthru
      _
    %p171 = scmp.lt.s32.totalorder %s9, 2
    // Predicated region
    $region21: #{pspnet_forward.17} parent=5 // pred_check
      %p172 = pneg %p171
    $region22: #{pspnet_forward.17} parent=5 // pred_check_branch
      %174 = sbr.rel (%p172) target = $region24
    $region23: #{pspnet_forward.17} parent=5 // pred_region
      // Predicated region
      $region25: #{pspnet_forward.17} parent=23 // pred_check
        %p175 = pneg %p50
      $region26: #{pspnet_forward.17} parent=23 // pred_check_branch
        %177 = sbr.rel (%p175) target = $region28
      $region27: #{pspnet_forward.17} parent=23 // pred_region
        %s178 = smul.u32 4, %s16
        %p179 = scmp.lt.s32.totalorder %s178, 7
        %s180 = scalar_select %p179, %s178, 7
        %p181 = scmp.lt.s32.totalorder %s18, 0
        %s182 = scalar_select %p181, %s18, 0
        %s183 = sadd.s32 %s182, %s180
        %s184 = smul.addr %s183, 4
        %s185 = scalar_lea.vmem %s0, %s184
        %s186 = smul.u32 4, %s16
      $region28: #{pspnet_forward.17} parent=23 // pred_fallthru
        _
    $region24: #{pspnet_forward.17} parent=5 // pred_fallthru
      _
    %p187 = scmp.le.s32.totalorder 1, %s9
    %p188 = scmp.lt.s32.totalorder %s9, 3
    %p189 = pnand %p187, %p188
    %p190 = pneg %p189
    // Predicated region
    $region29: #{pspnet_forward.17} parent=5 // pred_check
      _
    $region30: #{pspnet_forward.17} parent=5 // pred_check_branch
      %192 = sbr.rel (%p189) target = $region32
    $region31: #{pspnet_forward.17} parent=5 // pred_region
      %s193 = ssub.s32 %s9, 1
      %s194 = smul.u32 4, %s19
      %p195 = scmp.lt.s32.totalorder %s194, 7
      %s196 = scalar_select %p195, %s194, 7
      %p197 = scmp.lt.s32.totalorder %s21, 0
      %s198 = scalar_select %p197, %s21, 0
      %s199 = sadd.s32 %s198, %s196
      %s200 = smul.addr %s199, 4
      %s201 = scalar_lea.vmem %s0, %s200
      %p202 = pneg %p56
      %p203 = pneg %p53
      %s204 = smul.u32 16, %s21
      %p205 = scmp.lt.s32.totalorder %s204, 15
      %s206 = scalar_select %p205, %s204, 15
      %p207 = scmp.lt.s32.totalorder %s20, 0
      %s208 = scalar_select %p207, %s20, 0
      %s209 = sadd.s32 %s208, %s206
      %s210 = smul.addr %s209, 4
      %s211 = scalar_lea.vmem %s1, %s210
      %p212 = pneg %p84
      %p213 = pneg %p81
      %p214 = scmp.lt.s32.totalorder %s20, 0
      %s215 = scalar_select %p214, %s20, 0
      %s216 = scalar_lea.vmem %s2, %s215
      %p217 = pneg %p110
      %p218 = pneg %p107
      %p219 = pneg %p138
      %p220 = pneg %p135
      %s221 = smul.u32 4, %s19
      %p222 = scmp.lt.s32.totalorder %s221, 7
      %s223 = scalar_select %p222, %s221, 7
      %p224 = scmp.lt.s32.totalorder %s20, 0
      %s225 = scalar_select %p224, %s20, 0
      %s226 = sadd.s32 %s225, %s223
      %s227 = smul.addr %s226, 4
      %s228 = scalar_lea.vmem %s3, %s227
      %s229 = smul.u32 4, %s19
      %p230 = scmp.lt.s32.totalorder %s229, 7
      %s231 = scalar_select %p230, %s229, 7
      %p232 = scmp.lt.s32.totalorder %s21, 0
      %s233 = scalar_select %p232, %s21, 0
      %s234 = sadd.s32 %s233, %s231
      %s235 = smul.addr %s234, 4
      %s236 = scalar_lea.vmem %s0, %s235
      %s237 = smul.u32 4, %s19
      %s238 = smul.u32 16, %s21
      %p239 = scmp.lt.s32.totalorder %s238, 15
      %s240 = scalar_select %p239, %s238, 15
      %p241 = scmp.lt.s32.totalorder %s20, 0
      %s242 = scalar_select %p241, %s20, 0
      %s243 = sadd.s32 %s242, %s240
      %s244 = smul.addr %s243, 4
      %s245 = scalar_lea.vmem %s1, %s244
      %s246 = smul.u32 16, %s21
      %p247 = scmp.lt.s32.totalorder %s20, 0
      %s248 = scalar_select %p247, %s20, 0
      %s249 = scalar_lea.vmem %s2, %s248
      %s250 = smul.u32 4, %s19
      %p251 = scmp.lt.s32.totalorder %s250, 7
      %s252 = scalar_select %p251, %s250, 7
      %p253 = scmp.lt.s32.totalorder %s20, 0
      %s254 = scalar_select %p253, %s20, 0
      %s255 = sadd.s32 %s254, %s252
      %s256 = smul.addr %s255, 4
      %s257 = scalar_lea.vmem %s3, %s256
      %s258 = smul.u32 4, %s19
      %p260 = scmp.eq.s32.totalorder %s21, 0
      // Predicated region
      $region33: #{pspnet_forward.17} parent=31 // pred_check
        %p261 = pneg %p260
      $region34: #{pspnet_forward.17} parent=31 // pred_check_branch
        %263 = sbr.rel (%p261) target = $region36
      $region35: #{pspnet_forward.17} parent=31 // pred_region
        %264 = vst [vmem:[#allocation2] sm:$0xff] 0.0
        %265 = vst [vmem:[#allocation2 + $0x8] sm:$0xff] 0.0
        %266 = vst [vmem:[#allocation2 + $0x10] sm:$0xff] 0.0
        %267 = vst [vmem:[#allocation2 + $0x18] sm:$0xff] 0.0
      $region36: #{pspnet_forward.17} parent=31 // pred_fallthru
        _
      %v268 = vld [vmem:[#allocation2] sm:$0xff]
      %v269 = vld [vmem:[#allocation2 + $0x8] sm:$0xff]
      %v270 = vld [vmem:[#allocation2 + $0x10] sm:$0xff]
      %v271 = vld [vmem:[#allocation2 + $0x18] sm:$0xff]
      %v272 = vld [vmem:[%s236] sm:$0xf]
      %v273 = vld [vmem:[%s236 + $0x4] sm:$0xf]
      %v274 = vld [vmem:[%s236 + $0x8] sm:$0xf]
      %v275 = vld [vmem:[%s236 + $0xc] sm:$0xf]
      %v276 = vld [vmem:[%s245] sm:$0xf]
      %v277 = vld [vmem:[%s245 + $0x4] sm:$0xf]
      %v278 = vld [vmem:[%s245 + $0x8] sm:$0xf]
      %v279 = vld [vmem:[%s245 + $0xc] sm:$0xf]
      %v280 = vld [vmem:[%s245 + $0x10] sm:$0xf]
      %v281 = vld [vmem:[%s245 + $0x14] sm:$0xf]
      %v282 = vld [vmem:[%s245 + $0x18] sm:$0xf]
      %v283 = vld [vmem:[%s245 + $0x1c] sm:$0xf]
      %v284 = vld [vmem:[%s245 + $0x20] sm:$0xf]
      %v285 = vld [vmem:[%s245 + $0x24] sm:$0xf]
      %v286 = vld [vmem:[%s245 + $0x28] sm:$0xf]
      %v287 = vld [vmem:[%s245 + $0x2c] sm:$0xf]
      %v288 = vld [vmem:[%s245 + $0x30] sm:$0xf]
      %v289 = vld [vmem:[%s245 + $0x34] sm:$0xf]
      %v290 = vld [vmem:[%s245 + $0x38] sm:$0xf]
      %v291 = vld [vmem:[%s245 + $0x3c] sm:$0xf]
      %v296 = vunpack.c.l.b16 %v272
      %v297 = vunpack.c.l.b16 %v273
      %v298 = vunpack.c.l.b16 %v274
      %v299 = vunpack.c.l.b16 %v275
      %v300 = vpack.c.b16 %v297, %v296
      %v301 = vpack.c.b16 %v299, %v298
      %v320 = vunpack.c.l.b16 %v276
      %v321 = vunpack.c.l.b16 %v277
      %v322 = vunpack.c.l.b16 %v278
      %v323 = vunpack.c.l.b16 %v279
      %v324 = vunpack.c.l.b16 %v280
      %v325 = vunpack.c.l.b16 %v281
      %v326 = vunpack.c.l.b16 %v282
      %v327 = vunpack.c.l.b16 %v283
      %v328 = vunpack.c.l.b16 %v284
      %v329 = vunpack.c.l.b16 %v285
      %v330 = vunpack.c.l.b16 %v286
      %v331 = vunpack.c.l.b16 %v287
      %v332 = vunpack.c.l.b16 %v288
      %v333 = vunpack.c.l.b16 %v289
      %v334 = vunpack.c.l.b16 %v290
      %v335 = vunpack.c.l.b16 %v291
      %v336 = vpack.c.b16 %v321, %v320
      %v337 = vpack.c.b16 %v323, %v322
      %v338 = vpack.c.b16 %v325, %v324
      %v339 = vpack.c.b16 %v327, %v326
      %v340 = vpack.c.b16 %v329, %v328
      %v341 = vpack.c.b16 %v331, %v330
      %v342 = vpack.c.b16 %v333, %v332
      %v343 = vpack.c.b16 %v335, %v334
      %352 = vmatprep.subr.bf16.mxu0 0
      %353 = vmatpush1.bf16.msra.mxu0 %v343
      %354 = vmatprep.subr.bf16.mxu0 0
      %355 = vmatpush1.bf16.msra.mxu0 %v342
      %356 = vmatprep.subr.bf16.mxu0 0
      %357 = vmatpush1.bf16.msra.mxu0 %v341
      %358 = vmatprep.subr.bf16.mxu0 0
      %359 = vmatpush1.bf16.msra.mxu0 %v340
      %360 = vmatprep.subr.bf16.mxu0 0
      %361 = vmatpush1.bf16.msra.mxu0 %v339
      %362 = vmatprep.subr.bf16.mxu0 0
      %363 = vmatpush1.bf16.msra.mxu0 %v338
      %364 = vmatprep.subr.bf16.mxu0 0
      %365 = vmatpush1.bf16.msra.mxu0 %v337
      %366 = vmatprep.subr.bf16.mxu0 0
      %367 = vmatpush1.bf16.msra.mxu0 %v336
      %368 = vmatprep.subr.bf16.mxu0 0
      %369 = vmatpush2.bf16.msra.mxu0 0
      %370 = vmatprep.subr.bf16.mxu0 0
      %371 = vmatpush2.bf16.msra.mxu0 0
      %372 = vmatprep.subr.bf16.mxu0 0
      %373 = vmatpush2.bf16.msra.mxu0 0
      %374 = vmatprep.subr.bf16.mxu0 0
      %375 = vmatpush2.bf16.msra.mxu0 0
      %376 = vmatprep.subr.bf16.mxu0 0
      %377 = vmatpush2.bf16.msra.mxu0 0
      %378 = vmatprep.subr.bf16.mxu0 0
      %379 = vmatpush2.bf16.msra.mxu0 0
      %380 = vmatprep.subr.bf16.mxu0 0
      %381 = vmatpush2.bf16.msra.mxu0 0
      %382 = vmatprep.subr.bf16.mxu0 0
      %383 = vmatpush2.bf16.msra.mxu0 0
      %384 = vmatprep.mubr.bf16.mxu0 0
      %385 = vmatmul.mubr.bf16.gmra.mxu0 %v300
      %v386 = vpop.f32.mrf.mxu0
      %v387 = vadd.f32 0.0, %v386
      %v388 = vpop.f32.mrf.mxu0
      %v389 = vpop.f32.mrf.mxu0
      %v390 = vadd.f32 0.0, %v389
      %v391 = vpop.f32.mrf.mxu0
      %392 = vmatprep.mubr.bf16.mxu0 0
      %393 = vmatmul.mubr.bf16.gmra.mxu0 %v301
      %v394 = vpop.f32.mrf.mxu0
      %v395 = vadd.f32 0.0, %v394
      %v396 = vpop.f32.mrf.mxu0
      %v397 = vpop.f32.mrf.mxu0
      %v398 = vadd.f32 0.0, %v397
      %v399 = vpop.f32.mrf.mxu0
      %400 = vdwg.mxu0
      %v401 = vadd.f32 %v268, %v387
      %v402 = vadd.f32 %v269, %v390
      %v403 = vadd.f32 %v270, %v395
      %v404 = vadd.f32 %v271, %v398
      %405 = vst [vmem:[#allocation2] sm:$0xff] %v401
      %406 = vst [vmem:[#allocation2 + $0x8] sm:$0xff] %v402
      %407 = vst [vmem:[#allocation2 + $0x10] sm:$0xff] %v403
      %408 = vst [vmem:[#allocation2 + $0x18] sm:$0xff] %v404
      // Predicated region
      $region37: #{pspnet_forward.17} parent=31 // pred_check
        %p409 = pneg %p260
      $region38: #{pspnet_forward.17} parent=31 // pred_check_branch
        %411 = sbr.rel (%p409) target = $region40
      $region39: #{pspnet_forward.17} parent=31 // pred_region
        %v412 = vld [vmem:[#allocation2] sm:$0xff]
        %v413 = vld [vmem:[#allocation2 + $0x8] sm:$0xff]
        %v414 = vld [vmem:[#allocation2 + $0x10] sm:$0xff]
        %v415 = vld [vmem:[#allocation2 + $0x18] sm:$0xff]
        %v416 = vld [vmem:[%s249] sm:$0x1]
        %v418 = vlaneseq
        %v419 = vshrl.u32 %v418, 7
        %v420 = vsub.s32 0, %v419
        %v421 = vrot.slane %v416, %v420
        %v423 = vadd.f32 %v412, %v421
        %v424 = vadd.f32 %v413, %v421
        %v425 = vadd.f32 %v414, %v421
        %v426 = vadd.f32 %v415, %v421
        %v427 = vpack.c.bf16 %v424, %v423
        %v428 = vpack.c.bf16 %v426, %v425
        %v431 = vunpack.c.l.b16 %v427
        %v432 = vunpack.c.h.b16 %v427
        %v433 = vunpack.c.l.b16 %v428
        %v434 = vunpack.c.h.b16 %v428
        %v435 = vpack.c.b16 %v431, %v431
        %v436 = vpack.c.b16 %v432, %v432
        %v437 = vpack.c.b16 %v433, %v433
        %v438 = vpack.c.b16 %v434, %v434
        %443 = vst [vmem:[%s257] sm:$0xf] %v435
        %444 = vst [vmem:[%s257 + $0x4] sm:$0xf] %v436
        %445 = vst [vmem:[%s257 + $0x8] sm:$0xf] %v437
        %446 = vst [vmem:[%s257 + $0xc] sm:$0xf] %v438
      $region40: #{pspnet_forward.17} parent=31 // pred_fallthru
        _
      %s447 = smul.u32 4, %s19
      %p448 = scmp.lt.s32.totalorder %s447, 7
      %s449 = scalar_select %p448, %s447, 7
      %p450 = scmp.lt.s32.totalorder %s20, 0
      %s451 = scalar_select %p450, %s20, 0
      %s452 = sadd.s32 %s451, %s449
      %s453 = smul.addr %s452, 4
      %s454 = scalar_lea.vmem %s3, %s453
      // Predicated region
      $region41: #{pspnet_forward.17} parent=31 // pred_check
        %p455 = pneg %p135
      $region42: #{pspnet_forward.17} parent=31 // pred_check_branch
        %457 = sbr.rel (%p455) target = $region44
      $region43: #{pspnet_forward.17} parent=31 // pred_region
        %s458 = smul.u32 4, %s19
      $region44: #{pspnet_forward.17} parent=31 // pred_fallthru
        _
    $region32: #{pspnet_forward.17} parent=5 // pred_fallthru
      _
    %p459 = scmp.le.s32.totalorder 2, %s9
    // Predicated region
    $region45: #{pspnet_forward.17} parent=5 // pred_check
      %p460 = pneg %p459
    $region46: #{pspnet_forward.17} parent=5 // pred_check_branch
      %462 = sbr.rel (%p460) target = $region48
    $region47: #{pspnet_forward.17} parent=5 // pred_region
      %s463 = ssub.s32 %s9, 2
      // Predicated region
      $region49: #{pspnet_forward.17} parent=47 // pred_check
        %p464 = pneg %p141
      $region50: #{pspnet_forward.17} parent=47 // pred_check_branch
        %466 = sbr.rel (%p464) target = $region52
      $region51: #{pspnet_forward.17} parent=47 // pred_region
        %s467 = smul.u32 4, %s22
        %p468 = scmp.lt.s32.totalorder %s467, 7
        %s469 = scalar_select %p468, %s467, 7
        %p470 = scmp.lt.s32.totalorder %s23, 0
        %s471 = scalar_select %p470, %s23, 0
        %s472 = sadd.s32 %s471, %s469
        %s473 = smul.addr %s472, 4
        %s474 = scalar_lea.vmem %s3, %s473
      $region52: #{pspnet_forward.17} parent=47 // pred_fallthru
        _
    $region48: #{pspnet_forward.17} parent=5 // pred_fallthru
      _
  $region6: #{pspnet_forward.17} parent=0 // loop_footer
    %s13 = sadd.s32 1, %s9
  $region7: #{pspnet_forward.17} parent=0 // loop_footer_branch
    %8 = sbr.rel target = $region3
  $region8: #{pspnet_forward.17} parent=0 // loop_exit
    _

// kernel: mul.0
$region0: #{mul.0}
  #allocation0 [shape = 's32[1]{0}', space=sflag, size = 0x4, scoped, tag = 'scoped memory for mul.0']
  %s0 = inlined_call_operand.vmem [shape: bf16[50,128], index: 0, kind: input, shape index: {}]
  %s1 = inlined_call_operand.vmem [shape: bf16[50,128], index: 1, kind: input, shape index: {}]
  %s2 = inlined_call_operand.vmem [shape: bf16[50,128], index: 2, kind: output, shape index: {}]
  %v3 = vld [vmem:[%s0] sm:$0xf]
  %v4 = vunpack.c.l.bf16 %v3
  %v5 = vunpack.c.h.bf16 %v3
  %v6 = vld [vmem:[%s1] sm:$0xf]
  %v7 = vunpack.c.l.bf16 %v6
  %v8 = vunpack.c.h.bf16 %v6
  %9 = xla_tuple %v4, %v7
  %10 = xla_tuple %9
  %v11 = vmul.f32 %v4, %v7
  %12 = xla_tuple %v11
  %v13 = vpack.c.bf16 0.0, %v11
  %14 = vst [vmem:[%s2] sm:$0xf] %v13
  %s15 = scalar_lea.vmem %s0, 4
  %v16 = vld [vmem:[%s15] sm:$0xf]
  %v17 = vunpack.c.l.bf16 %v16
  %v18 = vunpack.c.h.bf16 %v16
  %s19 = scalar_lea.vmem %s1, 4
  %v20 = vld [vmem:[%s19] sm:$0xf]
  %v21 = vunpack.c.l.bf16 %v20
  %v22 = vunpack.c.h.bf16 %v20
  %23 = xla_tuple %v17, %v21
  %24 = xla_tuple %23
  %v25 = vmul.f32 %v17, %v21
  %26 = xla_tuple %v25
  %s27 = scalar_lea.vmem %s2, 4
  %v28 = vpack.c.bf16 0.0, %v25
  %29 = vst [vmem:[%s27] sm:$0xf] %v28
  %s30 = scalar_lea.vmem %s0, 8
  %v31 = vld [vmem:[%s30] sm:$0xf]
  %v32 = vunpack.c.l.bf16 %v31
  %v33 = vunpack.c.h.bf16 %v31
  %s34 = scalar_lea.vmem %s1, 8
  %v35 = vld [vmem:[%s34] sm:$0xf]
  %v36 = vunpack.c.l.bf16 %v35
  %v37 = vunpack.c.h.bf16 %v35
  %38 = xla_tuple %v32, %v36
  %39 = xla_tuple %38
  %v40 = vmul.f32 %v32, %v36
  %41 = xla_tuple %v40
  %s42 = scalar_lea.vmem %s2, 8
  %v43 = vpack.c.bf16 0.0, %v40
  %44 = vst [vmem:[%s42] sm:$0xf] %v43
  %s45 = scalar_lea.vmem %s0, 12
  %v46 = vld [vmem:[%s45] sm:$0xf]
  %v47 = vunpack.c.l.bf16 %v46
  %v48 = vunpack.c.h.bf16 %v46
  %s49 = scalar_lea.vmem %s1, 12
  %v50 = vld [vmem:[%s49] sm:$0xf]
  %v51 = vunpack.c.l.bf16 %v50
  %v52 = vunpack.c.h.bf16 %v50
  %53 = xla_tuple %v47, %v51
  %54 = xla_tuple %53
  %v55 = vmul.f32 %v47, %v51
  %56 = xla_tuple %v55
  %s57 = scalar_lea.vmem %s2, 12
  %v58 = vpack.c.bf16 0.0, %v55
  %59 = vst [vmem:[%s57] sm:$0xf] %v58
  %s60 = scalar_lea.vmem %s0, 16
  %v61 = vld [vmem:[%s60] sm:$0xf]
  %v62 = vunpack.c.l.bf16 %v61
  %v63 = vunpack.c.h.bf16 %v61
  %s64 = scalar_lea.vmem %s1, 16
  %v65 = vld [vmem:[%s64] sm:$0xf]
  %v66 = vunpack.c.l.bf16 %v65
  %v67 = vunpack.c.h.bf16 %v65
  %68 = xla_tuple %v62, %v66
  %69 = xla_tuple %68
  %v70 = vmul.f32 %v62, %v66
  %71 = xla_tuple %v70
  %s72 = scalar_lea.vmem %s2, 16
  %v73 = vpack.c.bf16 0.0, %v70
  %74 = vst [vmem:[%s72] sm:$0xf] %v73
  %s75 = scalar_lea.vmem %s0, 20
  %v76 = vld [vmem:[%s75] sm:$0xf]
  %v77 = vunpack.c.l.bf16 %v76
  %v78 = vunpack.c.h.bf16 %v76
  %s79 = scalar_lea.vmem %s1, 20
  %v80 = vld [vmem:[%s79] sm:$0xf]
  %v81 = vunpack.c.l.bf16 %v80
  %v82 = vunpack.c.h.bf16 %v80
  %83 = xla_tuple %v77, %v81
  %84 = xla_tuple %83
  %v85 = vmul.f32 %v77, %v81
  %86 = xla_tuple %v85
  %s87 = scalar_lea.vmem %s2, 20
  %v88 = vpack.c.bf16 0.0, %v85
  %89 = vst [vmem:[%s87] sm:$0xf] %v88
  %s90 = scalar_lea.vmem %s0, 24
  %v91 = vld [vmem:[%s90] sm:$0xf]
  %v92 = vunpack.c.l.bf16 %v91
  %v93 = vunpack.c.h.bf16 %v91
  %s94 = scalar_lea.vmem %s1, 24
  %v95 = vld [vmem:[%s94] sm:$0xf]
  %v96 = vunpack.c.l.bf16 %v95
  %v97 = vunpack.c.h.bf16 %v95
  %98 = xla_tuple %v92, %v96
  %99 = xla_tuple %98
  %v100 = vmul.f32 %v92, %v96
  %101 = xla_tuple %v100
  %s102 = scalar_lea.vmem %s2, 24
  %v103 = vpack.c.bf16 0.0, %v100
  %104 = vst [vmem:[%s102] sm:$0xf] %v103

// kernel: pspnet_forward.18
$region0: #{pspnet_forward.18}
  #allocation0 [shape = 'u32[]', space=smem, size = 0x4, offset = 0x4, fixed_abs, tag = 'smem constant byte address 0x4 - core index']
  #allocation1 [shape = 'u32[144,128]{1,0:T(1,128)}', space=vmem, size = 0x12000, scoped, tag = 'internal scratch']
  #allocation2 [shape = 'f32[64,128]{1,0:T(8,128)}', space=vmem, size = 0x8000, scoped, tag = 'scratch operand']
  %s0 = inlined_call_operand.vmem [shape: bf16[128,128], index: 0, kind: input, shape index: {}]
  %s1 = inlined_call_operand.vmem [shape: bf16[128,128], index: 1, kind: input, shape index: {}]
  %s2 = inlined_call_operand.vmem [shape: f32[1,128], index: 2, kind: input, shape index: {}]
  %s3 = inlined_call_operand.vmem [shape: bf16[128,128], index: 3, kind: output, shape index: {}]
  %s4 = sld [smem:[#allocation0]]
  $region53: #{pspnet_forward.18} parent=0
    _
  %s6 = ssub.s32 1, %s4
  %s7 = scalar_select 0, %s6, %s4
  loop: start=0, step=1, limit=4
  $region2: #{pspnet_forward.18} parent=0 // loop_pre_header
    _
  $region3: #{pspnet_forward.18} parent=0 // loop_header
    %s9 = sphi 0, %s13
    %p10 = scmp.ge.s32.totalorder %s9, 4
    %s16 = sphi 0, %s35
    %s17 = sphi 0, %s31
    %s18 = sphi 0, %s27
    %s19 = sphi 0, %s16
    %s20 = sphi 0, %s17
    %s21 = sphi 0, %s18
    %s22 = sphi 0, %s19
    %s23 = sphi 0, %s20
    %s24 = sphi 0, %s21
    %s40 = sphi 0, %s42
    %s43 = sphi 0, %s40
    %s44 = sphi 0, %s43
    %s60 = sphi 0, %s44
    %s68 = sphi 0, %s70
    %s71 = sphi 0, %s68
    %s72 = sphi 0, %s71
    %s88 = sphi 0, %s72
    %s94 = sphi 0, %s96
    %s97 = sphi 0, %s94
    %s98 = sphi 0, %s97
    %s114 = sphi 0, %s98
    %s122 = sphi 0, %s124
    %s125 = sphi 0, %s122
    %s126 = sphi 0, %s125
    %s142 = sphi 0, %s126
  $region4: #{pspnet_forward.18} parent=0 // loop_header_branch
    %12 = sbr.rel (%p10) target = $region8
  $region5: #{pspnet_forward.18} parent=0 // loop_body
    %s14 = ssub.s32 %s9, 1
    %s15 = ssub.s32 %s9, 2
    %s25 = sadd.s32 1, %s18
    %p26 = scmp.ge.s32.totalorder %s25, 1
    %s27 = scalar_select %p26, 0, %s25
    %s28 = sadd.s32 1, %s17
    %s29 = scalar_select %p26, %s28, %s17
    %p30 = scmp.ge.s32.totalorder %s29, 1
    %s31 = scalar_select %p30, 0, %s29
    %s32 = sadd.s32 1, %s16
    %s33 = scalar_select %p30, %s32, %s16
    %p34 = scmp.ge.s32.totalorder %s33, 2
    %s35 = scalar_select %p34, 0, %s33
    %s36 = ssub.s32 %s16, %s35
    %s37 = ssub.s32 %s18, %s27
    %s38 = sor.u32 %s36, %s37
    %p39 = scmp.eq.s32.totalorder %s38, 0
    %s41 = sadd.s32 %s40, 1
    %s42 = scalar_select %p39, %s40, %s41
    %p45 = pneg %p39
    %p46 = scmp.eq.s32.totalorder %s9, 1
    %p47 = por %p45, %p46
    %p48 = scmp.ne.s32.totalorder %s40, %s43
    %p49 = scmp.eq.s32.totalorder %s9, 0
    %p50 = por %p48, %p49
    %p51 = scmp.ne.s32.totalorder %s40, %s43
    %p52 = scmp.eq.s32.totalorder %s14, 1
    %p53 = por %p51, %p52
    %p54 = scmp.ne.s32.totalorder %s43, %s44
    %p55 = scmp.eq.s32.totalorder %s14, 0
    %p56 = por %p54, %p55
    %p57 = scmp.ne.s32.totalorder %s43, %s44
    %p58 = scmp.eq.s32.totalorder %s15, 1
    %p59 = por %p57, %p58
    %p61 = scmp.ne.s32.totalorder %s44, %s60
    %p62 = scmp.eq.s32.totalorder %s15, 0
    %p63 = por %p61, %p62
    %s64 = ssub.s32 %s18, %s27
    %s65 = ssub.s32 %s17, %s31
    %s66 = sor.u32 %s64, %s65
    %p67 = scmp.eq.s32.totalorder %s66, 0
    %s69 = sadd.s32 %s68, 1
    %s70 = scalar_select %p67, %s68, %s69
    %p73 = pneg %p67
    %p74 = scmp.eq.s32.totalorder %s9, 1
    %p75 = por %p73, %p74
    %p76 = scmp.ne.s32.totalorder %s68, %s71
    %p77 = scmp.eq.s32.totalorder %s9, 0
    %p78 = por %p76, %p77
    %p79 = scmp.ne.s32.totalorder %s68, %s71
    %p80 = scmp.eq.s32.totalorder %s14, 1
    %p81 = por %p79, %p80
    %p82 = scmp.ne.s32.totalorder %s71, %s72
    %p83 = scmp.eq.s32.totalorder %s14, 0
    %p84 = por %p82, %p83
    %p85 = scmp.ne.s32.totalorder %s71, %s72
    %p86 = scmp.eq.s32.totalorder %s15, 1
    %p87 = por %p85, %p86
    %p89 = scmp.ne.s32.totalorder %s72, %s88
    %p90 = scmp.eq.s32.totalorder %s15, 0
    %p91 = por %p89, %p90
    %s92 = ssub.s32 %s17, %s31
    %p93 = scmp.eq.s32.totalorder %s92, 0
    %s95 = sadd.s32 %s94, 1
    %s96 = scalar_select %p93, %s94, %s95
    %p99 = pneg %p93
    %p100 = scmp.eq.s32.totalorder %s9, 1
    %p101 = por %p99, %p100
    %p102 = scmp.ne.s32.totalorder %s94, %s97
    %p103 = scmp.eq.s32.totalorder %s9, 0
    %p104 = por %p102, %p103
    %p105 = scmp.ne.s32.totalorder %s94, %s97
    %p106 = scmp.eq.s32.totalorder %s14, 1
    %p107 = por %p105, %p106
    %p108 = scmp.ne.s32.totalorder %s97, %s98
    %p109 = scmp.eq.s32.totalorder %s14, 0
    %p110 = por %p108, %p109
    %p111 = scmp.ne.s32.totalorder %s97, %s98
    %p112 = scmp.eq.s32.totalorder %s15, 1
    %p113 = por %p111, %p112
    %p115 = scmp.ne.s32.totalorder %s98, %s114
    %p116 = scmp.eq.s32.totalorder %s15, 0
    %p117 = por %p115, %p116
    %s118 = ssub.s32 %s16, %s35
    %s119 = ssub.s32 %s17, %s31
    %s120 = sor.u32 %s118, %s119
    %p121 = scmp.eq.s32.totalorder %s120, 0
    %s123 = sadd.s32 %s122, 1
    %s124 = scalar_select %p121, %s122, %s123
    %p127 = pneg %p121
    %p128 = scmp.eq.s32.totalorder %s9, 1
    %p129 = por %p127, %p128
    %p130 = scmp.ne.s32.totalorder %s122, %s125
    %p131 = scmp.eq.s32.totalorder %s9, 0
    %p132 = por %p130, %p131
    %p133 = scmp.ne.s32.totalorder %s122, %s125
    %p134 = scmp.eq.s32.totalorder %s14, 1
    %p135 = por %p133, %p134
    %p136 = scmp.ne.s32.totalorder %s125, %s126
    %p137 = scmp.eq.s32.totalorder %s14, 0
    %p138 = por %p136, %p137
    %p139 = scmp.ne.s32.totalorder %s125, %s126
    %p140 = scmp.eq.s32.totalorder %s15, 1
    %p141 = por %p139, %p140
    %p143 = scmp.ne.s32.totalorder %s126, %s142
    %p144 = scmp.eq.s32.totalorder %s15, 0
    %p145 = por %p143, %p144
    %p146 = scmp.le.s32.totalorder 1, %s9
    %p147 = scmp.lt.s32.totalorder %s9, 3
    %p148 = pnand %p146, %p147
    %p149 = pneg %p148
    // Predicated region
    $region9: #{pspnet_forward.18} parent=5 // pred_check
      _
    $region10: #{pspnet_forward.18} parent=5 // pred_check_branch
      %151 = sbr.rel (%p148) target = $region12
    $region11: #{pspnet_forward.18} parent=5 // pred_region
      %s152 = ssub.s32 %s9, 1
      // Predicated region
      $region13: #{pspnet_forward.18} parent=11 // pred_check
        %p153 = pneg %p84
      $region14: #{pspnet_forward.18} parent=11 // pred_check_branch
        %155 = sbr.rel (%p153) target = $region16
      $region15: #{pspnet_forward.18} parent=11 // pred_region
        %s156 = smul.u32 16, %s21
        %p157 = scmp.lt.s32.totalorder %s156, 15
        %s158 = scalar_select %p157, %s156, 15
        %p159 = scmp.lt.s32.totalorder %s20, 0
        %s160 = scalar_select %p159, %s20, 0
        %s161 = sadd.s32 %s160, %s158
        %s162 = smul.addr %s161, 4
        %s163 = scalar_lea.vmem %s1, %s162
        %s164 = smul.u32 16, %s21
      $region16: #{pspnet_forward.18} parent=11 // pred_fallthru
        _
      // Predicated region
      $region17: #{pspnet_forward.18} parent=11 // pred_check
        %p165 = pneg %p110
      $region18: #{pspnet_forward.18} parent=11 // pred_check_branch
        %167 = sbr.rel (%p165) target = $region20
      $region19: #{pspnet_forward.18} parent=11 // pred_region
        %p168 = scmp.lt.s32.totalorder %s20, 0
        %s169 = scalar_select %p168, %s20, 0
        %s170 = scalar_lea.vmem %s2, %s169
      $region20: #{pspnet_forward.18} parent=11 // pred_fallthru
        _
    $region12: #{pspnet_forward.18} parent=5 // pred_fallthru
      _
    %p171 = scmp.lt.s32.totalorder %s9, 2
    // Predicated region
    $region21: #{pspnet_forward.18} parent=5 // pred_check
      %p172 = pneg %p171
    $region22: #{pspnet_forward.18} parent=5 // pred_check_branch
      %174 = sbr.rel (%p172) target = $region24
    $region23: #{pspnet_forward.18} parent=5 // pred_region
      // Predicated region
      $region25: #{pspnet_forward.18} parent=23 // pred_check
        %p175 = pneg %p50
      $region26: #{pspnet_forward.18} parent=23 // pred_check_branch
        %177 = sbr.rel (%p175) target = $region28
      $region27: #{pspnet_forward.18} parent=23 // pred_region
        %s178 = smul.u32 8, %s16
        %p179 = scmp.lt.s32.totalorder %s178, 15
        %s180 = scalar_select %p179, %s178, 15
        %p181 = scmp.lt.s32.totalorder %s18, 0
        %s182 = scalar_select %p181, %s18, 0
        %s183 = sadd.s32 %s182, %s180
        %s184 = smul.addr %s183, 4
        %s185 = scalar_lea.vmem %s0, %s184
        %s186 = smul.u32 8, %s16
      $region28: #{pspnet_forward.18} parent=23 // pred_fallthru
        _
    $region24: #{pspnet_forward.18} parent=5 // pred_fallthru
      _
    %p187 = scmp.le.s32.totalorder 1, %s9
    %p188 = scmp.lt.s32.totalorder %s9, 3
    %p189 = pnand %p187, %p188
    %p190 = pneg %p189
    // Predicated region
    $region29: #{pspnet_forward.18} parent=5 // pred_check
      _
    $region30: #{pspnet_forward.18} parent=5 // pred_check_branch
      %192 = sbr.rel (%p189) target = $region32
    $region31: #{pspnet_forward.18} parent=5 // pred_region
      %s193 = ssub.s32 %s9, 1
      %s194 = smul.u32 8, %s19
      %p195 = scmp.lt.s32.totalorder %s194, 15
      %s196 = scalar_select %p195, %s194, 15
      %p197 = scmp.lt.s32.totalorder %s21, 0
      %s198 = scalar_select %p197, %s21, 0
      %s199 = sadd.s32 %s198, %s196
      %s200 = smul.addr %s199, 4
      %s201 = scalar_lea.vmem %s0, %s200
      %p202 = pneg %p56
      %p203 = pneg %p53
      %s204 = smul.u32 16, %s21
      %p205 = scmp.lt.s32.totalorder %s204, 15
      %s206 = scalar_select %p205, %s204, 15
      %p207 = scmp.lt.s32.totalorder %s20, 0
      %s208 = scalar_select %p207, %s20, 0
      %s209 = sadd.s32 %s208, %s206
      %s210 = smul.addr %s209, 4
      %s211 = scalar_lea.vmem %s1, %s210
      %p212 = pneg %p84
      %p213 = pneg %p81
      %p214 = scmp.lt.s32.totalorder %s20, 0
      %s215 = scalar_select %p214, %s20, 0
      %s216 = scalar_lea.vmem %s2, %s215
      %p217 = pneg %p110
      %p218 = pneg %p107
      %p219 = pneg %p138
      %p220 = pneg %p135
      %s221 = smul.u32 8, %s19
      %p222 = scmp.lt.s32.totalorder %s221, 15
      %s223 = scalar_select %p222, %s221, 15
      %p224 = scmp.lt.s32.totalorder %s20, 0
      %s225 = scalar_select %p224, %s20, 0
      %s226 = sadd.s32 %s225, %s223
      %s227 = smul.addr %s226, 4
      %s228 = scalar_lea.vmem %s3, %s227
      %s229 = smul.u32 8, %s19
      %p230 = scmp.lt.s32.totalorder %s229, 15
      %s231 = scalar_select %p230, %s229, 15
      %p232 = scmp.lt.s32.totalorder %s21, 0
      %s233 = scalar_select %p232, %s21, 0
      %s234 = sadd.s32 %s233, %s231
      %s235 = smul.addr %s234, 4
      %s236 = scalar_lea.vmem %s0, %s235
      %s237 = smul.u32 8, %s19
      %s238 = smul.u32 16, %s21
      %p239 = scmp.lt.s32.totalorder %s238, 15
      %s240 = scalar_select %p239, %s238, 15
      %p241 = scmp.lt.s32.totalorder %s20, 0
      %s242 = scalar_select %p241, %s20, 0
      %s243 = sadd.s32 %s242, %s240
      %s244 = smul.addr %s243, 4
      %s245 = scalar_lea.vmem %s1, %s244
      %s246 = smul.u32 16, %s21
      %p247 = scmp.lt.s32.totalorder %s20, 0
      %s248 = scalar_select %p247, %s20, 0
      %s249 = scalar_lea.vmem %s2, %s248
      %s250 = smul.u32 8, %s19
      %p251 = scmp.lt.s32.totalorder %s250, 15
      %s252 = scalar_select %p251, %s250, 15
      %p253 = scmp.lt.s32.totalorder %s20, 0
      %s254 = scalar_select %p253, %s20, 0
      %s255 = sadd.s32 %s254, %s252
      %s256 = smul.addr %s255, 4
      %s257 = scalar_lea.vmem %s3, %s256
      %s258 = smul.u32 8, %s19
      %p260 = scmp.eq.s32.totalorder %s21, 0
      // Predicated region
      $region33: #{pspnet_forward.18} parent=31 // pred_check
        %p261 = pneg %p260
      $region34: #{pspnet_forward.18} parent=31 // pred_check_branch
        %263 = sbr.rel (%p261) target = $region36
      $region35: #{pspnet_forward.18} parent=31 // pred_region
        %264 = vst [vmem:[#allocation2] sm:$0xff] 0.0
        %265 = vst [vmem:[#allocation2 + $0x8] sm:$0xff] 0.0
        %266 = vst [vmem:[#allocation2 + $0x10] sm:$0xff] 0.0
        %267 = vst [vmem:[#allocation2 + $0x18] sm:$0xff] 0.0
        %268 = vst [vmem:[#allocation2 + $0x20] sm:$0xff] 0.0
        %269 = vst [vmem:[#allocation2 + $0x28] sm:$0xff] 0.0
        %270 = vst [vmem:[#allocation2 + $0x30] sm:$0xff] 0.0
        %271 = vst [vmem:[#allocation2 + $0x38] sm:$0xff] 0.0
      $region36: #{pspnet_forward.18} parent=31 // pred_fallthru
        _
      %v272 = vld [vmem:[#allocation2] sm:$0xff]
      %v273 = vld [vmem:[#allocation2 + $0x8] sm:$0xff]
      %v274 = vld [vmem:[#allocation2 + $0x10] sm:$0xff]
      %v275 = vld [vmem:[#allocation2 + $0x18] sm:$0xff]
      %v276 = vld [vmem:[#allocation2 + $0x20] sm:$0xff]
      %v277 = vld [vmem:[#allocation2 + $0x28] sm:$0xff]
      %v278 = vld [vmem:[#allocation2 + $0x30] sm:$0xff]
      %v279 = vld [vmem:[#allocation2 + $0x38] sm:$0xff]
      %v280 = vld [vmem:[%s236] sm:$0xf]
      %v281 = vld [vmem:[%s236 + $0x4] sm:$0xf]
      %v282 = vld [vmem:[%s236 + $0x8] sm:$0xf]
      %v283 = vld [vmem:[%s236 + $0xc] sm:$0xf]
      %v284 = vld [vmem:[%s236 + $0x10] sm:$0xf]
      %v285 = vld [vmem:[%s236 + $0x14] sm:$0xf]
      %v286 = vld [vmem:[%s236 + $0x18] sm:$0xf]
      %v287 = vld [vmem:[%s236 + $0x1c] sm:$0xf]
      %v288 = vld [vmem:[%s245] sm:$0xf]
      %v289 = vld [vmem:[%s245 + $0x4] sm:$0xf]
      %v290 = vld [vmem:[%s245 + $0x8] sm:$0xf]
      %v291 = vld [vmem:[%s245 + $0xc] sm:$0xf]
      %v292 = vld [vmem:[%s245 + $0x10] sm:$0xf]
      %v293 = vld [vmem:[%s245 + $0x14] sm:$0xf]
      %v294 = vld [vmem:[%s245 + $0x18] sm:$0xf]
      %v295 = vld [vmem:[%s245 + $0x1c] sm:$0xf]
      %v296 = vld [vmem:[%s245 + $0x20] sm:$0xf]
      %v297 = vld [vmem:[%s245 + $0x24] sm:$0xf]
      %v298 = vld [vmem:[%s245 + $0x28] sm:$0xf]
      %v299 = vld [vmem:[%s245 + $0x2c] sm:$0xf]
      %v300 = vld [vmem:[%s245 + $0x30] sm:$0xf]
      %v301 = vld [vmem:[%s245 + $0x34] sm:$0xf]
      %v302 = vld [vmem:[%s245 + $0x38] sm:$0xf]
      %v303 = vld [vmem:[%s245 + $0x3c] sm:$0xf]
      %v312 = vunpack.c.l.b16 %v280
      %v313 = vunpack.c.l.b16 %v281
      %v314 = vunpack.c.l.b16 %v282
      %v315 = vunpack.c.l.b16 %v283
      %v316 = vunpack.c.l.b16 %v284
      %v317 = vunpack.c.l.b16 %v285
      %v318 = vunpack.c.l.b16 %v286
      %v319 = vunpack.c.l.b16 %v287
      %v320 = vpack.c.b16 %v313, %v312
      %v321 = vpack.c.b16 %v315, %v314
      %v322 = vpack.c.b16 %v317, %v316
      %v323 = vpack.c.b16 %v319, %v318
      %v344 = vunpack.c.l.b16 %v288
      %v345 = vunpack.c.l.b16 %v289
      %v346 = vunpack.c.l.b16 %v290
      %v347 = vunpack.c.l.b16 %v291
      %v348 = vunpack.c.l.b16 %v292
      %v349 = vunpack.c.l.b16 %v293
      %v350 = vunpack.c.l.b16 %v294
      %v351 = vunpack.c.l.b16 %v295
      %v352 = vunpack.c.l.b16 %v296
      %v353 = vunpack.c.l.b16 %v297
      %v354 = vunpack.c.l.b16 %v298
      %v355 = vunpack.c.l.b16 %v299
      %v356 = vunpack.c.l.b16 %v300
      %v357 = vunpack.c.l.b16 %v301
      %v358 = vunpack.c.l.b16 %v302
      %v359 = vunpack.c.l.b16 %v303
      %v360 = vpack.c.b16 %v345, %v344
      %v361 = vpack.c.b16 %v347, %v346
      %v362 = vpack.c.b16 %v349, %v348
      %v363 = vpack.c.b16 %v351, %v350
      %v364 = vpack.c.b16 %v353, %v352
      %v365 = vpack.c.b16 %v355, %v354
      %v366 = vpack.c.b16 %v357, %v356
      %v367 = vpack.c.b16 %v359, %v358
      %376 = vmatprep.subr.bf16.mxu0 0
      %377 = vmatpush1.bf16.msra.mxu0 %v367
      %378 = vmatprep.subr.bf16.mxu0 0
      %379 = vmatpush1.bf16.msra.mxu0 %v366
      %380 = vmatprep.subr.bf16.mxu0 0
      %381 = vmatpush1.bf16.msra.mxu0 %v365
      %382 = vmatprep.subr.bf16.mxu0 0
      %383 = vmatpush1.bf16.msra.mxu0 %v364
      %384 = vmatprep.subr.bf16.mxu0 0
      %385 = vmatpush1.bf16.msra.mxu0 %v363
      %386 = vmatprep.subr.bf16.mxu0 0
      %387 = vmatpush1.bf16.msra.mxu0 %v362
      %388 = vmatprep.subr.bf16.mxu0 0
      %389 = vmatpush1.bf16.msra.mxu0 %v361
      %390 = vmatprep.subr.bf16.mxu0 0
      %391 = vmatpush1.bf16.msra.mxu0 %v360
      %392 = vmatprep.subr.bf16.mxu0 0
      %393 = vmatpush2.bf16.msra.mxu0 0
      %394 = vmatprep.subr.bf16.mxu0 0
      %395 = vmatpush2.bf16.msra.mxu0 0
      %396 = vmatprep.subr.bf16.mxu0 0
      %397 = vmatpush2.bf16.msra.mxu0 0
      %398 = vmatprep.subr.bf16.mxu0 0
      %399 = vmatpush2.bf16.msra.mxu0 0
      %400 = vmatprep.subr.bf16.mxu0 0
      %401 = vmatpush2.bf16.msra.mxu0 0
      %402 = vmatprep.subr.bf16.mxu0 0
      %403 = vmatpush2.bf16.msra.mxu0 0
      %404 = vmatprep.subr.bf16.mxu0 0
      %405 = vmatpush2.bf16.msra.mxu0 0
      %406 = vmatprep.subr.bf16.mxu0 0
      %407 = vmatpush2.bf16.msra.mxu0 0
      %408 = vmatprep.mubr.bf16.mxu0 0
      %409 = vmatmul.mubr.bf16.gmra.mxu0 %v320
      %v410 = vpop.f32.mrf.mxu0
      %v411 = vadd.f32 0.0, %v410
      %v412 = vpop.f32.mrf.mxu0
      %v413 = vpop.f32.mrf.mxu0
      %v414 = vadd.f32 0.0, %v413
      %v415 = vpop.f32.mrf.mxu0
      %416 = vmatprep.mubr.bf16.mxu0 0
      %417 = vmatmul.mubr.bf16.gmra.mxu0 %v321
      %v418 = vpop.f32.mrf.mxu0
      %v419 = vadd.f32 0.0, %v418
      %v420 = vpop.f32.mrf.mxu0
      %v421 = vpop.f32.mrf.mxu0
      %v422 = vadd.f32 0.0, %v421
      %v423 = vpop.f32.mrf.mxu0
      %424 = vmatprep.mubr.bf16.mxu0 0
      %425 = vmatmul.mubr.bf16.gmra.mxu0 %v322
      %v426 = vpop.f32.mrf.mxu0
      %v427 = vadd.f32 0.0, %v426
      %v428 = vpop.f32.mrf.mxu0
      %v429 = vpop.f32.mrf.mxu0
      %v430 = vadd.f32 0.0, %v429
      %v431 = vpop.f32.mrf.mxu0
      %432 = vmatprep.mubr.bf16.mxu0 0
      %433 = vmatmul.mubr.bf16.gmra.mxu0 %v323
      %v434 = vpop.f32.mrf.mxu0
      %v435 = vadd.f32 0.0, %v434
      %v436 = vpop.f32.mrf.mxu0
      %v437 = vpop.f32.mrf.mxu0
      %v438 = vadd.f32 0.0, %v437
      %v439 = vpop.f32.mrf.mxu0
      %440 = vdwg.mxu0
      %v441 = vadd.f32 %v272, %v411
      %v442 = vadd.f32 %v273, %v414
      %v443 = vadd.f32 %v274, %v419
      %v444 = vadd.f32 %v275, %v422
      %v445 = vadd.f32 %v276, %v427
      %v446 = vadd.f32 %v277, %v430
      %v447 = vadd.f32 %v278, %v435
      %v448 = vadd.f32 %v279, %v438
      %449 = vst [vmem:[#allocation2] sm:$0xff] %v441
      %450 = vst [vmem:[#allocation2 + $0x8] sm:$0xff] %v442
      %451 = vst [vmem:[#allocation2 + $0x10] sm:$0xff] %v443
      %452 = vst [vmem:[#allocation2 + $0x18] sm:$0xff] %v444
      %453 = vst [vmem:[#allocation2 + $0x20] sm:$0xff] %v445
      %454 = vst [vmem:[#allocation2 + $0x28] sm:$0xff] %v446
      %455 = vst [vmem:[#allocation2 + $0x30] sm:$0xff] %v447
      %456 = vst [vmem:[#allocation2 + $0x38] sm:$0xff] %v448
      // Predicated region
      $region37: #{pspnet_forward.18} parent=31 // pred_check
        %p457 = pneg %p260
      $region38: #{pspnet_forward.18} parent=31 // pred_check_branch
        %459 = sbr.rel (%p457) target = $region40
      $region39: #{pspnet_forward.18} parent=31 // pred_region
        %v460 = vld [vmem:[#allocation2] sm:$0xff]
        %v461 = vld [vmem:[#allocation2 + $0x8] sm:$0xff]
        %v462 = vld [vmem:[#allocation2 + $0x10] sm:$0xff]
        %v463 = vld [vmem:[#allocation2 + $0x18] sm:$0xff]
        %v464 = vld [vmem:[#allocation2 + $0x20] sm:$0xff]
        %v465 = vld [vmem:[#allocation2 + $0x28] sm:$0xff]
        %v466 = vld [vmem:[#allocation2 + $0x30] sm:$0xff]
        %v467 = vld [vmem:[#allocation2 + $0x38] sm:$0xff]
        %v468 = vld [vmem:[%s249] sm:$0x1]
        %v470 = vlaneseq
        %v471 = vshrl.u32 %v470, 7
        %v472 = vsub.s32 0, %v471
        %v473 = vrot.slane %v468, %v472
        %v475 = vadd.f32 %v460, %v473
        %v476 = vadd.f32 %v461, %v473
        %v477 = vadd.f32 %v462, %v473
        %v478 = vadd.f32 %v463, %v473
        %v479 = vadd.f32 %v464, %v473
        %v480 = vadd.f32 %v465, %v473
        %v481 = vadd.f32 %v466, %v473
        %v482 = vadd.f32 %v467, %v473
        %v483 = vmax.f32 %v475, 0.0
        %v484 = vmax.f32 %v476, 0.0
        %v485 = vmax.f32 %v477, 0.0
        %v486 = vmax.f32 %v478, 0.0
        %v487 = vmax.f32 %v479, 0.0
        %v488 = vmax.f32 %v480, 0.0
        %v489 = vmax.f32 %v481, 0.0
        %v490 = vmax.f32 %v482, 0.0
        %v491 = vpack.c.bf16 %v484, %v483
        %v492 = vpack.c.bf16 %v486, %v485
        %v493 = vpack.c.bf16 %v488, %v487
        %v494 = vpack.c.bf16 %v490, %v489
        %v499 = vunpack.c.l.b16 %v491
        %v500 = vunpack.c.h.b16 %v491
        %v501 = vunpack.c.l.b16 %v492
        %v502 = vunpack.c.h.b16 %v492
        %v503 = vunpack.c.l.b16 %v493
        %v504 = vunpack.c.h.b16 %v493
        %v505 = vunpack.c.l.b16 %v494
        %v506 = vunpack.c.h.b16 %v494
        %v507 = vpack.c.b16 %v499, %v499
        %v508 = vpack.c.b16 %v500, %v500
        %v509 = vpack.c.b16 %v501, %v501
        %v510 = vpack.c.b16 %v502, %v502
        %v511 = vpack.c.b16 %v503, %v503
        %v512 = vpack.c.b16 %v504, %v504
        %v513 = vpack.c.b16 %v505, %v505
        %v514 = vpack.c.b16 %v506, %v506
        %523 = vst [vmem:[%s257] sm:$0xf] %v507
        %524 = vst [vmem:[%s257 + $0x4] sm:$0xf] %v508
        %525 = vst [vmem:[%s257 + $0x8] sm:$0xf] %v509
        %526 = vst [vmem:[%s257 + $0xc] sm:$0xf] %v510
        %527 = vst [vmem:[%s257 + $0x10] sm:$0xf] %v511
        %528 = vst [vmem:[%s257 + $0x14] sm:$0xf] %v512
        %529 = vst [vmem:[%s257 + $0x18] sm:$0xf] %v513
        %530 = vst [vmem:[%s257 + $0x1c] sm:$0xf] %v514
      $region40: #{pspnet_forward.18} parent=31 // pred_fallthru
        _
      %s531 = smul.u32 8, %s19
      %p532 = scmp.lt.s32.totalorder %s531, 15
      %s533 = scalar_select %p532, %s531, 15
      %p534 = scmp.lt.s32.totalorder %s20, 0
      %s535 = scalar_select %p534, %s20, 0
      %s536 = sadd.s32 %s535, %s533
      %s537 = smul.addr %s536, 4
      %s538 = scalar_lea.vmem %s3, %s537
      // Predicated region
      $region41: #{pspnet_forward.18} parent=31 // pred_check
        %p539 = pneg %p135
      $region42: #{pspnet_forward.18} parent=31 // pred_check_branch
        %541 = sbr.rel (%p539) target = $region44
      $region43: #{pspnet_forward.18} parent=31 // pred_region
        %s542 = smul.u32 8, %s19
      $region44: #{pspnet_forward.18} parent=31 // pred_fallthru
        _
    $region32: #{pspnet_forward.18} parent=5 // pred_fallthru
      _
    %p543 = scmp.le.s32.totalorder 2, %s9
    // Predicated region
    $region45: #{pspnet_forward.18} parent=5 // pred_check
      %p544 = pneg %p543
    $region46: #{pspnet_forward.18} parent=5 // pred_check_branch
      %546 = sbr.rel (%p544) target = $region48
    $region47: #{pspnet_forward.18} parent=5 // pred_region
      %s547 = ssub.s32 %s9, 2
      // Predicated region
      $region49: #{pspnet_forward.18} parent=47 // pred_check
        %p548 = pneg %p141
      $region50: #{pspnet_forward.18} parent=47 // pred_check_branch
        %550 = sbr.rel (%p548) target = $region52
      $region51: #{pspnet_forward.18} parent=47 // pred_region
        %s551 = smul.u32 8, %s22
        %p552 = scmp.lt.s32.totalorder %s551, 15
        %s553 = scalar_select %p552, %s551, 15
        %p554 = scmp.lt.s32.totalorder %s23, 0
        %s555 = scalar_select %p554, %s23, 0
        %s556 = sadd.s32 %s555, %s553
        %s557 = smul.addr %s556, 4
        %s558 = scalar_lea.vmem %s3, %s557
      $region52: #{pspnet_forward.18} parent=47 // pred_fallthru
        _
    $region48: #{pspnet_forward.18} parent=5 // pred_fallthru
      _
  $region6: #{pspnet_forward.18} parent=0 // loop_footer
    %s13 = sadd.s32 1, %s9
  $region7: #{pspnet_forward.18} parent=0 // loop_footer_branch
    %8 = sbr.rel target = $region3
  $region8: #{pspnet_forward.18} parent=0 // loop_exit
    _

// kernel: pspnet_forward.19
$region0: #{pspnet_forward.19}
  #allocation0 [shape = 'u32[]', space=smem, size = 0x4, offset = 0x4, fixed_abs, tag = 'smem constant byte address 0x4 - core index']
  #allocation1 [shape = 'u32[144,128]{1,0:T(1,128)}', space=vmem, size = 0x12000, scoped, tag = 'internal scratch']
  #allocation2 [shape = 'f32[16,128]{1,0:T(8,128)}', space=vmem, size = 0x2000, scoped, tag = 'scratch operand']
  %s0 = inlined_call_operand.vmem [shape: bf16[16,128], index: 0, kind: input, shape index: {}]
  %s1 = inlined_call_operand.vmem [shape: bf16[128,128], index: 1, kind: input, shape index: {}]
  %s2 = inlined_call_operand.vmem [shape: f32[1,128], index: 2, kind: input, shape index: {}]
  %s3 = inlined_call_operand.vmem [shape: bf16[16,128], index: 3, kind: output, shape index: {}]
  %s4 = sld [smem:[#allocation0]]
  $region30: #{pspnet_forward.19} parent=0
    _
  %s6 = ssub.s32 1, %s4
  %s7 = scalar_select 0, %s6, %s4
  // Predicated region
  $region2: #{pspnet_forward.19} parent=0 // pred_check
    _
  $region3: #{pspnet_forward.19} parent=0 // pred_check_branch
    %9 = sbr.rel (0) target = $region5
  $region4: #{pspnet_forward.19} parent=0 // pred_region
    _
  $region5: #{pspnet_forward.19} parent=0 // pred_fallthru
    _
  // Predicated region
  $region6: #{pspnet_forward.19} parent=0 // pred_check
    _
  $region7: #{pspnet_forward.19} parent=0 // pred_check_branch
    %11 = sbr.rel (0) target = $region9
  $region8: #{pspnet_forward.19} parent=0 // pred_region
    _
  $region9: #{pspnet_forward.19} parent=0 // pred_fallthru
    _
  // Predicated region
  $region10: #{pspnet_forward.19} parent=0 // pred_check
    _
  $region11: #{pspnet_forward.19} parent=0 // pred_check_branch
    %13 = sbr.rel (0) target = $region13
  $region12: #{pspnet_forward.19} parent=0 // pred_region
    _
  $region13: #{pspnet_forward.19} parent=0 // pred_fallthru
    _
  %p15 = scmp.eq.s32.totalorder 0, 0
  // Predicated region
  $region14: #{pspnet_forward.19} parent=0 // pred_check
    %p16 = pneg %p15
  $region15: #{pspnet_forward.19} parent=0 // pred_check_branch
    %18 = sbr.rel (%p16) target = $region17
  $region16: #{pspnet_forward.19} parent=0 // pred_region
    %19 = vst [vmem:[#allocation2] sm:$0xff] 0.0
    %20 = vst [vmem:[#allocation2 + $0x8] sm:$0xff] 0.0
  $region17: #{pspnet_forward.19} parent=0 // pred_fallthru
    _
  %v21 = vld [vmem:[#allocation2] sm:$0xff]
  %v22 = vld [vmem:[#allocation2 + $0x8] sm:$0xff]
  %v23 = vld [vmem:[%s0] sm:$0xf]
  %v24 = vld [vmem:[%s0 + $0x4] sm:$0xf]
  %v25 = vld [vmem:[%s1] sm:$0xf]
  %v26 = vld [vmem:[%s1 + $0x4] sm:$0xf]
  %v27 = vld [vmem:[%s1 + $0x8] sm:$0xf]
  %v28 = vld [vmem:[%s1 + $0xc] sm:$0xf]
  %v29 = vld [vmem:[%s1 + $0x10] sm:$0xf]
  %v30 = vld [vmem:[%s1 + $0x14] sm:$0xf]
  %v31 = vld [vmem:[%s1 + $0x18] sm:$0xf]
  %v32 = vld [vmem:[%s1 + $0x1c] sm:$0xf]
  %v33 = vld [vmem:[%s1 + $0x20] sm:$0xf]
  %v34 = vld [vmem:[%s1 + $0x24] sm:$0xf]
  %v35 = vld [vmem:[%s1 + $0x28] sm:$0xf]
  %v36 = vld [vmem:[%s1 + $0x2c] sm:$0xf]
  %v37 = vld [vmem:[%s1 + $0x30] sm:$0xf]
  %v38 = vld [vmem:[%s1 + $0x34] sm:$0xf]
  %v39 = vld [vmem:[%s1 + $0x38] sm:$0xf]
  %v40 = vld [vmem:[%s1 + $0x3c] sm:$0xf]
  %v43 = vunpack.c.l.b16 %v23
  %v44 = vunpack.c.l.b16 %v24
  %v45 = vpack.c.b16 %v44, %v43
  %v63 = vunpack.c.l.b16 %v25
  %v64 = vunpack.c.l.b16 %v26
  %v65 = vunpack.c.l.b16 %v27
  %v66 = vunpack.c.l.b16 %v28
  %v67 = vunpack.c.l.b16 %v29
  %v68 = vunpack.c.l.b16 %v30
  %v69 = vunpack.c.l.b16 %v31
  %v70 = vunpack.c.l.b16 %v32
  %v71 = vunpack.c.l.b16 %v33
  %v72 = vunpack.c.l.b16 %v34
  %v73 = vunpack.c.l.b16 %v35
  %v74 = vunpack.c.l.b16 %v36
  %v75 = vunpack.c.l.b16 %v37
  %v76 = vunpack.c.l.b16 %v38
  %v77 = vunpack.c.l.b16 %v39
  %v78 = vunpack.c.l.b16 %v40
  %v79 = vpack.c.b16 %v64, %v63
  %v80 = vpack.c.b16 %v66, %v65
  %v81 = vpack.c.b16 %v68, %v67
  %v82 = vpack.c.b16 %v70, %v69
  %v83 = vpack.c.b16 %v72, %v71
  %v84 = vpack.c.b16 %v74, %v73
  %v85 = vpack.c.b16 %v76, %v75
  %v86 = vpack.c.b16 %v78, %v77
  %95 = vmatprep.subr.bf16.mxu0 0
  %96 = vmatpush1.bf16.msra.mxu0 %v86
  %97 = vmatprep.subr.bf16.mxu0 0
  %98 = vmatpush1.bf16.msra.mxu0 %v85
  %99 = vmatprep.subr.bf16.mxu0 0
  %100 = vmatpush1.bf16.msra.mxu0 %v84
  %101 = vmatprep.subr.bf16.mxu0 0
  %102 = vmatpush1.bf16.msra.mxu0 %v83
  %103 = vmatprep.subr.bf16.mxu0 0
  %104 = vmatpush1.bf16.msra.mxu0 %v82
  %105 = vmatprep.subr.bf16.mxu0 0
  %106 = vmatpush1.bf16.msra.mxu0 %v81
  %107 = vmatprep.subr.bf16.mxu0 0
  %108 = vmatpush1.bf16.msra.mxu0 %v80
  %109 = vmatprep.subr.bf16.mxu0 0
  %110 = vmatpush1.bf16.msra.mxu0 %v79
  %111 = vmatprep.subr.bf16.mxu0 0
  %112 = vmatpush2.bf16.msra.mxu0 0
  %113 = vmatprep.subr.bf16.mxu0 0
  %114 = vmatpush2.bf16.msra.mxu0 0
  %115 = vmatprep.subr.bf16.mxu0 0
  %116 = vmatpush2.bf16.msra.mxu0 0
  %117 = vmatprep.subr.bf16.mxu0 0
  %118 = vmatpush2.bf16.msra.mxu0 0
  %119 = vmatprep.subr.bf16.mxu0 0
  %120 = vmatpush2.bf16.msra.mxu0 0
  %121 = vmatprep.subr.bf16.mxu0 0
  %122 = vmatpush2.bf16.msra.mxu0 0
  %123 = vmatprep.subr.bf16.mxu0 0
  %124 = vmatpush2.bf16.msra.mxu0 0
  %125 = vmatprep.subr.bf16.mxu0 0
  %126 = vmatpush2.bf16.msra.mxu0 0
  %127 = vmatprep.mubr.bf16.mxu0 0
  %128 = vmatmul.mubr.bf16.gmra.mxu0 %v45
  %v129 = vpop.f32.mrf.mxu0
  %v130 = vadd.f32 0.0, %v129
  %v131 = vpop.f32.mrf.mxu0
  %v132 = vpop.f32.mrf.mxu0
  %v133 = vadd.f32 0.0, %v132
  %v134 = vpop.f32.mrf.mxu0
  %135 = vdwg.mxu0
  %v136 = vadd.f32 %v21, %v130
  %v137 = vadd.f32 %v22, %v133
  %138 = vst [vmem:[#allocation2] sm:$0xff] %v136
  %139 = vst [vmem:[#allocation2 + $0x8] sm:$0xff] %v137
  // Predicated region
  $region18: #{pspnet_forward.19} parent=0 // pred_check
    %p140 = pneg %p15
  $region19: #{pspnet_forward.19} parent=0 // pred_check_branch
    %142 = sbr.rel (%p140) target = $region21
  $region20: #{pspnet_forward.19} parent=0 // pred_region
    %v143 = vld [vmem:[#allocation2] sm:$0xff]
    %v144 = vld [vmem:[#allocation2 + $0x8] sm:$0xff]
    %v145 = vld [vmem:[%s2] sm:$0x1]
    %v147 = vlaneseq
    %v148 = vshrl.u32 %v147, 7
    %v149 = vsub.s32 0, %v148
    %v150 = vrot.slane %v145, %v149
    %v152 = vadd.f32 %v143, %v150
    %v153 = vadd.f32 %v144, %v150
    %v154 = vpack.c.bf16 %v153, %v152
    %v156 = vunpack.c.l.b16 %v154
    %v157 = vunpack.c.h.b16 %v154
    %v158 = vpack.c.b16 %v156, %v156
    %v159 = vpack.c.b16 %v157, %v157
    %162 = vst [vmem:[%s3] sm:$0xf] %v158
    %163 = vst [vmem:[%s3 + $0x4] sm:$0xf] %v159
  $region21: #{pspnet_forward.19} parent=0 // pred_fallthru
    _
  // Predicated region
  $region22: #{pspnet_forward.19} parent=0 // pred_check
    _
  $region23: #{pspnet_forward.19} parent=0 // pred_check_branch
    %165 = sbr.rel (0) target = $region25
  $region24: #{pspnet_forward.19} parent=0 // pred_region
    _
  $region25: #{pspnet_forward.19} parent=0 // pred_fallthru
    _
  // Predicated region
  $region26: #{pspnet_forward.19} parent=0 // pred_check
    _
  $region27: #{pspnet_forward.19} parent=0 // pred_check_branch
    %167 = sbr.rel (0) target = $region29
  $region28: #{pspnet_forward.19} parent=0 // pred_region
    _
  $region29: #{pspnet_forward.19} parent=0 // pred_fallthru
    _

// kernel: pspnet_forward.20
$region0: #{pspnet_forward.20}
  #allocation0 [shape = 'u32[]', space=smem, size = 0x4, offset = 0x4, fixed_abs, tag = 'smem constant byte address 0x4 - core index']
  #allocation1 [shape = 'u32[144,128]{1,0:T(1,128)}', space=vmem, size = 0x12000, scoped, tag = 'internal scratch']
  #allocation2 [shape = 'f32[16,128]{1,0:T(8,128)}', space=vmem, size = 0x2000, scoped, tag = 'scratch operand']
  %s0 = inlined_call_operand.vmem [shape: bf16[32,1152], index: 0, kind: input, shape index: {}]
  %s1 = inlined_call_operand.vmem [shape: bf16[1152,128], index: 1, kind: input, shape index: {}]
  %s2 = inlined_call_operand.vmem [shape: f32[1,128], index: 2, kind: input, shape index: {}]
  %s3 = inlined_call_operand.vmem [shape: bf16[32,128], index: 3, kind: output, shape index: {}]
  %s4 = sld [smem:[#allocation0]]
  $region79: #{pspnet_forward.20} parent=0
    _
  %s6 = ssub.s32 1, %s4
  %s7 = scalar_select 0, %s6, %s4
  $region1: #{pspnet_forward.20} parent=0
    #allocation3 [shape = 'u8[24576]{0}', space=vmem, size = 0x6000, scoped, tag = 'input window, operand 0']
    loop: start=0, step=1, limit=8
    $region2: #{pspnet_forward.20} parent=1 // loop_pre_header
      _
    $region3: #{pspnet_forward.20} parent=1 // loop_header
      %s9 = sphi 0, %s13
      %p10 = scmp.ge.s32.totalorder %s9, 8
      %s16 = sphi 0, %s35
      %s17 = sphi 0, %s31
      %s18 = sphi 0, %s27
      %s19 = sphi 0, %s16
      %s20 = sphi 0, %s17
      %s21 = sphi 0, %s18
      %s22 = sphi 0, %s19
      %s23 = sphi 0, %s20
      %s24 = sphi 0, %s21
      %s40 = sphi 0, %s42
      %s43 = sphi 0, %s40
      %s44 = sphi 0, %s43
      %s60 = sphi 0, %s44
      %s68 = sphi 0, %s70
      %s71 = sphi 0, %s68
      %s72 = sphi 0, %s71
      %s88 = sphi 0, %s72
      %s94 = sphi 0, %s96
      %s97 = sphi 0, %s94
      %s98 = sphi 0, %s97
      %s114 = sphi 0, %s98
      %s122 = sphi 0, %s124
      %s125 = sphi 0, %s122
      %s126 = sphi 0, %s125
      %s142 = sphi 0, %s126
    $region4: #{pspnet_forward.20} parent=1 // loop_header_branch
      %12 = sbr.rel (%p10) target = $region8
    $region5: #{pspnet_forward.20} parent=1 // loop_body
      %s14 = ssub.s32 %s9, 1
      %s15 = ssub.s32 %s9, 2
      %s25 = sadd.s32 1, %s18
      %p26 = scmp.ge.s32.totalorder %s25, 3
      %s27 = scalar_select %p26, 0, %s25
      %s28 = sadd.s32 1, %s17
      %s29 = scalar_select %p26, %s28, %s17
      %p30 = scmp.ge.s32.totalorder %s29, 1
      %s31 = scalar_select %p30, 0, %s29
      %s32 = sadd.s32 1, %s16
      %s33 = scalar_select %p30, %s32, %s16
      %p34 = scmp.ge.s32.totalorder %s33, 2
      %s35 = scalar_select %p34, 0, %s33
      %s36 = ssub.s32 %s16, %s35
      %s37 = ssub.s32 %s18, %s27
      %s38 = sor.u32 %s36, %s37
      %p39 = scmp.eq.s32.totalorder %s38, 0
      %s41 = sadd.s32 %s40, 1
      %s42 = scalar_select %p39, %s40, %s41
      %p45 = pneg %p39
      %p46 = scmp.eq.s32.totalorder %s9, 5
      %p47 = por %p45, %p46
      %p48 = scmp.ne.s32.totalorder %s40, %s43
      %p49 = scmp.eq.s32.totalorder %s9, 0
      %p50 = por %p48, %p49
      %p51 = scmp.ne.s32.totalorder %s40, %s43
      %p52 = scmp.eq.s32.totalorder %s14, 5
      %p53 = por %p51, %p52
      %p54 = scmp.ne.s32.totalorder %s43, %s44
      %p55 = scmp.eq.s32.totalorder %s14, 0
      %p56 = por %p54, %p55
      %p57 = scmp.ne.s32.totalorder %s43, %s44
      %p58 = scmp.eq.s32.totalorder %s15, 5
      %p59 = por %p57, %p58
      %p61 = scmp.ne.s32.totalorder %s44, %s60
      %p62 = scmp.eq.s32.totalorder %s15, 0
      %p63 = por %p61, %p62
      %s64 = ssub.s32 %s18, %s27
      %s65 = ssub.s32 %s17, %s31
      %s66 = sor.u32 %s64, %s65
      %p67 = scmp.eq.s32.totalorder %s66, 0
      %s69 = sadd.s32 %s68, 1
      %s70 = scalar_select %p67, %s68, %s69
      %p73 = pneg %p67
      %p74 = scmp.eq.s32.totalorder %s9, 5
      %p75 = por %p73, %p74
      %p76 = scmp.ne.s32.totalorder %s68, %s71
      %p77 = scmp.eq.s32.totalorder %s9, 0
      %p78 = por %p76, %p77
      %p79 = scmp.ne.s32.totalorder %s68, %s71
      %p80 = scmp.eq.s32.totalorder %s14, 5
      %p81 = por %p79, %p80
      %p82 = scmp.ne.s32.totalorder %s71, %s72
      %p83 = scmp.eq.s32.totalorder %s14, 0
      %p84 = por %p82, %p83
      %p85 = scmp.ne.s32.totalorder %s71, %s72
      %p86 = scmp.eq.s32.totalorder %s15, 5
      %p87 = por %p85, %p86
      %p89 = scmp.ne.s32.totalorder %s72, %s88
      %p90 = scmp.eq.s32.totalorder %s15, 0
      %p91 = por %p89, %p90
      %s92 = ssub.s32 %s17, %s31
      %p93 = scmp.eq.s32.totalorder %s92, 0
      %s95 = sadd.s32 %s94, 1
      %s96 = scalar_select %p93, %s94, %s95
      %p99 = pneg %p93
      %p100 = scmp.eq.s32.totalorder %s9, 5
      %p101 = por %p99, %p100
      %p102 = scmp.ne.s32.totalorder %s94, %s97
      %p103 = scmp.eq.s32.totalorder %s9, 0
      %p104 = por %p102, %p103
      %p105 = scmp.ne.s32.totalorder %s94, %s97
      %p106 = scmp.eq.s32.totalorder %s14, 5
      %p107 = por %p105, %p106
      %p108 = scmp.ne.s32.totalorder %s97, %s98
      %p109 = scmp.eq.s32.totalorder %s14, 0
      %p110 = por %p108, %p109
      %p111 = scmp.ne.s32.totalorder %s97, %s98
      %p112 = scmp.eq.s32.totalorder %s15, 5
      %p113 = por %p111, %p112
      %p115 = scmp.ne.s32.totalorder %s98, %s114
      %p116 = scmp.eq.s32.totalorder %s15, 0
      %p117 = por %p115, %p116
      %s118 = ssub.s32 %s16, %s35
      %s119 = ssub.s32 %s17, %s31
      %s120 = sor.u32 %s118, %s119
      %p121 = scmp.eq.s32.totalorder %s120, 0
      %s123 = sadd.s32 %s122, 1
      %s124 = scalar_select %p121, %s122, %s123
      %p127 = pneg %p121
      %p128 = scmp.eq.s32.totalorder %s9, 5
      %p129 = por %p127, %p128
      %p130 = scmp.ne.s32.totalorder %s122, %s125
      %p131 = scmp.eq.s32.totalorder %s9, 0
      %p132 = por %p130, %p131
      %p133 = scmp.ne.s32.totalorder %s122, %s125
      %p134 = scmp.eq.s32.totalorder %s14, 5
      %p135 = por %p133, %p134
      %p136 = scmp.ne.s32.totalorder %s125, %s126
      %p137 = scmp.eq.s32.totalorder %s14, 0
      %p138 = por %p136, %p137
      %p139 = scmp.ne.s32.totalorder %s125, %s126
      %p140 = scmp.eq.s32.totalorder %s15, 5
      %p141 = por %p139, %p140
      %p143 = scmp.ne.s32.totalorder %s126, %s142
      %p144 = scmp.eq.s32.totalorder %s15, 0
      %p145 = por %p143, %p144
      %p146 = scmp.le.s32.totalorder 1, %s9
      %p147 = scmp.lt.s32.totalorder %s9, 7
      %p148 = pnand %p146, %p147
      %p149 = pneg %p148
      // Predicated region
      $region9: #{pspnet_forward.20} parent=5 // pred_check
        _
      $region10: #{pspnet_forward.20} parent=5 // pred_check_branch
        %151 = sbr.rel (%p148) target = $region12
      $region11: #{pspnet_forward.20} parent=5 // pred_region
        %s152 = ssub.s32 %s9, 1
        // Predicated region
        $region13: #{pspnet_forward.20} parent=11 // pred_check
          %p153 = pneg %p110
        $region14: #{pspnet_forward.20} parent=11 // pred_check_branch
          %155 = sbr.rel (%p153) target = $region16
        $region15: #{pspnet_forward.20} parent=11 // pred_region
          %p156 = scmp.lt.s32.totalorder %s20, 0
          %s157 = scalar_select %p156, %s20, 0
          %s158 = scalar_lea.vmem %s2, %s157
        $region16: #{pspnet_forward.20} parent=11 // pred_fallthru
          _
      $region12: #{pspnet_forward.20} parent=5 // pred_fallthru
        _
      %p159 = scmp.lt.s32.totalorder %s9, 6
      // Predicated region
      $region17: #{pspnet_forward.20} parent=5 // pred_check
        %p160 = pneg %p159
      $region18: #{pspnet_forward.20} parent=5 // pred_check_branch
        %162 = sbr.rel (%p160) target = $region20
      $region19: #{pspnet_forward.20} parent=5 // pred_region
        // Predicated region
        $region21: #{pspnet_forward.20} parent=19 // pred_check
          %p163 = pneg %p50
        $region22: #{pspnet_forward.20} parent=19 // pred_check_branch
          %165 = sbr.rel (%p163) target = $region24
        $region23: #{pspnet_forward.20} parent=19 // pred_region
          %s166 = sand.u32 %s40, 1
          %s167 = sand.u32 %s40, 1
          %s168 = smul.addr %s167, 24
          %s169 = scalar_lea.vmem [#allocation3], %s168
          %s170 = smul.u32 2, %s16
          %s171 = smul.u32 3, %s18
          %s172 = smul.addr %s170, 9
          %s173 = sadd.s32 %s171, %s172
          %s174 = smul.addr %s173, 4
          %s175 = scalar_lea.vmem %s0, %s174
          // Predicated region
          $region25: #{pspnet_forward.20} parent=23 // pred_check
            _
          $region26: #{pspnet_forward.20} parent=23 // pred_check_branch
            %177 = sbr.rel (0) target = $region28
          $region27: #{pspnet_forward.20} parent=23 // pred_region
            // Predicated region
            $region29: #{pspnet_forward.20} parent=27 // pred_check
              _
            $region30: #{pspnet_forward.20} parent=27 // pred_check_branch
              %179 = sbr.rel (0) target = $region32
            $region31: #{pspnet_forward.20} parent=27 // pred_region
              %s180 = scalar_lea.vmem %s175, 8
              %s181 = scalar_lea.vmem %s169, 8 [#allocation3]
              loop: start=0, step=1, limit=1
              $region33: #{pspnet_forward.20} parent=31 // loop_pre_header
                _
              $region34: #{pspnet_forward.20} parent=31 // loop_header
                %s183 = sphi 0, %s187
                %p184 = scmp.ge.s32.totalorder %s183, 1
                %s188 = sphi %s175, %s175
                %s189 = sphi %s169, %s169
              $region35: #{pspnet_forward.20} parent=31 // loop_header_branch
                %186 = sbr.rel (%p184) target = $region39
              $region36: #{pspnet_forward.20} parent=31 // loop_body
                %v190 = vld [vmem:[%s188] sm:$0xff]
                %191 = vst [vmem:[%s189] sm:$0xff] %v190
                %v192 = vld [vmem:[%s188 + $0x24] sm:$0xff]
                %193 = vst [vmem:[%s189 + $0xc] sm:$0xff] %v192
              $region37: #{pspnet_forward.20} parent=31 // loop_footer
                %s187 = sadd.s32 1, %s183
              $region38: #{pspnet_forward.20} parent=31 // loop_footer_branch
                %182 = sbr.rel target = $region34
              $region39: #{pspnet_forward.20} parent=31 // loop_exit
                _
              %s195 = ssub.s32 16, 1
              loop: start=0, step=1, limit=1
              $region40: #{pspnet_forward.20} parent=31 // loop_pre_header
                _
              $region41: #{pspnet_forward.20} parent=31 // loop_header
                %s197 = sphi 0, %s201
                %p198 = scmp.ge.s32.totalorder %s197, 1
                %s202 = sphi %s180, %s180
                %s203 = sphi %s181, %s181
              $region42: #{pspnet_forward.20} parent=31 // loop_header_branch
                %200 = sbr.rel (%p198) target = $region46
              $region43: #{pspnet_forward.20} parent=31 // loop_body
                %v204 = vld [vmem:[%s202] sm:%s195]
                %205 = vst [vmem:[%s203] sm:%s195] %v204
                %v206 = vld [vmem:[%s202 + $0x24] sm:%s195]
                %207 = vst [vmem:[%s203 + $0xc] sm:%s195] %v206
              $region44: #{pspnet_forward.20} parent=31 // loop_footer
                %s201 = sadd.s32 1, %s197
              $region45: #{pspnet_forward.20} parent=31 // loop_footer_branch
                %196 = sbr.rel target = $region41
              $region46: #{pspnet_forward.20} parent=31 // loop_exit
                _
            $region32: #{pspnet_forward.20} parent=27 // pred_fallthru
              _
          $region28: #{pspnet_forward.20} parent=23 // pred_fallthru
            _
          %208 = vnop
        $region24: #{pspnet_forward.20} parent=19 // pred_fallthru
          _
        // Predicated region
        $region47: #{pspnet_forward.20} parent=19 // pred_check
          %p209 = pneg %p78
        $region48: #{pspnet_forward.20} parent=19 // pred_check_branch
          %211 = sbr.rel (%p209) target = $region50
        $region49: #{pspnet_forward.20} parent=19 // pred_region
          %s212 = smul.u32 48, %s18
          %p213 = scmp.lt.s32.totalorder %s212, 143
          %s214 = scalar_select %p213, %s212, 143
          %p215 = scmp.lt.s32.totalorder %s17, 0
          %s216 = scalar_select %p215, %s17, 0
          %s217 = sadd.s32 %s216, %s214
          %s218 = smul.addr %s217, 4
          %s219 = scalar_lea.vmem %s1, %s218
          %s220 = smul.u32 48, %s18
        $region50: #{pspnet_forward.20} parent=19 // pred_fallthru
          _
      $region20: #{pspnet_forward.20} parent=5 // pred_fallthru
        _
      %p221 = scmp.le.s32.totalorder 1, %s9
      %p222 = scmp.lt.s32.totalorder %s9, 7
      %p223 = pnand %p221, %p222
      %p224 = pneg %p223
      // Predicated region
      $region51: #{pspnet_forward.20} parent=5 // pred_check
        _
      $region52: #{pspnet_forward.20} parent=5 // pred_check_branch
        %226 = sbr.rel (%p223) target = $region54
      $region53: #{pspnet_forward.20} parent=5 // pred_region
        %s227 = ssub.s32 %s9, 1
        %s228 = sand.u32 %s43, 1
        %s229 = sand.u32 %s43, 1
        %s230 = smul.addr %s229, 24
        %s231 = scalar_lea.vmem [#allocation3], %s230
        // Predicated region
        $region55: #{pspnet_forward.20} parent=53 // pred_check
          %p232 = pneg %p56
        $region56: #{pspnet_forward.20} parent=53 // pred_check_branch
          %234 = sbr.rel (%p232) target = $region58
        $region57: #{pspnet_forward.20} parent=53 // pred_region
          _
        $region58: #{pspnet_forward.20} parent=53 // pred_fallthru
          _
        %s235 = sand.u32 %s43, 1
        %s236 = sand.u32 %s43, 1
        %s237 = smul.addr %s236, 24
        %s238 = scalar_lea.vmem [#allocation3], %s237
        %p239 = pneg %p56
        %p240 = pneg %p53
        %s241 = smul.u32 48, %s21
        %p242 = scmp.lt.s32.totalorder %s241, 143
        %s243 = scalar_select %p242, %s241, 143
        %p244 = scmp.lt.s32.totalorder %s20, 0
        %s245 = scalar_select %p244, %s20, 0
        %s246 = sadd.s32 %s245, %s243
        %s247 = smul.addr %s246, 4
        %s248 = scalar_lea.vmem %s1, %s247
        %p249 = pneg %p84
        %p250 = pneg %p81
        %p251 = scmp.lt.s32.totalorder %s20, 0
        %s252 = scalar_select %p251, %s20, 0
        %s253 = scalar_lea.vmem %s2, %s252
        %p254 = pneg %p110
        %p255 = pneg %p107
        %p256 = pneg %p138
        %p257 = pneg %p135
        %s258 = smul.u32 2, %s19
        %p259 = scmp.lt.s32.totalorder %s258, 3
        %s260 = scalar_select %p259, %s258, 3
        %p261 = scmp.lt.s32.totalorder %s20, 0
        %s262 = scalar_select %p261, %s20, 0
        %s263 = sadd.s32 %s262, %s260
        %s264 = smul.addr %s263, 4
        %s265 = scalar_lea.vmem %s3, %s264
        %s266 = smul.u32 2, %s19
        %s267 = smul.u32 3, %s21
        %s268 = smul.u32 48, %s21
        %p269 = scmp.lt.s32.totalorder %s268, 143
        %s270 = scalar_select %p269, %s268, 143
        %p271 = scmp.lt.s32.totalorder %s20, 0
        %s272 = scalar_select %p271, %s20, 0
        %s273 = sadd.s32 %s272, %s270
        %s274 = smul.addr %s273, 4
        %s275 = scalar_lea.vmem %s1, %s274
        %s276 = smul.u32 48, %s21
        %p277 = scmp.lt.s32.totalorder %s20, 0
        %s278 = scalar_select %p277, %s20, 0
        %s279 = scalar_lea.vmem %s2, %s278
        %s280 = smul.u32 2, %s19
        %p281 = scmp.lt.s32.totalorder %s280, 3
        %s282 = scalar_select %p281, %s280, 3
        %p283 = scmp.lt.s32.totalorder %s20, 0
        %s284 = scalar_select %p283, %s20, 0
        %s285 = sadd.s32 %s284, %s282
        %s286 = smul.addr %s285, 4
        %s287 = scalar_lea.vmem %s3, %s286
        %s288 = smul.u32 2, %s19
        %p290 = scmp.eq.s32.totalorder %s21, 0
        // Predicated region
        $region59: #{pspnet_forward.20} parent=53 // pred_check
          %p291 = pneg %p290
        $region60: #{pspnet_forward.20} parent=53 // pred_check_branch
          %293 = sbr.rel (%p291) target = $region62
        $region61: #{pspnet_forward.20} parent=53 // pred_region
          %294 = vst [vmem:[#allocation2] sm:$0xff] 0.0
          %295 = vst [vmem:[#allocation2 + $0x8] sm:$0xff] 0.0
        $region62: #{pspnet_forward.20} parent=53 // pred_fallthru
          _
        %v296 = vld [vmem:[#allocation2] sm:$0xff]
        %v297 = vld [vmem:[#allocation2 + $0x8] sm:$0xff]
        %v298 = vld [vmem:[%s231] sm:$0xff]
        %v299 = vld [vmem:[%s231 + $0x8] sm:$0xf]
        %v300 = vld [vmem:[%s231 + $0xc] sm:$0xff]
        %v301 = vld [vmem:[%s231 + $0x14] sm:$0xf]
        %v302 = vld [vmem:[%s275] sm:$0xf]
        %v303 = vld [vmem:[%s275 + $0x4] sm:$0xf]
        %v304 = vld [vmem:[%s275 + $0x8] sm:$0xf]
        %v305 = vld [vmem:[%s275 + $0xc] sm:$0xf]
        %v306 = vld [vmem:[%s275 + $0x10] sm:$0xf]
        %v307 = vld [vmem:[%s275 + $0x14] sm:$0xf]
        %v308 = vld [vmem:[%s275 + $0x18] sm:$0xf]
        %v309 = vld [vmem:[%s275 + $0x1c] sm:$0xf]
        %v310 = vld [vmem:[%s275 + $0x20] sm:$0xf]
        %v311 = vld [vmem:[%s275 + $0x24] sm:$0xf]
        %v312 = vld [vmem:[%s275 + $0x28] sm:$0xf]
        %v313 = vld [vmem:[%s275 + $0x2c] sm:$0xf]
        %v314 = vld [vmem:[%s275 + $0x30] sm:$0xf]
        %v315 = vld [vmem:[%s275 + $0x34] sm:$0xf]
        %v316 = vld [vmem:[%s275 + $0x38] sm:$0xf]
        %v317 = vld [vmem:[%s275 + $0x3c] sm:$0xf]
        %v318 = vld [vmem:[%s275 + $0x40] sm:$0xf]
        %v319 = vld [vmem:[%s275 + $0x44] sm:$0xf]
        %v320 = vld [vmem:[%s275 + $0x48] sm:$0xf]
        %v321 = vld [vmem:[%s275 + $0x4c] sm:$0xf]
        %v322 = vld [vmem:[%s275 + $0x50] sm:$0xf]
        %v323 = vld [vmem:[%s275 + $0x54] sm:$0xf]
        %v324 = vld [vmem:[%s275 + $0x58] sm:$0xf]
        %v325 = vld [vmem:[%s275 + $0x5c] sm:$0xf]
        %v326 = vld [vmem:[%s275 + $0x60] sm:$0xf]
        %v327 = vld [vmem:[%s275 + $0x64] sm:$0xf]
        %v328 = vld [vmem:[%s275 + $0x68] sm:$0xf]
        %v329 = vld [vmem:[%s275 + $0x6c] sm:$0xf]
        %v330 = vld [vmem:[%s275 + $0x70] sm:$0xf]
        %v331 = vld [vmem:[%s275 + $0x74] sm:$0xf]
        %v332 = vld [vmem:[%s275 + $0x78] sm:$0xf]
        %v333 = vld [vmem:[%s275 + $0x7c] sm:$0xf]
        %v334 = vld [vmem:[%s275 + $0x80] sm:$0xf]
        %v335 = vld [vmem:[%s275 + $0x84] sm:$0xf]
        %v336 = vld [vmem:[%s275 + $0x88] sm:$0xf]
        %v337 = vld [vmem:[%s275 + $0x8c] sm:$0xf]
        %v338 = vld [vmem:[%s275 + $0x90] sm:$0xf]
        %v339 = vld [vmem:[%s275 + $0x94] sm:$0xf]
        %v340 = vld [vmem:[%s275 + $0x98] sm:$0xf]
        %v341 = vld [vmem:[%s275 + $0x9c] sm:$0xf]
        %v342 = vld [vmem:[%s275 + $0xa0] sm:$0xf]
        %v343 = vld [vmem:[%s275 + $0xa4] sm:$0xf]
        %v344 = vld [vmem:[%s275 + $0xa8] sm:$0xf]
        %v345 = vld [vmem:[%s275 + $0xac] sm:$0xf]
        %v346 = vld [vmem:[%s275 + $0xb0] sm:$0xf]
        %v347 = vld [vmem:[%s275 + $0xb4] sm:$0xf]
        %v348 = vld [vmem:[%s275 + $0xb8] sm:$0xf]
        %v349 = vld [vmem:[%s275 + $0xbc] sm:$0xf]
        %v354 = vunpack.c.l.b16 %v298
        %v355 = vunpack.c.h.b16 %v298
        %v356 = vunpack.c.l.b16 %v299
        %v357 = vunpack.c.l.b16 %v300
        %v358 = vunpack.c.h.b16 %v300
        %v359 = vunpack.c.l.b16 %v301
        %v360 = vpack.c.b16 %v357, %v354
        %v361 = vpack.c.b16 %v358, %v355
        %v362 = vpack.c.b16 %v359, %v356
        %v414 = vunpack.c.l.b16 %v302
        %v415 = vunpack.c.l.b16 %v303
        %v416 = vunpack.c.l.b16 %v304
        %v417 = vunpack.c.l.b16 %v305
        %v418 = vunpack.c.l.b16 %v306
        %v419 = vunpack.c.l.b16 %v307
        %v420 = vunpack.c.l.b16 %v308
        %v421 = vunpack.c.l.b16 %v309
        %v422 = vunpack.c.l.b16 %v310
        %v423 = vunpack.c.l.b16 %v311
        %v424 = vunpack.c.l.b16 %v312
        %v425 = vunpack.c.l.b16 %v313
        %v426 = vunpack.c.l.b16 %v314
        %v427 = vunpack.c.l.b16 %v315
        %v428 = vunpack.c.l.b16 %v316
        %v429 = vunpack.c.l.b16 %v317
        %v430 = vunpack.c.l.b16 %v318
        %v431 = vunpack.c.l.b16 %v319
        %v432 = vunpack.c.l.b16 %v320
        %v433 = vunpack.c.l.b16 %v321
        %v434 = vunpack.c.l.b16 %v322
        %v435 = vunpack.c.l.b16 %v323
        %v436 = vunpack.c.l.b16 %v324
        %v437 = vunpack.c.l.b16 %v325
        %v438 = vunpack.c.l.b16 %v326
        %v439 = vunpack.c.l.b16 %v327
        %v440 = vunpack.c.l.b16 %v328
        %v441 = vunpack.c.l.b16 %v329
        %v442 = vunpack.c.l.b16 %v330
        %v443 = vunpack.c.l.b16 %v331
        %v444 = vunpack.c.l.b16 %v332
        %v445 = vunpack.c.l.b16 %v333
        %v446 = vunpack.c.l.b16 %v334
        %v447 = vunpack.c.l.b16 %v335
        %v448 = vunpack.c.l.b16 %v336
        %v449 = vunpack.c.l.b16 %v337
        %v450 = vunpack.c.l.b16 %v338
        %v451 = vunpack.c.l.b16 %v339
        %v452 = vunpack.c.l.b16 %v340
        %v453 = vunpack.c.l.b16 %v341
        %v454 = vunpack.c.l.b16 %v342
        %v455 = vunpack.c.l.b16 %v343
        %v456 = vunpack.c.l.b16 %v344
        %v457 = vunpack.c.l.b16 %v345
        %v458 = vunpack.c.l.b16 %v346
        %v459 = vunpack.c.l.b16 %v347
        %v460 = vunpack.c.l.b16 %v348
        %v461 = vunpack.c.l.b16 %v349
        %v462 = vpack.c.b16 %v415, %v414
        %v463 = vpack.c.b16 %v417, %v416
        %v464 = vpack.c.b16 %v419, %v418
        %v465 = vpack.c.b16 %v421, %v420
        %v466 = vpack.c.b16 %v423, %v422
        %v467 = vpack.c.b16 %v425, %v424
        %v468 = vpack.c.b16 %v427, %v426
        %v469 = vpack.c.b16 %v429, %v428
        %v470 = vpack.c.b16 %v431, %v430
        %v471 = vpack.c.b16 %v433, %v432
        %v472 = vpack.c.b16 %v435, %v434
        %v473 = vpack.c.b16 %v437, %v436
        %v474 = vpack.c.b16 %v439, %v438
        %v475 = vpack.c.b16 %v441, %v440
        %v476 = vpack.c.b16 %v443, %v442
        %v477 = vpack.c.b16 %v445, %v444
        %v478 = vpack.c.b16 %v447, %v446
        %v479 = vpack.c.b16 %v449, %v448
        %v480 = vpack.c.b16 %v451, %v450
        %v481 = vpack.c.b16 %v453, %v452
        %v482 = vpack.c.b16 %v455, %v454
        %v483 = vpack.c.b16 %v457, %v456
        %v484 = vpack.c.b16 %v459, %v458
        %v485 = vpack.c.b16 %v461, %v460
        %510 = vmatprep.subr.bf16.mxu0 0
        %511 = vmatpush1.bf16.msra.mxu0 %v469
        %512 = vmatprep.subr.bf16.mxu0 0
        %513 = vmatpush1.bf16.msra.mxu0 %v468
        %514 = vmatprep.subr.bf16.mxu0 0
        %515 = vmatpush1.bf16.msra.mxu0 %v467
        %516 = vmatprep.subr.bf16.mxu0 0
        %517 = vmatpush1.bf16.msra.mxu0 %v466
        %518 = vmatprep.subr.bf16.mxu0 0
        %519 = vmatpush1.bf16.msra.mxu0 %v465
        %520 = vmatprep.subr.bf16.mxu0 0
        %521 = vmatpush1.bf16.msra.mxu0 %v464
        %522 = vmatprep.subr.bf16.mxu0 0
        %523 = vmatpush1.bf16.msra.mxu0 %v463
        %524 = vmatprep.subr.bf16.mxu0 0
        %525 = vmatpush1.bf16.msra.mxu0 %v462
        %526 = vmatprep.subr.bf16.mxu0 0
        %527 = vmatpush2.bf16.msra.mxu0 %v477
        %528 = vmatprep.subr.bf16.mxu0 0
        %529 = vmatpush2.bf16.msra.mxu0 %v476
        %530 = vmatprep.subr.bf16.mxu0 0
        %531 = vmatpush2.bf16.msra.mxu0 %v475
        %532 = vmatprep.subr.bf16.mxu0 0
        %533 = vmatpush2.bf16.msra.mxu0 %v474
        %534 = vmatprep.subr.bf16.mxu0 0
        %535 = vmatpush2.bf16.msra.mxu0 %v473
        %536 = vmatprep.subr.bf16.mxu0 0
        %537 = vmatpush2.bf16.msra.mxu0 %v472
        %538 = vmatprep.subr.bf16.mxu0 0
        %539 = vmatpush2.bf16.msra.mxu0 %v471
        %540 = vmatprep.subr.bf16.mxu0 0
        %541 = vmatpush2.bf16.msra.mxu0 %v470
        %542 = vmatprep.mubr.bf16.mxu0 %v361
        %543 = vmatmul.mubr.bf16.gmra.mxu0 %v360
        %v544 = vpop.f32.mrf.mxu0
        %v545 = vadd.f32 0.0, %v544
        %v546 = vpop.f32.mrf.mxu0
        %v547 = vpop.f32.mrf.mxu0
        %v548 = vadd.f32 0.0, %v547
        %v549 = vpop.f32.mrf.mxu0
        %550 = vdwg.mxu0
        %551 = vmatprep.subr.bf16.mxu0 0
        %552 = vmatpush1.bf16.msra.mxu0 %v485
        %553 = vmatprep.subr.bf16.mxu0 0
        %554 = vmatpush1.bf16.msra.mxu0 %v484
        %555 = vmatprep.subr.bf16.mxu0 0
        %556 = vmatpush1.bf16.msra.mxu0 %v483
        %557 = vmatprep.subr.bf16.mxu0 0
        %558 = vmatpush1.bf16.msra.mxu0 %v482
        %559 = vmatprep.subr.bf16.mxu0 0
        %560 = vmatpush1.bf16.msra.mxu0 %v481
        %561 = vmatprep.subr.bf16.mxu0 0
        %562 = vmatpush1.bf16.msra.mxu0 %v480
        %563 = vmatprep.subr.bf16.mxu0 0
        %564 = vmatpush1.bf16.msra.mxu0 %v479
        %565 = vmatprep.subr.bf16.mxu0 0
        %566 = vmatpush1.bf16.msra.mxu0 %v478
        %567 = vmatprep.subr.bf16.mxu0 0
        %568 = vmatpush2.bf16.msra.mxu0 0
        %569 = vmatprep.subr.bf16.mxu0 0
        %570 = vmatpush2.bf16.msra.mxu0 0
        %571 = vmatprep.subr.bf16.mxu0 0
        %572 = vmatpush2.bf16.msra.mxu0 0
        %573 = vmatprep.subr.bf16.mxu0 0
        %574 = vmatpush2.bf16.msra.mxu0 0
        %575 = vmatprep.subr.bf16.mxu0 0
        %576 = vmatpush2.bf16.msra.mxu0 0
        %577 = vmatprep.subr.bf16.mxu0 0
        %578 = vmatpush2.bf16.msra.mxu0 0
        %579 = vmatprep.subr.bf16.mxu0 0
        %580 = vmatpush2.bf16.msra.mxu0 0
        %581 = vmatprep.subr.bf16.mxu0 0
        %582 = vmatpush2.bf16.msra.mxu0 0
        %583 = vmatprep.mubr.bf16.mxu0 0
        %584 = vmatmul.mubr.bf16.gmra.mxu0 %v362
        %v585 = vpop.f32.mrf.mxu0
        %v586 = vadd.f32 %v545, %v585
        %v587 = vpop.f32.mrf.mxu0
        %v588 = vpop.f32.mrf.mxu0
        %v589 = vadd.f32 %v548, %v588
        %v590 = vpop.f32.mrf.mxu0
        %591 = vdwg.mxu0
        %v592 = vadd.f32 %v296, %v586
        %v593 = vadd.f32 %v297, %v589
        %594 = vst [vmem:[#allocation2] sm:$0xff] %v592
        %595 = vst [vmem:[#allocation2 + $0x8] sm:$0xff] %v593
        %p596 = scmp.eq.s32.totalorder %s21, 2
        // Predicated region
        $region63: #{pspnet_forward.20} parent=53 // pred_check
          %p597 = pneg %p596
        $region64: #{pspnet_forward.20} parent=53 // pred_check_branch
          %599 = sbr.rel (%p597) target = $region66
        $region65: #{pspnet_forward.20} parent=53 // pred_region
          %v600 = vld [vmem:[#allocation2] sm:$0xff]
          %v601 = vld [vmem:[#allocation2 + $0x8] sm:$0xff]
          %v602 = vld [vmem:[%s279] sm:$0x1]
          %v604 = vlaneseq
          %v605 = vshrl.u32 %v604, 7
          %v606 = vsub.s32 0, %v605
          %v607 = vrot.slane %v602, %v606
          %v609 = vadd.f32 %v600, %v607
          %v610 = vadd.f32 %v601, %v607
          %v611 = vmax.f32 %v609, 0.0
          %v612 = vmax.f32 %v610, 0.0
          %v613 = vpack.c.bf16 %v612, %v611
          %v615 = vunpack.c.l.b16 %v613
          %v616 = vunpack.c.h.b16 %v613
          %v617 = vpack.c.b16 %v615, %v615
          %v618 = vpack.c.b16 %v616, %v616
          %621 = vst [vmem:[%s287] sm:$0xf] %v617
          %622 = vst [vmem:[%s287 + $0x4] sm:$0xf] %v618
        $region66: #{pspnet_forward.20} parent=53 // pred_fallthru
          _
        %s623 = smul.u32 2, %s19
        %p624 = scmp.lt.s32.totalorder %s623, 3
        %s625 = scalar_select %p624, %s623, 3
        %p626 = scmp.lt.s32.totalorder %s20, 0
        %s627 = scalar_select %p626, %s20, 0
        %s628 = sadd.s32 %s627, %s625
        %s629 = smul.addr %s628, 4
        %s630 = scalar_lea.vmem %s3, %s629
        // Predicated region
        $region67: #{pspnet_forward.20} parent=53 // pred_check
          %p631 = pneg %p135
        $region68: #{pspnet_forward.20} parent=53 // pred_check_branch
          %633 = sbr.rel (%p631) target = $region70
        $region69: #{pspnet_forward.20} parent=53 // pred_region
          %s634 = smul.u32 2, %s19
        $region70: #{pspnet_forward.20} parent=53 // pred_fallthru
          _
      $region54: #{pspnet_forward.20} parent=5 // pred_fallthru
        _
      %p635 = scmp.le.s32.totalorder 2, %s9
      // Predicated region
      $region71: #{pspnet_forward.20} parent=5 // pred_check
        %p636 = pneg %p635
      $region72: #{pspnet_forward.20} parent=5 // pred_check_branch
        %638 = sbr.rel (%p636) target = $region74
      $region73: #{pspnet_forward.20} parent=5 // pred_region
        %s639 = ssub.s32 %s9, 2
        // Predicated region
        $region75: #{pspnet_forward.20} parent=73 // pred_check
          %p640 = pneg %p141
        $region76: #{pspnet_forward.20} parent=73 // pred_check_branch
          %642 = sbr.rel (%p640) target = $region78
        $region77: #{pspnet_forward.20} parent=73 // pred_region
          %s643 = smul.u32 2, %s22
          %p644 = scmp.lt.s32.totalorder %s643, 3
          %s645 = scalar_select %p644, %s643, 3
          %p646 = scmp.lt.s32.totalorder %s23, 0
          %s647 = scalar_select %p646, %s23, 0
          %s648 = sadd.s32 %s647, %s645
          %s649 = smul.addr %s648, 4
          %s650 = scalar_lea.vmem %s3, %s649
        $region78: #{pspnet_forward.20} parent=73 // pred_fallthru
          _
      $region74: #{pspnet_forward.20} parent=5 // pred_fallthru
        _
    $region6: #{pspnet_forward.20} parent=1 // loop_footer
      %s13 = sadd.s32 1, %s9
    $region7: #{pspnet_forward.20} parent=1 // loop_footer_branch
      %8 = sbr.rel target = $region3
    $region8: #{pspnet_forward.20} parent=1 // loop_exit
      _

// kernel: pspnet_forward.21
$region0: #{pspnet_forward.21}
  #allocation0 [shape = 'u32[]', space=smem, size = 0x4, offset = 0x4, fixed_abs, tag = 'smem constant byte address 0x4 - core index']
  #allocation1 [shape = 'u32[144,128]{1,0:T(1,128)}', space=vmem, size = 0x12000, scoped, tag = 'internal scratch']
  #allocation2 [shape = 'f32[16,128]{1,0:T(8,128)}', space=vmem, size = 0x2000, scoped, tag = 'scratch operand']
  %s0 = inlined_call_operand.vmem [shape: bf16[32,128], index: 0, kind: input, shape index: {}]
  %s1 = inlined_call_operand.vmem [shape: bf16[128,128], index: 1, kind: input, shape index: {}]
  %s2 = inlined_call_operand.vmem [shape: f32[1,128], index: 2, kind: input, shape index: {}]
  %s3 = inlined_call_operand.vmem [shape: f32[32,128], index: 3, kind: output, shape index: {}]
  %s4 = sld [smem:[#allocation0]]
  $region53: #{pspnet_forward.21} parent=0
    _
  %s6 = ssub.s32 1, %s4
  %s7 = scalar_select 0, %s6, %s4
  loop: start=0, step=1, limit=4
  $region2: #{pspnet_forward.21} parent=0 // loop_pre_header
    _
  $region3: #{pspnet_forward.21} parent=0 // loop_header
    %s9 = sphi 0, %s13
    %p10 = scmp.ge.s32.totalorder %s9, 4
    %s16 = sphi 0, %s35
    %s17 = sphi 0, %s31
    %s18 = sphi 0, %s27
    %s19 = sphi 0, %s16
    %s20 = sphi 0, %s17
    %s21 = sphi 0, %s18
    %s22 = sphi 0, %s19
    %s23 = sphi 0, %s20
    %s24 = sphi 0, %s21
    %s40 = sphi 0, %s42
    %s43 = sphi 0, %s40
    %s44 = sphi 0, %s43
    %s60 = sphi 0, %s44
    %s68 = sphi 0, %s70
    %s71 = sphi 0, %s68
    %s72 = sphi 0, %s71
    %s88 = sphi 0, %s72
    %s94 = sphi 0, %s96
    %s97 = sphi 0, %s94
    %s98 = sphi 0, %s97
    %s114 = sphi 0, %s98
    %s122 = sphi 0, %s124
    %s125 = sphi 0, %s122
    %s126 = sphi 0, %s125
    %s142 = sphi 0, %s126
  $region4: #{pspnet_forward.21} parent=0 // loop_header_branch
    %12 = sbr.rel (%p10) target = $region8
  $region5: #{pspnet_forward.21} parent=0 // loop_body
    %s14 = ssub.s32 %s9, 1
    %s15 = ssub.s32 %s9, 2
    %s25 = sadd.s32 1, %s18
    %p26 = scmp.ge.s32.totalorder %s25, 1
    %s27 = scalar_select %p26, 0, %s25
    %s28 = sadd.s32 1, %s17
    %s29 = scalar_select %p26, %s28, %s17
    %p30 = scmp.ge.s32.totalorder %s29, 1
    %s31 = scalar_select %p30, 0, %s29
    %s32 = sadd.s32 1, %s16
    %s33 = scalar_select %p30, %s32, %s16
    %p34 = scmp.ge.s32.totalorder %s33, 2
    %s35 = scalar_select %p34, 0, %s33
    %s36 = ssub.s32 %s16, %s35
    %s37 = ssub.s32 %s18, %s27
    %s38 = sor.u32 %s36, %s37
    %p39 = scmp.eq.s32.totalorder %s38, 0
    %s41 = sadd.s32 %s40, 1
    %s42 = scalar_select %p39, %s40, %s41
    %p45 = pneg %p39
    %p46 = scmp.eq.s32.totalorder %s9, 1
    %p47 = por %p45, %p46
    %p48 = scmp.ne.s32.totalorder %s40, %s43
    %p49 = scmp.eq.s32.totalorder %s9, 0
    %p50 = por %p48, %p49
    %p51 = scmp.ne.s32.totalorder %s40, %s43
    %p52 = scmp.eq.s32.totalorder %s14, 1
    %p53 = por %p51, %p52
    %p54 = scmp.ne.s32.totalorder %s43, %s44
    %p55 = scmp.eq.s32.totalorder %s14, 0
    %p56 = por %p54, %p55
    %p57 = scmp.ne.s32.totalorder %s43, %s44
    %p58 = scmp.eq.s32.totalorder %s15, 1
    %p59 = por %p57, %p58
    %p61 = scmp.ne.s32.totalorder %s44, %s60
    %p62 = scmp.eq.s32.totalorder %s15, 0
    %p63 = por %p61, %p62
    %s64 = ssub.s32 %s18, %s27
    %s65 = ssub.s32 %s17, %s31
    %s66 = sor.u32 %s64, %s65
    %p67 = scmp.eq.s32.totalorder %s66, 0
    %s69 = sadd.s32 %s68, 1
    %s70 = scalar_select %p67, %s68, %s69
    %p73 = pneg %p67
    %p74 = scmp.eq.s32.totalorder %s9, 1
    %p75 = por %p73, %p74
    %p76 = scmp.ne.s32.totalorder %s68, %s71
    %p77 = scmp.eq.s32.totalorder %s9, 0
    %p78 = por %p76, %p77
    %p79 = scmp.ne.s32.totalorder %s68, %s71
    %p80 = scmp.eq.s32.totalorder %s14, 1
    %p81 = por %p79, %p80
    %p82 = scmp.ne.s32.totalorder %s71, %s72
    %p83 = scmp.eq.s32.totalorder %s14, 0
    %p84 = por %p82, %p83
    %p85 = scmp.ne.s32.totalorder %s71, %s72
    %p86 = scmp.eq.s32.totalorder %s15, 1
    %p87 = por %p85, %p86
    %p89 = scmp.ne.s32.totalorder %s72, %s88
    %p90 = scmp.eq.s32.totalorder %s15, 0
    %p91 = por %p89, %p90
    %s92 = ssub.s32 %s17, %s31
    %p93 = scmp.eq.s32.totalorder %s92, 0
    %s95 = sadd.s32 %s94, 1
    %s96 = scalar_select %p93, %s94, %s95
    %p99 = pneg %p93
    %p100 = scmp.eq.s32.totalorder %s9, 1
    %p101 = por %p99, %p100
    %p102 = scmp.ne.s32.totalorder %s94, %s97
    %p103 = scmp.eq.s32.totalorder %s9, 0
    %p104 = por %p102, %p103
    %p105 = scmp.ne.s32.totalorder %s94, %s97
    %p106 = scmp.eq.s32.totalorder %s14, 1
    %p107 = por %p105, %p106
    %p108 = scmp.ne.s32.totalorder %s97, %s98
    %p109 = scmp.eq.s32.totalorder %s14, 0
    %p110 = por %p108, %p109
    %p111 = scmp.ne.s32.totalorder %s97, %s98
    %p112 = scmp.eq.s32.totalorder %s15, 1
    %p113 = por %p111, %p112
    %p115 = scmp.ne.s32.totalorder %s98, %s114
    %p116 = scmp.eq.s32.totalorder %s15, 0
    %p117 = por %p115, %p116
    %s118 = ssub.s32 %s16, %s35
    %s119 = ssub.s32 %s17, %s31
    %s120 = sor.u32 %s118, %s119
    %p121 = scmp.eq.s32.totalorder %s120, 0
    %s123 = sadd.s32 %s122, 1
    %s124 = scalar_select %p121, %s122, %s123
    %p127 = pneg %p121
    %p128 = scmp.eq.s32.totalorder %s9, 1
    %p129 = por %p127, %p128
    %p130 = scmp.ne.s32.totalorder %s122, %s125
    %p131 = scmp.eq.s32.totalorder %s9, 0
    %p132 = por %p130, %p131
    %p133 = scmp.ne.s32.totalorder %s122, %s125
    %p134 = scmp.eq.s32.totalorder %s14, 1
    %p135 = por %p133, %p134
    %p136 = scmp.ne.s32.totalorder %s125, %s126
    %p137 = scmp.eq.s32.totalorder %s14, 0
    %p138 = por %p136, %p137
    %p139 = scmp.ne.s32.totalorder %s125, %s126
    %p140 = scmp.eq.s32.totalorder %s15, 1
    %p141 = por %p139, %p140
    %p143 = scmp.ne.s32.totalorder %s126, %s142
    %p144 = scmp.eq.s32.totalorder %s15, 0
    %p145 = por %p143, %p144
    %p146 = scmp.le.s32.totalorder 1, %s9
    %p147 = scmp.lt.s32.totalorder %s9, 3
    %p148 = pnand %p146, %p147
    %p149 = pneg %p148
    // Predicated region
    $region9: #{pspnet_forward.21} parent=5 // pred_check
      _
    $region10: #{pspnet_forward.21} parent=5 // pred_check_branch
      %151 = sbr.rel (%p148) target = $region12
    $region11: #{pspnet_forward.21} parent=5 // pred_region
      %s152 = ssub.s32 %s9, 1
      // Predicated region
      $region13: #{pspnet_forward.21} parent=11 // pred_check
        %p153 = pneg %p84
      $region14: #{pspnet_forward.21} parent=11 // pred_check_branch
        %155 = sbr.rel (%p153) target = $region16
      $region15: #{pspnet_forward.21} parent=11 // pred_region
        %s156 = smul.u32 16, %s21
        %p157 = scmp.lt.s32.totalorder %s156, 15
        %s158 = scalar_select %p157, %s156, 15
        %p159 = scmp.lt.s32.totalorder %s20, 0
        %s160 = scalar_select %p159, %s20, 0
        %s161 = sadd.s32 %s160, %s158
        %s162 = smul.addr %s161, 4
        %s163 = scalar_lea.vmem %s1, %s162
        %s164 = smul.u32 16, %s21
      $region16: #{pspnet_forward.21} parent=11 // pred_fallthru
        _
      // Predicated region
      $region17: #{pspnet_forward.21} parent=11 // pred_check
        %p165 = pneg %p110
      $region18: #{pspnet_forward.21} parent=11 // pred_check_branch
        %167 = sbr.rel (%p165) target = $region20
      $region19: #{pspnet_forward.21} parent=11 // pred_region
        %p168 = scmp.lt.s32.totalorder %s20, 0
        %s169 = scalar_select %p168, %s20, 0
        %s170 = scalar_lea.vmem %s2, %s169
      $region20: #{pspnet_forward.21} parent=11 // pred_fallthru
        _
    $region12: #{pspnet_forward.21} parent=5 // pred_fallthru
      _
    %p171 = scmp.lt.s32.totalorder %s9, 2
    // Predicated region
    $region21: #{pspnet_forward.21} parent=5 // pred_check
      %p172 = pneg %p171
    $region22: #{pspnet_forward.21} parent=5 // pred_check_branch
      %174 = sbr.rel (%p172) target = $region24
    $region23: #{pspnet_forward.21} parent=5 // pred_region
      // Predicated region
      $region25: #{pspnet_forward.21} parent=23 // pred_check
        %p175 = pneg %p50
      $region26: #{pspnet_forward.21} parent=23 // pred_check_branch
        %177 = sbr.rel (%p175) target = $region28
      $region27: #{pspnet_forward.21} parent=23 // pred_region
        %s178 = smul.u32 2, %s16
        %p179 = scmp.lt.s32.totalorder %s178, 3
        %s180 = scalar_select %p179, %s178, 3
        %p181 = scmp.lt.s32.totalorder %s18, 0
        %s182 = scalar_select %p181, %s18, 0
        %s183 = sadd.s32 %s182, %s180
        %s184 = smul.addr %s183, 4
        %s185 = scalar_lea.vmem %s0, %s184
        %s186 = smul.u32 2, %s16
      $region28: #{pspnet_forward.21} parent=23 // pred_fallthru
        _
    $region24: #{pspnet_forward.21} parent=5 // pred_fallthru
      _
    %p187 = scmp.le.s32.totalorder 1, %s9
    %p188 = scmp.lt.s32.totalorder %s9, 3
    %p189 = pnand %p187, %p188
    %p190 = pneg %p189
    // Predicated region
    $region29: #{pspnet_forward.21} parent=5 // pred_check
      _
    $region30: #{pspnet_forward.21} parent=5 // pred_check_branch
      %192 = sbr.rel (%p189) target = $region32
    $region31: #{pspnet_forward.21} parent=5 // pred_region
      %s193 = ssub.s32 %s9, 1
      %s194 = smul.u32 2, %s19
      %p195 = scmp.lt.s32.totalorder %s194, 3
      %s196 = scalar_select %p195, %s194, 3
      %p197 = scmp.lt.s32.totalorder %s21, 0
      %s198 = scalar_select %p197, %s21, 0
      %s199 = sadd.s32 %s198, %s196
      %s200 = smul.addr %s199, 4
      %s201 = scalar_lea.vmem %s0, %s200
      %p202 = pneg %p56
      %p203 = pneg %p53
      %s204 = smul.u32 16, %s21
      %p205 = scmp.lt.s32.totalorder %s204, 15
      %s206 = scalar_select %p205, %s204, 15
      %p207 = scmp.lt.s32.totalorder %s20, 0
      %s208 = scalar_select %p207, %s20, 0
      %s209 = sadd.s32 %s208, %s206
      %s210 = smul.addr %s209, 4
      %s211 = scalar_lea.vmem %s1, %s210
      %p212 = pneg %p84
      %p213 = pneg %p81
      %p214 = scmp.lt.s32.totalorder %s20, 0
      %s215 = scalar_select %p214, %s20, 0
      %s216 = scalar_lea.vmem %s2, %s215
      %p217 = pneg %p110
      %p218 = pneg %p107
      %p219 = pneg %p138
      %p220 = pneg %p135
      %s221 = smul.u32 2, %s19
      %p222 = scmp.lt.s32.totalorder %s221, 3
      %s223 = scalar_select %p222, %s221, 3
      %p224 = scmp.lt.s32.totalorder %s20, 0
      %s225 = scalar_select %p224, %s20, 0
      %s226 = sadd.s32 %s225, %s223
      %s227 = smul.addr %s226, 8
      %s228 = scalar_lea.vmem %s3, %s227
      %s229 = smul.u32 2, %s19
      %p230 = scmp.lt.s32.totalorder %s229, 3
      %s231 = scalar_select %p230, %s229, 3
      %p232 = scmp.lt.s32.totalorder %s21, 0
      %s233 = scalar_select %p232, %s21, 0
      %s234 = sadd.s32 %s233, %s231
      %s235 = smul.addr %s234, 4
      %s236 = scalar_lea.vmem %s0, %s235
      %s237 = smul.u32 2, %s19
      %s238 = smul.u32 16, %s21
      %p239 = scmp.lt.s32.totalorder %s238, 15
      %s240 = scalar_select %p239, %s238, 15
      %p241 = scmp.lt.s32.totalorder %s20, 0
      %s242 = scalar_select %p241, %s20, 0
      %s243 = sadd.s32 %s242, %s240
      %s244 = smul.addr %s243, 4
      %s245 = scalar_lea.vmem %s1, %s244
      %s246 = smul.u32 16, %s21
      %p247 = scmp.lt.s32.totalorder %s20, 0
      %s248 = scalar_select %p247, %s20, 0
      %s249 = scalar_lea.vmem %s2, %s248
      %s250 = smul.u32 2, %s19
      %p251 = scmp.lt.s32.totalorder %s250, 3
      %s252 = scalar_select %p251, %s250, 3
      %p253 = scmp.lt.s32.totalorder %s20, 0
      %s254 = scalar_select %p253, %s20, 0
      %s255 = sadd.s32 %s254, %s252
      %s256 = smul.addr %s255, 8
      %s257 = scalar_lea.vmem %s3, %s256
      %s258 = smul.u32 2, %s19
      %p260 = scmp.eq.s32.totalorder %s21, 0
      // Predicated region
      $region33: #{pspnet_forward.21} parent=31 // pred_check
        %p261 = pneg %p260
      $region34: #{pspnet_forward.21} parent=31 // pred_check_branch
        %263 = sbr.rel (%p261) target = $region36
      $region35: #{pspnet_forward.21} parent=31 // pred_region
        %264 = vst [vmem:[#allocation2] sm:$0xff] 0.0
        %265 = vst [vmem:[#allocation2 + $0x8] sm:$0xff] 0.0
      $region36: #{pspnet_forward.21} parent=31 // pred_fallthru
        _
      %v266 = vld [vmem:[#allocation2] sm:$0xff]
      %v267 = vld [vmem:[#allocation2 + $0x8] sm:$0xff]
      %v268 = vld [vmem:[%s236] sm:$0xf]
      %v269 = vld [vmem:[%s236 + $0x4] sm:$0xf]
      %v270 = vld [vmem:[%s245] sm:$0xf]
      %v271 = vld [vmem:[%s245 + $0x4] sm:$0xf]
      %v272 = vld [vmem:[%s245 + $0x8] sm:$0xf]
      %v273 = vld [vmem:[%s245 + $0xc] sm:$0xf]
      %v274 = vld [vmem:[%s245 + $0x10] sm:$0xf]
      %v275 = vld [vmem:[%s245 + $0x14] sm:$0xf]
      %v276 = vld [vmem:[%s245 + $0x18] sm:$0xf]
      %v277 = vld [vmem:[%s245 + $0x1c] sm:$0xf]
      %v278 = vld [vmem:[%s245 + $0x20] sm:$0xf]
      %v279 = vld [vmem:[%s245 + $0x24] sm:$0xf]
      %v280 = vld [vmem:[%s245 + $0x28] sm:$0xf]
      %v281 = vld [vmem:[%s245 + $0x2c] sm:$0xf]
      %v282 = vld [vmem:[%s245 + $0x30] sm:$0xf]
      %v283 = vld [vmem:[%s245 + $0x34] sm:$0xf]
      %v284 = vld [vmem:[%s245 + $0x38] sm:$0xf]
      %v285 = vld [vmem:[%s245 + $0x3c] sm:$0xf]
      %v288 = vunpack.c.l.b16 %v268
      %v289 = vunpack.c.l.b16 %v269
      %v290 = vpack.c.b16 %v289, %v288
      %v308 = vunpack.c.l.b16 %v270
      %v309 = vunpack.c.l.b16 %v271
      %v310 = vunpack.c.l.b16 %v272
      %v311 = vunpack.c.l.b16 %v273
      %v312 = vunpack.c.l.b16 %v274
      %v313 = vunpack.c.l.b16 %v275
      %v314 = vunpack.c.l.b16 %v276
      %v315 = vunpack.c.l.b16 %v277
      %v316 = vunpack.c.l.b16 %v278
      %v317 = vunpack.c.l.b16 %v279
      %v318 = vunpack.c.l.b16 %v280
      %v319 = vunpack.c.l.b16 %v281
      %v320 = vunpack.c.l.b16 %v282
      %v321 = vunpack.c.l.b16 %v283
      %v322 = vunpack.c.l.b16 %v284
      %v323 = vunpack.c.l.b16 %v285
      %v324 = vpack.c.b16 %v309, %v308
      %v325 = vpack.c.b16 %v311, %v310
      %v326 = vpack.c.b16 %v313, %v312
      %v327 = vpack.c.b16 %v315, %v314
      %v328 = vpack.c.b16 %v317, %v316
      %v329 = vpack.c.b16 %v319, %v318
      %v330 = vpack.c.b16 %v321, %v320
      %v331 = vpack.c.b16 %v323, %v322
      %340 = vmatprep.subr.bf16.mxu0 0
      %341 = vmatpush1.bf16.msra.mxu0 %v331
      %342 = vmatprep.subr.bf16.mxu0 0
      %343 = vmatpush1.bf16.msra.mxu0 %v330
      %344 = vmatprep.subr.bf16.mxu0 0
      %345 = vmatpush1.bf16.msra.mxu0 %v329
      %346 = vmatprep.subr.bf16.mxu0 0
      %347 = vmatpush1.bf16.msra.mxu0 %v328
      %348 = vmatprep.subr.bf16.mxu0 0
      %349 = vmatpush1.bf16.msra.mxu0 %v327
      %350 = vmatprep.subr.bf16.mxu0 0
      %351 = vmatpush1.bf16.msra.mxu0 %v326
      %352 = vmatprep.subr.bf16.mxu0 0
      %353 = vmatpush1.bf16.msra.mxu0 %v325
      %354 = vmatprep.subr.bf16.mxu0 0
      %355 = vmatpush1.bf16.msra.mxu0 %v324
      %356 = vmatprep.subr.bf16.mxu0 0
      %357 = vmatpush2.bf16.msra.mxu0 0
      %358 = vmatprep.subr.bf16.mxu0 0
      %359 = vmatpush2.bf16.msra.mxu0 0
      %360 = vmatprep.subr.bf16.mxu0 0
      %361 = vmatpush2.bf16.msra.mxu0 0
      %362 = vmatprep.subr.bf16.mxu0 0
      %363 = vmatpush2.bf16.msra.mxu0 0
      %364 = vmatprep.subr.bf16.mxu0 0
      %365 = vmatpush2.bf16.msra.mxu0 0
      %366 = vmatprep.subr.bf16.mxu0 0
      %367 = vmatpush2.bf16.msra.mxu0 0
      %368 = vmatprep.subr.bf16.mxu0 0
      %369 = vmatpush2.bf16.msra.mxu0 0
      %370 = vmatprep.subr.bf16.mxu0 0
      %371 = vmatpush2.bf16.msra.mxu0 0
      %372 = vmatprep.mubr.bf16.mxu0 0
      %373 = vmatmul.mubr.bf16.gmra.mxu0 %v290
      %v374 = vpop.f32.mrf.mxu0
      %v375 = vadd.f32 0.0, %v374
      %v376 = vpop.f32.mrf.mxu0
      %v377 = vpop.f32.mrf.mxu0
      %v378 = vadd.f32 0.0, %v377
      %v379 = vpop.f32.mrf.mxu0
      %380 = vdwg.mxu0
      %v381 = vadd.f32 %v266, %v375
      %v382 = vadd.f32 %v267, %v378
      %383 = vst [vmem:[#allocation2] sm:$0xff] %v381
      %384 = vst [vmem:[#allocation2 + $0x8] sm:$0xff] %v382
      // Predicated region
      $region37: #{pspnet_forward.21} parent=31 // pred_check
        %p385 = pneg %p260
      $region38: #{pspnet_forward.21} parent=31 // pred_check_branch
        %387 = sbr.rel (%p385) target = $region40
      $region39: #{pspnet_forward.21} parent=31 // pred_region
        %v388 = vld [vmem:[#allocation2] sm:$0xff]
        %v389 = vld [vmem:[#allocation2 + $0x8] sm:$0xff]
        %v390 = vld [vmem:[%s249] sm:$0x1]
        %v392 = vlaneseq
        %v393 = vshrl.u32 %v392, 7
        %v394 = vsub.s32 0, %v393
        %v395 = vrot.slane %v390, %v394
        %v397 = vadd.f32 %v388, %v395
        %v398 = vadd.f32 %v389, %v395
        %399 = vst [vmem:[%s257] sm:$0xff] %v397
        %400 = vst [vmem:[%s257 + $0x8] sm:$0xff] %v398
      $region40: #{pspnet_forward.21} parent=31 // pred_fallthru
        _
      %s401 = smul.u32 2, %s19
      %p402 = scmp.lt.s32.totalorder %s401, 3
      %s403 = scalar_select %p402, %s401, 3
      %p404 = scmp.lt.s32.totalorder %s20, 0
      %s405 = scalar_select %p404, %s20, 0
      %s406 = sadd.s32 %s405, %s403
      %s407 = smul.addr %s406, 8
      %s408 = scalar_lea.vmem %s3, %s407
      // Predicated region
      $region41: #{pspnet_forward.21} parent=31 // pred_check
        %p409 = pneg %p135
      $region42: #{pspnet_forward.21} parent=31 // pred_check_branch
        %411 = sbr.rel (%p409) target = $region44
      $region43: #{pspnet_forward.21} parent=31 // pred_region
        %s412 = smul.u32 2, %s19
      $region44: #{pspnet_forward.21} parent=31 // pred_fallthru
        _
    $region32: #{pspnet_forward.21} parent=5 // pred_fallthru
      _
    %p413 = scmp.le.s32.totalorder 2, %s9
    // Predicated region
    $region45: #{pspnet_forward.21} parent=5 // pred_check
      %p414 = pneg %p413
    $region46: #{pspnet_forward.21} parent=5 // pred_check_branch
      %416 = sbr.rel (%p414) target = $region48
    $region47: #{pspnet_forward.21} parent=5 // pred_region
      %s417 = ssub.s32 %s9, 2
      // Predicated region
      $region49: #{pspnet_forward.21} parent=47 // pred_check
        %p418 = pneg %p141
      $region50: #{pspnet_forward.21} parent=47 // pred_check_branch
        %420 = sbr.rel (%p418) target = $region52
      $region51: #{pspnet_forward.21} parent=47 // pred_region
        %s421 = smul.u32 2, %s22
        %p422 = scmp.lt.s32.totalorder %s421, 3
        %s423 = scalar_select %p422, %s421, 3
        %p424 = scmp.lt.s32.totalorder %s23, 0
        %s425 = scalar_select %p424, %s23, 0
        %s426 = sadd.s32 %s425, %s423
        %s427 = smul.addr %s426, 8
        %s428 = scalar_lea.vmem %s3, %s427
      $region52: #{pspnet_forward.21} parent=47 // pred_fallthru
        _
    $region48: #{pspnet_forward.21} parent=5 // pred_fallthru
      _
  $region6: #{pspnet_forward.21} parent=0 // loop_footer
    %s13 = sadd.s32 1, %s9
  $region7: #{pspnet_forward.21} parent=0 // loop_footer_branch
    %8 = sbr.rel target = $region3
  $region8: #{pspnet_forward.21} parent=0 // loop_exit
    _

// kernel: pspnet_forward.22
$region0: #{pspnet_forward.22}
  #allocation0 [shape = 'u32[]', space=smem, size = 0x4, offset = 0x4, fixed_abs, tag = 'smem constant byte address 0x4 - core index']
  #allocation1 [shape = 'u32[144,128]{1,0:T(1,128)}', space=vmem, size = 0x12000, scoped, tag = 'internal scratch']
  #allocation2 [shape = 'f32[16,128]{1,0:T(8,128)}', space=vmem, size = 0x2000, scoped, tag = 'scratch operand']
  %s0 = inlined_call_operand.vmem [shape: bf16[32,128], index: 0, kind: input, shape index: {}]
  %s1 = inlined_call_operand.vmem [shape: bf16[128,128], index: 1, kind: input, shape index: {}]
  %s2 = inlined_call_operand.vmem [shape: f32[1,128], index: 2, kind: input, shape index: {}]
  %s3 = inlined_call_operand.vmem [shape: bf16[32,128], index: 3, kind: output, shape index: {}]
  %s4 = sld [smem:[#allocation0]]
  $region53: #{pspnet_forward.22} parent=0
    _
  %s6 = ssub.s32 1, %s4
  %s7 = scalar_select 0, %s6, %s4
  loop: start=0, step=1, limit=4
  $region2: #{pspnet_forward.22} parent=0 // loop_pre_header
    _
  $region3: #{pspnet_forward.22} parent=0 // loop_header
    %s9 = sphi 0, %s13
    %p10 = scmp.ge.s32.totalorder %s9, 4
    %s16 = sphi 0, %s35
    %s17 = sphi 0, %s31
    %s18 = sphi 0, %s27
    %s19 = sphi 0, %s16
    %s20 = sphi 0, %s17
    %s21 = sphi 0, %s18
    %s22 = sphi 0, %s19
    %s23 = sphi 0, %s20
    %s24 = sphi 0, %s21
    %s40 = sphi 0, %s42
    %s43 = sphi 0, %s40
    %s44 = sphi 0, %s43
    %s60 = sphi 0, %s44
    %s68 = sphi 0, %s70
    %s71 = sphi 0, %s68
    %s72 = sphi 0, %s71
    %s88 = sphi 0, %s72
    %s94 = sphi 0, %s96
    %s97 = sphi 0, %s94
    %s98 = sphi 0, %s97
    %s114 = sphi 0, %s98
    %s122 = sphi 0, %s124
    %s125 = sphi 0, %s122
    %s126 = sphi 0, %s125
    %s142 = sphi 0, %s126
  $region4: #{pspnet_forward.22} parent=0 // loop_header_branch
    %12 = sbr.rel (%p10) target = $region8
  $region5: #{pspnet_forward.22} parent=0 // loop_body
    %s14 = ssub.s32 %s9, 1
    %s15 = ssub.s32 %s9, 2
    %s25 = sadd.s32 1, %s18
    %p26 = scmp.ge.s32.totalorder %s25, 1
    %s27 = scalar_select %p26, 0, %s25
    %s28 = sadd.s32 1, %s17
    %s29 = scalar_select %p26, %s28, %s17
    %p30 = scmp.ge.s32.totalorder %s29, 1
    %s31 = scalar_select %p30, 0, %s29
    %s32 = sadd.s32 1, %s16
    %s33 = scalar_select %p30, %s32, %s16
    %p34 = scmp.ge.s32.totalorder %s33, 2
    %s35 = scalar_select %p34, 0, %s33
    %s36 = ssub.s32 %s16, %s35
    %s37 = ssub.s32 %s18, %s27
    %s38 = sor.u32 %s36, %s37
    %p39 = scmp.eq.s32.totalorder %s38, 0
    %s41 = sadd.s32 %s40, 1
    %s42 = scalar_select %p39, %s40, %s41
    %p45 = pneg %p39
    %p46 = scmp.eq.s32.totalorder %s9, 1
    %p47 = por %p45, %p46
    %p48 = scmp.ne.s32.totalorder %s40, %s43
    %p49 = scmp.eq.s32.totalorder %s9, 0
    %p50 = por %p48, %p49
    %p51 = scmp.ne.s32.totalorder %s40, %s43
    %p52 = scmp.eq.s32.totalorder %s14, 1
    %p53 = por %p51, %p52
    %p54 = scmp.ne.s32.totalorder %s43, %s44
    %p55 = scmp.eq.s32.totalorder %s14, 0
    %p56 = por %p54, %p55
    %p57 = scmp.ne.s32.totalorder %s43, %s44
    %p58 = scmp.eq.s32.totalorder %s15, 1
    %p59 = por %p57, %p58
    %p61 = scmp.ne.s32.totalorder %s44, %s60
    %p62 = scmp.eq.s32.totalorder %s15, 0
    %p63 = por %p61, %p62
    %s64 = ssub.s32 %s18, %s27
    %s65 = ssub.s32 %s17, %s31
    %s66 = sor.u32 %s64, %s65
    %p67 = scmp.eq.s32.totalorder %s66, 0
    %s69 = sadd.s32 %s68, 1
    %s70 = scalar_select %p67, %s68, %s69
    %p73 = pneg %p67
    %p74 = scmp.eq.s32.totalorder %s9, 1
    %p75 = por %p73, %p74
    %p76 = scmp.ne.s32.totalorder %s68, %s71
    %p77 = scmp.eq.s32.totalorder %s9, 0
    %p78 = por %p76, %p77
    %p79 = scmp.ne.s32.totalorder %s68, %s71
    %p80 = scmp.eq.s32.totalorder %s14, 1
    %p81 = por %p79, %p80
    %p82 = scmp.ne.s32.totalorder %s71, %s72
    %p83 = scmp.eq.s32.totalorder %s14, 0
    %p84 = por %p82, %p83
    %p85 = scmp.ne.s32.totalorder %s71, %s72
    %p86 = scmp.eq.s32.totalorder %s15, 1
    %p87 = por %p85, %p86
    %p89 = scmp.ne.s32.totalorder %s72, %s88
    %p90 = scmp.eq.s32.totalorder %s15, 0
    %p91 = por %p89, %p90
    %s92 = ssub.s32 %s17, %s31
    %p93 = scmp.eq.s32.totalorder %s92, 0
    %s95 = sadd.s32 %s94, 1
    %s96 = scalar_select %p93, %s94, %s95
    %p99 = pneg %p93
    %p100 = scmp.eq.s32.totalorder %s9, 1
    %p101 = por %p99, %p100
    %p102 = scmp.ne.s32.totalorder %s94, %s97
    %p103 = scmp.eq.s32.totalorder %s9, 0
    %p104 = por %p102, %p103
    %p105 = scmp.ne.s32.totalorder %s94, %s97
    %p106 = scmp.eq.s32.totalorder %s14, 1
    %p107 = por %p105, %p106
    %p108 = scmp.ne.s32.totalorder %s97, %s98
    %p109 = scmp.eq.s32.totalorder %s14, 0
    %p110 = por %p108, %p109
    %p111 = scmp.ne.s32.totalorder %s97, %s98
    %p112 = scmp.eq.s32.totalorder %s15, 1
    %p113 = por %p111, %p112
    %p115 = scmp.ne.s32.totalorder %s98, %s114
    %p116 = scmp.eq.s32.totalorder %s15, 0
    %p117 = por %p115, %p116
    %s118 = ssub.s32 %s16, %s35
    %s119 = ssub.s32 %s17, %s31
    %s120 = sor.u32 %s118, %s119
    %p121 = scmp.eq.s32.totalorder %s120, 0
    %s123 = sadd.s32 %s122, 1
    %s124 = scalar_select %p121, %s122, %s123
    %p127 = pneg %p121
    %p128 = scmp.eq.s32.totalorder %s9, 1
    %p129 = por %p127, %p128
    %p130 = scmp.ne.s32.totalorder %s122, %s125
    %p131 = scmp.eq.s32.totalorder %s9, 0
    %p132 = por %p130, %p131
    %p133 = scmp.ne.s32.totalorder %s122, %s125
    %p134 = scmp.eq.s32.totalorder %s14, 1
    %p135 = por %p133, %p134
    %p136 = scmp.ne.s32.totalorder %s125, %s126
    %p137 = scmp.eq.s32.totalorder %s14, 0
    %p138 = por %p136, %p137
    %p139 = scmp.ne.s32.totalorder %s125, %s126
    %p140 = scmp.eq.s32.totalorder %s15, 1
    %p141 = por %p139, %p140
    %p143 = scmp.ne.s32.totalorder %s126, %s142
    %p144 = scmp.eq.s32.totalorder %s15, 0
    %p145 = por %p143, %p144
    %p146 = scmp.le.s32.totalorder 1, %s9
    %p147 = scmp.lt.s32.totalorder %s9, 3
    %p148 = pnand %p146, %p147
    %p149 = pneg %p148
    // Predicated region
    $region9: #{pspnet_forward.22} parent=5 // pred_check
      _
    $region10: #{pspnet_forward.22} parent=5 // pred_check_branch
      %151 = sbr.rel (%p148) target = $region12
    $region11: #{pspnet_forward.22} parent=5 // pred_region
      %s152 = ssub.s32 %s9, 1
      // Predicated region
      $region13: #{pspnet_forward.22} parent=11 // pred_check
        %p153 = pneg %p84
      $region14: #{pspnet_forward.22} parent=11 // pred_check_branch
        %155 = sbr.rel (%p153) target = $region16
      $region15: #{pspnet_forward.22} parent=11 // pred_region
        %s156 = smul.u32 16, %s21
        %p157 = scmp.lt.s32.totalorder %s156, 15
        %s158 = scalar_select %p157, %s156, 15
        %p159 = scmp.lt.s32.totalorder %s20, 0
        %s160 = scalar_select %p159, %s20, 0
        %s161 = sadd.s32 %s160, %s158
        %s162 = smul.addr %s161, 4
        %s163 = scalar_lea.vmem %s1, %s162
        %s164 = smul.u32 16, %s21
      $region16: #{pspnet_forward.22} parent=11 // pred_fallthru
        _
      // Predicated region
      $region17: #{pspnet_forward.22} parent=11 // pred_check
        %p165 = pneg %p110
      $region18: #{pspnet_forward.22} parent=11 // pred_check_branch
        %167 = sbr.rel (%p165) target = $region20
      $region19: #{pspnet_forward.22} parent=11 // pred_region
        %p168 = scmp.lt.s32.totalorder %s20, 0
        %s169 = scalar_select %p168, %s20, 0
        %s170 = scalar_lea.vmem %s2, %s169
      $region20: #{pspnet_forward.22} parent=11 // pred_fallthru
        _
    $region12: #{pspnet_forward.22} parent=5 // pred_fallthru
      _
    %p171 = scmp.lt.s32.totalorder %s9, 2
    // Predicated region
    $region21: #{pspnet_forward.22} parent=5 // pred_check
      %p172 = pneg %p171
    $region22: #{pspnet_forward.22} parent=5 // pred_check_branch
      %174 = sbr.rel (%p172) target = $region24
    $region23: #{pspnet_forward.22} parent=5 // pred_region
      // Predicated region
      $region25: #{pspnet_forward.22} parent=23 // pred_check
        %p175 = pneg %p50
      $region26: #{pspnet_forward.22} parent=23 // pred_check_branch
        %177 = sbr.rel (%p175) target = $region28
      $region27: #{pspnet_forward.22} parent=23 // pred_region
        %s178 = smul.u32 2, %s16
        %p179 = scmp.lt.s32.totalorder %s178, 3
        %s180 = scalar_select %p179, %s178, 3
        %p181 = scmp.lt.s32.totalorder %s18, 0
        %s182 = scalar_select %p181, %s18, 0
        %s183 = sadd.s32 %s182, %s180
        %s184 = smul.addr %s183, 4
        %s185 = scalar_lea.vmem %s0, %s184
        %s186 = smul.u32 2, %s16
      $region28: #{pspnet_forward.22} parent=23 // pred_fallthru
        _
    $region24: #{pspnet_forward.22} parent=5 // pred_fallthru
      _
    %p187 = scmp.le.s32.totalorder 1, %s9
    %p188 = scmp.lt.s32.totalorder %s9, 3
    %p189 = pnand %p187, %p188
    %p190 = pneg %p189
    // Predicated region
    $region29: #{pspnet_forward.22} parent=5 // pred_check
      _
    $region30: #{pspnet_forward.22} parent=5 // pred_check_branch
      %192 = sbr.rel (%p189) target = $region32
    $region31: #{pspnet_forward.22} parent=5 // pred_region
      %s193 = ssub.s32 %s9, 1
      %s194 = smul.u32 2, %s19
      %p195 = scmp.lt.s32.totalorder %s194, 3
      %s196 = scalar_select %p195, %s194, 3
      %p197 = scmp.lt.s32.totalorder %s21, 0
      %s198 = scalar_select %p197, %s21, 0
      %s199 = sadd.s32 %s198, %s196
      %s200 = smul.addr %s199, 4
      %s201 = scalar_lea.vmem %s0, %s200
      %p202 = pneg %p56
      %p203 = pneg %p53
      %s204 = smul.u32 16, %s21
      %p205 = scmp.lt.s32.totalorder %s204, 15
      %s206 = scalar_select %p205, %s204, 15
      %p207 = scmp.lt.s32.totalorder %s20, 0
      %s208 = scalar_select %p207, %s20, 0
      %s209 = sadd.s32 %s208, %s206
      %s210 = smul.addr %s209, 4
      %s211 = scalar_lea.vmem %s1, %s210
      %p212 = pneg %p84
      %p213 = pneg %p81
      %p214 = scmp.lt.s32.totalorder %s20, 0
      %s215 = scalar_select %p214, %s20, 0
      %s216 = scalar_lea.vmem %s2, %s215
      %p217 = pneg %p110
      %p218 = pneg %p107
      %p219 = pneg %p138
      %p220 = pneg %p135
      %s221 = smul.u32 2, %s19
      %p222 = scmp.lt.s32.totalorder %s221, 3
      %s223 = scalar_select %p222, %s221, 3
      %p224 = scmp.lt.s32.totalorder %s20, 0
      %s225 = scalar_select %p224, %s20, 0
      %s226 = sadd.s32 %s225, %s223
      %s227 = smul.addr %s226, 4
      %s228 = scalar_lea.vmem %s3, %s227
      %s229 = smul.u32 2, %s19
      %p230 = scmp.lt.s32.totalorder %s229, 3
      %s231 = scalar_select %p230, %s229, 3
      %p232 = scmp.lt.s32.totalorder %s21, 0
      %s233 = scalar_select %p232, %s21, 0
      %s234 = sadd.s32 %s233, %s231
      %s235 = smul.addr %s234, 4
      %s236 = scalar_lea.vmem %s0, %s235
      %s237 = smul.u32 2, %s19
      %s238 = smul.u32 16, %s21
      %p239 = scmp.lt.s32.totalorder %s238, 15
      %s240 = scalar_select %p239, %s238, 15
      %p241 = scmp.lt.s32.totalorder %s20, 0
      %s242 = scalar_select %p241, %s20, 0
      %s243 = sadd.s32 %s242, %s240
      %s244 = smul.addr %s243, 4
      %s245 = scalar_lea.vmem %s1, %s244
      %s246 = smul.u32 16, %s21
      %p247 = scmp.lt.s32.totalorder %s20, 0
      %s248 = scalar_select %p247, %s20, 0
      %s249 = scalar_lea.vmem %s2, %s248
      %s250 = smul.u32 2, %s19
      %p251 = scmp.lt.s32.totalorder %s250, 3
      %s252 = scalar_select %p251, %s250, 3
      %p253 = scmp.lt.s32.totalorder %s20, 0
      %s254 = scalar_select %p253, %s20, 0
      %s255 = sadd.s32 %s254, %s252
      %s256 = smul.addr %s255, 4
      %s257 = scalar_lea.vmem %s3, %s256
      %s258 = smul.u32 2, %s19
      %p260 = scmp.eq.s32.totalorder %s21, 0
      // Predicated region
      $region33: #{pspnet_forward.22} parent=31 // pred_check
        %p261 = pneg %p260
      $region34: #{pspnet_forward.22} parent=31 // pred_check_branch
        %263 = sbr.rel (%p261) target = $region36
      $region35: #{pspnet_forward.22} parent=31 // pred_region
        %264 = vst [vmem:[#allocation2] sm:$0xff] 0.0
        %265 = vst [vmem:[#allocation2 + $0x8] sm:$0xff] 0.0
      $region36: #{pspnet_forward.22} parent=31 // pred_fallthru
        _
      %v266 = vld [vmem:[#allocation2] sm:$0xff]
      %v267 = vld [vmem:[#allocation2 + $0x8] sm:$0xff]
      %v268 = vld [vmem:[%s236] sm:$0xf]
      %v269 = vld [vmem:[%s236 + $0x4] sm:$0xf]
      %v270 = vld [vmem:[%s245] sm:$0xf]
      %v271 = vld [vmem:[%s245 + $0x4] sm:$0xf]
      %v272 = vld [vmem:[%s245 + $0x8] sm:$0xf]
      %v273 = vld [vmem:[%s245 + $0xc] sm:$0xf]
      %v274 = vld [vmem:[%s245 + $0x10] sm:$0xf]
      %v275 = vld [vmem:[%s245 + $0x14] sm:$0xf]
      %v276 = vld [vmem:[%s245 + $0x18] sm:$0xf]
      %v277 = vld [vmem:[%s245 + $0x1c] sm:$0xf]
      %v278 = vld [vmem:[%s245 + $0x20] sm:$0xf]
      %v279 = vld [vmem:[%s245 + $0x24] sm:$0xf]
      %v280 = vld [vmem:[%s245 + $0x28] sm:$0xf]
      %v281 = vld [vmem:[%s245 + $0x2c] sm:$0xf]
      %v282 = vld [vmem:[%s245 + $0x30] sm:$0xf]
      %v283 = vld [vmem:[%s245 + $0x34] sm:$0xf]
      %v284 = vld [vmem:[%s245 + $0x38] sm:$0xf]
      %v285 = vld [vmem:[%s245 + $0x3c] sm:$0xf]
      %v288 = vunpack.c.l.b16 %v268
      %v289 = vunpack.c.l.b16 %v269
      %v290 = vpack.c.b16 %v289, %v288
      %v308 = vunpack.c.l.b16 %v270
      %v309 = vunpack.c.l.b16 %v271
      %v310 = vunpack.c.l.b16 %v272
      %v311 = vunpack.c.l.b16 %v273
      %v312 = vunpack.c.l.b16 %v274
      %v313 = vunpack.c.l.b16 %v275
      %v314 = vunpack.c.l.b16 %v276
      %v315 = vunpack.c.l.b16 %v277
      %v316 = vunpack.c.l.b16 %v278
      %v317 = vunpack.c.l.b16 %v279
      %v318 = vunpack.c.l.b16 %v280
      %v319 = vunpack.c.l.b16 %v281
      %v320 = vunpack.c.l.b16 %v282
      %v321 = vunpack.c.l.b16 %v283
      %v322 = vunpack.c.l.b16 %v284
      %v323 = vunpack.c.l.b16 %v285
      %v324 = vpack.c.b16 %v309, %v308
      %v325 = vpack.c.b16 %v311, %v310
      %v326 = vpack.c.b16 %v313, %v312
      %v327 = vpack.c.b16 %v315, %v314
      %v328 = vpack.c.b16 %v317, %v316
      %v329 = vpack.c.b16 %v319, %v318
      %v330 = vpack.c.b16 %v321, %v320
      %v331 = vpack.c.b16 %v323, %v322
      %340 = vmatprep.subr.bf16.mxu0 0
      %341 = vmatpush1.bf16.msra.mxu0 %v331
      %342 = vmatprep.subr.bf16.mxu0 0
      %343 = vmatpush1.bf16.msra.mxu0 %v330
      %344 = vmatprep.subr.bf16.mxu0 0
      %345 = vmatpush1.bf16.msra.mxu0 %v329
      %346 = vmatprep.subr.bf16.mxu0 0
      %347 = vmatpush1.bf16.msra.mxu0 %v328
      %348 = vmatprep.subr.bf16.mxu0 0
      %349 = vmatpush1.bf16.msra.mxu0 %v327
      %350 = vmatprep.subr.bf16.mxu0 0
      %351 = vmatpush1.bf16.msra.mxu0 %v326
      %352 = vmatprep.subr.bf16.mxu0 0
      %353 = vmatpush1.bf16.msra.mxu0 %v325
      %354 = vmatprep.subr.bf16.mxu0 0
      %355 = vmatpush1.bf16.msra.mxu0 %v324
      %356 = vmatprep.subr.bf16.mxu0 0
      %357 = vmatpush2.bf16.msra.mxu0 0
      %358 = vmatprep.subr.bf16.mxu0 0
      %359 = vmatpush2.bf16.msra.mxu0 0
      %360 = vmatprep.subr.bf16.mxu0 0
      %361 = vmatpush2.bf16.msra.mxu0 0
      %362 = vmatprep.subr.bf16.mxu0 0
      %363 = vmatpush2.bf16.msra.mxu0 0
      %364 = vmatprep.subr.bf16.mxu0 0
      %365 = vmatpush2.bf16.msra.mxu0 0
      %366 = vmatprep.subr.bf16.mxu0 0
      %367 = vmatpush2.bf16.msra.mxu0 0
      %368 = vmatprep.subr.bf16.mxu0 0
      %369 = vmatpush2.bf16.msra.mxu0 0
      %370 = vmatprep.subr.bf16.mxu0 0
      %371 = vmatpush2.bf16.msra.mxu0 0
      %372 = vmatprep.mubr.bf16.mxu0 0
      %373 = vmatmul.mubr.bf16.gmra.mxu0 %v290
      %v374 = vpop.f32.mrf.mxu0
      %v375 = vadd.f32 0.0, %v374
      %v376 = vpop.f32.mrf.mxu0
      %v377 = vpop.f32.mrf.mxu0
      %v378 = vadd.f32 0.0, %v377
      %v379 = vpop.f32.mrf.mxu0
      %380 = vdwg.mxu0
      %v381 = vadd.f32 %v266, %v375
      %v382 = vadd.f32 %v267, %v378
      %383 = vst [vmem:[#allocation2] sm:$0xff] %v381
      %384 = vst [vmem:[#allocation2 + $0x8] sm:$0xff] %v382
      // Predicated region
      $region37: #{pspnet_forward.22} parent=31 // pred_check
        %p385 = pneg %p260
      $region38: #{pspnet_forward.22} parent=31 // pred_check_branch
        %387 = sbr.rel (%p385) target = $region40
      $region39: #{pspnet_forward.22} parent=31 // pred_region
        %v388 = vld [vmem:[#allocation2] sm:$0xff]
        %v389 = vld [vmem:[#allocation2 + $0x8] sm:$0xff]
        %v390 = vld [vmem:[%s249] sm:$0x1]
        %v392 = vlaneseq
        %v393 = vshrl.u32 %v392, 7
        %v394 = vsub.s32 0, %v393
        %v395 = vrot.slane %v390, %v394
        %v397 = vadd.f32 %v388, %v395
        %v398 = vadd.f32 %v389, %v395
        %v399 = vpack.c.bf16 %v398, %v397
        %v401 = vunpack.c.l.b16 %v399
        %v402 = vunpack.c.h.b16 %v399
        %v403 = vpack.c.b16 %v401, %v401
        %v404 = vpack.c.b16 %v402, %v402
        %407 = vst [vmem:[%s257] sm:$0xf] %v403
        %408 = vst [vmem:[%s257 + $0x4] sm:$0xf] %v404
      $region40: #{pspnet_forward.22} parent=31 // pred_fallthru
        _
      %s409 = smul.u32 2, %s19
      %p410 = scmp.lt.s32.totalorder %s409, 3
      %s411 = scalar_select %p410, %s409, 3
      %p412 = scmp.lt.s32.totalorder %s20, 0
      %s413 = scalar_select %p412, %s20, 0
      %s414 = sadd.s32 %s413, %s411
      %s415 = smul.addr %s414, 4
      %s416 = scalar_lea.vmem %s3, %s415
      // Predicated region
      $region41: #{pspnet_forward.22} parent=31 // pred_check
        %p417 = pneg %p135
      $region42: #{pspnet_forward.22} parent=31 // pred_check_branch
        %419 = sbr.rel (%p417) target = $region44
      $region43: #{pspnet_forward.22} parent=31 // pred_region
        %s420 = smul.u32 2, %s19
      $region44: #{pspnet_forward.22} parent=31 // pred_fallthru
        _
    $region32: #{pspnet_forward.22} parent=5 // pred_fallthru
      _
    %p421 = scmp.le.s32.totalorder 2, %s9
    // Predicated region
    $region45: #{pspnet_forward.22} parent=5 // pred_check
      %p422 = pneg %p421
    $region46: #{pspnet_forward.22} parent=5 // pred_check_branch
      %424 = sbr.rel (%p422) target = $region48
    $region47: #{pspnet_forward.22} parent=5 // pred_region
      %s425 = ssub.s32 %s9, 2
      // Predicated region
      $region49: #{pspnet_forward.22} parent=47 // pred_check
        %p426 = pneg %p141
      $region50: #{pspnet_forward.22} parent=47 // pred_check_branch
        %428 = sbr.rel (%p426) target = $region52
      $region51: #{pspnet_forward.22} parent=47 // pred_region
        %s429 = smul.u32 2, %s22
        %p430 = scmp.lt.s32.totalorder %s429, 3
        %s431 = scalar_select %p430, %s429, 3
        %p432 = scmp.lt.s32.totalorder %s23, 0
        %s433 = scalar_select %p432, %s23, 0
        %s434 = sadd.s32 %s433, %s431
        %s435 = smul.addr %s434, 4
        %s436 = scalar_lea.vmem %s3, %s435
      $region52: #{pspnet_forward.22} parent=47 // pred_fallthru
        _
    $region48: #{pspnet_forward.22} parent=5 // pred_fallthru
      _
  $region6: #{pspnet_forward.22} parent=0 // loop_footer
    %s13 = sadd.s32 1, %s9
  $region7: #{pspnet_forward.22} parent=0 // loop_footer_branch
    %8 = sbr.rel target = $region3
  $region8: #{pspnet_forward.22} parent=0 // loop_exit
    _

// kernel: pspnet_forward.23
$region0: #{pspnet_forward.23}
  #allocation0 [shape = 'u32[]', space=smem, size = 0x4, offset = 0x4, fixed_abs, tag = 'smem constant byte address 0x4 - core index']
  #allocation1 [shape = 'u32[144,128]{1,0:T(1,128)}', space=vmem, size = 0x12000, scoped, tag = 'internal scratch']
  #allocation2 [shape = 'f32[16,128]{1,0:T(8,128)}', space=vmem, size = 0x2000, scoped, tag = 'scratch operand']
  %s0 = inlined_call_operand.vmem [shape: bf16[32,128], index: 0, kind: input, shape index: {}]
  %s1 = inlined_call_operand.vmem [shape: bf16[128,128], index: 1, kind: input, shape index: {}]
  %s2 = inlined_call_operand.vmem [shape: f32[1,128], index: 2, kind: input, shape index: {}]
  %s3 = inlined_call_operand.vmem [shape: f32[32,128], index: 3, kind: output, shape index: {}]
  %s4 = sld [smem:[#allocation0]]
  $region53: #{pspnet_forward.23} parent=0
    _
  %s6 = ssub.s32 1, %s4
  %s7 = scalar_select 0, %s6, %s4
  loop: start=0, step=1, limit=4
  $region2: #{pspnet_forward.23} parent=0 // loop_pre_header
    _
  $region3: #{pspnet_forward.23} parent=0 // loop_header
    %s9 = sphi 0, %s13
    %p10 = scmp.ge.s32.totalorder %s9, 4
    %s16 = sphi 0, %s35
    %s17 = sphi 0, %s31
    %s18 = sphi 0, %s27
    %s19 = sphi 0, %s16
    %s20 = sphi 0, %s17
    %s21 = sphi 0, %s18
    %s22 = sphi 0, %s19
    %s23 = sphi 0, %s20
    %s24 = sphi 0, %s21
    %s40 = sphi 0, %s42
    %s43 = sphi 0, %s40
    %s44 = sphi 0, %s43
    %s60 = sphi 0, %s44
    %s68 = sphi 0, %s70
    %s71 = sphi 0, %s68
    %s72 = sphi 0, %s71
    %s88 = sphi 0, %s72
    %s94 = sphi 0, %s96
    %s97 = sphi 0, %s94
    %s98 = sphi 0, %s97
    %s114 = sphi 0, %s98
    %s122 = sphi 0, %s124
    %s125 = sphi 0, %s122
    %s126 = sphi 0, %s125
    %s142 = sphi 0, %s126
  $region4: #{pspnet_forward.23} parent=0 // loop_header_branch
    %12 = sbr.rel (%p10) target = $region8
  $region5: #{pspnet_forward.23} parent=0 // loop_body
    %s14 = ssub.s32 %s9, 1
    %s15 = ssub.s32 %s9, 2
    %s25 = sadd.s32 1, %s18
    %p26 = scmp.ge.s32.totalorder %s25, 1
    %s27 = scalar_select %p26, 0, %s25
    %s28 = sadd.s32 1, %s17
    %s29 = scalar_select %p26, %s28, %s17
    %p30 = scmp.ge.s32.totalorder %s29, 1
    %s31 = scalar_select %p30, 0, %s29
    %s32 = sadd.s32 1, %s16
    %s33 = scalar_select %p30, %s32, %s16
    %p34 = scmp.ge.s32.totalorder %s33, 2
    %s35 = scalar_select %p34, 0, %s33
    %s36 = ssub.s32 %s16, %s35
    %s37 = ssub.s32 %s18, %s27
    %s38 = sor.u32 %s36, %s37
    %p39 = scmp.eq.s32.totalorder %s38, 0
    %s41 = sadd.s32 %s40, 1
    %s42 = scalar_select %p39, %s40, %s41
    %p45 = pneg %p39
    %p46 = scmp.eq.s32.totalorder %s9, 1
    %p47 = por %p45, %p46
    %p48 = scmp.ne.s32.totalorder %s40, %s43
    %p49 = scmp.eq.s32.totalorder %s9, 0
    %p50 = por %p48, %p49
    %p51 = scmp.ne.s32.totalorder %s40, %s43
    %p52 = scmp.eq.s32.totalorder %s14, 1
    %p53 = por %p51, %p52
    %p54 = scmp.ne.s32.totalorder %s43, %s44
    %p55 = scmp.eq.s32.totalorder %s14, 0
    %p56 = por %p54, %p55
    %p57 = scmp.ne.s32.totalorder %s43, %s44
    %p58 = scmp.eq.s32.totalorder %s15, 1
    %p59 = por %p57, %p58
    %p61 = scmp.ne.s32.totalorder %s44, %s60
    %p62 = scmp.eq.s32.totalorder %s15, 0
    %p63 = por %p61, %p62
    %s64 = ssub.s32 %s18, %s27
    %s65 = ssub.s32 %s17, %s31
    %s66 = sor.u32 %s64, %s65
    %p67 = scmp.eq.s32.totalorder %s66, 0
    %s69 = sadd.s32 %s68, 1
    %s70 = scalar_select %p67, %s68, %s69
    %p73 = pneg %p67
    %p74 = scmp.eq.s32.totalorder %s9, 1
    %p75 = por %p73, %p74
    %p76 = scmp.ne.s32.totalorder %s68, %s71
    %p77 = scmp.eq.s32.totalorder %s9, 0
    %p78 = por %p76, %p77
    %p79 = scmp.ne.s32.totalorder %s68, %s71
    %p80 = scmp.eq.s32.totalorder %s14, 1
    %p81 = por %p79, %p80
    %p82 = scmp.ne.s32.totalorder %s71, %s72
    %p83 = scmp.eq.s32.totalorder %s14, 0
    %p84 = por %p82, %p83
    %p85 = scmp.ne.s32.totalorder %s71, %s72
    %p86 = scmp.eq.s32.totalorder %s15, 1
    %p87 = por %p85, %p86
    %p89 = scmp.ne.s32.totalorder %s72, %s88
    %p90 = scmp.eq.s32.totalorder %s15, 0
    %p91 = por %p89, %p90
    %s92 = ssub.s32 %s17, %s31
    %p93 = scmp.eq.s32.totalorder %s92, 0
    %s95 = sadd.s32 %s94, 1
    %s96 = scalar_select %p93, %s94, %s95
    %p99 = pneg %p93
    %p100 = scmp.eq.s32.totalorder %s9, 1
    %p101 = por %p99, %p100
    %p102 = scmp.ne.s32.totalorder %s94, %s97
    %p103 = scmp.eq.s32.totalorder %s9, 0
    %p104 = por %p102, %p103
    %p105 = scmp.ne.s32.totalorder %s94, %s97
    %p106 = scmp.eq.s32.totalorder %s14, 1
    %p107 = por %p105, %p106
    %p108 = scmp.ne.s32.totalorder %s97, %s98
    %p109 = scmp.eq.s32.totalorder %s14, 0
    %p110 = por %p108, %p109
    %p111 = scmp.ne.s32.totalorder %s97, %s98
    %p112 = scmp.eq.s32.totalorder %s15, 1
    %p113 = por %p111, %p112
    %p115 = scmp.ne.s32.totalorder %s98, %s114
    %p116 = scmp.eq.s32.totalorder %s15, 0
    %p117 = por %p115, %p116
    %s118 = ssub.s32 %s16, %s35
    %s119 = ssub.s32 %s17, %s31
    %s120 = sor.u32 %s118, %s119
    %p121 = scmp.eq.s32.totalorder %s120, 0
    %s123 = sadd.s32 %s122, 1
    %s124 = scalar_select %p121, %s122, %s123
    %p127 = pneg %p121
    %p128 = scmp.eq.s32.totalorder %s9, 1
    %p129 = por %p127, %p128
    %p130 = scmp.ne.s32.totalorder %s122, %s125
    %p131 = scmp.eq.s32.totalorder %s9, 0
    %p132 = por %p130, %p131
    %p133 = scmp.ne.s32.totalorder %s122, %s125
    %p134 = scmp.eq.s32.totalorder %s14, 1
    %p135 = por %p133, %p134
    %p136 = scmp.ne.s32.totalorder %s125, %s126
    %p137 = scmp.eq.s32.totalorder %s14, 0
    %p138 = por %p136, %p137
    %p139 = scmp.ne.s32.totalorder %s125, %s126
    %p140 = scmp.eq.s32.totalorder %s15, 1
    %p141 = por %p139, %p140
    %p143 = scmp.ne.s32.totalorder %s126, %s142
    %p144 = scmp.eq.s32.totalorder %s15, 0
    %p145 = por %p143, %p144
    %p146 = scmp.le.s32.totalorder 1, %s9
    %p147 = scmp.lt.s32.totalorder %s9, 3
    %p148 = pnand %p146, %p147
    %p149 = pneg %p148
    // Predicated region
    $region9: #{pspnet_forward.23} parent=5 // pred_check
      _
    $region10: #{pspnet_forward.23} parent=5 // pred_check_branch
      %151 = sbr.rel (%p148) target = $region12
    $region11: #{pspnet_forward.23} parent=5 // pred_region
      %s152 = ssub.s32 %s9, 1
      // Predicated region
      $region13: #{pspnet_forward.23} parent=11 // pred_check
        %p153 = pneg %p84
      $region14: #{pspnet_forward.23} parent=11 // pred_check_branch
        %155 = sbr.rel (%p153) target = $region16
      $region15: #{pspnet_forward.23} parent=11 // pred_region
        %s156 = smul.u32 16, %s21
        %p157 = scmp.lt.s32.totalorder %s156, 15
        %s158 = scalar_select %p157, %s156, 15
        %p159 = scmp.lt.s32.totalorder %s20, 0
        %s160 = scalar_select %p159, %s20, 0
        %s161 = sadd.s32 %s160, %s158
        %s162 = smul.addr %s161, 4
        %s163 = scalar_lea.vmem %s1, %s162
        %s164 = smul.u32 16, %s21
      $region16: #{pspnet_forward.23} parent=11 // pred_fallthru
        _
      // Predicated region
      $region17: #{pspnet_forward.23} parent=11 // pred_check
        %p165 = pneg %p110
      $region18: #{pspnet_forward.23} parent=11 // pred_check_branch
        %167 = sbr.rel (%p165) target = $region20
      $region19: #{pspnet_forward.23} parent=11 // pred_region
        %p168 = scmp.lt.s32.totalorder %s20, 0
        %s169 = scalar_select %p168, %s20, 0
        %s170 = scalar_lea.vmem %s2, %s169
      $region20: #{pspnet_forward.23} parent=11 // pred_fallthru
        _
    $region12: #{pspnet_forward.23} parent=5 // pred_fallthru
      _
    %p171 = scmp.lt.s32.totalorder %s9, 2
    // Predicated region
    $region21: #{pspnet_forward.23} parent=5 // pred_check
      %p172 = pneg %p171
    $region22: #{pspnet_forward.23} parent=5 // pred_check_branch
      %174 = sbr.rel (%p172) target = $region24
    $region23: #{pspnet_forward.23} parent=5 // pred_region
      // Predicated region
      $region25: #{pspnet_forward.23} parent=23 // pred_check
        %p175 = pneg %p50
      $region26: #{pspnet_forward.23} parent=23 // pred_check_branch
        %177 = sbr.rel (%p175) target = $region28
      $region27: #{pspnet_forward.23} parent=23 // pred_region
        %s178 = smul.u32 2, %s16
        %p179 = scmp.lt.s32.totalorder %s178, 3
        %s180 = scalar_select %p179, %s178, 3
        %p181 = scmp.lt.s32.totalorder %s18, 0
        %s182 = scalar_select %p181, %s18, 0
        %s183 = sadd.s32 %s182, %s180
        %s184 = smul.addr %s183, 4
        %s185 = scalar_lea.vmem %s0, %s184
        %s186 = smul.u32 2, %s16
      $region28: #{pspnet_forward.23} parent=23 // pred_fallthru
        _
    $region24: #{pspnet_forward.23} parent=5 // pred_fallthru
      _
    %p187 = scmp.le.s32.totalorder 1, %s9
    %p188 = scmp.lt.s32.totalorder %s9, 3
    %p189 = pnand %p187, %p188
    %p190 = pneg %p189
    // Predicated region
    $region29: #{pspnet_forward.23} parent=5 // pred_check
      _
    $region30: #{pspnet_forward.23} parent=5 // pred_check_branch
      %192 = sbr.rel (%p189) target = $region32
    $region31: #{pspnet_forward.23} parent=5 // pred_region
      %s193 = ssub.s32 %s9, 1
      %s194 = smul.u32 2, %s19
      %p195 = scmp.lt.s32.totalorder %s194, 3
      %s196 = scalar_select %p195, %s194, 3
      %p197 = scmp.lt.s32.totalorder %s21, 0
      %s198 = scalar_select %p197, %s21, 0
      %s199 = sadd.s32 %s198, %s196
      %s200 = smul.addr %s199, 4
      %s201 = scalar_lea.vmem %s0, %s200
      %p202 = pneg %p56
      %p203 = pneg %p53
      %s204 = smul.u32 16, %s21
      %p205 = scmp.lt.s32.totalorder %s204, 15
      %s206 = scalar_select %p205, %s204, 15
      %p207 = scmp.lt.s32.totalorder %s20, 0
      %s208 = scalar_select %p207, %s20, 0
      %s209 = sadd.s32 %s208, %s206
      %s210 = smul.addr %s209, 4
      %s211 = scalar_lea.vmem %s1, %s210
      %p212 = pneg %p84
      %p213 = pneg %p81
      %p214 = scmp.lt.s32.totalorder %s20, 0
      %s215 = scalar_select %p214, %s20, 0
      %s216 = scalar_lea.vmem %s2, %s215
      %p217 = pneg %p110
      %p218 = pneg %p107
      %p219 = pneg %p138
      %p220 = pneg %p135
      %s221 = smul.u32 2, %s19
      %p222 = scmp.lt.s32.totalorder %s221, 3
      %s223 = scalar_select %p222, %s221, 3
      %p224 = scmp.lt.s32.totalorder %s20, 0
      %s225 = scalar_select %p224, %s20, 0
      %s226 = sadd.s32 %s225, %s223
      %s227 = smul.addr %s226, 8
      %s228 = scalar_lea.vmem %s3, %s227
      %s229 = smul.u32 2, %s19
      %p230 = scmp.lt.s32.totalorder %s229, 3
      %s231 = scalar_select %p230, %s229, 3
      %p232 = scmp.lt.s32.totalorder %s21, 0
      %s233 = scalar_select %p232, %s21, 0
      %s234 = sadd.s32 %s233, %s231
      %s235 = smul.addr %s234, 4
      %s236 = scalar_lea.vmem %s0, %s235
      %s237 = smul.u32 2, %s19
      %s238 = smul.u32 16, %s21
      %p239 = scmp.lt.s32.totalorder %s238, 15
      %s240 = scalar_select %p239, %s238, 15
      %p241 = scmp.lt.s32.totalorder %s20, 0
      %s242 = scalar_select %p241, %s20, 0
      %s243 = sadd.s32 %s242, %s240
      %s244 = smul.addr %s243, 4
      %s245 = scalar_lea.vmem %s1, %s244
      %s246 = smul.u32 16, %s21
      %p247 = scmp.lt.s32.totalorder %s20, 0
      %s248 = scalar_select %p247, %s20, 0
      %s249 = scalar_lea.vmem %s2, %s248
      %s250 = smul.u32 2, %s19
      %p251 = scmp.lt.s32.totalorder %s250, 3
      %s252 = scalar_select %p251, %s250, 3
      %p253 = scmp.lt.s32.totalorder %s20, 0
      %s254 = scalar_select %p253, %s20, 0
      %s255 = sadd.s32 %s254, %s252
      %s256 = smul.addr %s255, 8
      %s257 = scalar_lea.vmem %s3, %s256
      %s258 = smul.u32 2, %s19
      %p260 = scmp.eq.s32.totalorder %s21, 0
      // Predicated region
      $region33: #{pspnet_forward.23} parent=31 // pred_check
        %p261 = pneg %p260
      $region34: #{pspnet_forward.23} parent=31 // pred_check_branch
        %263 = sbr.rel (%p261) target = $region36
      $region35: #{pspnet_forward.23} parent=31 // pred_region
        %264 = vst [vmem:[#allocation2] sm:$0xff] 0.0
        %265 = vst [vmem:[#allocation2 + $0x8] sm:$0xff] 0.0
      $region36: #{pspnet_forward.23} parent=31 // pred_fallthru
        _
      %v266 = vld [vmem:[#allocation2] sm:$0xff]
      %v267 = vld [vmem:[#allocation2 + $0x8] sm:$0xff]
      %v268 = vld [vmem:[%s236] sm:$0xf]
      %v269 = vld [vmem:[%s236 + $0x4] sm:$0xf]
      %v270 = vld [vmem:[%s245] sm:$0xf]
      %v271 = vld [vmem:[%s245 + $0x4] sm:$0xf]
      %v272 = vld [vmem:[%s245 + $0x8] sm:$0xf]
      %v273 = vld [vmem:[%s245 + $0xc] sm:$0xf]
      %v274 = vld [vmem:[%s245 + $0x10] sm:$0xf]
      %v275 = vld [vmem:[%s245 + $0x14] sm:$0xf]
      %v276 = vld [vmem:[%s245 + $0x18] sm:$0xf]
      %v277 = vld [vmem:[%s245 + $0x1c] sm:$0xf]
      %v278 = vld [vmem:[%s245 + $0x20] sm:$0xf]
      %v279 = vld [vmem:[%s245 + $0x24] sm:$0xf]
      %v280 = vld [vmem:[%s245 + $0x28] sm:$0xf]
      %v281 = vld [vmem:[%s245 + $0x2c] sm:$0xf]
      %v282 = vld [vmem:[%s245 + $0x30] sm:$0xf]
      %v283 = vld [vmem:[%s245 + $0x34] sm:$0xf]
      %v284 = vld [vmem:[%s245 + $0x38] sm:$0xf]
      %v285 = vld [vmem:[%s245 + $0x3c] sm:$0xf]
      %v288 = vunpack.c.l.b16 %v268
      %v289 = vunpack.c.l.b16 %v269
      %v290 = vpack.c.b16 %v289, %v288
      %v308 = vunpack.c.l.b16 %v270
      %v309 = vunpack.c.l.b16 %v271
      %v310 = vunpack.c.l.b16 %v272
      %v311 = vunpack.c.l.b16 %v273
      %v312 = vunpack.c.l.b16 %v274
      %v313 = vunpack.c.l.b16 %v275
      %v314 = vunpack.c.l.b16 %v276
      %v315 = vunpack.c.l.b16 %v277
      %v316 = vunpack.c.l.b16 %v278
      %v317 = vunpack.c.l.b16 %v279
      %v318 = vunpack.c.l.b16 %v280
      %v319 = vunpack.c.l.b16 %v281
      %v320 = vunpack.c.l.b16 %v282
      %v321 = vunpack.c.l.b16 %v283
      %v322 = vunpack.c.l.b16 %v284
      %v323 = vunpack.c.l.b16 %v285
      %v324 = vpack.c.b16 %v309, %v308
      %v325 = vpack.c.b16 %v311, %v310
      %v326 = vpack.c.b16 %v313, %v312
      %v327 = vpack.c.b16 %v315, %v314
      %v328 = vpack.c.b16 %v317, %v316
      %v329 = vpack.c.b16 %v319, %v318
      %v330 = vpack.c.b16 %v321, %v320
      %v331 = vpack.c.b16 %v323, %v322
      %340 = vmatprep.subr.bf16.mxu0 0
      %341 = vmatpush1.bf16.msra.mxu0 %v331
      %342 = vmatprep.subr.bf16.mxu0 0
      %343 = vmatpush1.bf16.msra.mxu0 %v330
      %344 = vmatprep.subr.bf16.mxu0 0
      %345 = vmatpush1.bf16.msra.mxu0 %v329
      %346 = vmatprep.subr.bf16.mxu0 0
      %347 = vmatpush1.bf16.msra.mxu0 %v328
      %348 = vmatprep.subr.bf16.mxu0 0
      %349 = vmatpush1.bf16.msra.mxu0 %v327
      %350 = vmatprep.subr.bf16.mxu0 0
      %351 = vmatpush1.bf16.msra.mxu0 %v326
      %352 = vmatprep.subr.bf16.mxu0 0
      %353 = vmatpush1.bf16.msra.mxu0 %v325
      %354 = vmatprep.subr.bf16.mxu0 0
      %355 = vmatpush1.bf16.msra.mxu0 %v324
      %356 = vmatprep.subr.bf16.mxu0 0
      %357 = vmatpush2.bf16.msra.mxu0 0
      %358 = vmatprep.subr.bf16.mxu0 0
      %359 = vmatpush2.bf16.msra.mxu0 0
      %360 = vmatprep.subr.bf16.mxu0 0
      %361 = vmatpush2.bf16.msra.mxu0 0
      %362 = vmatprep.subr.bf16.mxu0 0
      %363 = vmatpush2.bf16.msra.mxu0 0
      %364 = vmatprep.subr.bf16.mxu0 0
      %365 = vmatpush2.bf16.msra.mxu0 0
      %366 = vmatprep.subr.bf16.mxu0 0
      %367 = vmatpush2.bf16.msra.mxu0 0
      %368 = vmatprep.subr.bf16.mxu0 0
      %369 = vmatpush2.bf16.msra.mxu0 0
      %370 = vmatprep.subr.bf16.mxu0 0
      %371 = vmatpush2.bf16.msra.mxu0 0
      %372 = vmatprep.mubr.bf16.mxu0 0
      %373 = vmatmul.mubr.bf16.gmra.mxu0 %v290
      %v374 = vpop.f32.mrf.mxu0
      %v375 = vadd.f32 0.0, %v374
      %v376 = vpop.f32.mrf.mxu0
      %v377 = vpop.f32.mrf.mxu0
      %v378 = vadd.f32 0.0, %v377
      %v379 = vpop.f32.mrf.mxu0
      %380 = vdwg.mxu0
      %v381 = vadd.f32 %v266, %v375
      %v382 = vadd.f32 %v267, %v378
      %383 = vst [vmem:[#allocation2] sm:$0xff] %v381
      %384 = vst [vmem:[#allocation2 + $0x8] sm:$0xff] %v382
      // Predicated region
      $region37: #{pspnet_forward.23} parent=31 // pred_check
        %p385 = pneg %p260
      $region38: #{pspnet_forward.23} parent=31 // pred_check_branch
        %387 = sbr.rel (%p385) target = $region40
      $region39: #{pspnet_forward.23} parent=31 // pred_region
        %v388 = vld [vmem:[#allocation2] sm:$0xff]
        %v389 = vld [vmem:[#allocation2 + $0x8] sm:$0xff]
        %v390 = vld [vmem:[%s249] sm:$0x1]
        %v392 = vlaneseq
        %v393 = vshrl.u32 %v392, 7
        %v394 = vsub.s32 0, %v393
        %v395 = vrot.slane %v390, %v394
        %v397 = vadd.f32 %v388, %v395
        %v398 = vadd.f32 %v389, %v395
        %399 = vst [vmem:[%s257] sm:$0xff] %v397
        %400 = vst [vmem:[%s257 + $0x8] sm:$0xff] %v398
      $region40: #{pspnet_forward.23} parent=31 // pred_fallthru
        _
      %s401 = smul.u32 2, %s19
      %p402 = scmp.lt.s32.totalorder %s401, 3
      %s403 = scalar_select %p402, %s401, 3
      %p404 = scmp.lt.s32.totalorder %s20, 0
      %s405 = scalar_select %p404, %s20, 0
      %s406 = sadd.s32 %s405, %s403
      %s407 = smul.addr %s406, 8
      %s408 = scalar_lea.vmem %s3, %s407
      // Predicated region
      $region41: #{pspnet_forward.23} parent=31 // pred_check
        %p409 = pneg %p135
      $region42: #{pspnet_forward.23} parent=31 // pred_check_branch
        %411 = sbr.rel (%p409) target = $region44
      $region43: #{pspnet_forward.23} parent=31 // pred_region
        %s412 = smul.u32 2, %s19
      $region44: #{pspnet_forward.23} parent=31 // pred_fallthru
        _
    $region32: #{pspnet_forward.23} parent=5 // pred_fallthru
      _
    %p413 = scmp.le.s32.totalorder 2, %s9
    // Predicated region
    $region45: #{pspnet_forward.23} parent=5 // pred_check
      %p414 = pneg %p413
    $region46: #{pspnet_forward.23} parent=5 // pred_check_branch
      %416 = sbr.rel (%p414) target = $region48
    $region47: #{pspnet_forward.23} parent=5 // pred_region
      %s417 = ssub.s32 %s9, 2
      // Predicated region
      $region49: #{pspnet_forward.23} parent=47 // pred_check
        %p418 = pneg %p141
      $region50: #{pspnet_forward.23} parent=47 // pred_check_branch
        %420 = sbr.rel (%p418) target = $region52
      $region51: #{pspnet_forward.23} parent=47 // pred_region
        %s421 = smul.u32 2, %s22
        %p422 = scmp.lt.s32.totalorder %s421, 3
        %s423 = scalar_select %p422, %s421, 3
        %p424 = scmp.lt.s32.totalorder %s23, 0
        %s425 = scalar_select %p424, %s23, 0
        %s426 = sadd.s32 %s425, %s423
        %s427 = smul.addr %s426, 8
        %s428 = scalar_lea.vmem %s3, %s427
      $region52: #{pspnet_forward.23} parent=47 // pred_fallthru
        _
    $region48: #{pspnet_forward.23} parent=5 // pred_fallthru
      _
  $region6: #{pspnet_forward.23} parent=0 // loop_footer
    %s13 = sadd.s32 1, %s9
  $region7: #{pspnet_forward.23} parent=0 // loop_footer_branch
    %8 = sbr.rel target = $region3
  $region8: #{pspnet_forward.23} parent=0 // loop_exit
    _

</llo_original>
